<compile_context>
chip_gen: v7x
topology: tpu7x:2x2x1
jax: 0.10.0
libtpu: 0.0.40
codegen_flags: <defaults>
</compile_context>

<pallas_src>
import functools
import math

import jax
import jax.numpy as jnp
from jax.experimental import pallas as pl
from jax.experimental.pallas import tpu as pltpu


# -----------------------------------------------------------------------------
# Fused kernel: LSTM1 -> LSTM2 -> MHA -> fc1 -> fc2 -> fc3 -> fc4 -> relu
# -----------------------------------------------------------------------------
def _make_fused_kernel(num_heads):
    def kernel(x_ref, h0_ref, c0_ref,
               wih1_ref, whh1_ref, lb1_ref,
               wih2_ref, whh2_ref, lb2_ref,
               wqkv_ref, bqkv_ref, wo_ref, bo_ref,
               fw1_ref, fb1_ref, fw2_ref, fb2_ref,
               fw3_ref, fb3_ref, fw4_ref, fb4_ref,
               o_ref, y2_sc, y1h_sc):
        f32 = jnp.float32
        B, N, _ = x_ref.shape           # (batch, n_seq, seq_len)
        H = h0_ref.shape[-1]            # hidden_dim
        hd = H // num_heads             # head_dim
        scale = 1.0 / math.sqrt(float(hd))

        xv = x_ref[...].astype(f32)     # (B, N, D) — whole input resident in VMEM

        # Weights loaded once into registers.
        wih1 = wih1_ref[...]; whh1 = whh1_ref[...]; lb1 = lb1_ref[...]
        wih2 = wih2_ref[...]; whh2 = whh2_ref[...]; lb2 = lb2_ref[...]

        def lstm_step(x_t, h, c, wih, whh, b):
            gates = (jnp.dot(x_t, wih, preferred_element_type=f32)
                     + jnp.dot(h, whh, preferred_element_type=f32) + b)  # (B, 4H)
            # Full-width nonlinearities, then static lane slices.
            sig = jax.nn.sigmoid(gates)
            tnh = jnp.tanh(gates)
            i_g = sig[:, 0 * H:1 * H]
            f_g = sig[:, 1 * H:2 * H]
            g_g = tnh[:, 2 * H:3 * H]
            o_g = sig[:, 3 * H:4 * H]
            c_new = f_g * c + i_g * g_g
            h_new = o_g * jnp.tanh(c_new)
            return h_new, c_new

        # ---- LSTM layer 1 (time loop fully unrolled; outputs kept in registers)
        h1 = h0_ref[...].astype(f32)
        c1 = c0_ref[...].astype(f32)
        h1_seq = []
        for t in range(N):
            h1, c1 = lstm_step(xv[:, t, :], h1, c1, wih1, whh1, lb1)
            h1_seq.append(h1)

        # ---- LSTM layer 2 (seeded with layer-1 FINAL state, as in the reference)
        h2 = h1
        c2 = c1
        for t in range(N):
            h2, c2 = lstm_step(h1_seq[t], h2, c2, wih2, whh2, lb2)
            y2_sc[t] = h2                               # (N, B, H) VMEM scratch

        y2 = y2_sc[...]                                 # (N, B, H)

        # ---- Multi-head self-attention + fc1, per batch element
        wqkv = wqkv_ref[...]; bqkv = bqkv_ref[...]
        wo = wo_ref[...]; bo = bo_ref[...]
        fw1 = fw1_ref[...]; fb1 = fb1_ref[...]
        for b in range(B):
            xb = y2[:, b, :]                            # (N, H)
            qkv = jnp.dot(xb, wqkv, preferred_element_type=f32) + bqkv   # (N, 3H)
            # Accumulate each head's contribution straight through the output
            # projection — no lane-axis concat.
            attb = jnp.zeros((N, H), f32) + bo
            for hh in range(num_heads):
                lo = hh * hd
                hi = lo + hd
                qh = qkv[:, lo:hi]
                kh = qkv[:, H + lo:H + hi]
                vh = qkv[:, 2 * H + lo:2 * H + hi]
                s = jnp.dot(qh, kh.T, preferred_element_type=f32) * scale  # (N, N)
                s = s - jnp.max(s, axis=-1, keepdims=True)
                p = jnp.exp(s)
                p = p * pl.reciprocal(jnp.sum(p, axis=-1, keepdims=True), approx=True)
                oh = jnp.dot(p, vh, preferred_element_type=f32)            # (N, hd)
                attb = attb + jnp.dot(oh, wo[lo:hi, :], preferred_element_type=f32)
            # fc1 fused here (one (N,H)@(H,H2) push per batch element).
            y1h_sc[b] = jnp.dot(attb, fw1, preferred_element_type=f32) + fb1

        # ---- fc2 (flatten over (n, H2) expressed as per-timestep contraction)
        y1h = y1h_sc[...]                               # (B, N, H2)
        fw2 = fw2_ref[...]                              # (N, H2, 36)
        acc = jnp.zeros((B, fb2_ref.shape[-1]), f32) + fb2_ref[...]
        for n in range(N):
            acc = acc + jnp.dot(y1h[:, n, :], fw2[n], preferred_element_type=f32)

        # ---- fc3 -> fc4 -> relu
        y3 = jnp.dot(acc, fw3_ref[...], preferred_element_type=f32) + fb3_ref[...]
        y4 = jnp.dot(y3, fw4_ref[...], preferred_element_type=f32) + fb4_ref[...]
        o_ref[...] = jnp.maximum(y4, 0.0).astype(o_ref.dtype)

    return kernel


# -----------------------------------------------------------------------------
# Parameters & full forward
# -----------------------------------------------------------------------------
def _uniform(key, shape, fan_in):
    bound = 1.0 / math.sqrt(float(fan_in))
    return jax.random.uniform(key, shape, jnp.float32, -bound, bound)


def init_params(key, n_seq, seq_len, hidden_dim, num_heads):
    H = hidden_dim
    H2 = H // 2
    ks = jax.random.split(key, 22)
    p = {}
    # LSTM 1 (PyTorch LSTM uses 1/sqrt(hidden_size) for all weights)
    p["l1_wih"] = _uniform(ks[0], (seq_len, 4 * H), H)
    p["l1_whh"] = _uniform(ks[1], (H, 4 * H), H)
    p["l1_b"] = _uniform(ks[2], (1, 4 * H), H)
    # LSTM 2
    p["l2_wih"] = _uniform(ks[3], (H, 4 * H), H)
    p["l2_whh"] = _uniform(ks[4], (H, 4 * H), H)
    p["l2_b"] = _uniform(ks[5], (1, 4 * H), H)
    # Attention: Q/K/V projections stored concatenated (single MXU push).
    wq = _uniform(ks[6], (H, H), H)
    wk = _uniform(ks[7], (H, H), H)
    wv = _uniform(ks[8], (H, H), H)
    bq = _uniform(ks[9], (1, H), H)
    bk = _uniform(ks[10], (1, H), H)
    bv = _uniform(ks[11], (1, H), H)
    p["wqkv"] = jnp.concatenate([wq, wk, wv], axis=1)   # (H, 3H)
    p["bqkv"] = jnp.concatenate([bq, bk, bv], axis=1)   # (1, 3H)
    p["wo"] = _uniform(ks[12], (H, H), H)
    p["bo"] = _uniform(ks[13], (1, H), H)
    # FC head
    p["fc1_w"] = _uniform(ks[14], (H, H2), H)
    p["fc1_b"] = _uniform(ks[15], (1, H2), H)
    # fc2 weight stored pre-reshaped to (n_seq, H2, 36): row n*H2+k of the
    # original (n_seq*H2, 36) matrix is fc2_w[n, k, :] (matches torch reshape).
    p["fc2_w"] = _uniform(ks[16], (n_seq, H2, 36), n_seq * H2)
    p["fc2_b"] = _uniform(ks[17], (1, 36), n_seq * H2)
    p["fc3_w"] = _uniform(ks[18], (36, 6), 36)
    p["fc3_b"] = _uniform(ks[19], (1, 6), 36)
    p["fc4_w"] = _uniform(ks[20], (6, 6), 6)
    p["fc4_b"] = _uniform(ks[21], (1, 6), 6)
    return p


@functools.partial(jax.jit, static_argnames=("num_heads",))
def complex_model_forward(params, x, h0, c0, num_heads=4):
    # x: (batch, n_seq, seq_len);  h0, c0: (batch, hidden_dim)
    B, N, _ = x.shape
    H = h0.shape[-1]
    H2 = params["fc1_w"].shape[1]

    kernel = _make_fused_kernel(num_heads)
    return pl.pallas_call(
        kernel,
        out_shape=jax.ShapeDtypeStruct((B, 6), jnp.float32),
        scratch_shapes=[
            pltpu.VMEM((N, B, H), jnp.float32),    # LSTM-2 outputs (attn input)
            pltpu.VMEM((B, N, H2), jnp.float32),   # fc1 outputs
        ],
    )(x, h0, c0,
      params["l1_wih"], params["l1_whh"], params["l1_b"],
      params["l2_wih"], params["l2_whh"], params["l2_b"],
      params["wqkv"], params["bqkv"], params["wo"], params["bo"],
      params["fc1_w"], params["fc1_b"], params["fc2_w"], params["fc2_b"],
      params["fc3_w"], params["fc3_b"], params["fc4_w"], params["fc4_b"])


if __name__ == "__main__":
    batch, n_seq, seq_len, hidden_dim, num_heads = 2, 8, 8, 32, 4

    key = jax.random.PRNGKey(0)
    k_param, k_x, k_h, k_c = jax.random.split(key, 4)

    params = init_params(k_param, n_seq, seq_len, hidden_dim, num_heads)
    x = jax.random.normal(k_x, (batch, n_seq, seq_len), jnp.float32)
    h0 = jax.random.normal(k_h, (batch, hidden_dim), jnp.float32)
    c0 = jax.random.normal(k_c, (batch, hidden_dim), jnp.float32)

    out = complex_model_forward(params, x, h0, c0, num_heads=num_heads)
    out = jax.block_until_ready(out)
    assert out.shape == (batch, 6), out.shape
    assert bool(jnp.all(jnp.isfinite(out)))
    print("KERNEL_OK")
</pallas_src>

<mosaic_0001>
module attributes {stable_mosaic.version = 11 : i64} {
  func.func @kernel(%arg0: memref<2x8x8xf32, #tpu.memory_space<vmem>>, %arg1: memref<2x32xf32, #tpu.memory_space<vmem>>, %arg2: memref<2x32xf32, #tpu.memory_space<vmem>>, %arg3: memref<8x128xf32, #tpu.memory_space<vmem>>, %arg4: memref<32x128xf32, #tpu.memory_space<vmem>>, %arg5: memref<1x128xf32, #tpu.memory_space<vmem>>, %arg6: memref<32x128xf32, #tpu.memory_space<vmem>>, %arg7: memref<32x128xf32, #tpu.memory_space<vmem>>, %arg8: memref<1x128xf32, #tpu.memory_space<vmem>>, %arg9: memref<32x96xf32, #tpu.memory_space<vmem>>, %arg10: memref<1x96xf32, #tpu.memory_space<vmem>>, %arg11: memref<32x32xf32, #tpu.memory_space<vmem>>, %arg12: memref<1x32xf32, #tpu.memory_space<vmem>>, %arg13: memref<32x16xf32, #tpu.memory_space<vmem>>, %arg14: memref<1x16xf32, #tpu.memory_space<vmem>>, %arg15: memref<8x16x36xf32, #tpu.memory_space<vmem>>, %arg16: memref<1x36xf32, #tpu.memory_space<vmem>>, %arg17: memref<36x6xf32, #tpu.memory_space<vmem>>, %arg18: memref<1x6xf32, #tpu.memory_space<vmem>>, %arg19: memref<6x6xf32, #tpu.memory_space<vmem>>, %arg20: memref<1x6xf32, #tpu.memory_space<vmem>>, %arg21: memref<2x6xf32, #tpu.memory_space<vmem>>, %arg22: memref<8x2x32xf32, #tpu.memory_space<vmem>>, %arg23: memref<2x8x16xf32, #tpu.memory_space<vmem>>) attributes {dimension_semantics = [], scalar_prefetch = 0 : i64, scratch_operands = 2 : i64, tpu.core_type = #tpu.core_type<tc>} {
    %c0 = arith.constant 0 : index
    %c0_0 = arith.constant 0 : index
    %c0_1 = arith.constant 0 : index
    %0 = vector.load %arg0[%c0, %c0_0, %c0_1] : memref<2x8x8xf32, #tpu.memory_space<vmem>>, vector<2x8x8xf32>
    %c0_2 = arith.constant 0 : index
    %c0_3 = arith.constant 0 : index
    %1 = vector.load %arg3[%c0_2, %c0_3] : memref<8x128xf32, #tpu.memory_space<vmem>>, vector<8x128xf32>
    %c0_4 = arith.constant 0 : index
    %c0_5 = arith.constant 0 : index
    %2 = vector.load %arg4[%c0_4, %c0_5] : memref<32x128xf32, #tpu.memory_space<vmem>>, vector<32x128xf32>
    %c0_6 = arith.constant 0 : index
    %c0_7 = arith.constant 0 : index
    %3 = vector.load %arg5[%c0_6, %c0_7] : memref<1x128xf32, #tpu.memory_space<vmem>>, vector<1x128xf32>
    %c0_8 = arith.constant 0 : index
    %c0_9 = arith.constant 0 : index
    %4 = vector.load %arg6[%c0_8, %c0_9] : memref<32x128xf32, #tpu.memory_space<vmem>>, vector<32x128xf32>
    %c0_10 = arith.constant 0 : index
    %c0_11 = arith.constant 0 : index
    %5 = vector.load %arg7[%c0_10, %c0_11] : memref<32x128xf32, #tpu.memory_space<vmem>>, vector<32x128xf32>
    %c0_12 = arith.constant 0 : index
    %c0_13 = arith.constant 0 : index
    %6 = vector.load %arg8[%c0_12, %c0_13] : memref<1x128xf32, #tpu.memory_space<vmem>>, vector<1x128xf32>
    %c0_14 = arith.constant 0 : index
    %c0_15 = arith.constant 0 : index
    %7 = vector.load %arg1[%c0_14, %c0_15] : memref<2x32xf32, #tpu.memory_space<vmem>>, vector<2x32xf32>
    %c0_16 = arith.constant 0 : index
    %c0_17 = arith.constant 0 : index
    %8 = vector.load %arg2[%c0_16, %c0_17] : memref<2x32xf32, #tpu.memory_space<vmem>>, vector<2x32xf32>
    %9 = vector.extract_strided_slice %0 {offsets = [0, 0, 0], sizes = [2, 1, 8], strides = [1, 1, 1]} : vector<2x8x8xf32> to vector<2x1x8xf32>
    %10 = vector.shape_cast %9 : vector<2x1x8xf32> to vector<2x8xf32>
    %cst = arith.constant dense<0.000000e+00> : vector<2x128xf32>
    %11 = tpu.matmul %10, %1, %cst {dimension_numbers = #tpu.dot_dimension_numbers<[1], [0], [0], [1], [0, 0, 1, 1], [], []>} : vector<2x8xf32>, vector<8x128xf32>, vector<2x128xf32> -> vector<2x128xf32>
    %cst_18 = arith.constant dense<0.000000e+00> : vector<2x128xf32>
    %12 = tpu.matmul %7, %2, %cst_18 {dimension_numbers = #tpu.dot_dimension_numbers<[1], [0], [0], [1], [0, 0, 1, 1], [], []>} : vector<2x32xf32>, vector<32x128xf32>, vector<2x128xf32> -> vector<2x128xf32>
    %13 = arith.addf %11, %12 : vector<2x128xf32>
    %14 = vector.broadcast %3 : vector<1x128xf32> to vector<2x128xf32>
    %15 = arith.addf %13, %14 : vector<2x128xf32>
    %16 = arith.negf %15 : vector<2x128xf32>
    %17 = math.exp %16 : vector<2x128xf32>
    %cst_19 = arith.constant 1.000000e+00 : f32
    %18 = vector.broadcast %cst_19 : f32 to vector<2x128xf32>
    %19 = arith.addf %18, %17 : vector<2x128xf32>
    %20 = arith.divf %18, %19 : vector<2x128xf32>
    %21 = math.tanh %15 : vector<2x128xf32>
    %22 = vector.extract_strided_slice %20 {offsets = [0, 0], sizes = [2, 32], strides = [1, 1]} : vector<2x128xf32> to vector<2x32xf32>
    %23 = vector.extract_strided_slice %20 {offsets = [0, 32], sizes = [2, 32], strides = [1, 1]} : vector<2x128xf32> to vector<2x32xf32>
    %24 = vector.extract_strided_slice %21 {offsets = [0, 64], sizes = [2, 32], strides = [1, 1]} : vector<2x128xf32> to vector<2x32xf32>
    %25 = vector.extract_strided_slice %20 {offsets = [0, 96], sizes = [2, 32], strides = [1, 1]} : vector<2x128xf32> to vector<2x32xf32>
    %26 = arith.mulf %23, %8 : vector<2x32xf32>
    %27 = arith.mulf %22, %24 : vector<2x32xf32>
    %28 = arith.addf %26, %27 : vector<2x32xf32>
    %29 = math.tanh %28 : vector<2x32xf32>
    %30 = arith.mulf %25, %29 : vector<2x32xf32>
    %31 = vector.extract_strided_slice %0 {offsets = [0, 1, 0], sizes = [2, 1, 8], strides = [1, 1, 1]} : vector<2x8x8xf32> to vector<2x1x8xf32>
    %32 = vector.shape_cast %31 : vector<2x1x8xf32> to vector<2x8xf32>
    %cst_20 = arith.constant dense<0.000000e+00> : vector<2x128xf32>
    %33 = tpu.matmul %32, %1, %cst_20 {dimension_numbers = #tpu.dot_dimension_numbers<[1], [0], [0], [1], [0, 0, 1, 1], [], []>} : vector<2x8xf32>, vector<8x128xf32>, vector<2x128xf32> -> vector<2x128xf32>
    %cst_21 = arith.constant dense<0.000000e+00> : vector<2x128xf32>
    %34 = tpu.matmul %30, %2, %cst_21 {dimension_numbers = #tpu.dot_dimension_numbers<[1], [0], [0], [1], [0, 0, 1, 1], [], []>} : vector<2x32xf32>, vector<32x128xf32>, vector<2x128xf32> -> vector<2x128xf32>
    %35 = arith.addf %33, %34 : vector<2x128xf32>
    %36 = vector.broadcast %3 : vector<1x128xf32> to vector<2x128xf32>
    %37 = arith.addf %35, %36 : vector<2x128xf32>
    %38 = arith.negf %37 : vector<2x128xf32>
    %39 = math.exp %38 : vector<2x128xf32>
    %cst_22 = arith.constant 1.000000e+00 : f32
    %40 = vector.broadcast %cst_22 : f32 to vector<2x128xf32>
    %41 = arith.addf %40, %39 : vector<2x128xf32>
    %42 = arith.divf %40, %41 : vector<2x128xf32>
    %43 = math.tanh %37 : vector<2x128xf32>
    %44 = vector.extract_strided_slice %42 {offsets = [0, 0], sizes = [2, 32], strides = [1, 1]} : vector<2x128xf32> to vector<2x32xf32>
    %45 = vector.extract_strided_slice %42 {offsets = [0, 32], sizes = [2, 32], strides = [1, 1]} : vector<2x128xf32> to vector<2x32xf32>
    %46 = vector.extract_strided_slice %43 {offsets = [0, 64], sizes = [2, 32], strides = [1, 1]} : vector<2x128xf32> to vector<2x32xf32>
    %47 = vector.extract_strided_slice %42 {offsets = [0, 96], sizes = [2, 32], strides = [1, 1]} : vector<2x128xf32> to vector<2x32xf32>
    %48 = arith.mulf %45, %28 : vector<2x32xf32>
    %49 = arith.mulf %44, %46 : vector<2x32xf32>
    %50 = arith.addf %48, %49 : vector<2x32xf32>
    %51 = math.tanh %50 : vector<2x32xf32>
    %52 = arith.mulf %47, %51 : vector<2x32xf32>
    %53 = vector.extract_strided_slice %0 {offsets = [0, 2, 0], sizes = [2, 1, 8], strides = [1, 1, 1]} : vector<2x8x8xf32> to vector<2x1x8xf32>
    %54 = vector.shape_cast %53 : vector<2x1x8xf32> to vector<2x8xf32>
    %cst_23 = arith.constant dense<0.000000e+00> : vector<2x128xf32>
    %55 = tpu.matmul %54, %1, %cst_23 {dimension_numbers = #tpu.dot_dimension_numbers<[1], [0], [0], [1], [0, 0, 1, 1], [], []>} : vector<2x8xf32>, vector<8x128xf32>, vector<2x128xf32> -> vector<2x128xf32>
    %cst_24 = arith.constant dense<0.000000e+00> : vector<2x128xf32>
    %56 = tpu.matmul %52, %2, %cst_24 {dimension_numbers = #tpu.dot_dimension_numbers<[1], [0], [0], [1], [0, 0, 1, 1], [], []>} : vector<2x32xf32>, vector<32x128xf32>, vector<2x128xf32> -> vector<2x128xf32>
    %57 = arith.addf %55, %56 : vector<2x128xf32>
    %58 = vector.broadcast %3 : vector<1x128xf32> to vector<2x128xf32>
    %59 = arith.addf %57, %58 : vector<2x128xf32>
    %60 = arith.negf %59 : vector<2x128xf32>
    %61 = math.exp %60 : vector<2x128xf32>
    %cst_25 = arith.constant 1.000000e+00 : f32
    %62 = vector.broadcast %cst_25 : f32 to vector<2x128xf32>
    %63 = arith.addf %62, %61 : vector<2x128xf32>
    %64 = arith.divf %62, %63 : vector<2x128xf32>
    %65 = math.tanh %59 : vector<2x128xf32>
    %66 = vector.extract_strided_slice %64 {offsets = [0, 0], sizes = [2, 32], strides = [1, 1]} : vector<2x128xf32> to vector<2x32xf32>
    %67 = vector.extract_strided_slice %64 {offsets = [0, 32], sizes = [2, 32], strides = [1, 1]} : vector<2x128xf32> to vector<2x32xf32>
    %68 = vector.extract_strided_slice %65 {offsets = [0, 64], sizes = [2, 32], strides = [1, 1]} : vector<2x128xf32> to vector<2x32xf32>
    %69 = vector.extract_strided_slice %64 {offsets = [0, 96], sizes = [2, 32], strides = [1, 1]} : vector<2x128xf32> to vector<2x32xf32>
    %70 = arith.mulf %67, %50 : vector<2x32xf32>
    %71 = arith.mulf %66, %68 : vector<2x32xf32>
    %72 = arith.addf %70, %71 : vector<2x32xf32>
    %73 = math.tanh %72 : vector<2x32xf32>
    %74 = arith.mulf %69, %73 : vector<2x32xf32>
    %75 = vector.extract_strided_slice %0 {offsets = [0, 3, 0], sizes = [2, 1, 8], strides = [1, 1, 1]} : vector<2x8x8xf32> to vector<2x1x8xf32>
    %76 = vector.shape_cast %75 : vector<2x1x8xf32> to vector<2x8xf32>
    %cst_26 = arith.constant dense<0.000000e+00> : vector<2x128xf32>
    %77 = tpu.matmul %76, %1, %cst_26 {dimension_numbers = #tpu.dot_dimension_numbers<[1], [0], [0], [1], [0, 0, 1, 1], [], []>} : vector<2x8xf32>, vector<8x128xf32>, vector<2x128xf32> -> vector<2x128xf32>
    %cst_27 = arith.constant dense<0.000000e+00> : vector<2x128xf32>
    %78 = tpu.matmul %74, %2, %cst_27 {dimension_numbers = #tpu.dot_dimension_numbers<[1], [0], [0], [1], [0, 0, 1, 1], [], []>} : vector<2x32xf32>, vector<32x128xf32>, vector<2x128xf32> -> vector<2x128xf32>
    %79 = arith.addf %77, %78 : vector<2x128xf32>
    %80 = vector.broadcast %3 : vector<1x128xf32> to vector<2x128xf32>
    %81 = arith.addf %79, %80 : vector<2x128xf32>
    %82 = arith.negf %81 : vector<2x128xf32>
    %83 = math.exp %82 : vector<2x128xf32>
    %cst_28 = arith.constant 1.000000e+00 : f32
    %84 = vector.broadcast %cst_28 : f32 to vector<2x128xf32>
    %85 = arith.addf %84, %83 : vector<2x128xf32>
    %86 = arith.divf %84, %85 : vector<2x128xf32>
    %87 = math.tanh %81 : vector<2x128xf32>
    %88 = vector.extract_strided_slice %86 {offsets = [0, 0], sizes = [2, 32], strides = [1, 1]} : vector<2x128xf32> to vector<2x32xf32>
    %89 = vector.extract_strided_slice %86 {offsets = [0, 32], sizes = [2, 32], strides = [1, 1]} : vector<2x128xf32> to vector<2x32xf32>
    %90 = vector.extract_strided_slice %87 {offsets = [0, 64], sizes = [2, 32], strides = [1, 1]} : vector<2x128xf32> to vector<2x32xf32>
    %91 = vector.extract_strided_slice %86 {offsets = [0, 96], sizes = [2, 32], strides = [1, 1]} : vector<2x128xf32> to vector<2x32xf32>
    %92 = arith.mulf %89, %72 : vector<2x32xf32>
    %93 = arith.mulf %88, %90 : vector<2x32xf32>
    %94 = arith.addf %92, %93 : vector<2x32xf32>
    %95 = math.tanh %94 : vector<2x32xf32>
    %96 = arith.mulf %91, %95 : vector<2x32xf32>
    %97 = vector.extract_strided_slice %0 {offsets = [0, 4, 0], sizes = [2, 1, 8], strides = [1, 1, 1]} : vector<2x8x8xf32> to vector<2x1x8xf32>
    %98 = vector.shape_cast %97 : vector<2x1x8xf32> to vector<2x8xf32>
    %cst_29 = arith.constant dense<0.000000e+00> : vector<2x128xf32>
    %99 = tpu.matmul %98, %1, %cst_29 {dimension_numbers = #tpu.dot_dimension_numbers<[1], [0], [0], [1], [0, 0, 1, 1], [], []>} : vector<2x8xf32>, vector<8x128xf32>, vector<2x128xf32> -> vector<2x128xf32>
    %cst_30 = arith.constant dense<0.000000e+00> : vector<2x128xf32>
    %100 = tpu.matmul %96, %2, %cst_30 {dimension_numbers = #tpu.dot_dimension_numbers<[1], [0], [0], [1], [0, 0, 1, 1], [], []>} : vector<2x32xf32>, vector<32x128xf32>, vector<2x128xf32> -> vector<2x128xf32>
    %101 = arith.addf %99, %100 : vector<2x128xf32>
    %102 = vector.broadcast %3 : vector<1x128xf32> to vector<2x128xf32>
    %103 = arith.addf %101, %102 : vector<2x128xf32>
    %104 = arith.negf %103 : vector<2x128xf32>
    %105 = math.exp %104 : vector<2x128xf32>
    %cst_31 = arith.constant 1.000000e+00 : f32
    %106 = vector.broadcast %cst_31 : f32 to vector<2x128xf32>
    %107 = arith.addf %106, %105 : vector<2x128xf32>
    %108 = arith.divf %106, %107 : vector<2x128xf32>
    %109 = math.tanh %103 : vector<2x128xf32>
    %110 = vector.extract_strided_slice %108 {offsets = [0, 0], sizes = [2, 32], strides = [1, 1]} : vector<2x128xf32> to vector<2x32xf32>
    %111 = vector.extract_strided_slice %108 {offsets = [0, 32], sizes = [2, 32], strides = [1, 1]} : vector<2x128xf32> to vector<2x32xf32>
    %112 = vector.extract_strided_slice %109 {offsets = [0, 64], sizes = [2, 32], strides = [1, 1]} : vector<2x128xf32> to vector<2x32xf32>
    %113 = vector.extract_strided_slice %108 {offsets = [0, 96], sizes = [2, 32], strides = [1, 1]} : vector<2x128xf32> to vector<2x32xf32>
    %114 = arith.mulf %111, %94 : vector<2x32xf32>
    %115 = arith.mulf %110, %112 : vector<2x32xf32>
    %116 = arith.addf %114, %115 : vector<2x32xf32>
    %117 = math.tanh %116 : vector<2x32xf32>
    %118 = arith.mulf %113, %117 : vector<2x32xf32>
    %119 = vector.extract_strided_slice %0 {offsets = [0, 5, 0], sizes = [2, 1, 8], strides = [1, 1, 1]} : vector<2x8x8xf32> to vector<2x1x8xf32>
    %120 = vector.shape_cast %119 : vector<2x1x8xf32> to vector<2x8xf32>
    %cst_32 = arith.constant dense<0.000000e+00> : vector<2x128xf32>
    %121 = tpu.matmul %120, %1, %cst_32 {dimension_numbers = #tpu.dot_dimension_numbers<[1], [0], [0], [1], [0, 0, 1, 1], [], []>} : vector<2x8xf32>, vector<8x128xf32>, vector<2x128xf32> -> vector<2x128xf32>
    %cst_33 = arith.constant dense<0.000000e+00> : vector<2x128xf32>
    %122 = tpu.matmul %118, %2, %cst_33 {dimension_numbers = #tpu.dot_dimension_numbers<[1], [0], [0], [1], [0, 0, 1, 1], [], []>} : vector<2x32xf32>, vector<32x128xf32>, vector<2x128xf32> -> vector<2x128xf32>
    %123 = arith.addf %121, %122 : vector<2x128xf32>
    %124 = vector.broadcast %3 : vector<1x128xf32> to vector<2x128xf32>
    %125 = arith.addf %123, %124 : vector<2x128xf32>
    %126 = arith.negf %125 : vector<2x128xf32>
    %127 = math.exp %126 : vector<2x128xf32>
    %cst_34 = arith.constant 1.000000e+00 : f32
    %128 = vector.broadcast %cst_34 : f32 to vector<2x128xf32>
    %129 = arith.addf %128, %127 : vector<2x128xf32>
    %130 = arith.divf %128, %129 : vector<2x128xf32>
    %131 = math.tanh %125 : vector<2x128xf32>
    %132 = vector.extract_strided_slice %130 {offsets = [0, 0], sizes = [2, 32], strides = [1, 1]} : vector<2x128xf32> to vector<2x32xf32>
    %133 = vector.extract_strided_slice %130 {offsets = [0, 32], sizes = [2, 32], strides = [1, 1]} : vector<2x128xf32> to vector<2x32xf32>
    %134 = vector.extract_strided_slice %131 {offsets = [0, 64], sizes = [2, 32], strides = [1, 1]} : vector<2x128xf32> to vector<2x32xf32>
    %135 = vector.extract_strided_slice %130 {offsets = [0, 96], sizes = [2, 32], strides = [1, 1]} : vector<2x128xf32> to vector<2x32xf32>
    %136 = arith.mulf %133, %116 : vector<2x32xf32>
    %137 = arith.mulf %132, %134 : vector<2x32xf32>
    %138 = arith.addf %136, %137 : vector<2x32xf32>
    %139 = math.tanh %138 : vector<2x32xf32>
    %140 = arith.mulf %135, %139 : vector<2x32xf32>
    %141 = vector.extract_strided_slice %0 {offsets = [0, 6, 0], sizes = [2, 1, 8], strides = [1, 1, 1]} : vector<2x8x8xf32> to vector<2x1x8xf32>
    %142 = vector.shape_cast %141 : vector<2x1x8xf32> to vector<2x8xf32>
    %cst_35 = arith.constant dense<0.000000e+00> : vector<2x128xf32>
    %143 = tpu.matmul %142, %1, %cst_35 {dimension_numbers = #tpu.dot_dimension_numbers<[1], [0], [0], [1], [0, 0, 1, 1], [], []>} : vector<2x8xf32>, vector<8x128xf32>, vector<2x128xf32> -> vector<2x128xf32>
    %cst_36 = arith.constant dense<0.000000e+00> : vector<2x128xf32>
    %144 = tpu.matmul %140, %2, %cst_36 {dimension_numbers = #tpu.dot_dimension_numbers<[1], [0], [0], [1], [0, 0, 1, 1], [], []>} : vector<2x32xf32>, vector<32x128xf32>, vector<2x128xf32> -> vector<2x128xf32>
    %145 = arith.addf %143, %144 : vector<2x128xf32>
    %146 = vector.broadcast %3 : vector<1x128xf32> to vector<2x128xf32>
    %147 = arith.addf %145, %146 : vector<2x128xf32>
    %148 = arith.negf %147 : vector<2x128xf32>
    %149 = math.exp %148 : vector<2x128xf32>
    %cst_37 = arith.constant 1.000000e+00 : f32
    %150 = vector.broadcast %cst_37 : f32 to vector<2x128xf32>
    %151 = arith.addf %150, %149 : vector<2x128xf32>
    %152 = arith.divf %150, %151 : vector<2x128xf32>
    %153 = math.tanh %147 : vector<2x128xf32>
    %154 = vector.extract_strided_slice %152 {offsets = [0, 0], sizes = [2, 32], strides = [1, 1]} : vector<2x128xf32> to vector<2x32xf32>
    %155 = vector.extract_strided_slice %152 {offsets = [0, 32], sizes = [2, 32], strides = [1, 1]} : vector<2x128xf32> to vector<2x32xf32>
    %156 = vector.extract_strided_slice %153 {offsets = [0, 64], sizes = [2, 32], strides = [1, 1]} : vector<2x128xf32> to vector<2x32xf32>
    %157 = vector.extract_strided_slice %152 {offsets = [0, 96], sizes = [2, 32], strides = [1, 1]} : vector<2x128xf32> to vector<2x32xf32>
    %158 = arith.mulf %155, %138 : vector<2x32xf32>
    %159 = arith.mulf %154, %156 : vector<2x32xf32>
    %160 = arith.addf %158, %159 : vector<2x32xf32>
    %161 = math.tanh %160 : vector<2x32xf32>
    %162 = arith.mulf %157, %161 : vector<2x32xf32>
    %163 = vector.extract_strided_slice %0 {offsets = [0, 7, 0], sizes = [2, 1, 8], strides = [1, 1, 1]} : vector<2x8x8xf32> to vector<2x1x8xf32>
    %164 = vector.shape_cast %163 : vector<2x1x8xf32> to vector<2x8xf32>
    %cst_38 = arith.constant dense<0.000000e+00> : vector<2x128xf32>
    %165 = tpu.matmul %164, %1, %cst_38 {dimension_numbers = #tpu.dot_dimension_numbers<[1], [0], [0], [1], [0, 0, 1, 1], [], []>} : vector<2x8xf32>, vector<8x128xf32>, vector<2x128xf32> -> vector<2x128xf32>
    %cst_39 = arith.constant dense<0.000000e+00> : vector<2x128xf32>
    %166 = tpu.matmul %162, %2, %cst_39 {dimension_numbers = #tpu.dot_dimension_numbers<[1], [0], [0], [1], [0, 0, 1, 1], [], []>} : vector<2x32xf32>, vector<32x128xf32>, vector<2x128xf32> -> vector<2x128xf32>
    %167 = arith.addf %165, %166 : vector<2x128xf32>
    %168 = vector.broadcast %3 : vector<1x128xf32> to vector<2x128xf32>
    %169 = arith.addf %167, %168 : vector<2x128xf32>
    %170 = arith.negf %169 : vector<2x128xf32>
    %171 = math.exp %170 : vector<2x128xf32>
    %cst_40 = arith.constant 1.000000e+00 : f32
    %172 = vector.broadcast %cst_40 : f32 to vector<2x128xf32>
    %173 = arith.addf %172, %171 : vector<2x128xf32>
    %174 = arith.divf %172, %173 : vector<2x128xf32>
    %175 = math.tanh %169 : vector<2x128xf32>
    %176 = vector.extract_strided_slice %174 {offsets = [0, 0], sizes = [2, 32], strides = [1, 1]} : vector<2x128xf32> to vector<2x32xf32>
    %177 = vector.extract_strided_slice %174 {offsets = [0, 32], sizes = [2, 32], strides = [1, 1]} : vector<2x128xf32> to vector<2x32xf32>
    %178 = vector.extract_strided_slice %175 {offsets = [0, 64], sizes = [2, 32], strides = [1, 1]} : vector<2x128xf32> to vector<2x32xf32>
    %179 = vector.extract_strided_slice %174 {offsets = [0, 96], sizes = [2, 32], strides = [1, 1]} : vector<2x128xf32> to vector<2x32xf32>
    %180 = arith.mulf %177, %160 : vector<2x32xf32>
    %181 = arith.mulf %176, %178 : vector<2x32xf32>
    %182 = arith.addf %180, %181 : vector<2x32xf32>
    %183 = math.tanh %182 : vector<2x32xf32>
    %184 = arith.mulf %179, %183 : vector<2x32xf32>
    %cst_41 = arith.constant dense<0.000000e+00> : vector<2x128xf32>
    %185 = tpu.matmul %30, %4, %cst_41 {dimension_numbers = #tpu.dot_dimension_numbers<[1], [0], [0], [1], [0, 0, 1, 1], [], []>} : vector<2x32xf32>, vector<32x128xf32>, vector<2x128xf32> -> vector<2x128xf32>
    %cst_42 = arith.constant dense<0.000000e+00> : vector<2x128xf32>
    %186 = tpu.matmul %184, %5, %cst_42 {dimension_numbers = #tpu.dot_dimension_numbers<[1], [0], [0], [1], [0, 0, 1, 1], [], []>} : vector<2x32xf32>, vector<32x128xf32>, vector<2x128xf32> -> vector<2x128xf32>
    %187 = arith.addf %185, %186 : vector<2x128xf32>
    %188 = vector.broadcast %6 : vector<1x128xf32> to vector<2x128xf32>
    %189 = arith.addf %187, %188 : vector<2x128xf32>
    %190 = arith.negf %189 : vector<2x128xf32>
    %191 = math.exp %190 : vector<2x128xf32>
    %cst_43 = arith.constant 1.000000e+00 : f32
    %192 = vector.broadcast %cst_43 : f32 to vector<2x128xf32>
    %193 = arith.addf %192, %191 : vector<2x128xf32>
    %194 = arith.divf %192, %193 : vector<2x128xf32>
    %195 = math.tanh %189 : vector<2x128xf32>
    %196 = vector.extract_strided_slice %194 {offsets = [0, 0], sizes = [2, 32], strides = [1, 1]} : vector<2x128xf32> to vector<2x32xf32>
    %197 = vector.extract_strided_slice %194 {offsets = [0, 32], sizes = [2, 32], strides = [1, 1]} : vector<2x128xf32> to vector<2x32xf32>
    %198 = vector.extract_strided_slice %195 {offsets = [0, 64], sizes = [2, 32], strides = [1, 1]} : vector<2x128xf32> to vector<2x32xf32>
    %199 = vector.extract_strided_slice %194 {offsets = [0, 96], sizes = [2, 32], strides = [1, 1]} : vector<2x128xf32> to vector<2x32xf32>
    %200 = arith.mulf %197, %182 : vector<2x32xf32>
    %201 = arith.mulf %196, %198 : vector<2x32xf32>
    %202 = arith.addf %200, %201 : vector<2x32xf32>
    %203 = math.tanh %202 : vector<2x32xf32>
    %204 = arith.mulf %199, %203 : vector<2x32xf32>
    %c0_44 = arith.constant 0 : index
    %c0_45 = arith.constant 0 : index
    %c0_46 = arith.constant 0 : index
    %205 = vector.load %arg22[%c0_44, %c0_45, %c0_46] : memref<8x2x32xf32, #tpu.memory_space<vmem>>, vector<1x2x32xf32>
    %206 = vector.shape_cast %205 : vector<1x2x32xf32> to vector<2x32xf32>
    %207 = vector.shape_cast %204 : vector<2x32xf32> to vector<1x2x32xf32>
    tpu.vector_store %arg22[%c0_44, %c0_45, %c0_46], %207 {strides = array<i32>} : memref<8x2x32xf32, #tpu.memory_space<vmem>>, vector<1x2x32xf32>,
    %cst_47 = arith.constant dense<0.000000e+00> : vector<2x128xf32>
    %208 = tpu.matmul %52, %4, %cst_47 {dimension_numbers = #tpu.dot_dimension_numbers<[1], [0], [0], [1], [0, 0, 1, 1], [], []>} : vector<2x32xf32>, vector<32x128xf32>, vector<2x128xf32> -> vector<2x128xf32>
    %cst_48 = arith.constant dense<0.000000e+00> : vector<2x128xf32>
    %209 = tpu.matmul %204, %5, %cst_48 {dimension_numbers = #tpu.dot_dimension_numbers<[1], [0], [0], [1], [0, 0, 1, 1], [], []>} : vector<2x32xf32>, vector<32x128xf32>, vector<2x128xf32> -> vector<2x128xf32>
    %210 = arith.addf %208, %209 : vector<2x128xf32>
    %211 = vector.broadcast %6 : vector<1x128xf32> to vector<2x128xf32>
    %212 = arith.addf %210, %211 : vector<2x128xf32>
    %213 = arith.negf %212 : vector<2x128xf32>
    %214 = math.exp %213 : vector<2x128xf32>
    %cst_49 = arith.constant 1.000000e+00 : f32
    %215 = vector.broadcast %cst_49 : f32 to vector<2x128xf32>
    %216 = arith.addf %215, %214 : vector<2x128xf32>
    %217 = arith.divf %215, %216 : vector<2x128xf32>
    %218 = math.tanh %212 : vector<2x128xf32>
    %219 = vector.extract_strided_slice %217 {offsets = [0, 0], sizes = [2, 32], strides = [1, 1]} : vector<2x128xf32> to vector<2x32xf32>
    %220 = vector.extract_strided_slice %217 {offsets = [0, 32], sizes = [2, 32], strides = [1, 1]} : vector<2x128xf32> to vector<2x32xf32>
    %221 = vector.extract_strided_slice %218 {offsets = [0, 64], sizes = [2, 32], strides = [1, 1]} : vector<2x128xf32> to vector<2x32xf32>
    %222 = vector.extract_strided_slice %217 {offsets = [0, 96], sizes = [2, 32], strides = [1, 1]} : vector<2x128xf32> to vector<2x32xf32>
    %223 = arith.mulf %220, %202 : vector<2x32xf32>
    %224 = arith.mulf %219, %221 : vector<2x32xf32>
    %225 = arith.addf %223, %224 : vector<2x32xf32>
    %226 = math.tanh %225 : vector<2x32xf32>
    %227 = arith.mulf %222, %226 : vector<2x32xf32>
    %c1 = arith.constant 1 : index
    %c0_50 = arith.constant 0 : index
    %c0_51 = arith.constant 0 : index
    %228 = vector.load %arg22[%c1, %c0_50, %c0_51] : memref<8x2x32xf32, #tpu.memory_space<vmem>>, vector<1x2x32xf32>
    %229 = vector.shape_cast %228 : vector<1x2x32xf32> to vector<2x32xf32>
    %230 = vector.shape_cast %227 : vector<2x32xf32> to vector<1x2x32xf32>
    tpu.vector_store %arg22[%c1, %c0_50, %c0_51], %230 {strides = array<i32>} : memref<8x2x32xf32, #tpu.memory_space<vmem>>, vector<1x2x32xf32>,
    %cst_52 = arith.constant dense<0.000000e+00> : vector<2x128xf32>
    %231 = tpu.matmul %74, %4, %cst_52 {dimension_numbers = #tpu.dot_dimension_numbers<[1], [0], [0], [1], [0, 0, 1, 1], [], []>} : vector<2x32xf32>, vector<32x128xf32>, vector<2x128xf32> -> vector<2x128xf32>
    %cst_53 = arith.constant dense<0.000000e+00> : vector<2x128xf32>
    %232 = tpu.matmul %227, %5, %cst_53 {dimension_numbers = #tpu.dot_dimension_numbers<[1], [0], [0], [1], [0, 0, 1, 1], [], []>} : vector<2x32xf32>, vector<32x128xf32>, vector<2x128xf32> -> vector<2x128xf32>
    %233 = arith.addf %231, %232 : vector<2x128xf32>
    %234 = vector.broadcast %6 : vector<1x128xf32> to vector<2x128xf32>
    %235 = arith.addf %233, %234 : vector<2x128xf32>
    %236 = arith.negf %235 : vector<2x128xf32>
    %237 = math.exp %236 : vector<2x128xf32>
    %cst_54 = arith.constant 1.000000e+00 : f32
    %238 = vector.broadcast %cst_54 : f32 to vector<2x128xf32>
    %239 = arith.addf %238, %237 : vector<2x128xf32>
    %240 = arith.divf %238, %239 : vector<2x128xf32>
    %241 = math.tanh %235 : vector<2x128xf32>
    %242 = vector.extract_strided_slice %240 {offsets = [0, 0], sizes = [2, 32], strides = [1, 1]} : vector<2x128xf32> to vector<2x32xf32>
    %243 = vector.extract_strided_slice %240 {offsets = [0, 32], sizes = [2, 32], strides = [1, 1]} : vector<2x128xf32> to vector<2x32xf32>
    %244 = vector.extract_strided_slice %241 {offsets = [0, 64], sizes = [2, 32], strides = [1, 1]} : vector<2x128xf32> to vector<2x32xf32>
    %245 = vector.extract_strided_slice %240 {offsets = [0, 96], sizes = [2, 32], strides = [1, 1]} : vector<2x128xf32> to vector<2x32xf32>
    %246 = arith.mulf %243, %225 : vector<2x32xf32>
    %247 = arith.mulf %242, %244 : vector<2x32xf32>
    %248 = arith.addf %246, %247 : vector<2x32xf32>
    %249 = math.tanh %248 : vector<2x32xf32>
    %250 = arith.mulf %245, %249 : vector<2x32xf32>
    %c2 = arith.constant 2 : index
    %c0_55 = arith.constant 0 : index
    %c0_56 = arith.constant 0 : index
    %251 = vector.load %arg22[%c2, %c0_55, %c0_56] : memref<8x2x32xf32, #tpu.memory_space<vmem>>, vector<1x2x32xf32>
    %252 = vector.shape_cast %251 : vector<1x2x32xf32> to vector<2x32xf32>
    %253 = vector.shape_cast %250 : vector<2x32xf32> to vector<1x2x32xf32>
    tpu.vector_store %arg22[%c2, %c0_55, %c0_56], %253 {strides = array<i32>} : memref<8x2x32xf32, #tpu.memory_space<vmem>>, vector<1x2x32xf32>,
    %cst_57 = arith.constant dense<0.000000e+00> : vector<2x128xf32>
    %254 = tpu.matmul %96, %4, %cst_57 {dimension_numbers = #tpu.dot_dimension_numbers<[1], [0], [0], [1], [0, 0, 1, 1], [], []>} : vector<2x32xf32>, vector<32x128xf32>, vector<2x128xf32> -> vector<2x128xf32>
    %cst_58 = arith.constant dense<0.000000e+00> : vector<2x128xf32>
    %255 = tpu.matmul %250, %5, %cst_58 {dimension_numbers = #tpu.dot_dimension_numbers<[1], [0], [0], [1], [0, 0, 1, 1], [], []>} : vector<2x32xf32>, vector<32x128xf32>, vector<2x128xf32> -> vector<2x128xf32>
    %256 = arith.addf %254, %255 : vector<2x128xf32>
    %257 = vector.broadcast %6 : vector<1x128xf32> to vector<2x128xf32>
    %258 = arith.addf %256, %257 : vector<2x128xf32>
    %259 = arith.negf %258 : vector<2x128xf32>
    %260 = math.exp %259 : vector<2x128xf32>
    %cst_59 = arith.constant 1.000000e+00 : f32
    %261 = vector.broadcast %cst_59 : f32 to vector<2x128xf32>
    %262 = arith.addf %261, %260 : vector<2x128xf32>
    %263 = arith.divf %261, %262 : vector<2x128xf32>
    %264 = math.tanh %258 : vector<2x128xf32>
    %265 = vector.extract_strided_slice %263 {offsets = [0, 0], sizes = [2, 32], strides = [1, 1]} : vector<2x128xf32> to vector<2x32xf32>
    %266 = vector.extract_strided_slice %263 {offsets = [0, 32], sizes = [2, 32], strides = [1, 1]} : vector<2x128xf32> to vector<2x32xf32>
    %267 = vector.extract_strided_slice %264 {offsets = [0, 64], sizes = [2, 32], strides = [1, 1]} : vector<2x128xf32> to vector<2x32xf32>
    %268 = vector.extract_strided_slice %263 {offsets = [0, 96], sizes = [2, 32], strides = [1, 1]} : vector<2x128xf32> to vector<2x32xf32>
    %269 = arith.mulf %266, %248 : vector<2x32xf32>
    %270 = arith.mulf %265, %267 : vector<2x32xf32>
    %271 = arith.addf %269, %270 : vector<2x32xf32>
    %272 = math.tanh %271 : vector<2x32xf32>
    %273 = arith.mulf %268, %272 : vector<2x32xf32>
    %c3 = arith.constant 3 : index
    %c0_60 = arith.constant 0 : index
    %c0_61 = arith.constant 0 : index
    %274 = vector.load %arg22[%c3, %c0_60, %c0_61] : memref<8x2x32xf32, #tpu.memory_space<vmem>>, vector<1x2x32xf32>
    %275 = vector.shape_cast %274 : vector<1x2x32xf32> to vector<2x32xf32>
    %276 = vector.shape_cast %273 : vector<2x32xf32> to vector<1x2x32xf32>
    tpu.vector_store %arg22[%c3, %c0_60, %c0_61], %276 {strides = array<i32>} : memref<8x2x32xf32, #tpu.memory_space<vmem>>, vector<1x2x32xf32>,
    %cst_62 = arith.constant dense<0.000000e+00> : vector<2x128xf32>
    %277 = tpu.matmul %118, %4, %cst_62 {dimension_numbers = #tpu.dot_dimension_numbers<[1], [0], [0], [1], [0, 0, 1, 1], [], []>} : vector<2x32xf32>, vector<32x128xf32>, vector<2x128xf32> -> vector<2x128xf32>
    %cst_63 = arith.constant dense<0.000000e+00> : vector<2x128xf32>
    %278 = tpu.matmul %273, %5, %cst_63 {dimension_numbers = #tpu.dot_dimension_numbers<[1], [0], [0], [1], [0, 0, 1, 1], [], []>} : vector<2x32xf32>, vector<32x128xf32>, vector<2x128xf32> -> vector<2x128xf32>
    %279 = arith.addf %277, %278 : vector<2x128xf32>
    %280 = vector.broadcast %6 : vector<1x128xf32> to vector<2x128xf32>
    %281 = arith.addf %279, %280 : vector<2x128xf32>
    %282 = arith.negf %281 : vector<2x128xf32>
    %283 = math.exp %282 : vector<2x128xf32>
    %cst_64 = arith.constant 1.000000e+00 : f32
    %284 = vector.broadcast %cst_64 : f32 to vector<2x128xf32>
    %285 = arith.addf %284, %283 : vector<2x128xf32>
    %286 = arith.divf %284, %285 : vector<2x128xf32>
    %287 = math.tanh %281 : vector<2x128xf32>
    %288 = vector.extract_strided_slice %286 {offsets = [0, 0], sizes = [2, 32], strides = [1, 1]} : vector<2x128xf32> to vector<2x32xf32>
    %289 = vector.extract_strided_slice %286 {offsets = [0, 32], sizes = [2, 32], strides = [1, 1]} : vector<2x128xf32> to vector<2x32xf32>
    %290 = vector.extract_strided_slice %287 {offsets = [0, 64], sizes = [2, 32], strides = [1, 1]} : vector<2x128xf32> to vector<2x32xf32>
    %291 = vector.extract_strided_slice %286 {offsets = [0, 96], sizes = [2, 32], strides = [1, 1]} : vector<2x128xf32> to vector<2x32xf32>
    %292 = arith.mulf %289, %271 : vector<2x32xf32>
    %293 = arith.mulf %288, %290 : vector<2x32xf32>
    %294 = arith.addf %292, %293 : vector<2x32xf32>
    %295 = math.tanh %294 : vector<2x32xf32>
    %296 = arith.mulf %291, %295 : vector<2x32xf32>
    %c4 = arith.constant 4 : index
    %c0_65 = arith.constant 0 : index
    %c0_66 = arith.constant 0 : index
    %297 = vector.load %arg22[%c4, %c0_65, %c0_66] : memref<8x2x32xf32, #tpu.memory_space<vmem>>, vector<1x2x32xf32>
    %298 = vector.shape_cast %297 : vector<1x2x32xf32> to vector<2x32xf32>
    %299 = vector.shape_cast %296 : vector<2x32xf32> to vector<1x2x32xf32>
    tpu.vector_store %arg22[%c4, %c0_65, %c0_66], %299 {strides = array<i32>} : memref<8x2x32xf32, #tpu.memory_space<vmem>>, vector<1x2x32xf32>,
    %cst_67 = arith.constant dense<0.000000e+00> : vector<2x128xf32>
    %300 = tpu.matmul %140, %4, %cst_67 {dimension_numbers = #tpu.dot_dimension_numbers<[1], [0], [0], [1], [0, 0, 1, 1], [], []>} : vector<2x32xf32>, vector<32x128xf32>, vector<2x128xf32> -> vector<2x128xf32>
    %cst_68 = arith.constant dense<0.000000e+00> : vector<2x128xf32>
    %301 = tpu.matmul %296, %5, %cst_68 {dimension_numbers = #tpu.dot_dimension_numbers<[1], [0], [0], [1], [0, 0, 1, 1], [], []>} : vector<2x32xf32>, vector<32x128xf32>, vector<2x128xf32> -> vector<2x128xf32>
    %302 = arith.addf %300, %301 : vector<2x128xf32>
    %303 = vector.broadcast %6 : vector<1x128xf32> to vector<2x128xf32>
    %304 = arith.addf %302, %303 : vector<2x128xf32>
    %305 = arith.negf %304 : vector<2x128xf32>
    %306 = math.exp %305 : vector<2x128xf32>
    %cst_69 = arith.constant 1.000000e+00 : f32
    %307 = vector.broadcast %cst_69 : f32 to vector<2x128xf32>
    %308 = arith.addf %307, %306 : vector<2x128xf32>
    %309 = arith.divf %307, %308 : vector<2x128xf32>
    %310 = math.tanh %304 : vector<2x128xf32>
    %311 = vector.extract_strided_slice %309 {offsets = [0, 0], sizes = [2, 32], strides = [1, 1]} : vector<2x128xf32> to vector<2x32xf32>
    %312 = vector.extract_strided_slice %309 {offsets = [0, 32], sizes = [2, 32], strides = [1, 1]} : vector<2x128xf32> to vector<2x32xf32>
    %313 = vector.extract_strided_slice %310 {offsets = [0, 64], sizes = [2, 32], strides = [1, 1]} : vector<2x128xf32> to vector<2x32xf32>
    %314 = vector.extract_strided_slice %309 {offsets = [0, 96], sizes = [2, 32], strides = [1, 1]} : vector<2x128xf32> to vector<2x32xf32>
    %315 = arith.mulf %312, %294 : vector<2x32xf32>
    %316 = arith.mulf %311, %313 : vector<2x32xf32>
    %317 = arith.addf %315, %316 : vector<2x32xf32>
    %318 = math.tanh %317 : vector<2x32xf32>
    %319 = arith.mulf %314, %318 : vector<2x32xf32>
    %c5 = arith.constant 5 : index
    %c0_70 = arith.constant 0 : index
    %c0_71 = arith.constant 0 : index
    %320 = vector.load %arg22[%c5, %c0_70, %c0_71] : memref<8x2x32xf32, #tpu.memory_space<vmem>>, vector<1x2x32xf32>
    %321 = vector.shape_cast %320 : vector<1x2x32xf32> to vector<2x32xf32>
    %322 = vector.shape_cast %319 : vector<2x32xf32> to vector<1x2x32xf32>
    tpu.vector_store %arg22[%c5, %c0_70, %c0_71], %322 {strides = array<i32>} : memref<8x2x32xf32, #tpu.memory_space<vmem>>, vector<1x2x32xf32>,
    %cst_72 = arith.constant dense<0.000000e+00> : vector<2x128xf32>
    %323 = tpu.matmul %162, %4, %cst_72 {dimension_numbers = #tpu.dot_dimension_numbers<[1], [0], [0], [1], [0, 0, 1, 1], [], []>} : vector<2x32xf32>, vector<32x128xf32>, vector<2x128xf32> -> vector<2x128xf32>
    %cst_73 = arith.constant dense<0.000000e+00> : vector<2x128xf32>
    %324 = tpu.matmul %319, %5, %cst_73 {dimension_numbers = #tpu.dot_dimension_numbers<[1], [0], [0], [1], [0, 0, 1, 1], [], []>} : vector<2x32xf32>, vector<32x128xf32>, vector<2x128xf32> -> vector<2x128xf32>
    %325 = arith.addf %323, %324 : vector<2x128xf32>
    %326 = vector.broadcast %6 : vector<1x128xf32> to vector<2x128xf32>
    %327 = arith.addf %325, %326 : vector<2x128xf32>
    %328 = arith.negf %327 : vector<2x128xf32>
    %329 = math.exp %328 : vector<2x128xf32>
    %cst_74 = arith.constant 1.000000e+00 : f32
    %330 = vector.broadcast %cst_74 : f32 to vector<2x128xf32>
    %331 = arith.addf %330, %329 : vector<2x128xf32>
    %332 = arith.divf %330, %331 : vector<2x128xf32>
    %333 = math.tanh %327 : vector<2x128xf32>
    %334 = vector.extract_strided_slice %332 {offsets = [0, 0], sizes = [2, 32], strides = [1, 1]} : vector<2x128xf32> to vector<2x32xf32>
    %335 = vector.extract_strided_slice %332 {offsets = [0, 32], sizes = [2, 32], strides = [1, 1]} : vector<2x128xf32> to vector<2x32xf32>
    %336 = vector.extract_strided_slice %333 {offsets = [0, 64], sizes = [2, 32], strides = [1, 1]} : vector<2x128xf32> to vector<2x32xf32>
    %337 = vector.extract_strided_slice %332 {offsets = [0, 96], sizes = [2, 32], strides = [1, 1]} : vector<2x128xf32> to vector<2x32xf32>
    %338 = arith.mulf %335, %317 : vector<2x32xf32>
    %339 = arith.mulf %334, %336 : vector<2x32xf32>
    %340 = arith.addf %338, %339 : vector<2x32xf32>
    %341 = math.tanh %340 : vector<2x32xf32>
    %342 = arith.mulf %337, %341 : vector<2x32xf32>
    %c6 = arith.constant 6 : index
    %c0_75 = arith.constant 0 : index
    %c0_76 = arith.constant 0 : index
    %343 = vector.load %arg22[%c6, %c0_75, %c0_76] : memref<8x2x32xf32, #tpu.memory_space<vmem>>, vector<1x2x32xf32>
    %344 = vector.shape_cast %343 : vector<1x2x32xf32> to vector<2x32xf32>
    %345 = vector.shape_cast %342 : vector<2x32xf32> to vector<1x2x32xf32>
    tpu.vector_store %arg22[%c6, %c0_75, %c0_76], %345 {strides = array<i32>} : memref<8x2x32xf32, #tpu.memory_space<vmem>>, vector<1x2x32xf32>,
    %cst_77 = arith.constant dense<0.000000e+00> : vector<2x128xf32>
    %346 = tpu.matmul %184, %4, %cst_77 {dimension_numbers = #tpu.dot_dimension_numbers<[1], [0], [0], [1], [0, 0, 1, 1], [], []>} : vector<2x32xf32>, vector<32x128xf32>, vector<2x128xf32> -> vector<2x128xf32>
    %cst_78 = arith.constant dense<0.000000e+00> : vector<2x128xf32>
    %347 = tpu.matmul %342, %5, %cst_78 {dimension_numbers = #tpu.dot_dimension_numbers<[1], [0], [0], [1], [0, 0, 1, 1], [], []>} : vector<2x32xf32>, vector<32x128xf32>, vector<2x128xf32> -> vector<2x128xf32>
    %348 = arith.addf %346, %347 : vector<2x128xf32>
    %349 = vector.broadcast %6 : vector<1x128xf32> to vector<2x128xf32>
    %350 = arith.addf %348, %349 : vector<2x128xf32>
    %351 = arith.negf %350 : vector<2x128xf32>
    %352 = math.exp %351 : vector<2x128xf32>
    %cst_79 = arith.constant 1.000000e+00 : f32
    %353 = vector.broadcast %cst_79 : f32 to vector<2x128xf32>
    %354 = arith.addf %353, %352 : vector<2x128xf32>
    %355 = arith.divf %353, %354 : vector<2x128xf32>
    %356 = math.tanh %350 : vector<2x128xf32>
    %357 = vector.extract_strided_slice %355 {offsets = [0, 0], sizes = [2, 32], strides = [1, 1]} : vector<2x128xf32> to vector<2x32xf32>
    %358 = vector.extract_strided_slice %355 {offsets = [0, 32], sizes = [2, 32], strides = [1, 1]} : vector<2x128xf32> to vector<2x32xf32>
    %359 = vector.extract_strided_slice %356 {offsets = [0, 64], sizes = [2, 32], strides = [1, 1]} : vector<2x128xf32> to vector<2x32xf32>
    %360 = vector.extract_strided_slice %355 {offsets = [0, 96], sizes = [2, 32], strides = [1, 1]} : vector<2x128xf32> to vector<2x32xf32>
    %361 = arith.mulf %358, %340 : vector<2x32xf32>
    %362 = arith.mulf %357, %359 : vector<2x32xf32>
    %363 = arith.addf %361, %362 : vector<2x32xf32>
    %364 = math.tanh %363 : vector<2x32xf32>
    %365 = arith.mulf %360, %364 : vector<2x32xf32>
    %c7 = arith.constant 7 : index
    %c0_80 = arith.constant 0 : index
    %c0_81 = arith.constant 0 : index
    %366 = vector.load %arg22[%c7, %c0_80, %c0_81] : memref<8x2x32xf32, #tpu.memory_space<vmem>>, vector<1x2x32xf32>
    %367 = vector.shape_cast %366 : vector<1x2x32xf32> to vector<2x32xf32>
    %368 = vector.shape_cast %365 : vector<2x32xf32> to vector<1x2x32xf32>
    tpu.vector_store %arg22[%c7, %c0_80, %c0_81], %368 {strides = array<i32>} : memref<8x2x32xf32, #tpu.memory_space<vmem>>, vector<1x2x32xf32>,
    %c0_82 = arith.constant 0 : index
    %c0_83 = arith.constant 0 : index
    %c0_84 = arith.constant 0 : index
    %369 = vector.load %arg22[%c0_82, %c0_83, %c0_84] : memref<8x2x32xf32, #tpu.memory_space<vmem>>, vector<8x2x32xf32>
    %c0_85 = arith.constant 0 : index
    %c0_86 = arith.constant 0 : index
    %370 = vector.load %arg9[%c0_85, %c0_86] : memref<32x96xf32, #tpu.memory_space<vmem>>, vector<32x96xf32>
    %c0_87 = arith.constant 0 : index
    %c0_88 = arith.constant 0 : index
    %371 = vector.load %arg10[%c0_87, %c0_88] : memref<1x96xf32, #tpu.memory_space<vmem>>, vector<1x96xf32>
    %c0_89 = arith.constant 0 : index
    %c0_90 = arith.constant 0 : index
    %372 = vector.load %arg11[%c0_89, %c0_90] : memref<32x32xf32, #tpu.memory_space<vmem>>, vector<32x32xf32>
    %c0_91 = arith.constant 0 : index
    %c0_92 = arith.constant 0 : index
    %373 = vector.load %arg12[%c0_91, %c0_92] : memref<1x32xf32, #tpu.memory_space<vmem>>, vector<1x32xf32>
    %c0_93 = arith.constant 0 : index
    %c0_94 = arith.constant 0 : index
    %374 = vector.load %arg13[%c0_93, %c0_94] : memref<32x16xf32, #tpu.memory_space<vmem>>, vector<32x16xf32>
    %c0_95 = arith.constant 0 : index
    %c0_96 = arith.constant 0 : index
    %375 = vector.load %arg14[%c0_95, %c0_96] : memref<1x16xf32, #tpu.memory_space<vmem>>, vector<1x16xf32>
    %376 = vector.extract_strided_slice %369 {offsets = [0, 0, 0], sizes = [8, 1, 32], strides = [1, 1, 1]} : vector<8x2x32xf32> to vector<8x1x32xf32>
    %377 = vector.shape_cast %376 : vector<8x1x32xf32> to vector<8x32xf32>
    %cst_97 = arith.constant dense<0.000000e+00> : vector<8x96xf32>
    %378 = tpu.matmul %377, %370, %cst_97 {dimension_numbers = #tpu.dot_dimension_numbers<[1], [0], [0], [1], [0, 0, 1, 1], [], []>} : vector<8x32xf32>, vector<32x96xf32>, vector<8x96xf32> -> vector<8x96xf32>
    %379 = vector.broadcast %371 : vector<1x96xf32> to vector<8x96xf32>
    %380 = arith.addf %378, %379 : vector<8x96xf32>
    %cst_98 = arith.constant 0.000000e+00 : f32
    %381 = vector.broadcast %cst_98 : f32 to vector<8x32xf32>
    %382 = vector.broadcast %373 : vector<1x32xf32> to vector<8x32xf32>
    %383 = arith.addf %381, %382 : vector<8x32xf32>
    %384 = vector.extract_strided_slice %380 {offsets = [0, 0], sizes = [8, 8], strides = [1, 1]} : vector<8x96xf32> to vector<8x8xf32>
    %385 = vector.extract_strided_slice %380 {offsets = [0, 32], sizes = [8, 8], strides = [1, 1]} : vector<8x96xf32> to vector<8x8xf32>
    %386 = vector.extract_strided_slice %380 {offsets = [0, 64], sizes = [8, 8], strides = [1, 1]} : vector<8x96xf32> to vector<8x8xf32>
    %387 = tpu.transpose %385, [1, 0] : vector<8x8xf32> -> vector<8x8xf32>
    %cst_99 = arith.constant dense<0.000000e+00> : vector<8x8xf32>
    %388 = tpu.matmul %384, %387, %cst_99 {dimension_numbers = #tpu.dot_dimension_numbers<[1], [0], [0], [1], [0, 0, 1, 1], [], []>} : vector<8x8xf32>, vector<8x8xf32>, vector<8x8xf32> -> vector<8x8xf32>
    %cst_100 = arith.constant 0.353553385 : f32
    %389 = vector.broadcast %cst_100 : f32 to vector<8x8xf32>
    %390 = arith.mulf %388, %389 : vector<8x8xf32>
    %cst_101 = arith.constant dense<0xFF800000> : vector<8xf32>
    %391 = vector.multi_reduction <maximumf>, %390, %cst_101 [1] : vector<8x8xf32> to vector<8xf32>
    %392 = vector.shape_cast %391 : vector<8xf32> to vector<8x1xf32>
    %393 = vector.broadcast %392 : vector<8x1xf32> to vector<8x8xf32>
    %394 = arith.subf %390, %393 : vector<8x8xf32>
    %395 = math.exp %394 : vector<8x8xf32>
    %cst_102 = arith.constant dense<0.000000e+00> : vector<8xf32>
    %396 = vector.multi_reduction <add>, %395, %cst_102 [1] : vector<8x8xf32> to vector<8xf32>
    %397 = vector.shape_cast %396 : vector<8xf32> to vector<8x1xf32>
    %398 = tpu.reciprocal %397 {approx = true} : vector<8x1xf32> -> vector<8x1xf32>
    %399 = vector.broadcast %398 : vector<8x1xf32> to vector<8x8xf32>
    %400 = arith.mulf %395, %399 : vector<8x8xf32>
    %cst_103 = arith.constant dense<0.000000e+00> : vector<8x8xf32>
    %401 = tpu.matmul %400, %386, %cst_103 {dimension_numbers = #tpu.dot_dimension_numbers<[1], [0], [0], [1], [0, 0, 1, 1], [], []>} : vector<8x8xf32>, vector<8x8xf32>, vector<8x8xf32> -> vector<8x8xf32>
    %402 = vector.extract_strided_slice %372 {offsets = [0, 0], sizes = [8, 32], strides = [1, 1]} : vector<32x32xf32> to vector<8x32xf32>
    %cst_104 = arith.constant dense<0.000000e+00> : vector<8x32xf32>
    %403 = tpu.matmul %401, %402, %cst_104 {dimension_numbers = #tpu.dot_dimension_numbers<[1], [0], [0], [1], [0, 0, 1, 1], [], []>} : vector<8x8xf32>, vector<8x32xf32>, vector<8x32xf32> -> vector<8x32xf32>
    %404 = arith.addf %383, %403 : vector<8x32xf32>
    %405 = vector.extract_strided_slice %380 {offsets = [0, 8], sizes = [8, 8], strides = [1, 1]} : vector<8x96xf32> to vector<8x8xf32>
    %406 = vector.extract_strided_slice %380 {offsets = [0, 40], sizes = [8, 8], strides = [1, 1]} : vector<8x96xf32> to vector<8x8xf32>
    %407 = vector.extract_strided_slice %380 {offsets = [0, 72], sizes = [8, 8], strides = [1, 1]} : vector<8x96xf32> to vector<8x8xf32>
    %408 = tpu.transpose %406, [1, 0] : vector<8x8xf32> -> vector<8x8xf32>
    %cst_105 = arith.constant dense<0.000000e+00> : vector<8x8xf32>
    %409 = tpu.matmul %405, %408, %cst_105 {dimension_numbers = #tpu.dot_dimension_numbers<[1], [0], [0], [1], [0, 0, 1, 1], [], []>} : vector<8x8xf32>, vector<8x8xf32>, vector<8x8xf32> -> vector<8x8xf32>
    %cst_106 = arith.constant 0.353553385 : f32
    %410 = vector.broadcast %cst_106 : f32 to vector<8x8xf32>
    %411 = arith.mulf %409, %410 : vector<8x8xf32>
    %cst_107 = arith.constant dense<0xFF800000> : vector<8xf32>
    %412 = vector.multi_reduction <maximumf>, %411, %cst_107 [1] : vector<8x8xf32> to vector<8xf32>
    %413 = vector.shape_cast %412 : vector<8xf32> to vector<8x1xf32>
    %414 = vector.broadcast %413 : vector<8x1xf32> to vector<8x8xf32>
    %415 = arith.subf %411, %414 : vector<8x8xf32>
    %416 = math.exp %415 : vector<8x8xf32>
    %cst_108 = arith.constant dense<0.000000e+00> : vector<8xf32>
    %417 = vector.multi_reduction <add>, %416, %cst_108 [1] : vector<8x8xf32> to vector<8xf32>
    %418 = vector.shape_cast %417 : vector<8xf32> to vector<8x1xf32>
    %419 = tpu.reciprocal %418 {approx = true} : vector<8x1xf32> -> vector<8x1xf32>
    %420 = vector.broadcast %419 : vector<8x1xf32> to vector<8x8xf32>
    %421 = arith.mulf %416, %420 : vector<8x8xf32>
    %cst_109 = arith.constant dense<0.000000e+00> : vector<8x8xf32>
    %422 = tpu.matmul %421, %407, %cst_109 {dimension_numbers = #tpu.dot_dimension_numbers<[1], [0], [0], [1], [0, 0, 1, 1], [], []>} : vector<8x8xf32>, vector<8x8xf32>, vector<8x8xf32> -> vector<8x8xf32>
    %423 = vector.extract_strided_slice %372 {offsets = [8, 0], sizes = [8, 32], strides = [1, 1]} : vector<32x32xf32> to vector<8x32xf32>
    %cst_110 = arith.constant dense<0.000000e+00> : vector<8x32xf32>
    %424 = tpu.matmul %422, %423, %cst_110 {dimension_numbers = #tpu.dot_dimension_numbers<[1], [0], [0], [1], [0, 0, 1, 1], [], []>} : vector<8x8xf32>, vector<8x32xf32>, vector<8x32xf32> -> vector<8x32xf32>
    %425 = arith.addf %404, %424 : vector<8x32xf32>
    %426 = vector.extract_strided_slice %380 {offsets = [0, 16], sizes = [8, 8], strides = [1, 1]} : vector<8x96xf32> to vector<8x8xf32>
    %427 = vector.extract_strided_slice %380 {offsets = [0, 48], sizes = [8, 8], strides = [1, 1]} : vector<8x96xf32> to vector<8x8xf32>
    %428 = vector.extract_strided_slice %380 {offsets = [0, 80], sizes = [8, 8], strides = [1, 1]} : vector<8x96xf32> to vector<8x8xf32>
    %429 = tpu.transpose %427, [1, 0] : vector<8x8xf32> -> vector<8x8xf32>
    %cst_111 = arith.constant dense<0.000000e+00> : vector<8x8xf32>
    %430 = tpu.matmul %426, %429, %cst_111 {dimension_numbers = #tpu.dot_dimension_numbers<[1], [0], [0], [1], [0, 0, 1, 1], [], []>} : vector<8x8xf32>, vector<8x8xf32>, vector<8x8xf32> -> vector<8x8xf32>
    %cst_112 = arith.constant 0.353553385 : f32
    %431 = vector.broadcast %cst_112 : f32 to vector<8x8xf32>
    %432 = arith.mulf %430, %431 : vector<8x8xf32>
    %cst_113 = arith.constant dense<0xFF800000> : vector<8xf32>
    %433 = vector.multi_reduction <maximumf>, %432, %cst_113 [1] : vector<8x8xf32> to vector<8xf32>
    %434 = vector.shape_cast %433 : vector<8xf32> to vector<8x1xf32>
    %435 = vector.broadcast %434 : vector<8x1xf32> to vector<8x8xf32>
    %436 = arith.subf %432, %435 : vector<8x8xf32>
    %437 = math.exp %436 : vector<8x8xf32>
    %cst_114 = arith.constant dense<0.000000e+00> : vector<8xf32>
    %438 = vector.multi_reduction <add>, %437, %cst_114 [1] : vector<8x8xf32> to vector<8xf32>
    %439 = vector.shape_cast %438 : vector<8xf32> to vector<8x1xf32>
    %440 = tpu.reciprocal %439 {approx = true} : vector<8x1xf32> -> vector<8x1xf32>
    %441 = vector.broadcast %440 : vector<8x1xf32> to vector<8x8xf32>
    %442 = arith.mulf %437, %441 : vector<8x8xf32>
    %cst_115 = arith.constant dense<0.000000e+00> : vector<8x8xf32>
    %443 = tpu.matmul %442, %428, %cst_115 {dimension_numbers = #tpu.dot_dimension_numbers<[1], [0], [0], [1], [0, 0, 1, 1], [], []>} : vector<8x8xf32>, vector<8x8xf32>, vector<8x8xf32> -> vector<8x8xf32>
    %444 = vector.extract_strided_slice %372 {offsets = [16, 0], sizes = [8, 32], strides = [1, 1]} : vector<32x32xf32> to vector<8x32xf32>
    %cst_116 = arith.constant dense<0.000000e+00> : vector<8x32xf32>
    %445 = tpu.matmul %443, %444, %cst_116 {dimension_numbers = #tpu.dot_dimension_numbers<[1], [0], [0], [1], [0, 0, 1, 1], [], []>} : vector<8x8xf32>, vector<8x32xf32>, vector<8x32xf32> -> vector<8x32xf32>
    %446 = arith.addf %425, %445 : vector<8x32xf32>
    %447 = vector.extract_strided_slice %380 {offsets = [0, 24], sizes = [8, 8], strides = [1, 1]} : vector<8x96xf32> to vector<8x8xf32>
    %448 = vector.extract_strided_slice %380 {offsets = [0, 56], sizes = [8, 8], strides = [1, 1]} : vector<8x96xf32> to vector<8x8xf32>
    %449 = vector.extract_strided_slice %380 {offsets = [0, 88], sizes = [8, 8], strides = [1, 1]} : vector<8x96xf32> to vector<8x8xf32>
    %450 = tpu.transpose %448, [1, 0] : vector<8x8xf32> -> vector<8x8xf32>
    %cst_117 = arith.constant dense<0.000000e+00> : vector<8x8xf32>
    %451 = tpu.matmul %447, %450, %cst_117 {dimension_numbers = #tpu.dot_dimension_numbers<[1], [0], [0], [1], [0, 0, 1, 1], [], []>} : vector<8x8xf32>, vector<8x8xf32>, vector<8x8xf32> -> vector<8x8xf32>
    %cst_118 = arith.constant 0.353553385 : f32
    %452 = vector.broadcast %cst_118 : f32 to vector<8x8xf32>
    %453 = arith.mulf %451, %452 : vector<8x8xf32>
    %cst_119 = arith.constant dense<0xFF800000> : vector<8xf32>
    %454 = vector.multi_reduction <maximumf>, %453, %cst_119 [1] : vector<8x8xf32> to vector<8xf32>
    %455 = vector.shape_cast %454 : vector<8xf32> to vector<8x1xf32>
    %456 = vector.broadcast %455 : vector<8x1xf32> to vector<8x8xf32>
    %457 = arith.subf %453, %456 : vector<8x8xf32>
    %458 = math.exp %457 : vector<8x8xf32>
    %cst_120 = arith.constant dense<0.000000e+00> : vector<8xf32>
    %459 = vector.multi_reduction <add>, %458, %cst_120 [1] : vector<8x8xf32> to vector<8xf32>
    %460 = vector.shape_cast %459 : vector<8xf32> to vector<8x1xf32>
    %461 = tpu.reciprocal %460 {approx = true} : vector<8x1xf32> -> vector<8x1xf32>
    %462 = vector.broadcast %461 : vector<8x1xf32> to vector<8x8xf32>
    %463 = arith.mulf %458, %462 : vector<8x8xf32>
    %cst_121 = arith.constant dense<0.000000e+00> : vector<8x8xf32>
    %464 = tpu.matmul %463, %449, %cst_121 {dimension_numbers = #tpu.dot_dimension_numbers<[1], [0], [0], [1], [0, 0, 1, 1], [], []>} : vector<8x8xf32>, vector<8x8xf32>, vector<8x8xf32> -> vector<8x8xf32>
    %465 = vector.extract_strided_slice %372 {offsets = [24, 0], sizes = [8, 32], strides = [1, 1]} : vector<32x32xf32> to vector<8x32xf32>
    %cst_122 = arith.constant dense<0.000000e+00> : vector<8x32xf32>
    %466 = tpu.matmul %464, %465, %cst_122 {dimension_numbers = #tpu.dot_dimension_numbers<[1], [0], [0], [1], [0, 0, 1, 1], [], []>} : vector<8x8xf32>, vector<8x32xf32>, vector<8x32xf32> -> vector<8x32xf32>
    %467 = arith.addf %446, %466 : vector<8x32xf32>
    %cst_123 = arith.constant dense<0.000000e+00> : vector<8x16xf32>
    %468 = tpu.matmul %467, %374, %cst_123 {dimension_numbers = #tpu.dot_dimension_numbers<[1], [0], [0], [1], [0, 0, 1, 1], [], []>} : vector<8x32xf32>, vector<32x16xf32>, vector<8x16xf32> -> vector<8x16xf32>
    %469 = vector.broadcast %375 : vector<1x16xf32> to vector<8x16xf32>
    %470 = arith.addf %468, %469 : vector<8x16xf32>
    %c0_124 = arith.constant 0 : index
    %c0_125 = arith.constant 0 : index
    %c0_126 = arith.constant 0 : index
    %471 = vector.load %arg23[%c0_124, %c0_125, %c0_126] : memref<2x8x16xf32, #tpu.memory_space<vmem>>, vector<1x8x16xf32>
    %472 = vector.shape_cast %471 : vector<1x8x16xf32> to vector<8x16xf32>
    %473 = vector.shape_cast %470 : vector<8x16xf32> to vector<1x8x16xf32>
    tpu.vector_store %arg23[%c0_124, %c0_125, %c0_126], %473 {strides = array<i32>} : memref<2x8x16xf32, #tpu.memory_space<vmem>>, vector<1x8x16xf32>,
    %474 = vector.extract_strided_slice %369 {offsets = [0, 1, 0], sizes = [8, 1, 32], strides = [1, 1, 1]} : vector<8x2x32xf32> to vector<8x1x32xf32>
    %475 = vector.shape_cast %474 : vector<8x1x32xf32> to vector<8x32xf32>
    %cst_127 = arith.constant dense<0.000000e+00> : vector<8x96xf32>
    %476 = tpu.matmul %475, %370, %cst_127 {dimension_numbers = #tpu.dot_dimension_numbers<[1], [0], [0], [1], [0, 0, 1, 1], [], []>} : vector<8x32xf32>, vector<32x96xf32>, vector<8x96xf32> -> vector<8x96xf32>
    %477 = vector.broadcast %371 : vector<1x96xf32> to vector<8x96xf32>
    %478 = arith.addf %476, %477 : vector<8x96xf32>
    %cst_128 = arith.constant 0.000000e+00 : f32
    %479 = vector.broadcast %cst_128 : f32 to vector<8x32xf32>
    %480 = vector.broadcast %373 : vector<1x32xf32> to vector<8x32xf32>
    %481 = arith.addf %479, %480 : vector<8x32xf32>
    %482 = vector.extract_strided_slice %478 {offsets = [0, 0], sizes = [8, 8], strides = [1, 1]} : vector<8x96xf32> to vector<8x8xf32>
    %483 = vector.extract_strided_slice %478 {offsets = [0, 32], sizes = [8, 8], strides = [1, 1]} : vector<8x96xf32> to vector<8x8xf32>
    %484 = vector.extract_strided_slice %478 {offsets = [0, 64], sizes = [8, 8], strides = [1, 1]} : vector<8x96xf32> to vector<8x8xf32>
    %485 = tpu.transpose %483, [1, 0] : vector<8x8xf32> -> vector<8x8xf32>
    %cst_129 = arith.constant dense<0.000000e+00> : vector<8x8xf32>
    %486 = tpu.matmul %482, %485, %cst_129 {dimension_numbers = #tpu.dot_dimension_numbers<[1], [0], [0], [1], [0, 0, 1, 1], [], []>} : vector<8x8xf32>, vector<8x8xf32>, vector<8x8xf32> -> vector<8x8xf32>
    %cst_130 = arith.constant 0.353553385 : f32
    %487 = vector.broadcast %cst_130 : f32 to vector<8x8xf32>
    %488 = arith.mulf %486, %487 : vector<8x8xf32>
    %cst_131 = arith.constant dense<0xFF800000> : vector<8xf32>
    %489 = vector.multi_reduction <maximumf>, %488, %cst_131 [1] : vector<8x8xf32> to vector<8xf32>
    %490 = vector.shape_cast %489 : vector<8xf32> to vector<8x1xf32>
    %491 = vector.broadcast %490 : vector<8x1xf32> to vector<8x8xf32>
    %492 = arith.subf %488, %491 : vector<8x8xf32>
    %493 = math.exp %492 : vector<8x8xf32>
    %cst_132 = arith.constant dense<0.000000e+00> : vector<8xf32>
    %494 = vector.multi_reduction <add>, %493, %cst_132 [1] : vector<8x8xf32> to vector<8xf32>
    %495 = vector.shape_cast %494 : vector<8xf32> to vector<8x1xf32>
    %496 = tpu.reciprocal %495 {approx = true} : vector<8x1xf32> -> vector<8x1xf32>
    %497 = vector.broadcast %496 : vector<8x1xf32> to vector<8x8xf32>
    %498 = arith.mulf %493, %497 : vector<8x8xf32>
    %cst_133 = arith.constant dense<0.000000e+00> : vector<8x8xf32>
    %499 = tpu.matmul %498, %484, %cst_133 {dimension_numbers = #tpu.dot_dimension_numbers<[1], [0], [0], [1], [0, 0, 1, 1], [], []>} : vector<8x8xf32>, vector<8x8xf32>, vector<8x8xf32> -> vector<8x8xf32>
    %500 = vector.extract_strided_slice %372 {offsets = [0, 0], sizes = [8, 32], strides = [1, 1]} : vector<32x32xf32> to vector<8x32xf32>
    %cst_134 = arith.constant dense<0.000000e+00> : vector<8x32xf32>
    %501 = tpu.matmul %499, %500, %cst_134 {dimension_numbers = #tpu.dot_dimension_numbers<[1], [0], [0], [1], [0, 0, 1, 1], [], []>} : vector<8x8xf32>, vector<8x32xf32>, vector<8x32xf32> -> vector<8x32xf32>
    %502 = arith.addf %481, %501 : vector<8x32xf32>
    %503 = vector.extract_strided_slice %478 {offsets = [0, 8], sizes = [8, 8], strides = [1, 1]} : vector<8x96xf32> to vector<8x8xf32>
    %504 = vector.extract_strided_slice %478 {offsets = [0, 40], sizes = [8, 8], strides = [1, 1]} : vector<8x96xf32> to vector<8x8xf32>
    %505 = vector.extract_strided_slice %478 {offsets = [0, 72], sizes = [8, 8], strides = [1, 1]} : vector<8x96xf32> to vector<8x8xf32>
    %506 = tpu.transpose %504, [1, 0] : vector<8x8xf32> -> vector<8x8xf32>
    %cst_135 = arith.constant dense<0.000000e+00> : vector<8x8xf32>
    %507 = tpu.matmul %503, %506, %cst_135 {dimension_numbers = #tpu.dot_dimension_numbers<[1], [0], [0], [1], [0, 0, 1, 1], [], []>} : vector<8x8xf32>, vector<8x8xf32>, vector<8x8xf32> -> vector<8x8xf32>
    %cst_136 = arith.constant 0.353553385 : f32
    %508 = vector.broadcast %cst_136 : f32 to vector<8x8xf32>
    %509 = arith.mulf %507, %508 : vector<8x8xf32>
    %cst_137 = arith.constant dense<0xFF800000> : vector<8xf32>
    %510 = vector.multi_reduction <maximumf>, %509, %cst_137 [1] : vector<8x8xf32> to vector<8xf32>
    %511 = vector.shape_cast %510 : vector<8xf32> to vector<8x1xf32>
    %512 = vector.broadcast %511 : vector<8x1xf32> to vector<8x8xf32>
    %513 = arith.subf %509, %512 : vector<8x8xf32>
    %514 = math.exp %513 : vector<8x8xf32>
    %cst_138 = arith.constant dense<0.000000e+00> : vector<8xf32>
    %515 = vector.multi_reduction <add>, %514, %cst_138 [1] : vector<8x8xf32> to vector<8xf32>
    %516 = vector.shape_cast %515 : vector<8xf32> to vector<8x1xf32>
    %517 = tpu.reciprocal %516 {approx = true} : vector<8x1xf32> -> vector<8x1xf32>
    %518 = vector.broadcast %517 : vector<8x1xf32> to vector<8x8xf32>
    %519 = arith.mulf %514, %518 : vector<8x8xf32>
    %cst_139 = arith.constant dense<0.000000e+00> : vector<8x8xf32>
    %520 = tpu.matmul %519, %505, %cst_139 {dimension_numbers = #tpu.dot_dimension_numbers<[1], [0], [0], [1], [0, 0, 1, 1], [], []>} : vector<8x8xf32>, vector<8x8xf32>, vector<8x8xf32> -> vector<8x8xf32>
    %521 = vector.extract_strided_slice %372 {offsets = [8, 0], sizes = [8, 32], strides = [1, 1]} : vector<32x32xf32> to vector<8x32xf32>
    %cst_140 = arith.constant dense<0.000000e+00> : vector<8x32xf32>
    %522 = tpu.matmul %520, %521, %cst_140 {dimension_numbers = #tpu.dot_dimension_numbers<[1], [0], [0], [1], [0, 0, 1, 1], [], []>} : vector<8x8xf32>, vector<8x32xf32>, vector<8x32xf32> -> vector<8x32xf32>
    %523 = arith.addf %502, %522 : vector<8x32xf32>
    %524 = vector.extract_strided_slice %478 {offsets = [0, 16], sizes = [8, 8], strides = [1, 1]} : vector<8x96xf32> to vector<8x8xf32>
    %525 = vector.extract_strided_slice %478 {offsets = [0, 48], sizes = [8, 8], strides = [1, 1]} : vector<8x96xf32> to vector<8x8xf32>
    %526 = vector.extract_strided_slice %478 {offsets = [0, 80], sizes = [8, 8], strides = [1, 1]} : vector<8x96xf32> to vector<8x8xf32>
    %527 = tpu.transpose %525, [1, 0] : vector<8x8xf32> -> vector<8x8xf32>
    %cst_141 = arith.constant dense<0.000000e+00> : vector<8x8xf32>
    %528 = tpu.matmul %524, %527, %cst_141 {dimension_numbers = #tpu.dot_dimension_numbers<[1], [0], [0], [1], [0, 0, 1, 1], [], []>} : vector<8x8xf32>, vector<8x8xf32>, vector<8x8xf32> -> vector<8x8xf32>
    %cst_142 = arith.constant 0.353553385 : f32
    %529 = vector.broadcast %cst_142 : f32 to vector<8x8xf32>
    %530 = arith.mulf %528, %529 : vector<8x8xf32>
    %cst_143 = arith.constant dense<0xFF800000> : vector<8xf32>
    %531 = vector.multi_reduction <maximumf>, %530, %cst_143 [1] : vector<8x8xf32> to vector<8xf32>
    %532 = vector.shape_cast %531 : vector<8xf32> to vector<8x1xf32>
    %533 = vector.broadcast %532 : vector<8x1xf32> to vector<8x8xf32>
    %534 = arith.subf %530, %533 : vector<8x8xf32>
    %535 = math.exp %534 : vector<8x8xf32>
    %cst_144 = arith.constant dense<0.000000e+00> : vector<8xf32>
    %536 = vector.multi_reduction <add>, %535, %cst_144 [1] : vector<8x8xf32> to vector<8xf32>
    %537 = vector.shape_cast %536 : vector<8xf32> to vector<8x1xf32>
    %538 = tpu.reciprocal %537 {approx = true} : vector<8x1xf32> -> vector<8x1xf32>
    %539 = vector.broadcast %538 : vector<8x1xf32> to vector<8x8xf32>
    %540 = arith.mulf %535, %539 : vector<8x8xf32>
    %cst_145 = arith.constant dense<0.000000e+00> : vector<8x8xf32>
    %541 = tpu.matmul %540, %526, %cst_145 {dimension_numbers = #tpu.dot_dimension_numbers<[1], [0], [0], [1], [0, 0, 1, 1], [], []>} : vector<8x8xf32>, vector<8x8xf32>, vector<8x8xf32> -> vector<8x8xf32>
    %542 = vector.extract_strided_slice %372 {offsets = [16, 0], sizes = [8, 32], strides = [1, 1]} : vector<32x32xf32> to vector<8x32xf32>
    %cst_146 = arith.constant dense<0.000000e+00> : vector<8x32xf32>
    %543 = tpu.matmul %541, %542, %cst_146 {dimension_numbers = #tpu.dot_dimension_numbers<[1], [0], [0], [1], [0, 0, 1, 1], [], []>} : vector<8x8xf32>, vector<8x32xf32>, vector<8x32xf32> -> vector<8x32xf32>
    %544 = arith.addf %523, %543 : vector<8x32xf32>
    %545 = vector.extract_strided_slice %478 {offsets = [0, 24], sizes = [8, 8], strides = [1, 1]} : vector<8x96xf32> to vector<8x8xf32>
    %546 = vector.extract_strided_slice %478 {offsets = [0, 56], sizes = [8, 8], strides = [1, 1]} : vector<8x96xf32> to vector<8x8xf32>
    %547 = vector.extract_strided_slice %478 {offsets = [0, 88], sizes = [8, 8], strides = [1, 1]} : vector<8x96xf32> to vector<8x8xf32>
    %548 = tpu.transpose %546, [1, 0] : vector<8x8xf32> -> vector<8x8xf32>
    %cst_147 = arith.constant dense<0.000000e+00> : vector<8x8xf32>
    %549 = tpu.matmul %545, %548, %cst_147 {dimension_numbers = #tpu.dot_dimension_numbers<[1], [0], [0], [1], [0, 0, 1, 1], [], []>} : vector<8x8xf32>, vector<8x8xf32>, vector<8x8xf32> -> vector<8x8xf32>
    %cst_148 = arith.constant 0.353553385 : f32
    %550 = vector.broadcast %cst_148 : f32 to vector<8x8xf32>
    %551 = arith.mulf %549, %550 : vector<8x8xf32>
    %cst_149 = arith.constant dense<0xFF800000> : vector<8xf32>
    %552 = vector.multi_reduction <maximumf>, %551, %cst_149 [1] : vector<8x8xf32> to vector<8xf32>
    %553 = vector.shape_cast %552 : vector<8xf32> to vector<8x1xf32>
    %554 = vector.broadcast %553 : vector<8x1xf32> to vector<8x8xf32>
    %555 = arith.subf %551, %554 : vector<8x8xf32>
    %556 = math.exp %555 : vector<8x8xf32>
    %cst_150 = arith.constant dense<0.000000e+00> : vector<8xf32>
    %557 = vector.multi_reduction <add>, %556, %cst_150 [1] : vector<8x8xf32> to vector<8xf32>
    %558 = vector.shape_cast %557 : vector<8xf32> to vector<8x1xf32>
    %559 = tpu.reciprocal %558 {approx = true} : vector<8x1xf32> -> vector<8x1xf32>
    %560 = vector.broadcast %559 : vector<8x1xf32> to vector<8x8xf32>
    %561 = arith.mulf %556, %560 : vector<8x8xf32>
    %cst_151 = arith.constant dense<0.000000e+00> : vector<8x8xf32>
    %562 = tpu.matmul %561, %547, %cst_151 {dimension_numbers = #tpu.dot_dimension_numbers<[1], [0], [0], [1], [0, 0, 1, 1], [], []>} : vector<8x8xf32>, vector<8x8xf32>, vector<8x8xf32> -> vector<8x8xf32>
    %563 = vector.extract_strided_slice %372 {offsets = [24, 0], sizes = [8, 32], strides = [1, 1]} : vector<32x32xf32> to vector<8x32xf32>
    %cst_152 = arith.constant dense<0.000000e+00> : vector<8x32xf32>
    %564 = tpu.matmul %562, %563, %cst_152 {dimension_numbers = #tpu.dot_dimension_numbers<[1], [0], [0], [1], [0, 0, 1, 1], [], []>} : vector<8x8xf32>, vector<8x32xf32>, vector<8x32xf32> -> vector<8x32xf32>
    %565 = arith.addf %544, %564 : vector<8x32xf32>
    %cst_153 = arith.constant dense<0.000000e+00> : vector<8x16xf32>
    %566 = tpu.matmul %565, %374, %cst_153 {dimension_numbers = #tpu.dot_dimension_numbers<[1], [0], [0], [1], [0, 0, 1, 1], [], []>} : vector<8x32xf32>, vector<32x16xf32>, vector<8x16xf32> -> vector<8x16xf32>
    %567 = vector.broadcast %375 : vector<1x16xf32> to vector<8x16xf32>
    %568 = arith.addf %566, %567 : vector<8x16xf32>
    %c1_154 = arith.constant 1 : index
    %c0_155 = arith.constant 0 : index
    %c0_156 = arith.constant 0 : index
    %569 = vector.load %arg23[%c1_154, %c0_155, %c0_156] : memref<2x8x16xf32, #tpu.memory_space<vmem>>, vector<1x8x16xf32>
    %570 = vector.shape_cast %569 : vector<1x8x16xf32> to vector<8x16xf32>
    %571 = vector.shape_cast %568 : vector<8x16xf32> to vector<1x8x16xf32>
    tpu.vector_store %arg23[%c1_154, %c0_155, %c0_156], %571 {strides = array<i32>} : memref<2x8x16xf32, #tpu.memory_space<vmem>>, vector<1x8x16xf32>,
    %c0_157 = arith.constant 0 : index
    %c0_158 = arith.constant 0 : index
    %c0_159 = arith.constant 0 : index
    %572 = vector.load %arg23[%c0_157, %c0_158, %c0_159] : memref<2x8x16xf32, #tpu.memory_space<vmem>>, vector<2x8x16xf32>
    %c0_160 = arith.constant 0 : index
    %c0_161 = arith.constant 0 : index
    %c0_162 = arith.constant 0 : index
    %573 = vector.load %arg15[%c0_160, %c0_161, %c0_162] : memref<8x16x36xf32, #tpu.memory_space<vmem>>, vector<8x16x36xf32>
    %cst_163 = arith.constant 0.000000e+00 : f32
    %574 = vector.broadcast %cst_163 : f32 to vector<2x36xf32>
    %c0_164 = arith.constant 0 : index
    %c0_165 = arith.constant 0 : index
    %575 = vector.load %arg16[%c0_164, %c0_165] : memref<1x36xf32, #tpu.memory_space<vmem>>, vector<1x36xf32>
    %576 = vector.broadcast %575 : vector<1x36xf32> to vector<2x36xf32>
    %577 = arith.addf %574, %576 : vector<2x36xf32>
    %578 = vector.extract_strided_slice %572 {offsets = [0, 0, 0], sizes = [2, 1, 16], strides = [1, 1, 1]} : vector<2x8x16xf32> to vector<2x1x16xf32>
    %579 = vector.shape_cast %578 : vector<2x1x16xf32> to vector<2x16xf32>
    %580 = vector.extract_strided_slice %573 {offsets = [0, 0, 0], sizes = [1, 16, 36], strides = [1, 1, 1]} : vector<8x16x36xf32> to vector<1x16x36xf32>
    %581 = vector.shape_cast %580 : vector<1x16x36xf32> to vector<16x36xf32>
    %cst_166 = arith.constant dense<0.000000e+00> : vector<2x36xf32>
    %582 = tpu.matmul %579, %581, %cst_166 {dimension_numbers = #tpu.dot_dimension_numbers<[1], [0], [0], [1], [0, 0, 1, 1], [], []>} : vector<2x16xf32>, vector<16x36xf32>, vector<2x36xf32> -> vector<2x36xf32>
    %583 = arith.addf %577, %582 : vector<2x36xf32>
    %584 = vector.extract_strided_slice %572 {offsets = [0, 1, 0], sizes = [2, 1, 16], strides = [1, 1, 1]} : vector<2x8x16xf32> to vector<2x1x16xf32>
    %585 = vector.shape_cast %584 : vector<2x1x16xf32> to vector<2x16xf32>
    %586 = vector.extract_strided_slice %573 {offsets = [1, 0, 0], sizes = [1, 16, 36], strides = [1, 1, 1]} : vector<8x16x36xf32> to vector<1x16x36xf32>
    %587 = vector.shape_cast %586 : vector<1x16x36xf32> to vector<16x36xf32>
    %cst_167 = arith.constant dense<0.000000e+00> : vector<2x36xf32>
    %588 = tpu.matmul %585, %587, %cst_167 {dimension_numbers = #tpu.dot_dimension_numbers<[1], [0], [0], [1], [0, 0, 1, 1], [], []>} : vector<2x16xf32>, vector<16x36xf32>, vector<2x36xf32> -> vector<2x36xf32>
    %589 = arith.addf %583, %588 : vector<2x36xf32>
    %590 = vector.extract_strided_slice %572 {offsets = [0, 2, 0], sizes = [2, 1, 16], strides = [1, 1, 1]} : vector<2x8x16xf32> to vector<2x1x16xf32>
    %591 = vector.shape_cast %590 : vector<2x1x16xf32> to vector<2x16xf32>
    %592 = vector.extract_strided_slice %573 {offsets = [2, 0, 0], sizes = [1, 16, 36], strides = [1, 1, 1]} : vector<8x16x36xf32> to vector<1x16x36xf32>
    %593 = vector.shape_cast %592 : vector<1x16x36xf32> to vector<16x36xf32>
    %cst_168 = arith.constant dense<0.000000e+00> : vector<2x36xf32>
    %594 = tpu.matmul %591, %593, %cst_168 {dimension_numbers = #tpu.dot_dimension_numbers<[1], [0], [0], [1], [0, 0, 1, 1], [], []>} : vector<2x16xf32>, vector<16x36xf32>, vector<2x36xf32> -> vector<2x36xf32>
    %595 = arith.addf %589, %594 : vector<2x36xf32>
    %596 = vector.extract_strided_slice %572 {offsets = [0, 3, 0], sizes = [2, 1, 16], strides = [1, 1, 1]} : vector<2x8x16xf32> to vector<2x1x16xf32>
    %597 = vector.shape_cast %596 : vector<2x1x16xf32> to vector<2x16xf32>
    %598 = vector.extract_strided_slice %573 {offsets = [3, 0, 0], sizes = [1, 16, 36], strides = [1, 1, 1]} : vector<8x16x36xf32> to vector<1x16x36xf32>
    %599 = vector.shape_cast %598 : vector<1x16x36xf32> to vector<16x36xf32>
    %cst_169 = arith.constant dense<0.000000e+00> : vector<2x36xf32>
    %600 = tpu.matmul %597, %599, %cst_169 {dimension_numbers = #tpu.dot_dimension_numbers<[1], [0], [0], [1], [0, 0, 1, 1], [], []>} : vector<2x16xf32>, vector<16x36xf32>, vector<2x36xf32> -> vector<2x36xf32>
    %601 = arith.addf %595, %600 : vector<2x36xf32>
    %602 = vector.extract_strided_slice %572 {offsets = [0, 4, 0], sizes = [2, 1, 16], strides = [1, 1, 1]} : vector<2x8x16xf32> to vector<2x1x16xf32>
    %603 = vector.shape_cast %602 : vector<2x1x16xf32> to vector<2x16xf32>
    %604 = vector.extract_strided_slice %573 {offsets = [4, 0, 0], sizes = [1, 16, 36], strides = [1, 1, 1]} : vector<8x16x36xf32> to vector<1x16x36xf32>
    %605 = vector.shape_cast %604 : vector<1x16x36xf32> to vector<16x36xf32>
    %cst_170 = arith.constant dense<0.000000e+00> : vector<2x36xf32>
    %606 = tpu.matmul %603, %605, %cst_170 {dimension_numbers = #tpu.dot_dimension_numbers<[1], [0], [0], [1], [0, 0, 1, 1], [], []>} : vector<2x16xf32>, vector<16x36xf32>, vector<2x36xf32> -> vector<2x36xf32>
    %607 = arith.addf %601, %606 : vector<2x36xf32>
    %608 = vector.extract_strided_slice %572 {offsets = [0, 5, 0], sizes = [2, 1, 16], strides = [1, 1, 1]} : vector<2x8x16xf32> to vector<2x1x16xf32>
    %609 = vector.shape_cast %608 : vector<2x1x16xf32> to vector<2x16xf32>
    %610 = vector.extract_strided_slice %573 {offsets = [5, 0, 0], sizes = [1, 16, 36], strides = [1, 1, 1]} : vector<8x16x36xf32> to vector<1x16x36xf32>
    %611 = vector.shape_cast %610 : vector<1x16x36xf32> to vector<16x36xf32>
    %cst_171 = arith.constant dense<0.000000e+00> : vector<2x36xf32>
    %612 = tpu.matmul %609, %611, %cst_171 {dimension_numbers = #tpu.dot_dimension_numbers<[1], [0], [0], [1], [0, 0, 1, 1], [], []>} : vector<2x16xf32>, vector<16x36xf32>, vector<2x36xf32> -> vector<2x36xf32>
    %613 = arith.addf %607, %612 : vector<2x36xf32>
    %614 = vector.extract_strided_slice %572 {offsets = [0, 6, 0], sizes = [2, 1, 16], strides = [1, 1, 1]} : vector<2x8x16xf32> to vector<2x1x16xf32>
    %615 = vector.shape_cast %614 : vector<2x1x16xf32> to vector<2x16xf32>
    %616 = vector.extract_strided_slice %573 {offsets = [6, 0, 0], sizes = [1, 16, 36], strides = [1, 1, 1]} : vector<8x16x36xf32> to vector<1x16x36xf32>
    %617 = vector.shape_cast %616 : vector<1x16x36xf32> to vector<16x36xf32>
    %cst_172 = arith.constant dense<0.000000e+00> : vector<2x36xf32>
    %618 = tpu.matmul %615, %617, %cst_172 {dimension_numbers = #tpu.dot_dimension_numbers<[1], [0], [0], [1], [0, 0, 1, 1], [], []>} : vector<2x16xf32>, vector<16x36xf32>, vector<2x36xf32> -> vector<2x36xf32>
    %619 = arith.addf %613, %618 : vector<2x36xf32>
    %620 = vector.extract_strided_slice %572 {offsets = [0, 7, 0], sizes = [2, 1, 16], strides = [1, 1, 1]} : vector<2x8x16xf32> to vector<2x1x16xf32>
    %621 = vector.shape_cast %620 : vector<2x1x16xf32> to vector<2x16xf32>
    %622 = vector.extract_strided_slice %573 {offsets = [7, 0, 0], sizes = [1, 16, 36], strides = [1, 1, 1]} : vector<8x16x36xf32> to vector<1x16x36xf32>
    %623 = vector.shape_cast %622 : vector<1x16x36xf32> to vector<16x36xf32>
    %cst_173 = arith.constant dense<0.000000e+00> : vector<2x36xf32>
    %624 = tpu.matmul %621, %623, %cst_173 {dimension_numbers = #tpu.dot_dimension_numbers<[1], [0], [0], [1], [0, 0, 1, 1], [], []>} : vector<2x16xf32>, vector<16x36xf32>, vector<2x36xf32> -> vector<2x36xf32>
    %625 = arith.addf %619, %624 : vector<2x36xf32>
    %c0_174 = arith.constant 0 : index
    %c0_175 = arith.constant 0 : index
    %626 = vector.load %arg17[%c0_174, %c0_175] : memref<36x6xf32, #tpu.memory_space<vmem>>, vector<36x6xf32>
    %cst_176 = arith.constant dense<0.000000e+00> : vector<2x6xf32>
    %627 = tpu.matmul %625, %626, %cst_176 {dimension_numbers = #tpu.dot_dimension_numbers<[1], [0], [0], [1], [0, 0, 1, 1], [], []>} : vector<2x36xf32>, vector<36x6xf32>, vector<2x6xf32> -> vector<2x6xf32>
    %c0_177 = arith.constant 0 : index
    %c0_178 = arith.constant 0 : index
    %628 = vector.load %arg18[%c0_177, %c0_178] : memref<1x6xf32, #tpu.memory_space<vmem>>, vector<1x6xf32>
    %629 = vector.broadcast %628 : vector<1x6xf32> to vector<2x6xf32>
    %630 = arith.addf %627, %629 : vector<2x6xf32>
    %c0_179 = arith.constant 0 : index
    %c0_180 = arith.constant 0 : index
    %631 = vector.load %arg19[%c0_179, %c0_180] : memref<6x6xf32, #tpu.memory_space<vmem>>, vector<6x6xf32>
    %cst_181 = arith.constant dense<0.000000e+00> : vector<2x6xf32>
    %632 = tpu.matmul %630, %631, %cst_181 {dimension_numbers = #tpu.dot_dimension_numbers<[1], [0], [0], [1], [0, 0, 1, 1], [], []>} : vector<2x6xf32>, vector<6x6xf32>, vector<2x6xf32> -> vector<2x6xf32>
    %c0_182 = arith.constant 0 : index
    %c0_183 = arith.constant 0 : index
    %633 = vector.load %arg20[%c0_182, %c0_183] : memref<1x6xf32, #tpu.memory_space<vmem>>, vector<1x6xf32>
    %634 = vector.broadcast %633 : vector<1x6xf32> to vector<2x6xf32>
    %635 = arith.addf %632, %634 : vector<2x6xf32>
    %cst_184 = arith.constant 0.000000e+00 : f32
    %636 = vector.broadcast %cst_184 : f32 to vector<2x6xf32>
    %637 = arith.maximumf %635, %636 : vector<2x6xf32>
    %c0_185 = arith.constant 0 : index
    %c0_186 = arith.constant 0 : index
    %638 = vector.load %arg21[%c0_185, %c0_186] : memref<2x6xf32, #tpu.memory_space<vmem>>, vector<2x6xf32>
    tpu.vector_store %arg21[%c0_185, %c0_186], %637 {strides = array<i32>} : memref<2x6xf32, #tpu.memory_space<vmem>>, vector<2x6xf32>,
    return
  }
}

</mosaic_0001>

<llo_original>
// kernel: complex_model_forward.1
$region0: #{complex_model_forward.1}
  #allocation0 [shape = 'u32[]', space=smem, size = 0x4, offset = 0x4, fixed_abs, tag = 'smem constant byte address 0x4 - core index']
  #allocation1 [shape = 'u32[144,128]{1,0:T(1,128)}', space=vmem, size = 0x12000, scoped, tag = 'internal scratch']
  #allocation2 [shape = 'f32[8,2,32]{2,1,0:T(2,128)}', space=vmem, size = 0x2000, scoped, tag = 'scratch operand']
  #allocation3 [shape = 'f32[2,8,16]{2,1,0:T(8,128)}', space=vmem, size = 0x2000, scoped, tag = 'scratch operand']
  %s0 = inlined_call_operand.vmem [shape: f32[2,8,8], index: 0, kind: input, shape index: {}]
  %s1 = inlined_call_operand.vmem [shape: f32[2,32], index: 1, kind: input, shape index: {}]
  %s2 = inlined_call_operand.vmem [shape: f32[2,32], index: 2, kind: input, shape index: {}]
  %s3 = inlined_call_operand.hbm [shape: f32[8,128], index: 3, kind: input, shape index: {}]
  %s4 = inlined_call_operand.vmem [shape: f32[32,128], index: 4, kind: input, shape index: {}]
  %s5 = inlined_call_operand.hbm [shape: f32[1,128], index: 5, kind: input, shape index: {}]
  %s6 = inlined_call_operand.vmem [shape: f32[32,128], index: 6, kind: input, shape index: {}]
  %s7 = inlined_call_operand.vmem [shape: f32[32,128], index: 7, kind: input, shape index: {}]
  %s8 = inlined_call_operand.hbm [shape: f32[1,128], index: 8, kind: input, shape index: {}]
  %s9 = inlined_call_operand.vmem [shape: f32[32,96], index: 9, kind: input, shape index: {}]
  %s10 = inlined_call_operand.hbm [shape: f32[1,96], index: 10, kind: input, shape index: {}]
  %s11 = inlined_call_operand.hbm [shape: f32[32,32], index: 11, kind: input, shape index: {}]
  %s12 = inlined_call_operand.hbm [shape: f32[1,32], index: 12, kind: input, shape index: {}]
  %s13 = inlined_call_operand.vmem [shape: f32[32,16], index: 13, kind: input, shape index: {}]
  %s14 = inlined_call_operand.hbm [shape: f32[1,16], index: 14, kind: input, shape index: {}]
  %s15 = inlined_call_operand.hbm [shape: f32[8,16,36], index: 15, kind: input, shape index: {}]
  %s16 = inlined_call_operand.hbm [shape: f32[1,36], index: 16, kind: input, shape index: {}]
  %s17 = inlined_call_operand.vmem [shape: f32[36,6], index: 17, kind: input, shape index: {}]
  %s18 = inlined_call_operand.hbm [shape: f32[1,6], index: 18, kind: input, shape index: {}]
  %s19 = inlined_call_operand.hbm [shape: f32[6,6], index: 19, kind: input, shape index: {}]
  %s20 = inlined_call_operand.hbm [shape: f32[1,6], index: 20, kind: input, shape index: {}]
  %s21 = inlined_call_operand.hbm [shape: f32[2,6], index: 21, kind: output, shape index: {}]
  %s22 = sld [smem:[#allocation0]]
  $region142: #{complex_model_forward.1} parent=0
    _
  %s24 = ssub.s32 1, %s22
  %s25 = scalar_select 0, %s24, %s22
  $region1: #{complex_model_forward.1} parent=0
    #allocation4 [shape = 'u8[4096]{0}', space=vmem, size = 0x1000, scoped, tag = 'input window, operand 3, single buffered']
    #allocation5 [shape = 's32[1]{0}', space=sflag, size = 0x4, scoped, tag = 'scoped memory for complex_model_forward.1']
    #allocation6 [shape = 's32[1]{0}', space=sflag, size = 0x4, scoped, tag = 'scoped memory for complex_model_forward.1']
    #allocation7 [shape = 'u8[512]{0}', space=vmem, size = 0x400, scoped, tag = 'input window, operand 5, single buffered']
    #allocation8 [shape = 's32[1]{0}', space=sflag, size = 0x4, scoped, tag = 'scoped memory for complex_model_forward.1']
    #allocation9 [shape = 'u8[512]{0}', space=vmem, size = 0x400, scoped, tag = 'input window, operand 8, single buffered']
    #allocation10 [shape = 'u8[512]{0}', space=vmem, size = 0x400, scoped, tag = 'input window, operand 10, single buffered']
    #allocation11 [shape = 's32[1]{0}', space=sflag, size = 0x4, scoped, tag = 'scoped memory for complex_model_forward.1']
    #allocation12 [shape = 'u8[16384]{0}', space=vmem, size = 0x4000, scoped, tag = 'input window, operand 11, single buffered']
    #allocation13 [shape = 'u8[512]{0}', space=vmem, size = 0x400, scoped, tag = 'input window, operand 12, single buffered']
    #allocation14 [shape = 's32[1]{0}', space=sflag, size = 0x4, scoped, tag = 'scoped memory for complex_model_forward.1']
    #allocation15 [shape = 'u8[512]{0}', space=vmem, size = 0x400, scoped, tag = 'input window, operand 14, single buffered']
    #allocation16 [shape = 'u8[65536]{0}', space=vmem, size = 0x10000, scoped, tag = 'input window, operand 15, single buffered']
    #allocation17 [shape = 's32[1]{0}', space=sflag, size = 0x4, scoped, tag = 'scoped memory for complex_model_forward.1']
    #allocation18 [shape = 'u8[512]{0}', space=vmem, size = 0x400, scoped, tag = 'input window, operand 16, single buffered']
    #allocation19 [shape = 'u8[512]{0}', space=vmem, size = 0x400, scoped, tag = 'input window, operand 18, single buffered']
    #allocation20 [shape = 's32[1]{0}', space=sflag, size = 0x4, scoped, tag = 'scoped memory for complex_model_forward.1']
    #allocation21 [shape = 'u8[4096]{0}', space=vmem, size = 0x1000, scoped, tag = 'input window, operand 19, single buffered']
    #allocation22 [shape = 'u8[512]{0}', space=vmem, size = 0x400, scoped, tag = 'input window, operand 20, single buffered']
    #allocation23 [shape = 's32[1]{0}', space=sflag, size = 0x4, scoped, tag = 'scoped memory for complex_model_forward.1']
    #allocation24 [shape = 'u8[1024]{0}', space=vmem, size = 0x400, scoped, tag = 'output window, operand 0, single buffered']
    %26 = vsyncpa [#allocation5], 0
    %27 = vsyncpa [#allocation8], 0
    %28 = vsyncpa [#allocation11], 0
    %29 = vsyncpa [#allocation14], 0
    %30 = vsyncpa [#allocation17], 0
    %31 = vsyncpa [#allocation20], 0
    %32 = vsyncpa [#allocation23], 0
    %33 = vsyncpa [#allocation6], 0
    // Predicated region
    $region2: #{complex_model_forward.1} parent=1 // pred_check
      _
    $region3: #{complex_model_forward.1} parent=1 // pred_check_branch
      %35 = sbr.rel (0) target = $region5
    $region4: #{complex_model_forward.1} parent=1 // pred_region
      _
    $region5: #{complex_model_forward.1} parent=1 // pred_fallthru
      _
    // Predicated region
    $region6: #{complex_model_forward.1} parent=1 // pred_check
      _
    $region7: #{complex_model_forward.1} parent=1 // pred_check_branch
      %37 = sbr.rel (0) target = $region9
    $region8: #{complex_model_forward.1} parent=1 // pred_region
      _
    $region9: #{complex_model_forward.1} parent=1 // pred_fallthru
      _
    // Predicated region
    $region10: #{complex_model_forward.1} parent=1 // pred_check
      _
    $region11: #{complex_model_forward.1} parent=1 // pred_check_branch
      %39 = sbr.rel (0) target = $region13
    $region12: #{complex_model_forward.1} parent=1 // pred_region
      _
    $region13: #{complex_model_forward.1} parent=1 // pred_fallthru
      _
    // Predicated region
    $region14: #{complex_model_forward.1} parent=1 // pred_check
      _
    $region15: #{complex_model_forward.1} parent=1 // pred_check_branch
      %41 = sbr.rel (0) target = $region17
    $region16: #{complex_model_forward.1} parent=1 // pred_region
      %s43 = ssub.s32 128, 128
      %44 = vsyncadd [#allocation5], %s43
      %s46 = sshll.u32 [#allocation4], 4
      %s47 = int_to_ptr.vmem [resolvable:$true] %s46
      %49 = dma.hbm_to_vmem [thread:$0]  %s3, 128, %s47, [#allocation5]
    $region17: #{complex_model_forward.1} parent=1 // pred_fallthru
      _
    // Predicated region
    $region18: #{complex_model_forward.1} parent=1 // pred_check
      _
    $region19: #{complex_model_forward.1} parent=1 // pred_check_branch
      %51 = sbr.rel (0) target = $region21
    $region20: #{complex_model_forward.1} parent=1 // pred_region
      _
    $region21: #{complex_model_forward.1} parent=1 // pred_fallthru
      _
    // Predicated region
    $region22: #{complex_model_forward.1} parent=1 // pred_check
      _
    $region23: #{complex_model_forward.1} parent=1 // pred_check_branch
      %53 = sbr.rel (0) target = $region25
    $region24: #{complex_model_forward.1} parent=1 // pred_region
      %s55 = ssub.s32 16, 16
      %56 = vsyncadd [#allocation8], %s55
      %s58 = sshll.u32 [#allocation7], 4
      %s59 = int_to_ptr.vmem [resolvable:$true] %s58
      %61 = dma.hbm_to_vmem [thread:$0]  %s5, 16, %s59, [#allocation8]
    $region25: #{complex_model_forward.1} parent=1 // pred_fallthru
      _
    // Predicated region
    $region26: #{complex_model_forward.1} parent=1 // pred_check
      _
    $region27: #{complex_model_forward.1} parent=1 // pred_check_branch
      %63 = sbr.rel (0) target = $region29
    $region28: #{complex_model_forward.1} parent=1 // pred_region
      _
    $region29: #{complex_model_forward.1} parent=1 // pred_fallthru
      _
    // Predicated region
    $region30: #{complex_model_forward.1} parent=1 // pred_check
      _
    $region31: #{complex_model_forward.1} parent=1 // pred_check_branch
      %65 = sbr.rel (0) target = $region33
    $region32: #{complex_model_forward.1} parent=1 // pred_region
      _
    $region33: #{complex_model_forward.1} parent=1 // pred_fallthru
      _
    // Predicated region
    $region34: #{complex_model_forward.1} parent=1 // pred_check
      _
    $region35: #{complex_model_forward.1} parent=1 // pred_check_branch
      %67 = sbr.rel (0) target = $region37
    $region36: #{complex_model_forward.1} parent=1 // pred_region
      %s69 = ssub.s32 16, 16
      %70 = vsyncadd [#allocation8], %s69
      %s72 = sshll.u32 [#allocation9], 4
      %s73 = int_to_ptr.vmem [resolvable:$true] %s72
      %75 = dma.hbm_to_vmem [thread:$0]  %s8, 16, %s73, [#allocation8]
    $region37: #{complex_model_forward.1} parent=1 // pred_fallthru
      _
    // Predicated region
    $region38: #{complex_model_forward.1} parent=1 // pred_check
      _
    $region39: #{complex_model_forward.1} parent=1 // pred_check_branch
      %77 = sbr.rel (0) target = $region41
    $region40: #{complex_model_forward.1} parent=1 // pred_region
      _
    $region41: #{complex_model_forward.1} parent=1 // pred_fallthru
      _
    // Predicated region
    $region42: #{complex_model_forward.1} parent=1 // pred_check
      _
    $region43: #{complex_model_forward.1} parent=1 // pred_check_branch
      %79 = sbr.rel (0) target = $region45
    $region44: #{complex_model_forward.1} parent=1 // pred_region
      %s81 = ssub.s32 16, 16
      %82 = vsyncadd [#allocation11], %s81
      %s84 = sshll.u32 [#allocation10], 4
      %s85 = int_to_ptr.vmem [resolvable:$true] %s84
      %87 = dma.hbm_to_vmem [thread:$0]  %s10, 16, %s85, [#allocation11]
    $region45: #{complex_model_forward.1} parent=1 // pred_fallthru
      _
    // Predicated region
    $region46: #{complex_model_forward.1} parent=1 // pred_check
      _
    $region47: #{complex_model_forward.1} parent=1 // pred_check_branch
      %89 = sbr.rel (0) target = $region49
    $region48: #{complex_model_forward.1} parent=1 // pred_region
      %s91 = ssub.s32 512, 512
      %92 = vsyncadd [#allocation11], %s91
      %s93 = sshll.u32 [#allocation12], 4
      %s94 = int_to_ptr.vmem [resolvable:$true] %s93
      %99 = dma.hbm_to_vmem [thread:$0]  %s11, 512, %s94, [#allocation11], 128, 128, 8
    $region49: #{complex_model_forward.1} parent=1 // pred_fallthru
      _
    // Predicated region
    $region50: #{complex_model_forward.1} parent=1 // pred_check
      _
    $region51: #{complex_model_forward.1} parent=1 // pred_check_branch
      %101 = sbr.rel (0) target = $region53
    $region52: #{complex_model_forward.1} parent=1 // pred_region
      %s103 = ssub.s32 16, 16
      %104 = vsyncadd [#allocation14], %s103
      %s106 = sshll.u32 [#allocation13], 4
      %s107 = int_to_ptr.vmem [resolvable:$true] %s106
      %109 = dma.hbm_to_vmem [thread:$0]  %s12, 16, %s107, [#allocation14]
    $region53: #{complex_model_forward.1} parent=1 // pred_fallthru
      _
    // Predicated region
    $region54: #{complex_model_forward.1} parent=1 // pred_check
      _
    $region55: #{complex_model_forward.1} parent=1 // pred_check_branch
      %111 = sbr.rel (0) target = $region57
    $region56: #{complex_model_forward.1} parent=1 // pred_region
      _
    $region57: #{complex_model_forward.1} parent=1 // pred_fallthru
      _
    // Predicated region
    $region58: #{complex_model_forward.1} parent=1 // pred_check
      _
    $region59: #{complex_model_forward.1} parent=1 // pred_check_branch
      %113 = sbr.rel (0) target = $region61
    $region60: #{complex_model_forward.1} parent=1 // pred_region
      %s115 = ssub.s32 16, 16
      %116 = vsyncadd [#allocation14], %s115
      %s118 = sshll.u32 [#allocation15], 4
      %s119 = int_to_ptr.vmem [resolvable:$true] %s118
      %121 = dma.hbm_to_vmem [thread:$0]  %s14, 16, %s119, [#allocation14]
    $region61: #{complex_model_forward.1} parent=1 // pred_fallthru
      _
    // Predicated region
    $region62: #{complex_model_forward.1} parent=1 // pred_check
      _
    $region63: #{complex_model_forward.1} parent=1 // pred_check_branch
      %123 = sbr.rel (0) target = $region65
    $region64: #{complex_model_forward.1} parent=1 // pred_region
      %s125 = ssub.s32 2048, 2048
      %126 = vsyncadd [#allocation17], %s125
      %s127 = sshll.u32 [#allocation16], 4
      %s128 = int_to_ptr.vmem [resolvable:$true] %s127
      %133 = dma.hbm_to_vmem [thread:$0]  %s15, 2048, %s128, [#allocation17], 128, 128, 8
    $region65: #{complex_model_forward.1} parent=1 // pred_fallthru
      _
    // Predicated region
    $region66: #{complex_model_forward.1} parent=1 // pred_check
      _
    $region67: #{complex_model_forward.1} parent=1 // pred_check_branch
      %135 = sbr.rel (0) target = $region69
    $region68: #{complex_model_forward.1} parent=1 // pred_region
      %s137 = ssub.s32 16, 16
      %138 = vsyncadd [#allocation17], %s137
      %s140 = sshll.u32 [#allocation18], 4
      %s141 = int_to_ptr.vmem [resolvable:$true] %s140
      %143 = dma.hbm_to_vmem [thread:$0]  %s16, 16, %s141, [#allocation17]
    $region69: #{complex_model_forward.1} parent=1 // pred_fallthru
      _
    // Predicated region
    $region70: #{complex_model_forward.1} parent=1 // pred_check
      _
    $region71: #{complex_model_forward.1} parent=1 // pred_check_branch
      %145 = sbr.rel (0) target = $region73
    $region72: #{complex_model_forward.1} parent=1 // pred_region
      _
    $region73: #{complex_model_forward.1} parent=1 // pred_fallthru
      _
    // Predicated region
    $region74: #{complex_model_forward.1} parent=1 // pred_check
      _
    $region75: #{complex_model_forward.1} parent=1 // pred_check_branch
      %147 = sbr.rel (0) target = $region77
    $region76: #{complex_model_forward.1} parent=1 // pred_region
      %s149 = ssub.s32 16, 16
      %150 = vsyncadd [#allocation20], %s149
      %s152 = sshll.u32 [#allocation19], 4
      %s153 = int_to_ptr.vmem [resolvable:$true] %s152
      %155 = dma.hbm_to_vmem [thread:$0]  %s18, 16, %s153, [#allocation20]
    $region77: #{complex_model_forward.1} parent=1 // pred_fallthru
      _
    // Predicated region
    $region78: #{complex_model_forward.1} parent=1 // pred_check
      _
    $region79: #{complex_model_forward.1} parent=1 // pred_check_branch
      %157 = sbr.rel (0) target = $region81
    $region80: #{complex_model_forward.1} parent=1 // pred_region
      %s159 = ssub.s32 128, 128
      %160 = vsyncadd [#allocation20], %s159
      %s162 = sshll.u32 [#allocation21], 4
      %s163 = int_to_ptr.vmem [resolvable:$true] %s162
      %165 = dma.hbm_to_vmem [thread:$0]  %s19, 128, %s163, [#allocation20]
    $region81: #{complex_model_forward.1} parent=1 // pred_fallthru
      _
    // Predicated region
    $region82: #{complex_model_forward.1} parent=1 // pred_check
      _
    $region83: #{complex_model_forward.1} parent=1 // pred_check_branch
      %167 = sbr.rel (0) target = $region85
    $region84: #{complex_model_forward.1} parent=1 // pred_region
      %s169 = ssub.s32 16, 16
      %170 = vsyncadd [#allocation23], %s169
      %s172 = sshll.u32 [#allocation22], 4
      %s173 = int_to_ptr.vmem [resolvable:$true] %s172
      %175 = dma.hbm_to_vmem [thread:$0]  %s20, 16, %s173, [#allocation23]
    $region85: #{complex_model_forward.1} parent=1 // pred_fallthru
      _
    // Predicated region
    $region86: #{complex_model_forward.1} parent=1 // pred_check
      _
    $region87: #{complex_model_forward.1} parent=1 // pred_check_branch
      %177 = sbr.rel (0) target = $region89
    $region88: #{complex_model_forward.1} parent=1 // pred_region
      %178 = dma.done [#allocation5], 128
    $region89: #{complex_model_forward.1} parent=1 // pred_fallthru
      _
    // Predicated region
    $region90: #{complex_model_forward.1} parent=1 // pred_check
      _
    $region91: #{complex_model_forward.1} parent=1 // pred_check_branch
      %180 = sbr.rel (0) target = $region93
    $region92: #{complex_model_forward.1} parent=1 // pred_region
      %181 = dma.done [#allocation8], 16
    $region93: #{complex_model_forward.1} parent=1 // pred_fallthru
      _
    // Predicated region
    $region94: #{complex_model_forward.1} parent=1 // pred_check
      _
    $region95: #{complex_model_forward.1} parent=1 // pred_check_branch
      %183 = sbr.rel (0) target = $region97
    $region96: #{complex_model_forward.1} parent=1 // pred_region
      %184 = dma.done [#allocation8], 16
    $region97: #{complex_model_forward.1} parent=1 // pred_fallthru
      _
    // Predicated region
    $region98: #{complex_model_forward.1} parent=1 // pred_check
      _
    $region99: #{complex_model_forward.1} parent=1 // pred_check_branch
      %186 = sbr.rel (0) target = $region101
    $region100: #{complex_model_forward.1} parent=1 // pred_region
      %187 = dma.done [#allocation11], 16
    $region101: #{complex_model_forward.1} parent=1 // pred_fallthru
      _
    // Predicated region
    $region102: #{complex_model_forward.1} parent=1 // pred_check
      _
    $region103: #{complex_model_forward.1} parent=1 // pred_check_branch
      %189 = sbr.rel (0) target = $region105
    $region104: #{complex_model_forward.1} parent=1 // pred_region
      %190 = dma.done [#allocation11], 512
    $region105: #{complex_model_forward.1} parent=1 // pred_fallthru
      _
    // Predicated region
    $region106: #{complex_model_forward.1} parent=1 // pred_check
      _
    $region107: #{complex_model_forward.1} parent=1 // pred_check_branch
      %192 = sbr.rel (0) target = $region109
    $region108: #{complex_model_forward.1} parent=1 // pred_region
      %193 = dma.done [#allocation14], 16
    $region109: #{complex_model_forward.1} parent=1 // pred_fallthru
      _
    // Predicated region
    $region110: #{complex_model_forward.1} parent=1 // pred_check
      _
    $region111: #{complex_model_forward.1} parent=1 // pred_check_branch
      %195 = sbr.rel (0) target = $region113
    $region112: #{complex_model_forward.1} parent=1 // pred_region
      %196 = dma.done [#allocation14], 16
    $region113: #{complex_model_forward.1} parent=1 // pred_fallthru
      _
    // Predicated region
    $region114: #{complex_model_forward.1} parent=1 // pred_check
      _
    $region115: #{complex_model_forward.1} parent=1 // pred_check_branch
      %198 = sbr.rel (0) target = $region117
    $region116: #{complex_model_forward.1} parent=1 // pred_region
      %199 = dma.done [#allocation17], 2048
    $region117: #{complex_model_forward.1} parent=1 // pred_fallthru
      _
    // Predicated region
    $region118: #{complex_model_forward.1} parent=1 // pred_check
      _
    $region119: #{complex_model_forward.1} parent=1 // pred_check_branch
      %201 = sbr.rel (0) target = $region121
    $region120: #{complex_model_forward.1} parent=1 // pred_region
      %202 = dma.done [#allocation17], 16
    $region121: #{complex_model_forward.1} parent=1 // pred_fallthru
      _
    // Predicated region
    $region122: #{complex_model_forward.1} parent=1 // pred_check
      _
    $region123: #{complex_model_forward.1} parent=1 // pred_check_branch
      %204 = sbr.rel (0) target = $region125
    $region124: #{complex_model_forward.1} parent=1 // pred_region
      %205 = dma.done [#allocation20], 16
    $region125: #{complex_model_forward.1} parent=1 // pred_fallthru
      _
    // Predicated region
    $region126: #{complex_model_forward.1} parent=1 // pred_check
      _
    $region127: #{complex_model_forward.1} parent=1 // pred_check_branch
      %207 = sbr.rel (0) target = $region129
    $region128: #{complex_model_forward.1} parent=1 // pred_region
      %208 = dma.done [#allocation20], 128
    $region129: #{complex_model_forward.1} parent=1 // pred_fallthru
      _
    // Predicated region
    $region130: #{complex_model_forward.1} parent=1 // pred_check
      _
    $region131: #{complex_model_forward.1} parent=1 // pred_check_branch
      %210 = sbr.rel (0) target = $region133
    $region132: #{complex_model_forward.1} parent=1 // pred_region
      %211 = dma.done [#allocation23], 16
    $region133: #{complex_model_forward.1} parent=1 // pred_fallthru
      _
    %v212 = vld [vmem:[%s0] sm:$0xff]
    %v213 = vld [vmem:[%s0 + $0x8] sm:$0xff]
    %v214 = vld [vmem:[#allocation4] sm:$0xff]
    %v215 = vld [vmem:[%s4] sm:$0xff]
    %v216 = vld [vmem:[%s4 + $0x8] sm:$0xff]
    %v217 = vld [vmem:[%s4 + $0x10] sm:$0xff]
    %v218 = vld [vmem:[%s4 + $0x18] sm:$0xff]
    %v219 = vld [vmem:[#allocation7] sm:$0x1]
    %v220 = vld [vmem:[%s6] sm:$0xff]
    %v221 = vld [vmem:[%s6 + $0x8] sm:$0xff]
    %v222 = vld [vmem:[%s6 + $0x10] sm:$0xff]
    %v223 = vld [vmem:[%s6 + $0x18] sm:$0xff]
    %v224 = vld [vmem:[%s7] sm:$0xff]
    %v225 = vld [vmem:[%s7 + $0x8] sm:$0xff]
    %v226 = vld [vmem:[%s7 + $0x10] sm:$0xff]
    %v227 = vld [vmem:[%s7 + $0x18] sm:$0xff]
    %v228 = vld [vmem:[#allocation9] sm:$0x1]
    %v229 = vld [vmem:[%s1] sm:$0x3]
    %v230 = vld [vmem:[%s2] sm:$0x3]
    %vm231 = vcmask 261120
    %v233 = vsel %vm231, %v229, 0
    %235 = vmatprep.subr.mxu0 0.0
    %236 = vmatpush1.msra.mxu0 %v215
    %237 = vmatprep.subr.mxu0 0.0
    %238 = vmatpush1.msra.mxu0 %v216
    %239 = vmatprep.subr.mxu0 0.0
    %240 = vmatpush1.msra.mxu0 %v217
    %241 = vmatprep.subr.mxu0 0.0
    %242 = vmatpush1.msra.mxu0 %v218
    %243 = vmatprep.subr.mxu0 0.0
    %244 = vmatpush1.msra.mxu0 0.0
    %245 = vmatprep.subr.mxu0 0.0
    %246 = vmatpush1.msra.mxu0 0.0
    %247 = vmatprep.subr.mxu0 0.0
    %248 = vmatpush1.msra.mxu0 0.0
    %249 = vmatprep.subr.mxu0 0.0
    %250 = vmatpush1.msra.mxu0 0.0
    %251 = vmatprep.subr.mxu0 0.0
    %252 = vmatpush1.msra.mxu0 0.0
    %253 = vmatprep.subr.mxu0 0.0
    %254 = vmatpush1.msra.mxu0 0.0
    %255 = vmatprep.subr.mxu0 0.0
    %256 = vmatpush1.msra.mxu0 0.0
    %257 = vmatprep.subr.mxu0 0.0
    %258 = vmatpush1.msra.mxu0 0.0
    %259 = vmatprep.subr.mxu0 0.0
    %260 = vmatpush1.msra.mxu0 0.0
    %261 = vmatprep.subr.mxu0 0.0
    %262 = vmatpush1.msra.mxu0 0.0
    %263 = vmatprep.subr.mxu0 0.0
    %264 = vmatpush1.msra.mxu0 0.0
    %265 = vmatprep.subr.mxu0 0.0
    %266 = vmatpush1.msra.mxu0 0.0
    %267 = vmatprep.subr.mxu0 0.0
    %268 = vmatpush1.msra.mxu0 0.0
    %269 = vmatprep.subr.mxu0 0.0
    %270 = vmatpush1.msra.mxu0 0.0
    %271 = vmatprep.subr.mxu0 0.0
    %272 = vmatpush1.msra.mxu0 0.0
    %273 = vmatprep.subr.mxu0 0.0
    %274 = vmatpush1.msra.mxu0 0.0
    %275 = vmatprep.subr.mxu0 0.0
    %276 = vmatpush1.msra.mxu0 0.0
    %277 = vmatprep.subr.mxu0 0.0
    %278 = vmatpush1.msra.mxu0 0.0
    %279 = vmatprep.subr.mxu0 0.0
    %280 = vmatpush1.msra.mxu0 0.0
    %281 = vmatprep.subr.mxu0 0.0
    %282 = vmatpush1.msra.mxu0 0.0
    %283 = vmatprep.subr.mxu0 0.0
    %284 = vmatpush1.msra.mxu0 0.0
    %285 = vmatprep.subr.mxu0 0.0
    %286 = vmatpush1.msra.mxu0 0.0
    %287 = vmatprep.subr.mxu0 0.0
    %288 = vmatpush1.msra.mxu0 0.0
    %289 = vmatprep.subr.mxu0 0.0
    %290 = vmatpush1.msra.mxu0 0.0
    %291 = vmatprep.subr.mxu0 0.0
    %292 = vmatpush1.msra.mxu0 0.0
    %293 = vmatprep.subr.mxu0 0.0
    %294 = vmatpush1.msra.mxu0 0.0
    %295 = vmatprep.subr.mxu0 0.0
    %296 = vmatpush1.msra.mxu0 0.0
    %297 = vmatprep.subr.mxu0 0.0
    %298 = vmatpush1.msra.mxu0 0.0
    %299 = vmatprep.mubr.f32.mxu0 0.0
    %300 = vmatmul.mubr.f32.gmra.mrb[0].mxu0 %v233
    %v301 = vpop.f32.mrb[0].mxu0
    %v302 = vadd.f32 0.0, %v301
    %v303 = vpop.f32.mrb[0].mxu0
    %304 = vdwg.mxu0
    %v307 = vrot.slane %v213, 7
    %vm308 = vcmask 1041409
    %v309 = vsel %vm308, %v307, %v212
    %vm310 = vcmask 64512
    %v311 = vsel %vm310, %v309, 0
    %313 = vmatprep.subr.mxu0 0.0
    %314 = vmatpush1.msra.mxu0 %v214
    %315 = vmatprep.subr.mxu0 0.0
    %316 = vmatpush1.msra.mxu0 0.0
    %317 = vmatprep.subr.mxu0 0.0
    %318 = vmatpush1.msra.mxu0 0.0
    %319 = vmatprep.subr.mxu0 0.0
    %320 = vmatpush1.msra.mxu0 0.0
    %321 = vmatprep.subr.mxu0 0.0
    %322 = vmatpush1.msra.mxu0 0.0
    %323 = vmatprep.subr.mxu0 0.0
    %324 = vmatpush1.msra.mxu0 0.0
    %325 = vmatprep.subr.mxu0 0.0
    %326 = vmatpush1.msra.mxu0 0.0
    %327 = vmatprep.subr.mxu0 0.0
    %328 = vmatpush1.msra.mxu0 0.0
    %329 = vmatprep.subr.mxu0 0.0
    %330 = vmatpush1.msra.mxu0 0.0
    %331 = vmatprep.subr.mxu0 0.0
    %332 = vmatpush1.msra.mxu0 0.0
    %333 = vmatprep.subr.mxu0 0.0
    %334 = vmatpush1.msra.mxu0 0.0
    %335 = vmatprep.subr.mxu0 0.0
    %336 = vmatpush1.msra.mxu0 0.0
    %337 = vmatprep.subr.mxu0 0.0
    %338 = vmatpush1.msra.mxu0 0.0
    %339 = vmatprep.subr.mxu0 0.0
    %340 = vmatpush1.msra.mxu0 0.0
    %341 = vmatprep.subr.mxu0 0.0
    %342 = vmatpush1.msra.mxu0 0.0
    %343 = vmatprep.subr.mxu0 0.0
    %344 = vmatpush1.msra.mxu0 0.0
    %345 = vmatprep.subr.mxu0 0.0
    %346 = vmatpush1.msra.mxu0 0.0
    %347 = vmatprep.subr.mxu0 0.0
    %348 = vmatpush1.msra.mxu0 0.0
    %349 = vmatprep.subr.mxu0 0.0
    %350 = vmatpush1.msra.mxu0 0.0
    %351 = vmatprep.subr.mxu0 0.0
    %352 = vmatpush1.msra.mxu0 0.0
    %353 = vmatprep.subr.mxu0 0.0
    %354 = vmatpush1.msra.mxu0 0.0
    %355 = vmatprep.subr.mxu0 0.0
    %356 = vmatpush1.msra.mxu0 0.0
    %357 = vmatprep.subr.mxu0 0.0
    %358 = vmatpush1.msra.mxu0 0.0
    %359 = vmatprep.subr.mxu0 0.0
    %360 = vmatpush1.msra.mxu0 0.0
    %361 = vmatprep.subr.mxu0 0.0
    %362 = vmatpush1.msra.mxu0 0.0
    %363 = vmatprep.subr.mxu0 0.0
    %364 = vmatpush1.msra.mxu0 0.0
    %365 = vmatprep.subr.mxu0 0.0
    %366 = vmatpush1.msra.mxu0 0.0
    %367 = vmatprep.subr.mxu0 0.0
    %368 = vmatpush1.msra.mxu0 0.0
    %369 = vmatprep.subr.mxu0 0.0
    %370 = vmatpush1.msra.mxu0 0.0
    %371 = vmatprep.subr.mxu0 0.0
    %372 = vmatpush1.msra.mxu0 0.0
    %373 = vmatprep.subr.mxu0 0.0
    %374 = vmatpush1.msra.mxu0 0.0
    %375 = vmatprep.subr.mxu0 0.0
    %376 = vmatpush1.msra.mxu0 0.0
    %377 = vmatprep.mubr.f32.mxu0 0.0
    %378 = vmatmul.mubr.f32.gmra.mrb[0].mxu0 %v311
    %v379 = vpop.f32.mrb[0].mxu0
    %v380 = vadd.f32 %v302, %v379
    %v381 = vpop.f32.mrb[0].mxu0
    %382 = vdwg.mxu0
    %v384 = vlaneseq
    %v385 = vshrl.u32 %v384, 7
    %v386 = vsub.s32 0, %v385
    %v387 = vrot.slane %v219, %v386
    %v389 = vadd.f32 %v380, %v387
    %v390 = vxor.u32 %v389, 2147483648
    %v391 = vmul.f32 %v390, 1.442695
    %v392 = vpow.pop %v391
    %v393 = vadd.f32 %v392, 1.0
    %v394 = vrcp.pop %v393
    %v395 = vmul.f32 1.0, %v394
    %v396 = vtanh.pop %v389
    %398 = vrot.lane.b32.xlu0 %v230, 32
    %v399 = vpop.permute.xlu0 %398
    %v401 = vmul.f32 %v395, %v399
    %403 = vrot.lane.b32.xlu0 %v396, 64
    %v404 = vpop.permute.xlu0 %403
    %v406 = vmul.f32 %v395, %v404
    %408 = vrot.lane.b32.xlu0 %v406, 32
    %v409 = vpop.permute.xlu0 %408
    %v411 = vadd.f32 %v401, %v409
    %v412 = vtanh.pop %v411
    %414 = vrot.lane.b32.xlu0 %v412, 64
    %v415 = vpop.permute.xlu0 %414
    %v417 = vmul.f32 %v395, %v415
    %419 = vrot.lane.b32.xlu0 %v417, 32
    %v420 = vpop.permute.xlu0 %419
    %v421 = vsel %vm231, %v420, 0
    %423 = vmatprep.subr.mxu0 0.0
    %424 = vmatpush1.msra.mxu0 %v215
    %425 = vmatprep.subr.mxu0 0.0
    %426 = vmatpush1.msra.mxu0 %v216
    %427 = vmatprep.subr.mxu0 0.0
    %428 = vmatpush1.msra.mxu0 %v217
    %429 = vmatprep.subr.mxu0 0.0
    %430 = vmatpush1.msra.mxu0 %v218
    %431 = vmatprep.subr.mxu0 0.0
    %432 = vmatpush1.msra.mxu0 0.0
    %433 = vmatprep.subr.mxu0 0.0
    %434 = vmatpush1.msra.mxu0 0.0
    %435 = vmatprep.subr.mxu0 0.0
    %436 = vmatpush1.msra.mxu0 0.0
    %437 = vmatprep.subr.mxu0 0.0
    %438 = vmatpush1.msra.mxu0 0.0
    %439 = vmatprep.subr.mxu0 0.0
    %440 = vmatpush1.msra.mxu0 0.0
    %441 = vmatprep.subr.mxu0 0.0
    %442 = vmatpush1.msra.mxu0 0.0
    %443 = vmatprep.subr.mxu0 0.0
    %444 = vmatpush1.msra.mxu0 0.0
    %445 = vmatprep.subr.mxu0 0.0
    %446 = vmatpush1.msra.mxu0 0.0
    %447 = vmatprep.subr.mxu0 0.0
    %448 = vmatpush1.msra.mxu0 0.0
    %449 = vmatprep.subr.mxu0 0.0
    %450 = vmatpush1.msra.mxu0 0.0
    %451 = vmatprep.subr.mxu0 0.0
    %452 = vmatpush1.msra.mxu0 0.0
    %453 = vmatprep.subr.mxu0 0.0
    %454 = vmatpush1.msra.mxu0 0.0
    %455 = vmatprep.subr.mxu0 0.0
    %456 = vmatpush1.msra.mxu0 0.0
    %457 = vmatprep.subr.mxu0 0.0
    %458 = vmatpush1.msra.mxu0 0.0
    %459 = vmatprep.subr.mxu0 0.0
    %460 = vmatpush1.msra.mxu0 0.0
    %461 = vmatprep.subr.mxu0 0.0
    %462 = vmatpush1.msra.mxu0 0.0
    %463 = vmatprep.subr.mxu0 0.0
    %464 = vmatpush1.msra.mxu0 0.0
    %465 = vmatprep.subr.mxu0 0.0
    %466 = vmatpush1.msra.mxu0 0.0
    %467 = vmatprep.subr.mxu0 0.0
    %468 = vmatpush1.msra.mxu0 0.0
    %469 = vmatprep.subr.mxu0 0.0
    %470 = vmatpush1.msra.mxu0 0.0
    %471 = vmatprep.subr.mxu0 0.0
    %472 = vmatpush1.msra.mxu0 0.0
    %473 = vmatprep.subr.mxu0 0.0
    %474 = vmatpush1.msra.mxu0 0.0
    %475 = vmatprep.subr.mxu0 0.0
    %476 = vmatpush1.msra.mxu0 0.0
    %477 = vmatprep.subr.mxu0 0.0
    %478 = vmatpush1.msra.mxu0 0.0
    %479 = vmatprep.subr.mxu0 0.0
    %480 = vmatpush1.msra.mxu0 0.0
    %481 = vmatprep.subr.mxu0 0.0
    %482 = vmatpush1.msra.mxu0 0.0
    %483 = vmatprep.subr.mxu0 0.0
    %484 = vmatpush1.msra.mxu0 0.0
    %485 = vmatprep.subr.mxu0 0.0
    %486 = vmatpush1.msra.mxu0 0.0
    %487 = vmatprep.mubr.f32.mxu0 0.0
    %488 = vmatmul.mubr.f32.gmra.mrb[0].mxu0 %v421
    %v489 = vpop.f32.mrb[0].mxu0
    %v490 = vadd.f32 0.0, %v489
    %v491 = vpop.f32.mrb[0].mxu0
    %492 = vdwg.mxu0
    %v493 = vrot.slane %v212, 1
    %v494 = vsel %vm308, %v213, %v493
    %v495 = vsel %vm310, %v494, 0
    %497 = vmatprep.subr.mxu0 0.0
    %498 = vmatpush1.msra.mxu0 %v214
    %499 = vmatprep.subr.mxu0 0.0
    %500 = vmatpush1.msra.mxu0 0.0
    %501 = vmatprep.subr.mxu0 0.0
    %502 = vmatpush1.msra.mxu0 0.0
    %503 = vmatprep.subr.mxu0 0.0
    %504 = vmatpush1.msra.mxu0 0.0
    %505 = vmatprep.subr.mxu0 0.0
    %506 = vmatpush1.msra.mxu0 0.0
    %507 = vmatprep.subr.mxu0 0.0
    %508 = vmatpush1.msra.mxu0 0.0
    %509 = vmatprep.subr.mxu0 0.0
    %510 = vmatpush1.msra.mxu0 0.0
    %511 = vmatprep.subr.mxu0 0.0
    %512 = vmatpush1.msra.mxu0 0.0
    %513 = vmatprep.subr.mxu0 0.0
    %514 = vmatpush1.msra.mxu0 0.0
    %515 = vmatprep.subr.mxu0 0.0
    %516 = vmatpush1.msra.mxu0 0.0
    %517 = vmatprep.subr.mxu0 0.0
    %518 = vmatpush1.msra.mxu0 0.0
    %519 = vmatprep.subr.mxu0 0.0
    %520 = vmatpush1.msra.mxu0 0.0
    %521 = vmatprep.subr.mxu0 0.0
    %522 = vmatpush1.msra.mxu0 0.0
    %523 = vmatprep.subr.mxu0 0.0
    %524 = vmatpush1.msra.mxu0 0.0
    %525 = vmatprep.subr.mxu0 0.0
    %526 = vmatpush1.msra.mxu0 0.0
    %527 = vmatprep.subr.mxu0 0.0
    %528 = vmatpush1.msra.mxu0 0.0
    %529 = vmatprep.subr.mxu0 0.0
    %530 = vmatpush1.msra.mxu0 0.0
    %531 = vmatprep.subr.mxu0 0.0
    %532 = vmatpush1.msra.mxu0 0.0
    %533 = vmatprep.subr.mxu0 0.0
    %534 = vmatpush1.msra.mxu0 0.0
    %535 = vmatprep.subr.mxu0 0.0
    %536 = vmatpush1.msra.mxu0 0.0
    %537 = vmatprep.subr.mxu0 0.0
    %538 = vmatpush1.msra.mxu0 0.0
    %539 = vmatprep.subr.mxu0 0.0
    %540 = vmatpush1.msra.mxu0 0.0
    %541 = vmatprep.subr.mxu0 0.0
    %542 = vmatpush1.msra.mxu0 0.0
    %543 = vmatprep.subr.mxu0 0.0
    %544 = vmatpush1.msra.mxu0 0.0
    %545 = vmatprep.subr.mxu0 0.0
    %546 = vmatpush1.msra.mxu0 0.0
    %547 = vmatprep.subr.mxu0 0.0
    %548 = vmatpush1.msra.mxu0 0.0
    %549 = vmatprep.subr.mxu0 0.0
    %550 = vmatpush1.msra.mxu0 0.0
    %551 = vmatprep.subr.mxu0 0.0
    %552 = vmatpush1.msra.mxu0 0.0
    %553 = vmatprep.subr.mxu0 0.0
    %554 = vmatpush1.msra.mxu0 0.0
    %555 = vmatprep.subr.mxu0 0.0
    %556 = vmatpush1.msra.mxu0 0.0
    %557 = vmatprep.subr.mxu0 0.0
    %558 = vmatpush1.msra.mxu0 0.0
    %559 = vmatprep.subr.mxu0 0.0
    %560 = vmatpush1.msra.mxu0 0.0
    %561 = vmatprep.mubr.f32.mxu0 0.0
    %562 = vmatmul.mubr.f32.gmra.mrb[0].mxu0 %v495
    %v563 = vpop.f32.mrb[0].mxu0
    %v564 = vadd.f32 %v490, %v563
    %v565 = vpop.f32.mrb[0].mxu0
    %566 = vdwg.mxu0
    %v567 = vadd.f32 %v564, %v387
    %v568 = vxor.u32 %v567, 2147483648
    %v569 = vmul.f32 %v568, 1.442695
    %v570 = vpow.pop %v569
    %v571 = vadd.f32 %v570, 1.0
    %v572 = vrcp.pop %v571
    %v573 = vmul.f32 1.0, %v572
    %v574 = vtanh.pop %v567
    %v575 = vmul.f32 %v573, %v411
    %577 = vrot.lane.b32.xlu0 %v574, 64
    %v578 = vpop.permute.xlu0 %577
    %v580 = vmul.f32 %v573, %v578
    %582 = vrot.lane.b32.xlu0 %v580, 32
    %v583 = vpop.permute.xlu0 %582
    %v585 = vadd.f32 %v575, %v583
    %v586 = vtanh.pop %v585
    %588 = vrot.lane.b32.xlu0 %v586, 64
    %v589 = vpop.permute.xlu0 %588
    %v591 = vmul.f32 %v573, %v589
    %593 = vrot.lane.b32.xlu0 %v591, 32
    %v594 = vpop.permute.xlu0 %593
    %v595 = vsel %vm231, %v594, 0
    %597 = vmatprep.subr.mxu0 0.0
    %598 = vmatpush1.msra.mxu0 %v215
    %599 = vmatprep.subr.mxu0 0.0
    %600 = vmatpush1.msra.mxu0 %v216
    %601 = vmatprep.subr.mxu0 0.0
    %602 = vmatpush1.msra.mxu0 %v217
    %603 = vmatprep.subr.mxu0 0.0
    %604 = vmatpush1.msra.mxu0 %v218
    %605 = vmatprep.subr.mxu0 0.0
    %606 = vmatpush1.msra.mxu0 0.0
    %607 = vmatprep.subr.mxu0 0.0
    %608 = vmatpush1.msra.mxu0 0.0
    %609 = vmatprep.subr.mxu0 0.0
    %610 = vmatpush1.msra.mxu0 0.0
    %611 = vmatprep.subr.mxu0 0.0
    %612 = vmatpush1.msra.mxu0 0.0
    %613 = vmatprep.subr.mxu0 0.0
    %614 = vmatpush1.msra.mxu0 0.0
    %615 = vmatprep.subr.mxu0 0.0
    %616 = vmatpush1.msra.mxu0 0.0
    %617 = vmatprep.subr.mxu0 0.0
    %618 = vmatpush1.msra.mxu0 0.0
    %619 = vmatprep.subr.mxu0 0.0
    %620 = vmatpush1.msra.mxu0 0.0
    %621 = vmatprep.subr.mxu0 0.0
    %622 = vmatpush1.msra.mxu0 0.0
    %623 = vmatprep.subr.mxu0 0.0
    %624 = vmatpush1.msra.mxu0 0.0
    %625 = vmatprep.subr.mxu0 0.0
    %626 = vmatpush1.msra.mxu0 0.0
    %627 = vmatprep.subr.mxu0 0.0
    %628 = vmatpush1.msra.mxu0 0.0
    %629 = vmatprep.subr.mxu0 0.0
    %630 = vmatpush1.msra.mxu0 0.0
    %631 = vmatprep.subr.mxu0 0.0
    %632 = vmatpush1.msra.mxu0 0.0
    %633 = vmatprep.subr.mxu0 0.0
    %634 = vmatpush1.msra.mxu0 0.0
    %635 = vmatprep.subr.mxu0 0.0
    %636 = vmatpush1.msra.mxu0 0.0
    %637 = vmatprep.subr.mxu0 0.0
    %638 = vmatpush1.msra.mxu0 0.0
    %639 = vmatprep.subr.mxu0 0.0
    %640 = vmatpush1.msra.mxu0 0.0
    %641 = vmatprep.subr.mxu0 0.0
    %642 = vmatpush1.msra.mxu0 0.0
    %643 = vmatprep.subr.mxu0 0.0
    %644 = vmatpush1.msra.mxu0 0.0
    %645 = vmatprep.subr.mxu0 0.0
    %646 = vmatpush1.msra.mxu0 0.0
    %647 = vmatprep.subr.mxu0 0.0
    %648 = vmatpush1.msra.mxu0 0.0
    %649 = vmatprep.subr.mxu0 0.0
    %650 = vmatpush1.msra.mxu0 0.0
    %651 = vmatprep.subr.mxu0 0.0
    %652 = vmatpush1.msra.mxu0 0.0
    %653 = vmatprep.subr.mxu0 0.0
    %654 = vmatpush1.msra.mxu0 0.0
    %655 = vmatprep.subr.mxu0 0.0
    %656 = vmatpush1.msra.mxu0 0.0
    %657 = vmatprep.subr.mxu0 0.0
    %658 = vmatpush1.msra.mxu0 0.0
    %659 = vmatprep.subr.mxu0 0.0
    %660 = vmatpush1.msra.mxu0 0.0
    %661 = vmatprep.mubr.f32.mxu0 0.0
    %662 = vmatmul.mubr.f32.gmra.mrb[0].mxu0 %v595
    %v663 = vpop.f32.mrb[0].mxu0
    %v664 = vadd.f32 0.0, %v663
    %v665 = vpop.f32.mrb[0].mxu0
    %666 = vdwg.mxu0
    %v667 = vrot.slane %v212, 2
    %v668 = vrot.slane %v213, 1
    %v669 = vsel %vm308, %v668, %v667
    %v670 = vsel %vm310, %v669, 0
    %672 = vmatprep.subr.mxu0 0.0
    %673 = vmatpush1.msra.mxu0 %v214
    %674 = vmatprep.subr.mxu0 0.0
    %675 = vmatpush1.msra.mxu0 0.0
    %676 = vmatprep.subr.mxu0 0.0
    %677 = vmatpush1.msra.mxu0 0.0
    %678 = vmatprep.subr.mxu0 0.0
    %679 = vmatpush1.msra.mxu0 0.0
    %680 = vmatprep.subr.mxu0 0.0
    %681 = vmatpush1.msra.mxu0 0.0
    %682 = vmatprep.subr.mxu0 0.0
    %683 = vmatpush1.msra.mxu0 0.0
    %684 = vmatprep.subr.mxu0 0.0
    %685 = vmatpush1.msra.mxu0 0.0
    %686 = vmatprep.subr.mxu0 0.0
    %687 = vmatpush1.msra.mxu0 0.0
    %688 = vmatprep.subr.mxu0 0.0
    %689 = vmatpush1.msra.mxu0 0.0
    %690 = vmatprep.subr.mxu0 0.0
    %691 = vmatpush1.msra.mxu0 0.0
    %692 = vmatprep.subr.mxu0 0.0
    %693 = vmatpush1.msra.mxu0 0.0
    %694 = vmatprep.subr.mxu0 0.0
    %695 = vmatpush1.msra.mxu0 0.0
    %696 = vmatprep.subr.mxu0 0.0
    %697 = vmatpush1.msra.mxu0 0.0
    %698 = vmatprep.subr.mxu0 0.0
    %699 = vmatpush1.msra.mxu0 0.0
    %700 = vmatprep.subr.mxu0 0.0
    %701 = vmatpush1.msra.mxu0 0.0
    %702 = vmatprep.subr.mxu0 0.0
    %703 = vmatpush1.msra.mxu0 0.0
    %704 = vmatprep.subr.mxu0 0.0
    %705 = vmatpush1.msra.mxu0 0.0
    %706 = vmatprep.subr.mxu0 0.0
    %707 = vmatpush1.msra.mxu0 0.0
    %708 = vmatprep.subr.mxu0 0.0
    %709 = vmatpush1.msra.mxu0 0.0
    %710 = vmatprep.subr.mxu0 0.0
    %711 = vmatpush1.msra.mxu0 0.0
    %712 = vmatprep.subr.mxu0 0.0
    %713 = vmatpush1.msra.mxu0 0.0
    %714 = vmatprep.subr.mxu0 0.0
    %715 = vmatpush1.msra.mxu0 0.0
    %716 = vmatprep.subr.mxu0 0.0
    %717 = vmatpush1.msra.mxu0 0.0
    %718 = vmatprep.subr.mxu0 0.0
    %719 = vmatpush1.msra.mxu0 0.0
    %720 = vmatprep.subr.mxu0 0.0
    %721 = vmatpush1.msra.mxu0 0.0
    %722 = vmatprep.subr.mxu0 0.0
    %723 = vmatpush1.msra.mxu0 0.0
    %724 = vmatprep.subr.mxu0 0.0
    %725 = vmatpush1.msra.mxu0 0.0
    %726 = vmatprep.subr.mxu0 0.0
    %727 = vmatpush1.msra.mxu0 0.0
    %728 = vmatprep.subr.mxu0 0.0
    %729 = vmatpush1.msra.mxu0 0.0
    %730 = vmatprep.subr.mxu0 0.0
    %731 = vmatpush1.msra.mxu0 0.0
    %732 = vmatprep.subr.mxu0 0.0
    %733 = vmatpush1.msra.mxu0 0.0
    %734 = vmatprep.subr.mxu0 0.0
    %735 = vmatpush1.msra.mxu0 0.0
    %736 = vmatprep.mubr.f32.mxu0 0.0
    %737 = vmatmul.mubr.f32.gmra.mrb[0].mxu0 %v670
    %v738 = vpop.f32.mrb[0].mxu0
    %v739 = vadd.f32 %v664, %v738
    %v740 = vpop.f32.mrb[0].mxu0
    %741 = vdwg.mxu0
    %v742 = vadd.f32 %v739, %v387
    %v743 = vxor.u32 %v742, 2147483648
    %v744 = vmul.f32 %v743, 1.442695
    %v745 = vpow.pop %v744
    %v746 = vadd.f32 %v745, 1.0
    %v747 = vrcp.pop %v746
    %v748 = vmul.f32 1.0, %v747
    %v749 = vtanh.pop %v742
    %v750 = vmul.f32 %v748, %v585
    %752 = vrot.lane.b32.xlu0 %v749, 64
    %v753 = vpop.permute.xlu0 %752
    %v755 = vmul.f32 %v748, %v753
    %757 = vrot.lane.b32.xlu0 %v755, 32
    %v758 = vpop.permute.xlu0 %757
    %v760 = vadd.f32 %v750, %v758
    %v761 = vtanh.pop %v760
    %763 = vrot.lane.b32.xlu0 %v761, 64
    %v764 = vpop.permute.xlu0 %763
    %v766 = vmul.f32 %v748, %v764
    %768 = vrot.lane.b32.xlu0 %v766, 32
    %v769 = vpop.permute.xlu0 %768
    %v770 = vsel %vm231, %v769, 0
    %772 = vmatprep.subr.mxu0 0.0
    %773 = vmatpush1.msra.mxu0 %v215
    %774 = vmatprep.subr.mxu0 0.0
    %775 = vmatpush1.msra.mxu0 %v216
    %776 = vmatprep.subr.mxu0 0.0
    %777 = vmatpush1.msra.mxu0 %v217
    %778 = vmatprep.subr.mxu0 0.0
    %779 = vmatpush1.msra.mxu0 %v218
    %780 = vmatprep.subr.mxu0 0.0
    %781 = vmatpush1.msra.mxu0 0.0
    %782 = vmatprep.subr.mxu0 0.0
    %783 = vmatpush1.msra.mxu0 0.0
    %784 = vmatprep.subr.mxu0 0.0
    %785 = vmatpush1.msra.mxu0 0.0
    %786 = vmatprep.subr.mxu0 0.0
    %787 = vmatpush1.msra.mxu0 0.0
    %788 = vmatprep.subr.mxu0 0.0
    %789 = vmatpush1.msra.mxu0 0.0
    %790 = vmatprep.subr.mxu0 0.0
    %791 = vmatpush1.msra.mxu0 0.0
    %792 = vmatprep.subr.mxu0 0.0
    %793 = vmatpush1.msra.mxu0 0.0
    %794 = vmatprep.subr.mxu0 0.0
    %795 = vmatpush1.msra.mxu0 0.0
    %796 = vmatprep.subr.mxu0 0.0
    %797 = vmatpush1.msra.mxu0 0.0
    %798 = vmatprep.subr.mxu0 0.0
    %799 = vmatpush1.msra.mxu0 0.0
    %800 = vmatprep.subr.mxu0 0.0
    %801 = vmatpush1.msra.mxu0 0.0
    %802 = vmatprep.subr.mxu0 0.0
    %803 = vmatpush1.msra.mxu0 0.0
    %804 = vmatprep.subr.mxu0 0.0
    %805 = vmatpush1.msra.mxu0 0.0
    %806 = vmatprep.subr.mxu0 0.0
    %807 = vmatpush1.msra.mxu0 0.0
    %808 = vmatprep.subr.mxu0 0.0
    %809 = vmatpush1.msra.mxu0 0.0
    %810 = vmatprep.subr.mxu0 0.0
    %811 = vmatpush1.msra.mxu0 0.0
    %812 = vmatprep.subr.mxu0 0.0
    %813 = vmatpush1.msra.mxu0 0.0
    %814 = vmatprep.subr.mxu0 0.0
    %815 = vmatpush1.msra.mxu0 0.0
    %816 = vmatprep.subr.mxu0 0.0
    %817 = vmatpush1.msra.mxu0 0.0
    %818 = vmatprep.subr.mxu0 0.0
    %819 = vmatpush1.msra.mxu0 0.0
    %820 = vmatprep.subr.mxu0 0.0
    %821 = vmatpush1.msra.mxu0 0.0
    %822 = vmatprep.subr.mxu0 0.0
    %823 = vmatpush1.msra.mxu0 0.0
    %824 = vmatprep.subr.mxu0 0.0
    %825 = vmatpush1.msra.mxu0 0.0
    %826 = vmatprep.subr.mxu0 0.0
    %827 = vmatpush1.msra.mxu0 0.0
    %828 = vmatprep.subr.mxu0 0.0
    %829 = vmatpush1.msra.mxu0 0.0
    %830 = vmatprep.subr.mxu0 0.0
    %831 = vmatpush1.msra.mxu0 0.0
    %832 = vmatprep.subr.mxu0 0.0
    %833 = vmatpush1.msra.mxu0 0.0
    %834 = vmatprep.subr.mxu0 0.0
    %835 = vmatpush1.msra.mxu0 0.0
    %836 = vmatprep.mubr.f32.mxu0 0.0
    %837 = vmatmul.mubr.f32.gmra.mrb[0].mxu0 %v770
    %v838 = vpop.f32.mrb[0].mxu0
    %v839 = vadd.f32 0.0, %v838
    %v840 = vpop.f32.mrb[0].mxu0
    %841 = vdwg.mxu0
    %v842 = vrot.slane %v212, 3
    %v843 = vrot.slane %v213, 2
    %v844 = vsel %vm308, %v843, %v842
    %v845 = vsel %vm310, %v844, 0
    %847 = vmatprep.subr.mxu0 0.0
    %848 = vmatpush1.msra.mxu0 %v214
    %849 = vmatprep.subr.mxu0 0.0
    %850 = vmatpush1.msra.mxu0 0.0
    %851 = vmatprep.subr.mxu0 0.0
    %852 = vmatpush1.msra.mxu0 0.0
    %853 = vmatprep.subr.mxu0 0.0
    %854 = vmatpush1.msra.mxu0 0.0
    %855 = vmatprep.subr.mxu0 0.0
    %856 = vmatpush1.msra.mxu0 0.0
    %857 = vmatprep.subr.mxu0 0.0
    %858 = vmatpush1.msra.mxu0 0.0
    %859 = vmatprep.subr.mxu0 0.0
    %860 = vmatpush1.msra.mxu0 0.0
    %861 = vmatprep.subr.mxu0 0.0
    %862 = vmatpush1.msra.mxu0 0.0
    %863 = vmatprep.subr.mxu0 0.0
    %864 = vmatpush1.msra.mxu0 0.0
    %865 = vmatprep.subr.mxu0 0.0
    %866 = vmatpush1.msra.mxu0 0.0
    %867 = vmatprep.subr.mxu0 0.0
    %868 = vmatpush1.msra.mxu0 0.0
    %869 = vmatprep.subr.mxu0 0.0
    %870 = vmatpush1.msra.mxu0 0.0
    %871 = vmatprep.subr.mxu0 0.0
    %872 = vmatpush1.msra.mxu0 0.0
    %873 = vmatprep.subr.mxu0 0.0
    %874 = vmatpush1.msra.mxu0 0.0
    %875 = vmatprep.subr.mxu0 0.0
    %876 = vmatpush1.msra.mxu0 0.0
    %877 = vmatprep.subr.mxu0 0.0
    %878 = vmatpush1.msra.mxu0 0.0
    %879 = vmatprep.subr.mxu0 0.0
    %880 = vmatpush1.msra.mxu0 0.0
    %881 = vmatprep.subr.mxu0 0.0
    %882 = vmatpush1.msra.mxu0 0.0
    %883 = vmatprep.subr.mxu0 0.0
    %884 = vmatpush1.msra.mxu0 0.0
    %885 = vmatprep.subr.mxu0 0.0
    %886 = vmatpush1.msra.mxu0 0.0
    %887 = vmatprep.subr.mxu0 0.0
    %888 = vmatpush1.msra.mxu0 0.0
    %889 = vmatprep.subr.mxu0 0.0
    %890 = vmatpush1.msra.mxu0 0.0
    %891 = vmatprep.subr.mxu0 0.0
    %892 = vmatpush1.msra.mxu0 0.0
    %893 = vmatprep.subr.mxu0 0.0
    %894 = vmatpush1.msra.mxu0 0.0
    %895 = vmatprep.subr.mxu0 0.0
    %896 = vmatpush1.msra.mxu0 0.0
    %897 = vmatprep.subr.mxu0 0.0
    %898 = vmatpush1.msra.mxu0 0.0
    %899 = vmatprep.subr.mxu0 0.0
    %900 = vmatpush1.msra.mxu0 0.0
    %901 = vmatprep.subr.mxu0 0.0
    %902 = vmatpush1.msra.mxu0 0.0
    %903 = vmatprep.subr.mxu0 0.0
    %904 = vmatpush1.msra.mxu0 0.0
    %905 = vmatprep.subr.mxu0 0.0
    %906 = vmatpush1.msra.mxu0 0.0
    %907 = vmatprep.subr.mxu0 0.0
    %908 = vmatpush1.msra.mxu0 0.0
    %909 = vmatprep.subr.mxu0 0.0
    %910 = vmatpush1.msra.mxu0 0.0
    %911 = vmatprep.mubr.f32.mxu0 0.0
    %912 = vmatmul.mubr.f32.gmra.mrb[0].mxu0 %v845
    %v913 = vpop.f32.mrb[0].mxu0
    %v914 = vadd.f32 %v839, %v913
    %v915 = vpop.f32.mrb[0].mxu0
    %916 = vdwg.mxu0
    %v917 = vadd.f32 %v914, %v387
    %v918 = vxor.u32 %v917, 2147483648
    %v919 = vmul.f32 %v918, 1.442695
    %v920 = vpow.pop %v919
    %v921 = vadd.f32 %v920, 1.0
    %v922 = vrcp.pop %v921
    %v923 = vmul.f32 1.0, %v922
    %v924 = vtanh.pop %v917
    %v925 = vmul.f32 %v923, %v760
    %927 = vrot.lane.b32.xlu0 %v924, 64
    %v928 = vpop.permute.xlu0 %927
    %v930 = vmul.f32 %v923, %v928
    %932 = vrot.lane.b32.xlu0 %v930, 32
    %v933 = vpop.permute.xlu0 %932
    %v935 = vadd.f32 %v925, %v933
    %v936 = vtanh.pop %v935
    %938 = vrot.lane.b32.xlu0 %v936, 64
    %v939 = vpop.permute.xlu0 %938
    %v941 = vmul.f32 %v923, %v939
    %943 = vrot.lane.b32.xlu0 %v941, 32
    %v944 = vpop.permute.xlu0 %943
    %v945 = vsel %vm231, %v944, 0
    %947 = vmatprep.subr.mxu0 0.0
    %948 = vmatpush1.msra.mxu0 %v215
    %949 = vmatprep.subr.mxu0 0.0
    %950 = vmatpush1.msra.mxu0 %v216
    %951 = vmatprep.subr.mxu0 0.0
    %952 = vmatpush1.msra.mxu0 %v217
    %953 = vmatprep.subr.mxu0 0.0
    %954 = vmatpush1.msra.mxu0 %v218
    %955 = vmatprep.subr.mxu0 0.0
    %956 = vmatpush1.msra.mxu0 0.0
    %957 = vmatprep.subr.mxu0 0.0
    %958 = vmatpush1.msra.mxu0 0.0
    %959 = vmatprep.subr.mxu0 0.0
    %960 = vmatpush1.msra.mxu0 0.0
    %961 = vmatprep.subr.mxu0 0.0
    %962 = vmatpush1.msra.mxu0 0.0
    %963 = vmatprep.subr.mxu0 0.0
    %964 = vmatpush1.msra.mxu0 0.0
    %965 = vmatprep.subr.mxu0 0.0
    %966 = vmatpush1.msra.mxu0 0.0
    %967 = vmatprep.subr.mxu0 0.0
    %968 = vmatpush1.msra.mxu0 0.0
    %969 = vmatprep.subr.mxu0 0.0
    %970 = vmatpush1.msra.mxu0 0.0
    %971 = vmatprep.subr.mxu0 0.0
    %972 = vmatpush1.msra.mxu0 0.0
    %973 = vmatprep.subr.mxu0 0.0
    %974 = vmatpush1.msra.mxu0 0.0
    %975 = vmatprep.subr.mxu0 0.0
    %976 = vmatpush1.msra.mxu0 0.0
    %977 = vmatprep.subr.mxu0 0.0
    %978 = vmatpush1.msra.mxu0 0.0
    %979 = vmatprep.subr.mxu0 0.0
    %980 = vmatpush1.msra.mxu0 0.0
    %981 = vmatprep.subr.mxu0 0.0
    %982 = vmatpush1.msra.mxu0 0.0
    %983 = vmatprep.subr.mxu0 0.0
    %984 = vmatpush1.msra.mxu0 0.0
    %985 = vmatprep.subr.mxu0 0.0
    %986 = vmatpush1.msra.mxu0 0.0
    %987 = vmatprep.subr.mxu0 0.0
    %988 = vmatpush1.msra.mxu0 0.0
    %989 = vmatprep.subr.mxu0 0.0
    %990 = vmatpush1.msra.mxu0 0.0
    %991 = vmatprep.subr.mxu0 0.0
    %992 = vmatpush1.msra.mxu0 0.0
    %993 = vmatprep.subr.mxu0 0.0
    %994 = vmatpush1.msra.mxu0 0.0
    %995 = vmatprep.subr.mxu0 0.0
    %996 = vmatpush1.msra.mxu0 0.0
    %997 = vmatprep.subr.mxu0 0.0
    %998 = vmatpush1.msra.mxu0 0.0
    %999 = vmatprep.subr.mxu0 0.0
    %1000 = vmatpush1.msra.mxu0 0.0
    %1001 = vmatprep.subr.mxu0 0.0
    %1002 = vmatpush1.msra.mxu0 0.0
    %1003 = vmatprep.subr.mxu0 0.0
    %1004 = vmatpush1.msra.mxu0 0.0
    %1005 = vmatprep.subr.mxu0 0.0
    %1006 = vmatpush1.msra.mxu0 0.0
    %1007 = vmatprep.subr.mxu0 0.0
    %1008 = vmatpush1.msra.mxu0 0.0
    %1009 = vmatprep.subr.mxu0 0.0
    %1010 = vmatpush1.msra.mxu0 0.0
    %1011 = vmatprep.mubr.f32.mxu0 0.0
    %1012 = vmatmul.mubr.f32.gmra.mrb[0].mxu0 %v945
    %v1013 = vpop.f32.mrb[0].mxu0
    %v1014 = vadd.f32 0.0, %v1013
    %v1015 = vpop.f32.mrb[0].mxu0
    %1016 = vdwg.mxu0
    %v1017 = vrot.slane %v212, 4
    %v1018 = vrot.slane %v213, 3
    %v1019 = vsel %vm308, %v1018, %v1017
    %v1020 = vsel %vm310, %v1019, 0
    %1022 = vmatprep.subr.mxu0 0.0
    %1023 = vmatpush1.msra.mxu0 %v214
    %1024 = vmatprep.subr.mxu0 0.0
    %1025 = vmatpush1.msra.mxu0 0.0
    %1026 = vmatprep.subr.mxu0 0.0
    %1027 = vmatpush1.msra.mxu0 0.0
    %1028 = vmatprep.subr.mxu0 0.0
    %1029 = vmatpush1.msra.mxu0 0.0
    %1030 = vmatprep.subr.mxu0 0.0
    %1031 = vmatpush1.msra.mxu0 0.0
    %1032 = vmatprep.subr.mxu0 0.0
    %1033 = vmatpush1.msra.mxu0 0.0
    %1034 = vmatprep.subr.mxu0 0.0
    %1035 = vmatpush1.msra.mxu0 0.0
    %1036 = vmatprep.subr.mxu0 0.0
    %1037 = vmatpush1.msra.mxu0 0.0
    %1038 = vmatprep.subr.mxu0 0.0
    %1039 = vmatpush1.msra.mxu0 0.0
    %1040 = vmatprep.subr.mxu0 0.0
    %1041 = vmatpush1.msra.mxu0 0.0
    %1042 = vmatprep.subr.mxu0 0.0
    %1043 = vmatpush1.msra.mxu0 0.0
    %1044 = vmatprep.subr.mxu0 0.0
    %1045 = vmatpush1.msra.mxu0 0.0
    %1046 = vmatprep.subr.mxu0 0.0
    %1047 = vmatpush1.msra.mxu0 0.0
    %1048 = vmatprep.subr.mxu0 0.0
    %1049 = vmatpush1.msra.mxu0 0.0
    %1050 = vmatprep.subr.mxu0 0.0
    %1051 = vmatpush1.msra.mxu0 0.0
    %1052 = vmatprep.subr.mxu0 0.0
    %1053 = vmatpush1.msra.mxu0 0.0
    %1054 = vmatprep.subr.mxu0 0.0
    %1055 = vmatpush1.msra.mxu0 0.0
    %1056 = vmatprep.subr.mxu0 0.0
    %1057 = vmatpush1.msra.mxu0 0.0
    %1058 = vmatprep.subr.mxu0 0.0
    %1059 = vmatpush1.msra.mxu0 0.0
    %1060 = vmatprep.subr.mxu0 0.0
    %1061 = vmatpush1.msra.mxu0 0.0
    %1062 = vmatprep.subr.mxu0 0.0
    %1063 = vmatpush1.msra.mxu0 0.0
    %1064 = vmatprep.subr.mxu0 0.0
    %1065 = vmatpush1.msra.mxu0 0.0
    %1066 = vmatprep.subr.mxu0 0.0
    %1067 = vmatpush1.msra.mxu0 0.0
    %1068 = vmatprep.subr.mxu0 0.0
    %1069 = vmatpush1.msra.mxu0 0.0
    %1070 = vmatprep.subr.mxu0 0.0
    %1071 = vmatpush1.msra.mxu0 0.0
    %1072 = vmatprep.subr.mxu0 0.0
    %1073 = vmatpush1.msra.mxu0 0.0
    %1074 = vmatprep.subr.mxu0 0.0
    %1075 = vmatpush1.msra.mxu0 0.0
    %1076 = vmatprep.subr.mxu0 0.0
    %1077 = vmatpush1.msra.mxu0 0.0
    %1078 = vmatprep.subr.mxu0 0.0
    %1079 = vmatpush1.msra.mxu0 0.0
    %1080 = vmatprep.subr.mxu0 0.0
    %1081 = vmatpush1.msra.mxu0 0.0
    %1082 = vmatprep.subr.mxu0 0.0
    %1083 = vmatpush1.msra.mxu0 0.0
    %1084 = vmatprep.subr.mxu0 0.0
    %1085 = vmatpush1.msra.mxu0 0.0
    %1086 = vmatprep.mubr.f32.mxu0 0.0
    %1087 = vmatmul.mubr.f32.gmra.mrb[0].mxu0 %v1020
    %v1088 = vpop.f32.mrb[0].mxu0
    %v1089 = vadd.f32 %v1014, %v1088
    %v1090 = vpop.f32.mrb[0].mxu0
    %1091 = vdwg.mxu0
    %v1092 = vadd.f32 %v1089, %v387
    %v1093 = vxor.u32 %v1092, 2147483648
    %v1094 = vmul.f32 %v1093, 1.442695
    %v1095 = vpow.pop %v1094
    %v1096 = vadd.f32 %v1095, 1.0
    %v1097 = vrcp.pop %v1096
    %v1098 = vmul.f32 1.0, %v1097
    %v1099 = vtanh.pop %v1092
    %v1100 = vmul.f32 %v1098, %v935
    %1102 = vrot.lane.b32.xlu0 %v1099, 64
    %v1103 = vpop.permute.xlu0 %1102
    %v1105 = vmul.f32 %v1098, %v1103
    %1107 = vrot.lane.b32.xlu0 %v1105, 32
    %v1108 = vpop.permute.xlu0 %1107
    %v1110 = vadd.f32 %v1100, %v1108
    %v1111 = vtanh.pop %v1110
    %1113 = vrot.lane.b32.xlu0 %v1111, 64
    %v1114 = vpop.permute.xlu0 %1113
    %v1116 = vmul.f32 %v1098, %v1114
    %1118 = vrot.lane.b32.xlu0 %v1116, 32
    %v1119 = vpop.permute.xlu0 %1118
    %v1120 = vsel %vm231, %v1119, 0
    %1122 = vmatprep.subr.mxu0 0.0
    %1123 = vmatpush1.msra.mxu0 %v215
    %1124 = vmatprep.subr.mxu0 0.0
    %1125 = vmatpush1.msra.mxu0 %v216
    %1126 = vmatprep.subr.mxu0 0.0
    %1127 = vmatpush1.msra.mxu0 %v217
    %1128 = vmatprep.subr.mxu0 0.0
    %1129 = vmatpush1.msra.mxu0 %v218
    %1130 = vmatprep.subr.mxu0 0.0
    %1131 = vmatpush1.msra.mxu0 0.0
    %1132 = vmatprep.subr.mxu0 0.0
    %1133 = vmatpush1.msra.mxu0 0.0
    %1134 = vmatprep.subr.mxu0 0.0
    %1135 = vmatpush1.msra.mxu0 0.0
    %1136 = vmatprep.subr.mxu0 0.0
    %1137 = vmatpush1.msra.mxu0 0.0
    %1138 = vmatprep.subr.mxu0 0.0
    %1139 = vmatpush1.msra.mxu0 0.0
    %1140 = vmatprep.subr.mxu0 0.0
    %1141 = vmatpush1.msra.mxu0 0.0
    %1142 = vmatprep.subr.mxu0 0.0
    %1143 = vmatpush1.msra.mxu0 0.0
    %1144 = vmatprep.subr.mxu0 0.0
    %1145 = vmatpush1.msra.mxu0 0.0
    %1146 = vmatprep.subr.mxu0 0.0
    %1147 = vmatpush1.msra.mxu0 0.0
    %1148 = vmatprep.subr.mxu0 0.0
    %1149 = vmatpush1.msra.mxu0 0.0
    %1150 = vmatprep.subr.mxu0 0.0
    %1151 = vmatpush1.msra.mxu0 0.0
    %1152 = vmatprep.subr.mxu0 0.0
    %1153 = vmatpush1.msra.mxu0 0.0
    %1154 = vmatprep.subr.mxu0 0.0
    %1155 = vmatpush1.msra.mxu0 0.0
    %1156 = vmatprep.subr.mxu0 0.0
    %1157 = vmatpush1.msra.mxu0 0.0
    %1158 = vmatprep.subr.mxu0 0.0
    %1159 = vmatpush1.msra.mxu0 0.0
    %1160 = vmatprep.subr.mxu0 0.0
    %1161 = vmatpush1.msra.mxu0 0.0
    %1162 = vmatprep.subr.mxu0 0.0
    %1163 = vmatpush1.msra.mxu0 0.0
    %1164 = vmatprep.subr.mxu0 0.0
    %1165 = vmatpush1.msra.mxu0 0.0
    %1166 = vmatprep.subr.mxu0 0.0
    %1167 = vmatpush1.msra.mxu0 0.0
    %1168 = vmatprep.subr.mxu0 0.0
    %1169 = vmatpush1.msra.mxu0 0.0
    %1170 = vmatprep.subr.mxu0 0.0
    %1171 = vmatpush1.msra.mxu0 0.0
    %1172 = vmatprep.subr.mxu0 0.0
    %1173 = vmatpush1.msra.mxu0 0.0
    %1174 = vmatprep.subr.mxu0 0.0
    %1175 = vmatpush1.msra.mxu0 0.0
    %1176 = vmatprep.subr.mxu0 0.0
    %1177 = vmatpush1.msra.mxu0 0.0
    %1178 = vmatprep.subr.mxu0 0.0
    %1179 = vmatpush1.msra.mxu0 0.0
    %1180 = vmatprep.subr.mxu0 0.0
    %1181 = vmatpush1.msra.mxu0 0.0
    %1182 = vmatprep.subr.mxu0 0.0
    %1183 = vmatpush1.msra.mxu0 0.0
    %1184 = vmatprep.subr.mxu0 0.0
    %1185 = vmatpush1.msra.mxu0 0.0
    %1186 = vmatprep.mubr.f32.mxu0 0.0
    %1187 = vmatmul.mubr.f32.gmra.mrb[0].mxu0 %v1120
    %v1188 = vpop.f32.mrb[0].mxu0
    %v1189 = vadd.f32 0.0, %v1188
    %v1190 = vpop.f32.mrb[0].mxu0
    %1191 = vdwg.mxu0
    %v1192 = vrot.slane %v212, 5
    %v1193 = vrot.slane %v213, 4
    %v1194 = vsel %vm308, %v1193, %v1192
    %v1195 = vsel %vm310, %v1194, 0
    %1197 = vmatprep.subr.mxu0 0.0
    %1198 = vmatpush1.msra.mxu0 %v214
    %1199 = vmatprep.subr.mxu0 0.0
    %1200 = vmatpush1.msra.mxu0 0.0
    %1201 = vmatprep.subr.mxu0 0.0
    %1202 = vmatpush1.msra.mxu0 0.0
    %1203 = vmatprep.subr.mxu0 0.0
    %1204 = vmatpush1.msra.mxu0 0.0
    %1205 = vmatprep.subr.mxu0 0.0
    %1206 = vmatpush1.msra.mxu0 0.0
    %1207 = vmatprep.subr.mxu0 0.0
    %1208 = vmatpush1.msra.mxu0 0.0
    %1209 = vmatprep.subr.mxu0 0.0
    %1210 = vmatpush1.msra.mxu0 0.0
    %1211 = vmatprep.subr.mxu0 0.0
    %1212 = vmatpush1.msra.mxu0 0.0
    %1213 = vmatprep.subr.mxu0 0.0
    %1214 = vmatpush1.msra.mxu0 0.0
    %1215 = vmatprep.subr.mxu0 0.0
    %1216 = vmatpush1.msra.mxu0 0.0
    %1217 = vmatprep.subr.mxu0 0.0
    %1218 = vmatpush1.msra.mxu0 0.0
    %1219 = vmatprep.subr.mxu0 0.0
    %1220 = vmatpush1.msra.mxu0 0.0
    %1221 = vmatprep.subr.mxu0 0.0
    %1222 = vmatpush1.msra.mxu0 0.0
    %1223 = vmatprep.subr.mxu0 0.0
    %1224 = vmatpush1.msra.mxu0 0.0
    %1225 = vmatprep.subr.mxu0 0.0
    %1226 = vmatpush1.msra.mxu0 0.0
    %1227 = vmatprep.subr.mxu0 0.0
    %1228 = vmatpush1.msra.mxu0 0.0
    %1229 = vmatprep.subr.mxu0 0.0
    %1230 = vmatpush1.msra.mxu0 0.0
    %1231 = vmatprep.subr.mxu0 0.0
    %1232 = vmatpush1.msra.mxu0 0.0
    %1233 = vmatprep.subr.mxu0 0.0
    %1234 = vmatpush1.msra.mxu0 0.0
    %1235 = vmatprep.subr.mxu0 0.0
    %1236 = vmatpush1.msra.mxu0 0.0
    %1237 = vmatprep.subr.mxu0 0.0
    %1238 = vmatpush1.msra.mxu0 0.0
    %1239 = vmatprep.subr.mxu0 0.0
    %1240 = vmatpush1.msra.mxu0 0.0
    %1241 = vmatprep.subr.mxu0 0.0
    %1242 = vmatpush1.msra.mxu0 0.0
    %1243 = vmatprep.subr.mxu0 0.0
    %1244 = vmatpush1.msra.mxu0 0.0
    %1245 = vmatprep.subr.mxu0 0.0
    %1246 = vmatpush1.msra.mxu0 0.0
    %1247 = vmatprep.subr.mxu0 0.0
    %1248 = vmatpush1.msra.mxu0 0.0
    %1249 = vmatprep.subr.mxu0 0.0
    %1250 = vmatpush1.msra.mxu0 0.0
    %1251 = vmatprep.subr.mxu0 0.0
    %1252 = vmatpush1.msra.mxu0 0.0
    %1253 = vmatprep.subr.mxu0 0.0
    %1254 = vmatpush1.msra.mxu0 0.0
    %1255 = vmatprep.subr.mxu0 0.0
    %1256 = vmatpush1.msra.mxu0 0.0
    %1257 = vmatprep.subr.mxu0 0.0
    %1258 = vmatpush1.msra.mxu0 0.0
    %1259 = vmatprep.subr.mxu0 0.0
    %1260 = vmatpush1.msra.mxu0 0.0
    %1261 = vmatprep.mubr.f32.mxu0 0.0
    %1262 = vmatmul.mubr.f32.gmra.mrb[0].mxu0 %v1195
    %v1263 = vpop.f32.mrb[0].mxu0
    %v1264 = vadd.f32 %v1189, %v1263
    %v1265 = vpop.f32.mrb[0].mxu0
    %1266 = vdwg.mxu0
    %v1267 = vadd.f32 %v1264, %v387
    %v1268 = vxor.u32 %v1267, 2147483648
    %v1269 = vmul.f32 %v1268, 1.442695
    %v1270 = vpow.pop %v1269
    %v1271 = vadd.f32 %v1270, 1.0
    %v1272 = vrcp.pop %v1271
    %v1273 = vmul.f32 1.0, %v1272
    %v1274 = vtanh.pop %v1267
    %v1275 = vmul.f32 %v1273, %v1110
    %1277 = vrot.lane.b32.xlu0 %v1274, 64
    %v1278 = vpop.permute.xlu0 %1277
    %v1280 = vmul.f32 %v1273, %v1278
    %1282 = vrot.lane.b32.xlu0 %v1280, 32
    %v1283 = vpop.permute.xlu0 %1282
    %v1285 = vadd.f32 %v1275, %v1283
    %v1286 = vtanh.pop %v1285
    %1288 = vrot.lane.b32.xlu0 %v1286, 64
    %v1289 = vpop.permute.xlu0 %1288
    %v1291 = vmul.f32 %v1273, %v1289
    %1293 = vrot.lane.b32.xlu0 %v1291, 32
    %v1294 = vpop.permute.xlu0 %1293
    %v1295 = vsel %vm231, %v1294, 0
    %1297 = vmatprep.subr.mxu0 0.0
    %1298 = vmatpush1.msra.mxu0 %v215
    %1299 = vmatprep.subr.mxu0 0.0
    %1300 = vmatpush1.msra.mxu0 %v216
    %1301 = vmatprep.subr.mxu0 0.0
    %1302 = vmatpush1.msra.mxu0 %v217
    %1303 = vmatprep.subr.mxu0 0.0
    %1304 = vmatpush1.msra.mxu0 %v218
    %1305 = vmatprep.subr.mxu0 0.0
    %1306 = vmatpush1.msra.mxu0 0.0
    %1307 = vmatprep.subr.mxu0 0.0
    %1308 = vmatpush1.msra.mxu0 0.0
    %1309 = vmatprep.subr.mxu0 0.0
    %1310 = vmatpush1.msra.mxu0 0.0
    %1311 = vmatprep.subr.mxu0 0.0
    %1312 = vmatpush1.msra.mxu0 0.0
    %1313 = vmatprep.subr.mxu0 0.0
    %1314 = vmatpush1.msra.mxu0 0.0
    %1315 = vmatprep.subr.mxu0 0.0
    %1316 = vmatpush1.msra.mxu0 0.0
    %1317 = vmatprep.subr.mxu0 0.0
    %1318 = vmatpush1.msra.mxu0 0.0
    %1319 = vmatprep.subr.mxu0 0.0
    %1320 = vmatpush1.msra.mxu0 0.0
    %1321 = vmatprep.subr.mxu0 0.0
    %1322 = vmatpush1.msra.mxu0 0.0
    %1323 = vmatprep.subr.mxu0 0.0
    %1324 = vmatpush1.msra.mxu0 0.0
    %1325 = vmatprep.subr.mxu0 0.0
    %1326 = vmatpush1.msra.mxu0 0.0
    %1327 = vmatprep.subr.mxu0 0.0
    %1328 = vmatpush1.msra.mxu0 0.0
    %1329 = vmatprep.subr.mxu0 0.0
    %1330 = vmatpush1.msra.mxu0 0.0
    %1331 = vmatprep.subr.mxu0 0.0
    %1332 = vmatpush1.msra.mxu0 0.0
    %1333 = vmatprep.subr.mxu0 0.0
    %1334 = vmatpush1.msra.mxu0 0.0
    %1335 = vmatprep.subr.mxu0 0.0
    %1336 = vmatpush1.msra.mxu0 0.0
    %1337 = vmatprep.subr.mxu0 0.0
    %1338 = vmatpush1.msra.mxu0 0.0
    %1339 = vmatprep.subr.mxu0 0.0
    %1340 = vmatpush1.msra.mxu0 0.0
    %1341 = vmatprep.subr.mxu0 0.0
    %1342 = vmatpush1.msra.mxu0 0.0
    %1343 = vmatprep.subr.mxu0 0.0
    %1344 = vmatpush1.msra.mxu0 0.0
    %1345 = vmatprep.subr.mxu0 0.0
    %1346 = vmatpush1.msra.mxu0 0.0
    %1347 = vmatprep.subr.mxu0 0.0
    %1348 = vmatpush1.msra.mxu0 0.0
    %1349 = vmatprep.subr.mxu0 0.0
    %1350 = vmatpush1.msra.mxu0 0.0
    %1351 = vmatprep.subr.mxu0 0.0
    %1352 = vmatpush1.msra.mxu0 0.0
    %1353 = vmatprep.subr.mxu0 0.0
    %1354 = vmatpush1.msra.mxu0 0.0
    %1355 = vmatprep.subr.mxu0 0.0
    %1356 = vmatpush1.msra.mxu0 0.0
    %1357 = vmatprep.subr.mxu0 0.0
    %1358 = vmatpush1.msra.mxu0 0.0
    %1359 = vmatprep.subr.mxu0 0.0
    %1360 = vmatpush1.msra.mxu0 0.0
    %1361 = vmatprep.mubr.f32.mxu0 0.0
    %1362 = vmatmul.mubr.f32.gmra.mrb[0].mxu0 %v1295
    %v1363 = vpop.f32.mrb[0].mxu0
    %v1364 = vadd.f32 0.0, %v1363
    %v1365 = vpop.f32.mrb[0].mxu0
    %1366 = vdwg.mxu0
    %v1367 = vrot.slane %v212, 6
    %v1368 = vrot.slane %v213, 5
    %v1369 = vsel %vm308, %v1368, %v1367
    %v1370 = vsel %vm310, %v1369, 0
    %1372 = vmatprep.subr.mxu0 0.0
    %1373 = vmatpush1.msra.mxu0 %v214
    %1374 = vmatprep.subr.mxu0 0.0
    %1375 = vmatpush1.msra.mxu0 0.0
    %1376 = vmatprep.subr.mxu0 0.0
    %1377 = vmatpush1.msra.mxu0 0.0
    %1378 = vmatprep.subr.mxu0 0.0
    %1379 = vmatpush1.msra.mxu0 0.0
    %1380 = vmatprep.subr.mxu0 0.0
    %1381 = vmatpush1.msra.mxu0 0.0
    %1382 = vmatprep.subr.mxu0 0.0
    %1383 = vmatpush1.msra.mxu0 0.0
    %1384 = vmatprep.subr.mxu0 0.0
    %1385 = vmatpush1.msra.mxu0 0.0
    %1386 = vmatprep.subr.mxu0 0.0
    %1387 = vmatpush1.msra.mxu0 0.0
    %1388 = vmatprep.subr.mxu0 0.0
    %1389 = vmatpush1.msra.mxu0 0.0
    %1390 = vmatprep.subr.mxu0 0.0
    %1391 = vmatpush1.msra.mxu0 0.0
    %1392 = vmatprep.subr.mxu0 0.0
    %1393 = vmatpush1.msra.mxu0 0.0
    %1394 = vmatprep.subr.mxu0 0.0
    %1395 = vmatpush1.msra.mxu0 0.0
    %1396 = vmatprep.subr.mxu0 0.0
    %1397 = vmatpush1.msra.mxu0 0.0
    %1398 = vmatprep.subr.mxu0 0.0
    %1399 = vmatpush1.msra.mxu0 0.0
    %1400 = vmatprep.subr.mxu0 0.0
    %1401 = vmatpush1.msra.mxu0 0.0
    %1402 = vmatprep.subr.mxu0 0.0
    %1403 = vmatpush1.msra.mxu0 0.0
    %1404 = vmatprep.subr.mxu0 0.0
    %1405 = vmatpush1.msra.mxu0 0.0
    %1406 = vmatprep.subr.mxu0 0.0
    %1407 = vmatpush1.msra.mxu0 0.0
    %1408 = vmatprep.subr.mxu0 0.0
    %1409 = vmatpush1.msra.mxu0 0.0
    %1410 = vmatprep.subr.mxu0 0.0
    %1411 = vmatpush1.msra.mxu0 0.0
    %1412 = vmatprep.subr.mxu0 0.0
    %1413 = vmatpush1.msra.mxu0 0.0
    %1414 = vmatprep.subr.mxu0 0.0
    %1415 = vmatpush1.msra.mxu0 0.0
    %1416 = vmatprep.subr.mxu0 0.0
    %1417 = vmatpush1.msra.mxu0 0.0
    %1418 = vmatprep.subr.mxu0 0.0
    %1419 = vmatpush1.msra.mxu0 0.0
    %1420 = vmatprep.subr.mxu0 0.0
    %1421 = vmatpush1.msra.mxu0 0.0
    %1422 = vmatprep.subr.mxu0 0.0
    %1423 = vmatpush1.msra.mxu0 0.0
    %1424 = vmatprep.subr.mxu0 0.0
    %1425 = vmatpush1.msra.mxu0 0.0
    %1426 = vmatprep.subr.mxu0 0.0
    %1427 = vmatpush1.msra.mxu0 0.0
    %1428 = vmatprep.subr.mxu0 0.0
    %1429 = vmatpush1.msra.mxu0 0.0
    %1430 = vmatprep.subr.mxu0 0.0
    %1431 = vmatpush1.msra.mxu0 0.0
    %1432 = vmatprep.subr.mxu0 0.0
    %1433 = vmatpush1.msra.mxu0 0.0
    %1434 = vmatprep.subr.mxu0 0.0
    %1435 = vmatpush1.msra.mxu0 0.0
    %1436 = vmatprep.mubr.f32.mxu0 0.0
    %1437 = vmatmul.mubr.f32.gmra.mrb[0].mxu0 %v1370
    %v1438 = vpop.f32.mrb[0].mxu0
    %v1439 = vadd.f32 %v1364, %v1438
    %v1440 = vpop.f32.mrb[0].mxu0
    %1441 = vdwg.mxu0
    %v1442 = vadd.f32 %v1439, %v387
    %v1443 = vxor.u32 %v1442, 2147483648
    %v1444 = vmul.f32 %v1443, 1.442695
    %v1445 = vpow.pop %v1444
    %v1446 = vadd.f32 %v1445, 1.0
    %v1447 = vrcp.pop %v1446
    %v1448 = vmul.f32 1.0, %v1447
    %v1449 = vtanh.pop %v1442
    %v1450 = vmul.f32 %v1448, %v1285
    %1452 = vrot.lane.b32.xlu0 %v1449, 64
    %v1453 = vpop.permute.xlu0 %1452
    %v1455 = vmul.f32 %v1448, %v1453
    %1457 = vrot.lane.b32.xlu0 %v1455, 32
    %v1458 = vpop.permute.xlu0 %1457
    %v1460 = vadd.f32 %v1450, %v1458
    %v1461 = vtanh.pop %v1460
    %1463 = vrot.lane.b32.xlu0 %v1461, 64
    %v1464 = vpop.permute.xlu0 %1463
    %v1466 = vmul.f32 %v1448, %v1464
    %1468 = vrot.lane.b32.xlu0 %v1466, 32
    %v1469 = vpop.permute.xlu0 %1468
    %v1470 = vsel %vm231, %v1469, 0
    %1472 = vmatprep.subr.mxu0 0.0
    %1473 = vmatpush1.msra.mxu0 %v215
    %1474 = vmatprep.subr.mxu0 0.0
    %1475 = vmatpush1.msra.mxu0 %v216
    %1476 = vmatprep.subr.mxu0 0.0
    %1477 = vmatpush1.msra.mxu0 %v217
    %1478 = vmatprep.subr.mxu0 0.0
    %1479 = vmatpush1.msra.mxu0 %v218
    %1480 = vmatprep.subr.mxu0 0.0
    %1481 = vmatpush1.msra.mxu0 0.0
    %1482 = vmatprep.subr.mxu0 0.0
    %1483 = vmatpush1.msra.mxu0 0.0
    %1484 = vmatprep.subr.mxu0 0.0
    %1485 = vmatpush1.msra.mxu0 0.0
    %1486 = vmatprep.subr.mxu0 0.0
    %1487 = vmatpush1.msra.mxu0 0.0
    %1488 = vmatprep.subr.mxu0 0.0
    %1489 = vmatpush1.msra.mxu0 0.0
    %1490 = vmatprep.subr.mxu0 0.0
    %1491 = vmatpush1.msra.mxu0 0.0
    %1492 = vmatprep.subr.mxu0 0.0
    %1493 = vmatpush1.msra.mxu0 0.0
    %1494 = vmatprep.subr.mxu0 0.0
    %1495 = vmatpush1.msra.mxu0 0.0
    %1496 = vmatprep.subr.mxu0 0.0
    %1497 = vmatpush1.msra.mxu0 0.0
    %1498 = vmatprep.subr.mxu0 0.0
    %1499 = vmatpush1.msra.mxu0 0.0
    %1500 = vmatprep.subr.mxu0 0.0
    %1501 = vmatpush1.msra.mxu0 0.0
    %1502 = vmatprep.subr.mxu0 0.0
    %1503 = vmatpush1.msra.mxu0 0.0
    %1504 = vmatprep.subr.mxu0 0.0
    %1505 = vmatpush1.msra.mxu0 0.0
    %1506 = vmatprep.subr.mxu0 0.0
    %1507 = vmatpush1.msra.mxu0 0.0
    %1508 = vmatprep.subr.mxu0 0.0
    %1509 = vmatpush1.msra.mxu0 0.0
    %1510 = vmatprep.subr.mxu0 0.0
    %1511 = vmatpush1.msra.mxu0 0.0
    %1512 = vmatprep.subr.mxu0 0.0
    %1513 = vmatpush1.msra.mxu0 0.0
    %1514 = vmatprep.subr.mxu0 0.0
    %1515 = vmatpush1.msra.mxu0 0.0
    %1516 = vmatprep.subr.mxu0 0.0
    %1517 = vmatpush1.msra.mxu0 0.0
    %1518 = vmatprep.subr.mxu0 0.0
    %1519 = vmatpush1.msra.mxu0 0.0
    %1520 = vmatprep.subr.mxu0 0.0
    %1521 = vmatpush1.msra.mxu0 0.0
    %1522 = vmatprep.subr.mxu0 0.0
    %1523 = vmatpush1.msra.mxu0 0.0
    %1524 = vmatprep.subr.mxu0 0.0
    %1525 = vmatpush1.msra.mxu0 0.0
    %1526 = vmatprep.subr.mxu0 0.0
    %1527 = vmatpush1.msra.mxu0 0.0
    %1528 = vmatprep.subr.mxu0 0.0
    %1529 = vmatpush1.msra.mxu0 0.0
    %1530 = vmatprep.subr.mxu0 0.0
    %1531 = vmatpush1.msra.mxu0 0.0
    %1532 = vmatprep.subr.mxu0 0.0
    %1533 = vmatpush1.msra.mxu0 0.0
    %1534 = vmatprep.subr.mxu0 0.0
    %1535 = vmatpush1.msra.mxu0 0.0
    %1536 = vmatprep.mubr.f32.mxu0 0.0
    %1537 = vmatmul.mubr.f32.gmra.mrb[0].mxu0 %v1470
    %v1538 = vpop.f32.mrb[0].mxu0
    %v1539 = vadd.f32 0.0, %v1538
    %v1540 = vpop.f32.mrb[0].mxu0
    %1541 = vdwg.mxu0
    %v1542 = vrot.slane %v212, 7
    %v1543 = vrot.slane %v213, 6
    %v1544 = vsel %vm308, %v1543, %v1542
    %v1545 = vsel %vm310, %v1544, 0
    %1547 = vmatprep.subr.mxu0 0.0
    %1548 = vmatpush1.msra.mxu0 %v214
    %1549 = vmatprep.subr.mxu0 0.0
    %1550 = vmatpush1.msra.mxu0 0.0
    %1551 = vmatprep.subr.mxu0 0.0
    %1552 = vmatpush1.msra.mxu0 0.0
    %1553 = vmatprep.subr.mxu0 0.0
    %1554 = vmatpush1.msra.mxu0 0.0
    %1555 = vmatprep.subr.mxu0 0.0
    %1556 = vmatpush1.msra.mxu0 0.0
    %1557 = vmatprep.subr.mxu0 0.0
    %1558 = vmatpush1.msra.mxu0 0.0
    %1559 = vmatprep.subr.mxu0 0.0
    %1560 = vmatpush1.msra.mxu0 0.0
    %1561 = vmatprep.subr.mxu0 0.0
    %1562 = vmatpush1.msra.mxu0 0.0
    %1563 = vmatprep.subr.mxu0 0.0
    %1564 = vmatpush1.msra.mxu0 0.0
    %1565 = vmatprep.subr.mxu0 0.0
    %1566 = vmatpush1.msra.mxu0 0.0
    %1567 = vmatprep.subr.mxu0 0.0
    %1568 = vmatpush1.msra.mxu0 0.0
    %1569 = vmatprep.subr.mxu0 0.0
    %1570 = vmatpush1.msra.mxu0 0.0
    %1571 = vmatprep.subr.mxu0 0.0
    %1572 = vmatpush1.msra.mxu0 0.0
    %1573 = vmatprep.subr.mxu0 0.0
    %1574 = vmatpush1.msra.mxu0 0.0
    %1575 = vmatprep.subr.mxu0 0.0
    %1576 = vmatpush1.msra.mxu0 0.0
    %1577 = vmatprep.subr.mxu0 0.0
    %1578 = vmatpush1.msra.mxu0 0.0
    %1579 = vmatprep.subr.mxu0 0.0
    %1580 = vmatpush1.msra.mxu0 0.0
    %1581 = vmatprep.subr.mxu0 0.0
    %1582 = vmatpush1.msra.mxu0 0.0
    %1583 = vmatprep.subr.mxu0 0.0
    %1584 = vmatpush1.msra.mxu0 0.0
    %1585 = vmatprep.subr.mxu0 0.0
    %1586 = vmatpush1.msra.mxu0 0.0
    %1587 = vmatprep.subr.mxu0 0.0
    %1588 = vmatpush1.msra.mxu0 0.0
    %1589 = vmatprep.subr.mxu0 0.0
    %1590 = vmatpush1.msra.mxu0 0.0
    %1591 = vmatprep.subr.mxu0 0.0
    %1592 = vmatpush1.msra.mxu0 0.0
    %1593 = vmatprep.subr.mxu0 0.0
    %1594 = vmatpush1.msra.mxu0 0.0
    %1595 = vmatprep.subr.mxu0 0.0
    %1596 = vmatpush1.msra.mxu0 0.0
    %1597 = vmatprep.subr.mxu0 0.0
    %1598 = vmatpush1.msra.mxu0 0.0
    %1599 = vmatprep.subr.mxu0 0.0
    %1600 = vmatpush1.msra.mxu0 0.0
    %1601 = vmatprep.subr.mxu0 0.0
    %1602 = vmatpush1.msra.mxu0 0.0
    %1603 = vmatprep.subr.mxu0 0.0
    %1604 = vmatpush1.msra.mxu0 0.0
    %1605 = vmatprep.subr.mxu0 0.0
    %1606 = vmatpush1.msra.mxu0 0.0
    %1607 = vmatprep.subr.mxu0 0.0
    %1608 = vmatpush1.msra.mxu0 0.0
    %1609 = vmatprep.subr.mxu0 0.0
    %1610 = vmatpush1.msra.mxu0 0.0
    %1611 = vmatprep.mubr.f32.mxu0 0.0
    %1612 = vmatmul.mubr.f32.gmra.mrb[0].mxu0 %v1545
    %v1613 = vpop.f32.mrb[0].mxu0
    %v1614 = vadd.f32 %v1539, %v1613
    %v1615 = vpop.f32.mrb[0].mxu0
    %1616 = vdwg.mxu0
    %v1617 = vadd.f32 %v1614, %v387
    %v1618 = vxor.u32 %v1617, 2147483648
    %v1619 = vmul.f32 %v1618, 1.442695
    %v1620 = vpow.pop %v1619
    %v1621 = vadd.f32 %v1620, 1.0
    %v1622 = vrcp.pop %v1621
    %v1623 = vmul.f32 1.0, %v1622
    %v1624 = vtanh.pop %v1617
    %v1625 = vmul.f32 %v1623, %v1460
    %1627 = vrot.lane.b32.xlu0 %v1624, 64
    %v1628 = vpop.permute.xlu0 %1627
    %v1630 = vmul.f32 %v1623, %v1628
    %1632 = vrot.lane.b32.xlu0 %v1630, 32
    %v1633 = vpop.permute.xlu0 %1632
    %v1635 = vadd.f32 %v1625, %v1633
    %v1636 = vtanh.pop %v1635
    %1638 = vrot.lane.b32.xlu0 %v1636, 64
    %v1639 = vpop.permute.xlu0 %1638
    %v1641 = vmul.f32 %v1623, %v1639
    %1643 = vrot.lane.b32.xlu0 %v1641, 32
    %v1644 = vpop.permute.xlu0 %1643
    %v1645 = vsel %vm231, %v1644, 0
    %1647 = vmatprep.subr.mxu0 0.0
    %1648 = vmatpush1.msra.mxu0 %v224
    %1649 = vmatprep.subr.mxu0 0.0
    %1650 = vmatpush1.msra.mxu0 %v225
    %1651 = vmatprep.subr.mxu0 0.0
    %1652 = vmatpush1.msra.mxu0 %v226
    %1653 = vmatprep.subr.mxu0 0.0
    %1654 = vmatpush1.msra.mxu0 %v227
    %1655 = vmatprep.subr.mxu0 0.0
    %1656 = vmatpush1.msra.mxu0 0.0
    %1657 = vmatprep.subr.mxu0 0.0
    %1658 = vmatpush1.msra.mxu0 0.0
    %1659 = vmatprep.subr.mxu0 0.0
    %1660 = vmatpush1.msra.mxu0 0.0
    %1661 = vmatprep.subr.mxu0 0.0
    %1662 = vmatpush1.msra.mxu0 0.0
    %1663 = vmatprep.subr.mxu0 0.0
    %1664 = vmatpush1.msra.mxu0 0.0
    %1665 = vmatprep.subr.mxu0 0.0
    %1666 = vmatpush1.msra.mxu0 0.0
    %1667 = vmatprep.subr.mxu0 0.0
    %1668 = vmatpush1.msra.mxu0 0.0
    %1669 = vmatprep.subr.mxu0 0.0
    %1670 = vmatpush1.msra.mxu0 0.0
    %1671 = vmatprep.subr.mxu0 0.0
    %1672 = vmatpush1.msra.mxu0 0.0
    %1673 = vmatprep.subr.mxu0 0.0
    %1674 = vmatpush1.msra.mxu0 0.0
    %1675 = vmatprep.subr.mxu0 0.0
    %1676 = vmatpush1.msra.mxu0 0.0
    %1677 = vmatprep.subr.mxu0 0.0
    %1678 = vmatpush1.msra.mxu0 0.0
    %1679 = vmatprep.subr.mxu0 0.0
    %1680 = vmatpush1.msra.mxu0 0.0
    %1681 = vmatprep.subr.mxu0 0.0
    %1682 = vmatpush1.msra.mxu0 0.0
    %1683 = vmatprep.subr.mxu0 0.0
    %1684 = vmatpush1.msra.mxu0 0.0
    %1685 = vmatprep.subr.mxu0 0.0
    %1686 = vmatpush1.msra.mxu0 0.0
    %1687 = vmatprep.subr.mxu0 0.0
    %1688 = vmatpush1.msra.mxu0 0.0
    %1689 = vmatprep.subr.mxu0 0.0
    %1690 = vmatpush1.msra.mxu0 0.0
    %1691 = vmatprep.subr.mxu0 0.0
    %1692 = vmatpush1.msra.mxu0 0.0
    %1693 = vmatprep.subr.mxu0 0.0
    %1694 = vmatpush1.msra.mxu0 0.0
    %1695 = vmatprep.subr.mxu0 0.0
    %1696 = vmatpush1.msra.mxu0 0.0
    %1697 = vmatprep.subr.mxu0 0.0
    %1698 = vmatpush1.msra.mxu0 0.0
    %1699 = vmatprep.subr.mxu0 0.0
    %1700 = vmatpush1.msra.mxu0 0.0
    %1701 = vmatprep.subr.mxu0 0.0
    %1702 = vmatpush1.msra.mxu0 0.0
    %1703 = vmatprep.subr.mxu0 0.0
    %1704 = vmatpush1.msra.mxu0 0.0
    %1705 = vmatprep.subr.mxu0 0.0
    %1706 = vmatpush1.msra.mxu0 0.0
    %1707 = vmatprep.subr.mxu0 0.0
    %1708 = vmatpush1.msra.mxu0 0.0
    %1709 = vmatprep.subr.mxu0 0.0
    %1710 = vmatpush1.msra.mxu0 0.0
    %1711 = vmatprep.mubr.f32.mxu0 0.0
    %1712 = vmatmul.mubr.f32.gmra.mrb[0].mxu0 %v1645
    %v1713 = vpop.f32.mrb[0].mxu0
    %v1714 = vadd.f32 0.0, %v1713
    %v1715 = vpop.f32.mrb[0].mxu0
    %1716 = vdwg.mxu0
    %1717 = vmatprep.subr.mxu0 0.0
    %1718 = vmatpush1.msra.mxu0 %v220
    %1719 = vmatprep.subr.mxu0 0.0
    %1720 = vmatpush1.msra.mxu0 %v221
    %1721 = vmatprep.subr.mxu0 0.0
    %1722 = vmatpush1.msra.mxu0 %v222
    %1723 = vmatprep.subr.mxu0 0.0
    %1724 = vmatpush1.msra.mxu0 %v223
    %1725 = vmatprep.subr.mxu0 0.0
    %1726 = vmatpush1.msra.mxu0 0.0
    %1727 = vmatprep.subr.mxu0 0.0
    %1728 = vmatpush1.msra.mxu0 0.0
    %1729 = vmatprep.subr.mxu0 0.0
    %1730 = vmatpush1.msra.mxu0 0.0
    %1731 = vmatprep.subr.mxu0 0.0
    %1732 = vmatpush1.msra.mxu0 0.0
    %1733 = vmatprep.subr.mxu0 0.0
    %1734 = vmatpush1.msra.mxu0 0.0
    %1735 = vmatprep.subr.mxu0 0.0
    %1736 = vmatpush1.msra.mxu0 0.0
    %1737 = vmatprep.subr.mxu0 0.0
    %1738 = vmatpush1.msra.mxu0 0.0
    %1739 = vmatprep.subr.mxu0 0.0
    %1740 = vmatpush1.msra.mxu0 0.0
    %1741 = vmatprep.subr.mxu0 0.0
    %1742 = vmatpush1.msra.mxu0 0.0
    %1743 = vmatprep.subr.mxu0 0.0
    %1744 = vmatpush1.msra.mxu0 0.0
    %1745 = vmatprep.subr.mxu0 0.0
    %1746 = vmatpush1.msra.mxu0 0.0
    %1747 = vmatprep.subr.mxu0 0.0
    %1748 = vmatpush1.msra.mxu0 0.0
    %1749 = vmatprep.subr.mxu0 0.0
    %1750 = vmatpush1.msra.mxu0 0.0
    %1751 = vmatprep.subr.mxu0 0.0
    %1752 = vmatpush1.msra.mxu0 0.0
    %1753 = vmatprep.subr.mxu0 0.0
    %1754 = vmatpush1.msra.mxu0 0.0
    %1755 = vmatprep.subr.mxu0 0.0
    %1756 = vmatpush1.msra.mxu0 0.0
    %1757 = vmatprep.subr.mxu0 0.0
    %1758 = vmatpush1.msra.mxu0 0.0
    %1759 = vmatprep.subr.mxu0 0.0
    %1760 = vmatpush1.msra.mxu0 0.0
    %1761 = vmatprep.subr.mxu0 0.0
    %1762 = vmatpush1.msra.mxu0 0.0
    %1763 = vmatprep.subr.mxu0 0.0
    %1764 = vmatpush1.msra.mxu0 0.0
    %1765 = vmatprep.subr.mxu0 0.0
    %1766 = vmatpush1.msra.mxu0 0.0
    %1767 = vmatprep.subr.mxu0 0.0
    %1768 = vmatpush1.msra.mxu0 0.0
    %1769 = vmatprep.subr.mxu0 0.0
    %1770 = vmatpush1.msra.mxu0 0.0
    %1771 = vmatprep.subr.mxu0 0.0
    %1772 = vmatpush1.msra.mxu0 0.0
    %1773 = vmatprep.subr.mxu0 0.0
    %1774 = vmatpush1.msra.mxu0 0.0
    %1775 = vmatprep.subr.mxu0 0.0
    %1776 = vmatpush1.msra.mxu0 0.0
    %1777 = vmatprep.subr.mxu0 0.0
    %1778 = vmatpush1.msra.mxu0 0.0
    %1779 = vmatprep.subr.mxu0 0.0
    %1780 = vmatpush1.msra.mxu0 0.0
    %1781 = vmatprep.mubr.f32.mxu0 0.0
    %1782 = vmatmul.mubr.f32.gmra.mrb[0].mxu0 %v421
    %v1783 = vpop.f32.mrb[0].mxu0
    %v1784 = vadd.f32 %v1714, %v1783
    %v1785 = vpop.f32.mrb[0].mxu0
    %1786 = vdwg.mxu0
    %v1788 = vlaneseq
    %v1789 = vshrl.u32 %v1788, 7
    %v1790 = vsub.s32 0, %v1789
    %v1791 = vrot.slane %v228, %v1790
    %v1793 = vadd.f32 %v1784, %v1791
    %v1794 = vxor.u32 %v1793, 2147483648
    %v1795 = vmul.f32 %v1794, 1.442695
    %v1796 = vpow.pop %v1795
    %v1797 = vadd.f32 %v1796, 1.0
    %v1798 = vrcp.pop %v1797
    %v1799 = vmul.f32 1.0, %v1798
    %v1800 = vtanh.pop %v1793
    %v1801 = vmul.f32 %v1799, %v1635
    %1803 = vrot.lane.b32.xlu0 %v1800, 64
    %v1804 = vpop.permute.xlu0 %1803
    %v1806 = vmul.f32 %v1799, %v1804
    %1808 = vrot.lane.b32.xlu0 %v1806, 32
    %v1809 = vpop.permute.xlu0 %1808
    %v1811 = vadd.f32 %v1801, %v1809
    %v1812 = vtanh.pop %v1811
    %1814 = vrot.lane.b32.xlu0 %v1812, 64
    %v1815 = vpop.permute.xlu0 %1814
    %v1817 = vmul.f32 %v1799, %v1815
    %1819 = vrot.lane.b32.xlu0 %v1817, 32
    %v1820 = vpop.permute.xlu0 %1819
    %vm1822 = vcmask 254976
    %1823 = vst.msk [vmem:[#allocation2] sm:$0x3] %vm1822, %v1820
    %v1824 = vsel %vm231, %v1820, 0
    %1826 = vmatprep.subr.mxu0 0.0
    %1827 = vmatpush1.msra.mxu0 %v224
    %1828 = vmatprep.subr.mxu0 0.0
    %1829 = vmatpush1.msra.mxu0 %v225
    %1830 = vmatprep.subr.mxu0 0.0
    %1831 = vmatpush1.msra.mxu0 %v226
    %1832 = vmatprep.subr.mxu0 0.0
    %1833 = vmatpush1.msra.mxu0 %v227
    %1834 = vmatprep.subr.mxu0 0.0
    %1835 = vmatpush1.msra.mxu0 0.0
    %1836 = vmatprep.subr.mxu0 0.0
    %1837 = vmatpush1.msra.mxu0 0.0
    %1838 = vmatprep.subr.mxu0 0.0
    %1839 = vmatpush1.msra.mxu0 0.0
    %1840 = vmatprep.subr.mxu0 0.0
    %1841 = vmatpush1.msra.mxu0 0.0
    %1842 = vmatprep.subr.mxu0 0.0
    %1843 = vmatpush1.msra.mxu0 0.0
    %1844 = vmatprep.subr.mxu0 0.0
    %1845 = vmatpush1.msra.mxu0 0.0
    %1846 = vmatprep.subr.mxu0 0.0
    %1847 = vmatpush1.msra.mxu0 0.0
    %1848 = vmatprep.subr.mxu0 0.0
    %1849 = vmatpush1.msra.mxu0 0.0
    %1850 = vmatprep.subr.mxu0 0.0
    %1851 = vmatpush1.msra.mxu0 0.0
    %1852 = vmatprep.subr.mxu0 0.0
    %1853 = vmatpush1.msra.mxu0 0.0
    %1854 = vmatprep.subr.mxu0 0.0
    %1855 = vmatpush1.msra.mxu0 0.0
    %1856 = vmatprep.subr.mxu0 0.0
    %1857 = vmatpush1.msra.mxu0 0.0
    %1858 = vmatprep.subr.mxu0 0.0
    %1859 = vmatpush1.msra.mxu0 0.0
    %1860 = vmatprep.subr.mxu0 0.0
    %1861 = vmatpush1.msra.mxu0 0.0
    %1862 = vmatprep.subr.mxu0 0.0
    %1863 = vmatpush1.msra.mxu0 0.0
    %1864 = vmatprep.subr.mxu0 0.0
    %1865 = vmatpush1.msra.mxu0 0.0
    %1866 = vmatprep.subr.mxu0 0.0
    %1867 = vmatpush1.msra.mxu0 0.0
    %1868 = vmatprep.subr.mxu0 0.0
    %1869 = vmatpush1.msra.mxu0 0.0
    %1870 = vmatprep.subr.mxu0 0.0
    %1871 = vmatpush1.msra.mxu0 0.0
    %1872 = vmatprep.subr.mxu0 0.0
    %1873 = vmatpush1.msra.mxu0 0.0
    %1874 = vmatprep.subr.mxu0 0.0
    %1875 = vmatpush1.msra.mxu0 0.0
    %1876 = vmatprep.subr.mxu0 0.0
    %1877 = vmatpush1.msra.mxu0 0.0
    %1878 = vmatprep.subr.mxu0 0.0
    %1879 = vmatpush1.msra.mxu0 0.0
    %1880 = vmatprep.subr.mxu0 0.0
    %1881 = vmatpush1.msra.mxu0 0.0
    %1882 = vmatprep.subr.mxu0 0.0
    %1883 = vmatpush1.msra.mxu0 0.0
    %1884 = vmatprep.subr.mxu0 0.0
    %1885 = vmatpush1.msra.mxu0 0.0
    %1886 = vmatprep.subr.mxu0 0.0
    %1887 = vmatpush1.msra.mxu0 0.0
    %1888 = vmatprep.subr.mxu0 0.0
    %1889 = vmatpush1.msra.mxu0 0.0
    %1890 = vmatprep.mubr.f32.mxu0 0.0
    %1891 = vmatmul.mubr.f32.gmra.mrb[0].mxu0 %v1824
    %v1892 = vpop.f32.mrb[0].mxu0
    %v1893 = vadd.f32 0.0, %v1892
    %v1894 = vpop.f32.mrb[0].mxu0
    %1895 = vdwg.mxu0
    %1896 = vmatprep.subr.mxu0 0.0
    %1897 = vmatpush1.msra.mxu0 %v220
    %1898 = vmatprep.subr.mxu0 0.0
    %1899 = vmatpush1.msra.mxu0 %v221
    %1900 = vmatprep.subr.mxu0 0.0
    %1901 = vmatpush1.msra.mxu0 %v222
    %1902 = vmatprep.subr.mxu0 0.0
    %1903 = vmatpush1.msra.mxu0 %v223
    %1904 = vmatprep.subr.mxu0 0.0
    %1905 = vmatpush1.msra.mxu0 0.0
    %1906 = vmatprep.subr.mxu0 0.0
    %1907 = vmatpush1.msra.mxu0 0.0
    %1908 = vmatprep.subr.mxu0 0.0
    %1909 = vmatpush1.msra.mxu0 0.0
    %1910 = vmatprep.subr.mxu0 0.0
    %1911 = vmatpush1.msra.mxu0 0.0
    %1912 = vmatprep.subr.mxu0 0.0
    %1913 = vmatpush1.msra.mxu0 0.0
    %1914 = vmatprep.subr.mxu0 0.0
    %1915 = vmatpush1.msra.mxu0 0.0
    %1916 = vmatprep.subr.mxu0 0.0
    %1917 = vmatpush1.msra.mxu0 0.0
    %1918 = vmatprep.subr.mxu0 0.0
    %1919 = vmatpush1.msra.mxu0 0.0
    %1920 = vmatprep.subr.mxu0 0.0
    %1921 = vmatpush1.msra.mxu0 0.0
    %1922 = vmatprep.subr.mxu0 0.0
    %1923 = vmatpush1.msra.mxu0 0.0
    %1924 = vmatprep.subr.mxu0 0.0
    %1925 = vmatpush1.msra.mxu0 0.0
    %1926 = vmatprep.subr.mxu0 0.0
    %1927 = vmatpush1.msra.mxu0 0.0
    %1928 = vmatprep.subr.mxu0 0.0
    %1929 = vmatpush1.msra.mxu0 0.0
    %1930 = vmatprep.subr.mxu0 0.0
    %1931 = vmatpush1.msra.mxu0 0.0
    %1932 = vmatprep.subr.mxu0 0.0
    %1933 = vmatpush1.msra.mxu0 0.0
    %1934 = vmatprep.subr.mxu0 0.0
    %1935 = vmatpush1.msra.mxu0 0.0
    %1936 = vmatprep.subr.mxu0 0.0
    %1937 = vmatpush1.msra.mxu0 0.0
    %1938 = vmatprep.subr.mxu0 0.0
    %1939 = vmatpush1.msra.mxu0 0.0
    %1940 = vmatprep.subr.mxu0 0.0
    %1941 = vmatpush1.msra.mxu0 0.0
    %1942 = vmatprep.subr.mxu0 0.0
    %1943 = vmatpush1.msra.mxu0 0.0
    %1944 = vmatprep.subr.mxu0 0.0
    %1945 = vmatpush1.msra.mxu0 0.0
    %1946 = vmatprep.subr.mxu0 0.0
    %1947 = vmatpush1.msra.mxu0 0.0
    %1948 = vmatprep.subr.mxu0 0.0
    %1949 = vmatpush1.msra.mxu0 0.0
    %1950 = vmatprep.subr.mxu0 0.0
    %1951 = vmatpush1.msra.mxu0 0.0
    %1952 = vmatprep.subr.mxu0 0.0
    %1953 = vmatpush1.msra.mxu0 0.0
    %1954 = vmatprep.subr.mxu0 0.0
    %1955 = vmatpush1.msra.mxu0 0.0
    %1956 = vmatprep.subr.mxu0 0.0
    %1957 = vmatpush1.msra.mxu0 0.0
    %1958 = vmatprep.subr.mxu0 0.0
    %1959 = vmatpush1.msra.mxu0 0.0
    %1960 = vmatprep.mubr.f32.mxu0 0.0
    %1961 = vmatmul.mubr.f32.gmra.mrb[0].mxu0 %v595
    %v1962 = vpop.f32.mrb[0].mxu0
    %v1963 = vadd.f32 %v1893, %v1962
    %v1964 = vpop.f32.mrb[0].mxu0
    %1965 = vdwg.mxu0
    %v1966 = vadd.f32 %v1963, %v1791
    %v1967 = vxor.u32 %v1966, 2147483648
    %v1968 = vmul.f32 %v1967, 1.442695
    %v1969 = vpow.pop %v1968
    %v1970 = vadd.f32 %v1969, 1.0
    %v1971 = vrcp.pop %v1970
    %v1972 = vmul.f32 1.0, %v1971
    %v1973 = vtanh.pop %v1966
    %v1974 = vmul.f32 %v1972, %v1811
    %1976 = vrot.lane.b32.xlu0 %v1973, 64
    %v1977 = vpop.permute.xlu0 %1976
    %v1979 = vmul.f32 %v1972, %v1977
    %1981 = vrot.lane.b32.xlu0 %v1979, 32
    %v1982 = vpop.permute.xlu0 %1981
    %v1984 = vadd.f32 %v1974, %v1982
    %v1985 = vtanh.pop %v1984
    %1987 = vrot.lane.b32.xlu0 %v1985, 64
    %v1988 = vpop.permute.xlu0 %1987
    %v1990 = vmul.f32 %v1972, %v1988
    %1992 = vrot.lane.b32.xlu0 %v1990, 32
    %v1993 = vpop.permute.xlu0 %1992
    %s1995 = scalar_lea.vmem [#allocation2], 2
    %1996 = vst.msk [vmem:[%s1995] sm:$0x3] %vm1822, %v1993
    %v1997 = vsel %vm231, %v1993, 0
    %1999 = vmatprep.subr.mxu0 0.0
    %2000 = vmatpush1.msra.mxu0 %v224
    %2001 = vmatprep.subr.mxu0 0.0
    %2002 = vmatpush1.msra.mxu0 %v225
    %2003 = vmatprep.subr.mxu0 0.0
    %2004 = vmatpush1.msra.mxu0 %v226
    %2005 = vmatprep.subr.mxu0 0.0
    %2006 = vmatpush1.msra.mxu0 %v227
    %2007 = vmatprep.subr.mxu0 0.0
    %2008 = vmatpush1.msra.mxu0 0.0
    %2009 = vmatprep.subr.mxu0 0.0
    %2010 = vmatpush1.msra.mxu0 0.0
    %2011 = vmatprep.subr.mxu0 0.0
    %2012 = vmatpush1.msra.mxu0 0.0
    %2013 = vmatprep.subr.mxu0 0.0
    %2014 = vmatpush1.msra.mxu0 0.0
    %2015 = vmatprep.subr.mxu0 0.0
    %2016 = vmatpush1.msra.mxu0 0.0
    %2017 = vmatprep.subr.mxu0 0.0
    %2018 = vmatpush1.msra.mxu0 0.0
    %2019 = vmatprep.subr.mxu0 0.0
    %2020 = vmatpush1.msra.mxu0 0.0
    %2021 = vmatprep.subr.mxu0 0.0
    %2022 = vmatpush1.msra.mxu0 0.0
    %2023 = vmatprep.subr.mxu0 0.0
    %2024 = vmatpush1.msra.mxu0 0.0
    %2025 = vmatprep.subr.mxu0 0.0
    %2026 = vmatpush1.msra.mxu0 0.0
    %2027 = vmatprep.subr.mxu0 0.0
    %2028 = vmatpush1.msra.mxu0 0.0
    %2029 = vmatprep.subr.mxu0 0.0
    %2030 = vmatpush1.msra.mxu0 0.0
    %2031 = vmatprep.subr.mxu0 0.0
    %2032 = vmatpush1.msra.mxu0 0.0
    %2033 = vmatprep.subr.mxu0 0.0
    %2034 = vmatpush1.msra.mxu0 0.0
    %2035 = vmatprep.subr.mxu0 0.0
    %2036 = vmatpush1.msra.mxu0 0.0
    %2037 = vmatprep.subr.mxu0 0.0
    %2038 = vmatpush1.msra.mxu0 0.0
    %2039 = vmatprep.subr.mxu0 0.0
    %2040 = vmatpush1.msra.mxu0 0.0
    %2041 = vmatprep.subr.mxu0 0.0
    %2042 = vmatpush1.msra.mxu0 0.0
    %2043 = vmatprep.subr.mxu0 0.0
    %2044 = vmatpush1.msra.mxu0 0.0
    %2045 = vmatprep.subr.mxu0 0.0
    %2046 = vmatpush1.msra.mxu0 0.0
    %2047 = vmatprep.subr.mxu0 0.0
    %2048 = vmatpush1.msra.mxu0 0.0
    %2049 = vmatprep.subr.mxu0 0.0
    %2050 = vmatpush1.msra.mxu0 0.0
    %2051 = vmatprep.subr.mxu0 0.0
    %2052 = vmatpush1.msra.mxu0 0.0
    %2053 = vmatprep.subr.mxu0 0.0
    %2054 = vmatpush1.msra.mxu0 0.0
    %2055 = vmatprep.subr.mxu0 0.0
    %2056 = vmatpush1.msra.mxu0 0.0
    %2057 = vmatprep.subr.mxu0 0.0
    %2058 = vmatpush1.msra.mxu0 0.0
    %2059 = vmatprep.subr.mxu0 0.0
    %2060 = vmatpush1.msra.mxu0 0.0
    %2061 = vmatprep.subr.mxu0 0.0
    %2062 = vmatpush1.msra.mxu0 0.0
    %2063 = vmatprep.mubr.f32.mxu0 0.0
    %2064 = vmatmul.mubr.f32.gmra.mrb[0].mxu0 %v1997
    %v2065 = vpop.f32.mrb[0].mxu0
    %v2066 = vadd.f32 0.0, %v2065
    %v2067 = vpop.f32.mrb[0].mxu0
    %2068 = vdwg.mxu0
    %2069 = vmatprep.subr.mxu0 0.0
    %2070 = vmatpush1.msra.mxu0 %v220
    %2071 = vmatprep.subr.mxu0 0.0
    %2072 = vmatpush1.msra.mxu0 %v221
    %2073 = vmatprep.subr.mxu0 0.0
    %2074 = vmatpush1.msra.mxu0 %v222
    %2075 = vmatprep.subr.mxu0 0.0
    %2076 = vmatpush1.msra.mxu0 %v223
    %2077 = vmatprep.subr.mxu0 0.0
    %2078 = vmatpush1.msra.mxu0 0.0
    %2079 = vmatprep.subr.mxu0 0.0
    %2080 = vmatpush1.msra.mxu0 0.0
    %2081 = vmatprep.subr.mxu0 0.0
    %2082 = vmatpush1.msra.mxu0 0.0
    %2083 = vmatprep.subr.mxu0 0.0
    %2084 = vmatpush1.msra.mxu0 0.0
    %2085 = vmatprep.subr.mxu0 0.0
    %2086 = vmatpush1.msra.mxu0 0.0
    %2087 = vmatprep.subr.mxu0 0.0
    %2088 = vmatpush1.msra.mxu0 0.0
    %2089 = vmatprep.subr.mxu0 0.0
    %2090 = vmatpush1.msra.mxu0 0.0
    %2091 = vmatprep.subr.mxu0 0.0
    %2092 = vmatpush1.msra.mxu0 0.0
    %2093 = vmatprep.subr.mxu0 0.0
    %2094 = vmatpush1.msra.mxu0 0.0
    %2095 = vmatprep.subr.mxu0 0.0
    %2096 = vmatpush1.msra.mxu0 0.0
    %2097 = vmatprep.subr.mxu0 0.0
    %2098 = vmatpush1.msra.mxu0 0.0
    %2099 = vmatprep.subr.mxu0 0.0
    %2100 = vmatpush1.msra.mxu0 0.0
    %2101 = vmatprep.subr.mxu0 0.0
    %2102 = vmatpush1.msra.mxu0 0.0
    %2103 = vmatprep.subr.mxu0 0.0
    %2104 = vmatpush1.msra.mxu0 0.0
    %2105 = vmatprep.subr.mxu0 0.0
    %2106 = vmatpush1.msra.mxu0 0.0
    %2107 = vmatprep.subr.mxu0 0.0
    %2108 = vmatpush1.msra.mxu0 0.0
    %2109 = vmatprep.subr.mxu0 0.0
    %2110 = vmatpush1.msra.mxu0 0.0
    %2111 = vmatprep.subr.mxu0 0.0
    %2112 = vmatpush1.msra.mxu0 0.0
    %2113 = vmatprep.subr.mxu0 0.0
    %2114 = vmatpush1.msra.mxu0 0.0
    %2115 = vmatprep.subr.mxu0 0.0
    %2116 = vmatpush1.msra.mxu0 0.0
    %2117 = vmatprep.subr.mxu0 0.0
    %2118 = vmatpush1.msra.mxu0 0.0
    %2119 = vmatprep.subr.mxu0 0.0
    %2120 = vmatpush1.msra.mxu0 0.0
    %2121 = vmatprep.subr.mxu0 0.0
    %2122 = vmatpush1.msra.mxu0 0.0
    %2123 = vmatprep.subr.mxu0 0.0
    %2124 = vmatpush1.msra.mxu0 0.0
    %2125 = vmatprep.subr.mxu0 0.0
    %2126 = vmatpush1.msra.mxu0 0.0
    %2127 = vmatprep.subr.mxu0 0.0
    %2128 = vmatpush1.msra.mxu0 0.0
    %2129 = vmatprep.subr.mxu0 0.0
    %2130 = vmatpush1.msra.mxu0 0.0
    %2131 = vmatprep.subr.mxu0 0.0
    %2132 = vmatpush1.msra.mxu0 0.0
    %2133 = vmatprep.mubr.f32.mxu0 0.0
    %2134 = vmatmul.mubr.f32.gmra.mrb[0].mxu0 %v770
    %v2135 = vpop.f32.mrb[0].mxu0
    %v2136 = vadd.f32 %v2066, %v2135
    %v2137 = vpop.f32.mrb[0].mxu0
    %2138 = vdwg.mxu0
    %v2139 = vadd.f32 %v2136, %v1791
    %v2140 = vxor.u32 %v2139, 2147483648
    %v2141 = vmul.f32 %v2140, 1.442695
    %v2142 = vpow.pop %v2141
    %v2143 = vadd.f32 %v2142, 1.0
    %v2144 = vrcp.pop %v2143
    %v2145 = vmul.f32 1.0, %v2144
    %v2146 = vtanh.pop %v2139
    %v2147 = vmul.f32 %v2145, %v1984
    %2149 = vrot.lane.b32.xlu0 %v2146, 64
    %v2150 = vpop.permute.xlu0 %2149
    %v2152 = vmul.f32 %v2145, %v2150
    %2154 = vrot.lane.b32.xlu0 %v2152, 32
    %v2155 = vpop.permute.xlu0 %2154
    %v2157 = vadd.f32 %v2147, %v2155
    %v2158 = vtanh.pop %v2157
    %2160 = vrot.lane.b32.xlu0 %v2158, 64
    %v2161 = vpop.permute.xlu0 %2160
    %v2163 = vmul.f32 %v2145, %v2161
    %2165 = vrot.lane.b32.xlu0 %v2163, 32
    %v2166 = vpop.permute.xlu0 %2165
    %s2168 = scalar_lea.vmem [#allocation2], 4
    %2169 = vst.msk [vmem:[%s2168] sm:$0x3] %vm1822, %v2166
    %v2170 = vsel %vm231, %v2166, 0
    %2172 = vmatprep.subr.mxu0 0.0
    %2173 = vmatpush1.msra.mxu0 %v224
    %2174 = vmatprep.subr.mxu0 0.0
    %2175 = vmatpush1.msra.mxu0 %v225
    %2176 = vmatprep.subr.mxu0 0.0
    %2177 = vmatpush1.msra.mxu0 %v226
    %2178 = vmatprep.subr.mxu0 0.0
    %2179 = vmatpush1.msra.mxu0 %v227
    %2180 = vmatprep.subr.mxu0 0.0
    %2181 = vmatpush1.msra.mxu0 0.0
    %2182 = vmatprep.subr.mxu0 0.0
    %2183 = vmatpush1.msra.mxu0 0.0
    %2184 = vmatprep.subr.mxu0 0.0
    %2185 = vmatpush1.msra.mxu0 0.0
    %2186 = vmatprep.subr.mxu0 0.0
    %2187 = vmatpush1.msra.mxu0 0.0
    %2188 = vmatprep.subr.mxu0 0.0
    %2189 = vmatpush1.msra.mxu0 0.0
    %2190 = vmatprep.subr.mxu0 0.0
    %2191 = vmatpush1.msra.mxu0 0.0
    %2192 = vmatprep.subr.mxu0 0.0
    %2193 = vmatpush1.msra.mxu0 0.0
    %2194 = vmatprep.subr.mxu0 0.0
    %2195 = vmatpush1.msra.mxu0 0.0
    %2196 = vmatprep.subr.mxu0 0.0
    %2197 = vmatpush1.msra.mxu0 0.0
    %2198 = vmatprep.subr.mxu0 0.0
    %2199 = vmatpush1.msra.mxu0 0.0
    %2200 = vmatprep.subr.mxu0 0.0
    %2201 = vmatpush1.msra.mxu0 0.0
    %2202 = vmatprep.subr.mxu0 0.0
    %2203 = vmatpush1.msra.mxu0 0.0
    %2204 = vmatprep.subr.mxu0 0.0
    %2205 = vmatpush1.msra.mxu0 0.0
    %2206 = vmatprep.subr.mxu0 0.0
    %2207 = vmatpush1.msra.mxu0 0.0
    %2208 = vmatprep.subr.mxu0 0.0
    %2209 = vmatpush1.msra.mxu0 0.0
    %2210 = vmatprep.subr.mxu0 0.0
    %2211 = vmatpush1.msra.mxu0 0.0
    %2212 = vmatprep.subr.mxu0 0.0
    %2213 = vmatpush1.msra.mxu0 0.0
    %2214 = vmatprep.subr.mxu0 0.0
    %2215 = vmatpush1.msra.mxu0 0.0
    %2216 = vmatprep.subr.mxu0 0.0
    %2217 = vmatpush1.msra.mxu0 0.0
    %2218 = vmatprep.subr.mxu0 0.0
    %2219 = vmatpush1.msra.mxu0 0.0
    %2220 = vmatprep.subr.mxu0 0.0
    %2221 = vmatpush1.msra.mxu0 0.0
    %2222 = vmatprep.subr.mxu0 0.0
    %2223 = vmatpush1.msra.mxu0 0.0
    %2224 = vmatprep.subr.mxu0 0.0
    %2225 = vmatpush1.msra.mxu0 0.0
    %2226 = vmatprep.subr.mxu0 0.0
    %2227 = vmatpush1.msra.mxu0 0.0
    %2228 = vmatprep.subr.mxu0 0.0
    %2229 = vmatpush1.msra.mxu0 0.0
    %2230 = vmatprep.subr.mxu0 0.0
    %2231 = vmatpush1.msra.mxu0 0.0
    %2232 = vmatprep.subr.mxu0 0.0
    %2233 = vmatpush1.msra.mxu0 0.0
    %2234 = vmatprep.subr.mxu0 0.0
    %2235 = vmatpush1.msra.mxu0 0.0
    %2236 = vmatprep.mubr.f32.mxu0 0.0
    %2237 = vmatmul.mubr.f32.gmra.mrb[0].mxu0 %v2170
    %v2238 = vpop.f32.mrb[0].mxu0
    %v2239 = vadd.f32 0.0, %v2238
    %v2240 = vpop.f32.mrb[0].mxu0
    %2241 = vdwg.mxu0
    %2242 = vmatprep.subr.mxu0 0.0
    %2243 = vmatpush1.msra.mxu0 %v220
    %2244 = vmatprep.subr.mxu0 0.0
    %2245 = vmatpush1.msra.mxu0 %v221
    %2246 = vmatprep.subr.mxu0 0.0
    %2247 = vmatpush1.msra.mxu0 %v222
    %2248 = vmatprep.subr.mxu0 0.0
    %2249 = vmatpush1.msra.mxu0 %v223
    %2250 = vmatprep.subr.mxu0 0.0
    %2251 = vmatpush1.msra.mxu0 0.0
    %2252 = vmatprep.subr.mxu0 0.0
    %2253 = vmatpush1.msra.mxu0 0.0
    %2254 = vmatprep.subr.mxu0 0.0
    %2255 = vmatpush1.msra.mxu0 0.0
    %2256 = vmatprep.subr.mxu0 0.0
    %2257 = vmatpush1.msra.mxu0 0.0
    %2258 = vmatprep.subr.mxu0 0.0
    %2259 = vmatpush1.msra.mxu0 0.0
    %2260 = vmatprep.subr.mxu0 0.0
    %2261 = vmatpush1.msra.mxu0 0.0
    %2262 = vmatprep.subr.mxu0 0.0
    %2263 = vmatpush1.msra.mxu0 0.0
    %2264 = vmatprep.subr.mxu0 0.0
    %2265 = vmatpush1.msra.mxu0 0.0
    %2266 = vmatprep.subr.mxu0 0.0
    %2267 = vmatpush1.msra.mxu0 0.0
    %2268 = vmatprep.subr.mxu0 0.0
    %2269 = vmatpush1.msra.mxu0 0.0
    %2270 = vmatprep.subr.mxu0 0.0
    %2271 = vmatpush1.msra.mxu0 0.0
    %2272 = vmatprep.subr.mxu0 0.0
    %2273 = vmatpush1.msra.mxu0 0.0
    %2274 = vmatprep.subr.mxu0 0.0
    %2275 = vmatpush1.msra.mxu0 0.0
    %2276 = vmatprep.subr.mxu0 0.0
    %2277 = vmatpush1.msra.mxu0 0.0
    %2278 = vmatprep.subr.mxu0 0.0
    %2279 = vmatpush1.msra.mxu0 0.0
    %2280 = vmatprep.subr.mxu0 0.0
    %2281 = vmatpush1.msra.mxu0 0.0
    %2282 = vmatprep.subr.mxu0 0.0
    %2283 = vmatpush1.msra.mxu0 0.0
    %2284 = vmatprep.subr.mxu0 0.0
    %2285 = vmatpush1.msra.mxu0 0.0
    %2286 = vmatprep.subr.mxu0 0.0
    %2287 = vmatpush1.msra.mxu0 0.0
    %2288 = vmatprep.subr.mxu0 0.0
    %2289 = vmatpush1.msra.mxu0 0.0
    %2290 = vmatprep.subr.mxu0 0.0
    %2291 = vmatpush1.msra.mxu0 0.0
    %2292 = vmatprep.subr.mxu0 0.0
    %2293 = vmatpush1.msra.mxu0 0.0
    %2294 = vmatprep.subr.mxu0 0.0
    %2295 = vmatpush1.msra.mxu0 0.0
    %2296 = vmatprep.subr.mxu0 0.0
    %2297 = vmatpush1.msra.mxu0 0.0
    %2298 = vmatprep.subr.mxu0 0.0
    %2299 = vmatpush1.msra.mxu0 0.0
    %2300 = vmatprep.subr.mxu0 0.0
    %2301 = vmatpush1.msra.mxu0 0.0
    %2302 = vmatprep.subr.mxu0 0.0
    %2303 = vmatpush1.msra.mxu0 0.0
    %2304 = vmatprep.subr.mxu0 0.0
    %2305 = vmatpush1.msra.mxu0 0.0
    %2306 = vmatprep.mubr.f32.mxu0 0.0
    %2307 = vmatmul.mubr.f32.gmra.mrb[0].mxu0 %v945
    %v2308 = vpop.f32.mrb[0].mxu0
    %v2309 = vadd.f32 %v2239, %v2308
    %v2310 = vpop.f32.mrb[0].mxu0
    %2311 = vdwg.mxu0
    %v2312 = vadd.f32 %v2309, %v1791
    %v2313 = vxor.u32 %v2312, 2147483648
    %v2314 = vmul.f32 %v2313, 1.442695
    %v2315 = vpow.pop %v2314
    %v2316 = vadd.f32 %v2315, 1.0
    %v2317 = vrcp.pop %v2316
    %v2318 = vmul.f32 1.0, %v2317
    %v2319 = vtanh.pop %v2312
    %v2320 = vmul.f32 %v2318, %v2157
    %2322 = vrot.lane.b32.xlu0 %v2319, 64
    %v2323 = vpop.permute.xlu0 %2322
    %v2325 = vmul.f32 %v2318, %v2323
    %2327 = vrot.lane.b32.xlu0 %v2325, 32
    %v2328 = vpop.permute.xlu0 %2327
    %v2330 = vadd.f32 %v2320, %v2328
    %v2331 = vtanh.pop %v2330
    %2333 = vrot.lane.b32.xlu0 %v2331, 64
    %v2334 = vpop.permute.xlu0 %2333
    %v2336 = vmul.f32 %v2318, %v2334
    %2338 = vrot.lane.b32.xlu0 %v2336, 32
    %v2339 = vpop.permute.xlu0 %2338
    %s2341 = scalar_lea.vmem [#allocation2], 6
    %2342 = vst.msk [vmem:[%s2341] sm:$0x3] %vm1822, %v2339
    %v2343 = vsel %vm231, %v2339, 0
    %2345 = vmatprep.subr.mxu0 0.0
    %2346 = vmatpush1.msra.mxu0 %v224
    %2347 = vmatprep.subr.mxu0 0.0
    %2348 = vmatpush1.msra.mxu0 %v225
    %2349 = vmatprep.subr.mxu0 0.0
    %2350 = vmatpush1.msra.mxu0 %v226
    %2351 = vmatprep.subr.mxu0 0.0
    %2352 = vmatpush1.msra.mxu0 %v227
    %2353 = vmatprep.subr.mxu0 0.0
    %2354 = vmatpush1.msra.mxu0 0.0
    %2355 = vmatprep.subr.mxu0 0.0
    %2356 = vmatpush1.msra.mxu0 0.0
    %2357 = vmatprep.subr.mxu0 0.0
    %2358 = vmatpush1.msra.mxu0 0.0
    %2359 = vmatprep.subr.mxu0 0.0
    %2360 = vmatpush1.msra.mxu0 0.0
    %2361 = vmatprep.subr.mxu0 0.0
    %2362 = vmatpush1.msra.mxu0 0.0
    %2363 = vmatprep.subr.mxu0 0.0
    %2364 = vmatpush1.msra.mxu0 0.0
    %2365 = vmatprep.subr.mxu0 0.0
    %2366 = vmatpush1.msra.mxu0 0.0
    %2367 = vmatprep.subr.mxu0 0.0
    %2368 = vmatpush1.msra.mxu0 0.0
    %2369 = vmatprep.subr.mxu0 0.0
    %2370 = vmatpush1.msra.mxu0 0.0
    %2371 = vmatprep.subr.mxu0 0.0
    %2372 = vmatpush1.msra.mxu0 0.0
    %2373 = vmatprep.subr.mxu0 0.0
    %2374 = vmatpush1.msra.mxu0 0.0
    %2375 = vmatprep.subr.mxu0 0.0
    %2376 = vmatpush1.msra.mxu0 0.0
    %2377 = vmatprep.subr.mxu0 0.0
    %2378 = vmatpush1.msra.mxu0 0.0
    %2379 = vmatprep.subr.mxu0 0.0
    %2380 = vmatpush1.msra.mxu0 0.0
    %2381 = vmatprep.subr.mxu0 0.0
    %2382 = vmatpush1.msra.mxu0 0.0
    %2383 = vmatprep.subr.mxu0 0.0
    %2384 = vmatpush1.msra.mxu0 0.0
    %2385 = vmatprep.subr.mxu0 0.0
    %2386 = vmatpush1.msra.mxu0 0.0
    %2387 = vmatprep.subr.mxu0 0.0
    %2388 = vmatpush1.msra.mxu0 0.0
    %2389 = vmatprep.subr.mxu0 0.0
    %2390 = vmatpush1.msra.mxu0 0.0
    %2391 = vmatprep.subr.mxu0 0.0
    %2392 = vmatpush1.msra.mxu0 0.0
    %2393 = vmatprep.subr.mxu0 0.0
    %2394 = vmatpush1.msra.mxu0 0.0
    %2395 = vmatprep.subr.mxu0 0.0
    %2396 = vmatpush1.msra.mxu0 0.0
    %2397 = vmatprep.subr.mxu0 0.0
    %2398 = vmatpush1.msra.mxu0 0.0
    %2399 = vmatprep.subr.mxu0 0.0
    %2400 = vmatpush1.msra.mxu0 0.0
    %2401 = vmatprep.subr.mxu0 0.0
    %2402 = vmatpush1.msra.mxu0 0.0
    %2403 = vmatprep.subr.mxu0 0.0
    %2404 = vmatpush1.msra.mxu0 0.0
    %2405 = vmatprep.subr.mxu0 0.0
    %2406 = vmatpush1.msra.mxu0 0.0
    %2407 = vmatprep.subr.mxu0 0.0
    %2408 = vmatpush1.msra.mxu0 0.0
    %2409 = vmatprep.mubr.f32.mxu0 0.0
    %2410 = vmatmul.mubr.f32.gmra.mrb[0].mxu0 %v2343
    %v2411 = vpop.f32.mrb[0].mxu0
    %v2412 = vadd.f32 0.0, %v2411
    %v2413 = vpop.f32.mrb[0].mxu0
    %2414 = vdwg.mxu0
    %2415 = vmatprep.subr.mxu0 0.0
    %2416 = vmatpush1.msra.mxu0 %v220
    %2417 = vmatprep.subr.mxu0 0.0
    %2418 = vmatpush1.msra.mxu0 %v221
    %2419 = vmatprep.subr.mxu0 0.0
    %2420 = vmatpush1.msra.mxu0 %v222
    %2421 = vmatprep.subr.mxu0 0.0
    %2422 = vmatpush1.msra.mxu0 %v223
    %2423 = vmatprep.subr.mxu0 0.0
    %2424 = vmatpush1.msra.mxu0 0.0
    %2425 = vmatprep.subr.mxu0 0.0
    %2426 = vmatpush1.msra.mxu0 0.0
    %2427 = vmatprep.subr.mxu0 0.0
    %2428 = vmatpush1.msra.mxu0 0.0
    %2429 = vmatprep.subr.mxu0 0.0
    %2430 = vmatpush1.msra.mxu0 0.0
    %2431 = vmatprep.subr.mxu0 0.0
    %2432 = vmatpush1.msra.mxu0 0.0
    %2433 = vmatprep.subr.mxu0 0.0
    %2434 = vmatpush1.msra.mxu0 0.0
    %2435 = vmatprep.subr.mxu0 0.0
    %2436 = vmatpush1.msra.mxu0 0.0
    %2437 = vmatprep.subr.mxu0 0.0
    %2438 = vmatpush1.msra.mxu0 0.0
    %2439 = vmatprep.subr.mxu0 0.0
    %2440 = vmatpush1.msra.mxu0 0.0
    %2441 = vmatprep.subr.mxu0 0.0
    %2442 = vmatpush1.msra.mxu0 0.0
    %2443 = vmatprep.subr.mxu0 0.0
    %2444 = vmatpush1.msra.mxu0 0.0
    %2445 = vmatprep.subr.mxu0 0.0
    %2446 = vmatpush1.msra.mxu0 0.0
    %2447 = vmatprep.subr.mxu0 0.0
    %2448 = vmatpush1.msra.mxu0 0.0
    %2449 = vmatprep.subr.mxu0 0.0
    %2450 = vmatpush1.msra.mxu0 0.0
    %2451 = vmatprep.subr.mxu0 0.0
    %2452 = vmatpush1.msra.mxu0 0.0
    %2453 = vmatprep.subr.mxu0 0.0
    %2454 = vmatpush1.msra.mxu0 0.0
    %2455 = vmatprep.subr.mxu0 0.0
    %2456 = vmatpush1.msra.mxu0 0.0
    %2457 = vmatprep.subr.mxu0 0.0
    %2458 = vmatpush1.msra.mxu0 0.0
    %2459 = vmatprep.subr.mxu0 0.0
    %2460 = vmatpush1.msra.mxu0 0.0
    %2461 = vmatprep.subr.mxu0 0.0
    %2462 = vmatpush1.msra.mxu0 0.0
    %2463 = vmatprep.subr.mxu0 0.0
    %2464 = vmatpush1.msra.mxu0 0.0
    %2465 = vmatprep.subr.mxu0 0.0
    %2466 = vmatpush1.msra.mxu0 0.0
    %2467 = vmatprep.subr.mxu0 0.0
    %2468 = vmatpush1.msra.mxu0 0.0
    %2469 = vmatprep.subr.mxu0 0.0
    %2470 = vmatpush1.msra.mxu0 0.0
    %2471 = vmatprep.subr.mxu0 0.0
    %2472 = vmatpush1.msra.mxu0 0.0
    %2473 = vmatprep.subr.mxu0 0.0
    %2474 = vmatpush1.msra.mxu0 0.0
    %2475 = vmatprep.subr.mxu0 0.0
    %2476 = vmatpush1.msra.mxu0 0.0
    %2477 = vmatprep.subr.mxu0 0.0
    %2478 = vmatpush1.msra.mxu0 0.0
    %2479 = vmatprep.mubr.f32.mxu0 0.0
    %2480 = vmatmul.mubr.f32.gmra.mrb[0].mxu0 %v1120
    %v2481 = vpop.f32.mrb[0].mxu0
    %v2482 = vadd.f32 %v2412, %v2481
    %v2483 = vpop.f32.mrb[0].mxu0
    %2484 = vdwg.mxu0
    %v2485 = vadd.f32 %v2482, %v1791
    %v2486 = vxor.u32 %v2485, 2147483648
    %v2487 = vmul.f32 %v2486, 1.442695
    %v2488 = vpow.pop %v2487
    %v2489 = vadd.f32 %v2488, 1.0
    %v2490 = vrcp.pop %v2489
    %v2491 = vmul.f32 1.0, %v2490
    %v2492 = vtanh.pop %v2485
    %v2493 = vmul.f32 %v2491, %v2330
    %2495 = vrot.lane.b32.xlu0 %v2492, 64
    %v2496 = vpop.permute.xlu0 %2495
    %v2498 = vmul.f32 %v2491, %v2496
    %2500 = vrot.lane.b32.xlu0 %v2498, 32
    %v2501 = vpop.permute.xlu0 %2500
    %v2503 = vadd.f32 %v2493, %v2501
    %v2504 = vtanh.pop %v2503
    %2506 = vrot.lane.b32.xlu0 %v2504, 64
    %v2507 = vpop.permute.xlu0 %2506
    %v2509 = vmul.f32 %v2491, %v2507
    %2511 = vrot.lane.b32.xlu0 %v2509, 32
    %v2512 = vpop.permute.xlu0 %2511
    %s2514 = scalar_lea.vmem [#allocation2], 8
    %2515 = vst.msk [vmem:[%s2514] sm:$0x3] %vm1822, %v2512
    %v2516 = vsel %vm231, %v2512, 0
    %2518 = vmatprep.subr.mxu0 0.0
    %2519 = vmatpush1.msra.mxu0 %v224
    %2520 = vmatprep.subr.mxu0 0.0
    %2521 = vmatpush1.msra.mxu0 %v225
    %2522 = vmatprep.subr.mxu0 0.0
    %2523 = vmatpush1.msra.mxu0 %v226
    %2524 = vmatprep.subr.mxu0 0.0
    %2525 = vmatpush1.msra.mxu0 %v227
    %2526 = vmatprep.subr.mxu0 0.0
    %2527 = vmatpush1.msra.mxu0 0.0
    %2528 = vmatprep.subr.mxu0 0.0
    %2529 = vmatpush1.msra.mxu0 0.0
    %2530 = vmatprep.subr.mxu0 0.0
    %2531 = vmatpush1.msra.mxu0 0.0
    %2532 = vmatprep.subr.mxu0 0.0
    %2533 = vmatpush1.msra.mxu0 0.0
    %2534 = vmatprep.subr.mxu0 0.0
    %2535 = vmatpush1.msra.mxu0 0.0
    %2536 = vmatprep.subr.mxu0 0.0
    %2537 = vmatpush1.msra.mxu0 0.0
    %2538 = vmatprep.subr.mxu0 0.0
    %2539 = vmatpush1.msra.mxu0 0.0
    %2540 = vmatprep.subr.mxu0 0.0
    %2541 = vmatpush1.msra.mxu0 0.0
    %2542 = vmatprep.subr.mxu0 0.0
    %2543 = vmatpush1.msra.mxu0 0.0
    %2544 = vmatprep.subr.mxu0 0.0
    %2545 = vmatpush1.msra.mxu0 0.0
    %2546 = vmatprep.subr.mxu0 0.0
    %2547 = vmatpush1.msra.mxu0 0.0
    %2548 = vmatprep.subr.mxu0 0.0
    %2549 = vmatpush1.msra.mxu0 0.0
    %2550 = vmatprep.subr.mxu0 0.0
    %2551 = vmatpush1.msra.mxu0 0.0
    %2552 = vmatprep.subr.mxu0 0.0
    %2553 = vmatpush1.msra.mxu0 0.0
    %2554 = vmatprep.subr.mxu0 0.0
    %2555 = vmatpush1.msra.mxu0 0.0
    %2556 = vmatprep.subr.mxu0 0.0
    %2557 = vmatpush1.msra.mxu0 0.0
    %2558 = vmatprep.subr.mxu0 0.0
    %2559 = vmatpush1.msra.mxu0 0.0
    %2560 = vmatprep.subr.mxu0 0.0
    %2561 = vmatpush1.msra.mxu0 0.0
    %2562 = vmatprep.subr.mxu0 0.0
    %2563 = vmatpush1.msra.mxu0 0.0
    %2564 = vmatprep.subr.mxu0 0.0
    %2565 = vmatpush1.msra.mxu0 0.0
    %2566 = vmatprep.subr.mxu0 0.0
    %2567 = vmatpush1.msra.mxu0 0.0
    %2568 = vmatprep.subr.mxu0 0.0
    %2569 = vmatpush1.msra.mxu0 0.0
    %2570 = vmatprep.subr.mxu0 0.0
    %2571 = vmatpush1.msra.mxu0 0.0
    %2572 = vmatprep.subr.mxu0 0.0
    %2573 = vmatpush1.msra.mxu0 0.0
    %2574 = vmatprep.subr.mxu0 0.0
    %2575 = vmatpush1.msra.mxu0 0.0
    %2576 = vmatprep.subr.mxu0 0.0
    %2577 = vmatpush1.msra.mxu0 0.0
    %2578 = vmatprep.subr.mxu0 0.0
    %2579 = vmatpush1.msra.mxu0 0.0
    %2580 = vmatprep.subr.mxu0 0.0
    %2581 = vmatpush1.msra.mxu0 0.0
    %2582 = vmatprep.mubr.f32.mxu0 0.0
    %2583 = vmatmul.mubr.f32.gmra.mrb[0].mxu0 %v2516
    %v2584 = vpop.f32.mrb[0].mxu0
    %v2585 = vadd.f32 0.0, %v2584
    %v2586 = vpop.f32.mrb[0].mxu0
    %2587 = vdwg.mxu0
    %2588 = vmatprep.subr.mxu0 0.0
    %2589 = vmatpush1.msra.mxu0 %v220
    %2590 = vmatprep.subr.mxu0 0.0
    %2591 = vmatpush1.msra.mxu0 %v221
    %2592 = vmatprep.subr.mxu0 0.0
    %2593 = vmatpush1.msra.mxu0 %v222
    %2594 = vmatprep.subr.mxu0 0.0
    %2595 = vmatpush1.msra.mxu0 %v223
    %2596 = vmatprep.subr.mxu0 0.0
    %2597 = vmatpush1.msra.mxu0 0.0
    %2598 = vmatprep.subr.mxu0 0.0
    %2599 = vmatpush1.msra.mxu0 0.0
    %2600 = vmatprep.subr.mxu0 0.0
    %2601 = vmatpush1.msra.mxu0 0.0
    %2602 = vmatprep.subr.mxu0 0.0
    %2603 = vmatpush1.msra.mxu0 0.0
    %2604 = vmatprep.subr.mxu0 0.0
    %2605 = vmatpush1.msra.mxu0 0.0
    %2606 = vmatprep.subr.mxu0 0.0
    %2607 = vmatpush1.msra.mxu0 0.0
    %2608 = vmatprep.subr.mxu0 0.0
    %2609 = vmatpush1.msra.mxu0 0.0
    %2610 = vmatprep.subr.mxu0 0.0
    %2611 = vmatpush1.msra.mxu0 0.0
    %2612 = vmatprep.subr.mxu0 0.0
    %2613 = vmatpush1.msra.mxu0 0.0
    %2614 = vmatprep.subr.mxu0 0.0
    %2615 = vmatpush1.msra.mxu0 0.0
    %2616 = vmatprep.subr.mxu0 0.0
    %2617 = vmatpush1.msra.mxu0 0.0
    %2618 = vmatprep.subr.mxu0 0.0
    %2619 = vmatpush1.msra.mxu0 0.0
    %2620 = vmatprep.subr.mxu0 0.0
    %2621 = vmatpush1.msra.mxu0 0.0
    %2622 = vmatprep.subr.mxu0 0.0
    %2623 = vmatpush1.msra.mxu0 0.0
    %2624 = vmatprep.subr.mxu0 0.0
    %2625 = vmatpush1.msra.mxu0 0.0
    %2626 = vmatprep.subr.mxu0 0.0
    %2627 = vmatpush1.msra.mxu0 0.0
    %2628 = vmatprep.subr.mxu0 0.0
    %2629 = vmatpush1.msra.mxu0 0.0
    %2630 = vmatprep.subr.mxu0 0.0
    %2631 = vmatpush1.msra.mxu0 0.0
    %2632 = vmatprep.subr.mxu0 0.0
    %2633 = vmatpush1.msra.mxu0 0.0
    %2634 = vmatprep.subr.mxu0 0.0
    %2635 = vmatpush1.msra.mxu0 0.0
    %2636 = vmatprep.subr.mxu0 0.0
    %2637 = vmatpush1.msra.mxu0 0.0
    %2638 = vmatprep.subr.mxu0 0.0
    %2639 = vmatpush1.msra.mxu0 0.0
    %2640 = vmatprep.subr.mxu0 0.0
    %2641 = vmatpush1.msra.mxu0 0.0
    %2642 = vmatprep.subr.mxu0 0.0
    %2643 = vmatpush1.msra.mxu0 0.0
    %2644 = vmatprep.subr.mxu0 0.0
    %2645 = vmatpush1.msra.mxu0 0.0
    %2646 = vmatprep.subr.mxu0 0.0
    %2647 = vmatpush1.msra.mxu0 0.0
    %2648 = vmatprep.subr.mxu0 0.0
    %2649 = vmatpush1.msra.mxu0 0.0
    %2650 = vmatprep.subr.mxu0 0.0
    %2651 = vmatpush1.msra.mxu0 0.0
    %2652 = vmatprep.mubr.f32.mxu0 0.0
    %2653 = vmatmul.mubr.f32.gmra.mrb[0].mxu0 %v1295
    %v2654 = vpop.f32.mrb[0].mxu0
    %v2655 = vadd.f32 %v2585, %v2654
    %v2656 = vpop.f32.mrb[0].mxu0
    %2657 = vdwg.mxu0
    %v2658 = vadd.f32 %v2655, %v1791
    %v2659 = vxor.u32 %v2658, 2147483648
    %v2660 = vmul.f32 %v2659, 1.442695
    %v2661 = vpow.pop %v2660
    %v2662 = vadd.f32 %v2661, 1.0
    %v2663 = vrcp.pop %v2662
    %v2664 = vmul.f32 1.0, %v2663
    %v2665 = vtanh.pop %v2658
    %v2666 = vmul.f32 %v2664, %v2503
    %2668 = vrot.lane.b32.xlu0 %v2665, 64
    %v2669 = vpop.permute.xlu0 %2668
    %v2671 = vmul.f32 %v2664, %v2669
    %2673 = vrot.lane.b32.xlu0 %v2671, 32
    %v2674 = vpop.permute.xlu0 %2673
    %v2676 = vadd.f32 %v2666, %v2674
    %v2677 = vtanh.pop %v2676
    %2679 = vrot.lane.b32.xlu0 %v2677, 64
    %v2680 = vpop.permute.xlu0 %2679
    %v2682 = vmul.f32 %v2664, %v2680
    %2684 = vrot.lane.b32.xlu0 %v2682, 32
    %v2685 = vpop.permute.xlu0 %2684
    %s2687 = scalar_lea.vmem [#allocation2], 10
    %2688 = vst.msk [vmem:[%s2687] sm:$0x3] %vm1822, %v2685
    %v2689 = vsel %vm231, %v2685, 0
    %2691 = vmatprep.subr.mxu0 0.0
    %2692 = vmatpush1.msra.mxu0 %v224
    %2693 = vmatprep.subr.mxu0 0.0
    %2694 = vmatpush1.msra.mxu0 %v225
    %2695 = vmatprep.subr.mxu0 0.0
    %2696 = vmatpush1.msra.mxu0 %v226
    %2697 = vmatprep.subr.mxu0 0.0
    %2698 = vmatpush1.msra.mxu0 %v227
    %2699 = vmatprep.subr.mxu0 0.0
    %2700 = vmatpush1.msra.mxu0 0.0
    %2701 = vmatprep.subr.mxu0 0.0
    %2702 = vmatpush1.msra.mxu0 0.0
    %2703 = vmatprep.subr.mxu0 0.0
    %2704 = vmatpush1.msra.mxu0 0.0
    %2705 = vmatprep.subr.mxu0 0.0
    %2706 = vmatpush1.msra.mxu0 0.0
    %2707 = vmatprep.subr.mxu0 0.0
    %2708 = vmatpush1.msra.mxu0 0.0
    %2709 = vmatprep.subr.mxu0 0.0
    %2710 = vmatpush1.msra.mxu0 0.0
    %2711 = vmatprep.subr.mxu0 0.0
    %2712 = vmatpush1.msra.mxu0 0.0
    %2713 = vmatprep.subr.mxu0 0.0
    %2714 = vmatpush1.msra.mxu0 0.0
    %2715 = vmatprep.subr.mxu0 0.0
    %2716 = vmatpush1.msra.mxu0 0.0
    %2717 = vmatprep.subr.mxu0 0.0
    %2718 = vmatpush1.msra.mxu0 0.0
    %2719 = vmatprep.subr.mxu0 0.0
    %2720 = vmatpush1.msra.mxu0 0.0
    %2721 = vmatprep.subr.mxu0 0.0
    %2722 = vmatpush1.msra.mxu0 0.0
    %2723 = vmatprep.subr.mxu0 0.0
    %2724 = vmatpush1.msra.mxu0 0.0
    %2725 = vmatprep.subr.mxu0 0.0
    %2726 = vmatpush1.msra.mxu0 0.0
    %2727 = vmatprep.subr.mxu0 0.0
    %2728 = vmatpush1.msra.mxu0 0.0
    %2729 = vmatprep.subr.mxu0 0.0
    %2730 = vmatpush1.msra.mxu0 0.0
    %2731 = vmatprep.subr.mxu0 0.0
    %2732 = vmatpush1.msra.mxu0 0.0
    %2733 = vmatprep.subr.mxu0 0.0
    %2734 = vmatpush1.msra.mxu0 0.0
    %2735 = vmatprep.subr.mxu0 0.0
    %2736 = vmatpush1.msra.mxu0 0.0
    %2737 = vmatprep.subr.mxu0 0.0
    %2738 = vmatpush1.msra.mxu0 0.0
    %2739 = vmatprep.subr.mxu0 0.0
    %2740 = vmatpush1.msra.mxu0 0.0
    %2741 = vmatprep.subr.mxu0 0.0
    %2742 = vmatpush1.msra.mxu0 0.0
    %2743 = vmatprep.subr.mxu0 0.0
    %2744 = vmatpush1.msra.mxu0 0.0
    %2745 = vmatprep.subr.mxu0 0.0
    %2746 = vmatpush1.msra.mxu0 0.0
    %2747 = vmatprep.subr.mxu0 0.0
    %2748 = vmatpush1.msra.mxu0 0.0
    %2749 = vmatprep.subr.mxu0 0.0
    %2750 = vmatpush1.msra.mxu0 0.0
    %2751 = vmatprep.subr.mxu0 0.0
    %2752 = vmatpush1.msra.mxu0 0.0
    %2753 = vmatprep.subr.mxu0 0.0
    %2754 = vmatpush1.msra.mxu0 0.0
    %2755 = vmatprep.mubr.f32.mxu0 0.0
    %2756 = vmatmul.mubr.f32.gmra.mrb[0].mxu0 %v2689
    %v2757 = vpop.f32.mrb[0].mxu0
    %v2758 = vadd.f32 0.0, %v2757
    %v2759 = vpop.f32.mrb[0].mxu0
    %2760 = vdwg.mxu0
    %2761 = vmatprep.subr.mxu0 0.0
    %2762 = vmatpush1.msra.mxu0 %v220
    %2763 = vmatprep.subr.mxu0 0.0
    %2764 = vmatpush1.msra.mxu0 %v221
    %2765 = vmatprep.subr.mxu0 0.0
    %2766 = vmatpush1.msra.mxu0 %v222
    %2767 = vmatprep.subr.mxu0 0.0
    %2768 = vmatpush1.msra.mxu0 %v223
    %2769 = vmatprep.subr.mxu0 0.0
    %2770 = vmatpush1.msra.mxu0 0.0
    %2771 = vmatprep.subr.mxu0 0.0
    %2772 = vmatpush1.msra.mxu0 0.0
    %2773 = vmatprep.subr.mxu0 0.0
    %2774 = vmatpush1.msra.mxu0 0.0
    %2775 = vmatprep.subr.mxu0 0.0
    %2776 = vmatpush1.msra.mxu0 0.0
    %2777 = vmatprep.subr.mxu0 0.0
    %2778 = vmatpush1.msra.mxu0 0.0
    %2779 = vmatprep.subr.mxu0 0.0
    %2780 = vmatpush1.msra.mxu0 0.0
    %2781 = vmatprep.subr.mxu0 0.0
    %2782 = vmatpush1.msra.mxu0 0.0
    %2783 = vmatprep.subr.mxu0 0.0
    %2784 = vmatpush1.msra.mxu0 0.0
    %2785 = vmatprep.subr.mxu0 0.0
    %2786 = vmatpush1.msra.mxu0 0.0
    %2787 = vmatprep.subr.mxu0 0.0
    %2788 = vmatpush1.msra.mxu0 0.0
    %2789 = vmatprep.subr.mxu0 0.0
    %2790 = vmatpush1.msra.mxu0 0.0
    %2791 = vmatprep.subr.mxu0 0.0
    %2792 = vmatpush1.msra.mxu0 0.0
    %2793 = vmatprep.subr.mxu0 0.0
    %2794 = vmatpush1.msra.mxu0 0.0
    %2795 = vmatprep.subr.mxu0 0.0
    %2796 = vmatpush1.msra.mxu0 0.0
    %2797 = vmatprep.subr.mxu0 0.0
    %2798 = vmatpush1.msra.mxu0 0.0
    %2799 = vmatprep.subr.mxu0 0.0
    %2800 = vmatpush1.msra.mxu0 0.0
    %2801 = vmatprep.subr.mxu0 0.0
    %2802 = vmatpush1.msra.mxu0 0.0
    %2803 = vmatprep.subr.mxu0 0.0
    %2804 = vmatpush1.msra.mxu0 0.0
    %2805 = vmatprep.subr.mxu0 0.0
    %2806 = vmatpush1.msra.mxu0 0.0
    %2807 = vmatprep.subr.mxu0 0.0
    %2808 = vmatpush1.msra.mxu0 0.0
    %2809 = vmatprep.subr.mxu0 0.0
    %2810 = vmatpush1.msra.mxu0 0.0
    %2811 = vmatprep.subr.mxu0 0.0
    %2812 = vmatpush1.msra.mxu0 0.0
    %2813 = vmatprep.subr.mxu0 0.0
    %2814 = vmatpush1.msra.mxu0 0.0
    %2815 = vmatprep.subr.mxu0 0.0
    %2816 = vmatpush1.msra.mxu0 0.0
    %2817 = vmatprep.subr.mxu0 0.0
    %2818 = vmatpush1.msra.mxu0 0.0
    %2819 = vmatprep.subr.mxu0 0.0
    %2820 = vmatpush1.msra.mxu0 0.0
    %2821 = vmatprep.subr.mxu0 0.0
    %2822 = vmatpush1.msra.mxu0 0.0
    %2823 = vmatprep.subr.mxu0 0.0
    %2824 = vmatpush1.msra.mxu0 0.0
    %2825 = vmatprep.mubr.f32.mxu0 0.0
    %2826 = vmatmul.mubr.f32.gmra.mrb[0].mxu0 %v1470
    %v2827 = vpop.f32.mrb[0].mxu0
    %v2828 = vadd.f32 %v2758, %v2827
    %v2829 = vpop.f32.mrb[0].mxu0
    %2830 = vdwg.mxu0
    %v2831 = vadd.f32 %v2828, %v1791
    %v2832 = vxor.u32 %v2831, 2147483648
    %v2833 = vmul.f32 %v2832, 1.442695
    %v2834 = vpow.pop %v2833
    %v2835 = vadd.f32 %v2834, 1.0
    %v2836 = vrcp.pop %v2835
    %v2837 = vmul.f32 1.0, %v2836
    %v2838 = vtanh.pop %v2831
    %v2839 = vmul.f32 %v2837, %v2676
    %2841 = vrot.lane.b32.xlu0 %v2838, 64
    %v2842 = vpop.permute.xlu0 %2841
    %v2844 = vmul.f32 %v2837, %v2842
    %2846 = vrot.lane.b32.xlu0 %v2844, 32
    %v2847 = vpop.permute.xlu0 %2846
    %v2849 = vadd.f32 %v2839, %v2847
    %v2850 = vtanh.pop %v2849
    %2852 = vrot.lane.b32.xlu0 %v2850, 64
    %v2853 = vpop.permute.xlu0 %2852
    %v2855 = vmul.f32 %v2837, %v2853
    %2857 = vrot.lane.b32.xlu0 %v2855, 32
    %v2858 = vpop.permute.xlu0 %2857
    %s2860 = scalar_lea.vmem [#allocation2], 12
    %2861 = vst.msk [vmem:[%s2860] sm:$0x3] %vm1822, %v2858
    %v2862 = vsel %vm231, %v2858, 0
    %2864 = vmatprep.subr.mxu0 0.0
    %2865 = vmatpush1.msra.mxu0 %v224
    %2866 = vmatprep.subr.mxu0 0.0
    %2867 = vmatpush1.msra.mxu0 %v225
    %2868 = vmatprep.subr.mxu0 0.0
    %2869 = vmatpush1.msra.mxu0 %v226
    %2870 = vmatprep.subr.mxu0 0.0
    %2871 = vmatpush1.msra.mxu0 %v227
    %2872 = vmatprep.subr.mxu0 0.0
    %2873 = vmatpush1.msra.mxu0 0.0
    %2874 = vmatprep.subr.mxu0 0.0
    %2875 = vmatpush1.msra.mxu0 0.0
    %2876 = vmatprep.subr.mxu0 0.0
    %2877 = vmatpush1.msra.mxu0 0.0
    %2878 = vmatprep.subr.mxu0 0.0
    %2879 = vmatpush1.msra.mxu0 0.0
    %2880 = vmatprep.subr.mxu0 0.0
    %2881 = vmatpush1.msra.mxu0 0.0
    %2882 = vmatprep.subr.mxu0 0.0
    %2883 = vmatpush1.msra.mxu0 0.0
    %2884 = vmatprep.subr.mxu0 0.0
    %2885 = vmatpush1.msra.mxu0 0.0
    %2886 = vmatprep.subr.mxu0 0.0
    %2887 = vmatpush1.msra.mxu0 0.0
    %2888 = vmatprep.subr.mxu0 0.0
    %2889 = vmatpush1.msra.mxu0 0.0
    %2890 = vmatprep.subr.mxu0 0.0
    %2891 = vmatpush1.msra.mxu0 0.0
    %2892 = vmatprep.subr.mxu0 0.0
    %2893 = vmatpush1.msra.mxu0 0.0
    %2894 = vmatprep.subr.mxu0 0.0
    %2895 = vmatpush1.msra.mxu0 0.0
    %2896 = vmatprep.subr.mxu0 0.0
    %2897 = vmatpush1.msra.mxu0 0.0
    %2898 = vmatprep.subr.mxu0 0.0
    %2899 = vmatpush1.msra.mxu0 0.0
    %2900 = vmatprep.subr.mxu0 0.0
    %2901 = vmatpush1.msra.mxu0 0.0
    %2902 = vmatprep.subr.mxu0 0.0
    %2903 = vmatpush1.msra.mxu0 0.0
    %2904 = vmatprep.subr.mxu0 0.0
    %2905 = vmatpush1.msra.mxu0 0.0
    %2906 = vmatprep.subr.mxu0 0.0
    %2907 = vmatpush1.msra.mxu0 0.0
    %2908 = vmatprep.subr.mxu0 0.0
    %2909 = vmatpush1.msra.mxu0 0.0
    %2910 = vmatprep.subr.mxu0 0.0
    %2911 = vmatpush1.msra.mxu0 0.0
    %2912 = vmatprep.subr.mxu0 0.0
    %2913 = vmatpush1.msra.mxu0 0.0
    %2914 = vmatprep.subr.mxu0 0.0
    %2915 = vmatpush1.msra.mxu0 0.0
    %2916 = vmatprep.subr.mxu0 0.0
    %2917 = vmatpush1.msra.mxu0 0.0
    %2918 = vmatprep.subr.mxu0 0.0
    %2919 = vmatpush1.msra.mxu0 0.0
    %2920 = vmatprep.subr.mxu0 0.0
    %2921 = vmatpush1.msra.mxu0 0.0
    %2922 = vmatprep.subr.mxu0 0.0
    %2923 = vmatpush1.msra.mxu0 0.0
    %2924 = vmatprep.subr.mxu0 0.0
    %2925 = vmatpush1.msra.mxu0 0.0
    %2926 = vmatprep.subr.mxu0 0.0
    %2927 = vmatpush1.msra.mxu0 0.0
    %2928 = vmatprep.mubr.f32.mxu0 0.0
    %2929 = vmatmul.mubr.f32.gmra.mrb[0].mxu0 %v2862
    %v2930 = vpop.f32.mrb[0].mxu0
    %v2931 = vadd.f32 0.0, %v2930
    %v2932 = vpop.f32.mrb[0].mxu0
    %2933 = vdwg.mxu0
    %2934 = vmatprep.subr.mxu0 0.0
    %2935 = vmatpush1.msra.mxu0 %v220
    %2936 = vmatprep.subr.mxu0 0.0
    %2937 = vmatpush1.msra.mxu0 %v221
    %2938 = vmatprep.subr.mxu0 0.0
    %2939 = vmatpush1.msra.mxu0 %v222
    %2940 = vmatprep.subr.mxu0 0.0
    %2941 = vmatpush1.msra.mxu0 %v223
    %2942 = vmatprep.subr.mxu0 0.0
    %2943 = vmatpush1.msra.mxu0 0.0
    %2944 = vmatprep.subr.mxu0 0.0
    %2945 = vmatpush1.msra.mxu0 0.0
    %2946 = vmatprep.subr.mxu0 0.0
    %2947 = vmatpush1.msra.mxu0 0.0
    %2948 = vmatprep.subr.mxu0 0.0
    %2949 = vmatpush1.msra.mxu0 0.0
    %2950 = vmatprep.subr.mxu0 0.0
    %2951 = vmatpush1.msra.mxu0 0.0
    %2952 = vmatprep.subr.mxu0 0.0
    %2953 = vmatpush1.msra.mxu0 0.0
    %2954 = vmatprep.subr.mxu0 0.0
    %2955 = vmatpush1.msra.mxu0 0.0
    %2956 = vmatprep.subr.mxu0 0.0
    %2957 = vmatpush1.msra.mxu0 0.0
    %2958 = vmatprep.subr.mxu0 0.0
    %2959 = vmatpush1.msra.mxu0 0.0
    %2960 = vmatprep.subr.mxu0 0.0
    %2961 = vmatpush1.msra.mxu0 0.0
    %2962 = vmatprep.subr.mxu0 0.0
    %2963 = vmatpush1.msra.mxu0 0.0
    %2964 = vmatprep.subr.mxu0 0.0
    %2965 = vmatpush1.msra.mxu0 0.0
    %2966 = vmatprep.subr.mxu0 0.0
    %2967 = vmatpush1.msra.mxu0 0.0
    %2968 = vmatprep.subr.mxu0 0.0
    %2969 = vmatpush1.msra.mxu0 0.0
    %2970 = vmatprep.subr.mxu0 0.0
    %2971 = vmatpush1.msra.mxu0 0.0
    %2972 = vmatprep.subr.mxu0 0.0
    %2973 = vmatpush1.msra.mxu0 0.0
    %2974 = vmatprep.subr.mxu0 0.0
    %2975 = vmatpush1.msra.mxu0 0.0
    %2976 = vmatprep.subr.mxu0 0.0
    %2977 = vmatpush1.msra.mxu0 0.0
    %2978 = vmatprep.subr.mxu0 0.0
    %2979 = vmatpush1.msra.mxu0 0.0
    %2980 = vmatprep.subr.mxu0 0.0
    %2981 = vmatpush1.msra.mxu0 0.0
    %2982 = vmatprep.subr.mxu0 0.0
    %2983 = vmatpush1.msra.mxu0 0.0
    %2984 = vmatprep.subr.mxu0 0.0
    %2985 = vmatpush1.msra.mxu0 0.0
    %2986 = vmatprep.subr.mxu0 0.0
    %2987 = vmatpush1.msra.mxu0 0.0
    %2988 = vmatprep.subr.mxu0 0.0
    %2989 = vmatpush1.msra.mxu0 0.0
    %2990 = vmatprep.subr.mxu0 0.0
    %2991 = vmatpush1.msra.mxu0 0.0
    %2992 = vmatprep.subr.mxu0 0.0
    %2993 = vmatpush1.msra.mxu0 0.0
    %2994 = vmatprep.subr.mxu0 0.0
    %2995 = vmatpush1.msra.mxu0 0.0
    %2996 = vmatprep.subr.mxu0 0.0
    %2997 = vmatpush1.msra.mxu0 0.0
    %2998 = vmatprep.mubr.f32.mxu0 0.0
    %2999 = vmatmul.mubr.f32.gmra.mrb[0].mxu0 %v1645
    %v3000 = vpop.f32.mrb[0].mxu0
    %v3001 = vadd.f32 %v2931, %v3000
    %v3002 = vpop.f32.mrb[0].mxu0
    %3003 = vdwg.mxu0
    %v3004 = vadd.f32 %v3001, %v1791
    %v3005 = vxor.u32 %v3004, 2147483648
    %v3006 = vmul.f32 %v3005, 1.442695
    %v3007 = vpow.pop %v3006
    %v3008 = vadd.f32 %v3007, 1.0
    %v3009 = vrcp.pop %v3008
    %v3010 = vmul.f32 1.0, %v3009
    %v3011 = vtanh.pop %v3004
    %v3012 = vmul.f32 %v3010, %v2849
    %3014 = vrot.lane.b32.xlu0 %v3011, 64
    %v3015 = vpop.permute.xlu0 %3014
    %v3017 = vmul.f32 %v3010, %v3015
    %3019 = vrot.lane.b32.xlu0 %v3017, 32
    %v3020 = vpop.permute.xlu0 %3019
    %v3022 = vadd.f32 %v3012, %v3020
    %v3023 = vtanh.pop %v3022
    %3025 = vrot.lane.b32.xlu0 %v3023, 64
    %v3026 = vpop.permute.xlu0 %3025
    %v3028 = vmul.f32 %v3010, %v3026
    %3030 = vrot.lane.b32.xlu0 %v3028, 32
    %v3031 = vpop.permute.xlu0 %3030
    %s3033 = scalar_lea.vmem [#allocation2], 14
    %3034 = vst.msk [vmem:[%s3033] sm:$0x3] %vm1822, %v3031
    %v3035 = vld [vmem:[#allocation2] sm:$0x3]
    %v3036 = vld [vmem:[#allocation2 + $0x2] sm:$0x3]
    %v3037 = vld [vmem:[#allocation2 + $0x4] sm:$0x3]
    %v3038 = vld [vmem:[#allocation2 + $0x6] sm:$0x3]
    %v3039 = vld [vmem:[#allocation2 + $0x8] sm:$0x3]
    %v3040 = vld [vmem:[#allocation2 + $0xa] sm:$0x3]
    %v3041 = vld [vmem:[#allocation2 + $0xc] sm:$0x3]
    %v3042 = vld [vmem:[#allocation2 + $0xe] sm:$0x3]
    %v3043 = vld [vmem:[%s9] sm:$0xff]
    %v3044 = vld [vmem:[%s9 + $0x8] sm:$0xff]
    %v3045 = vld [vmem:[%s9 + $0x10] sm:$0xff]
    %v3046 = vld [vmem:[%s9 + $0x18] sm:$0xff]
    %v3047 = vld [vmem:[#allocation10] sm:$0x1]
    %v3048 = vld [vmem:[#allocation12] sm:$0xff]
    %v3049 = vld [vmem:[#allocation12 + $0x8] sm:$0xff]
    %v3050 = vld [vmem:[#allocation12 + $0x10] sm:$0xff]
    %v3051 = vld [vmem:[#allocation12 + $0x18] sm:$0xff]
    %v3052 = vld [vmem:[#allocation13] sm:$0x1]
    %v3053 = vld [vmem:[%s13] sm:$0xff]
    %v3054 = vld [vmem:[%s13 + $0x8] sm:$0xff]
    %v3055 = vld [vmem:[%s13 + $0x10] sm:$0xff]
    %v3056 = vld [vmem:[%s13 + $0x18] sm:$0xff]
    %v3057 = vld [vmem:[#allocation15] sm:$0x1]
    %v3059 = vlaneseq
    %v3060 = vshrl.u32 %v3059, 7
    %v3061 = vsub.s32 0, %v3060
    %v3062 = vrot.slane %v3047, %v3061
    %v3072 = vrot.slane %v3036, 7
    %v3073 = vsel %vm308, %v3072, %v3035
    %v3074 = vrot.slane %v3037, 6
    %vm3075 = vcmask 1042434
    %v3076 = vsel %vm3075, %v3074, %v3073
    %v3077 = vrot.slane %v3038, 5
    %vm3078 = vcmask 1043459
    %v3079 = vsel %vm3078, %v3077, %v3076
    %v3080 = vrot.slane %v3039, 4
    %vm3081 = vcmask 1044484
    %v3082 = vsel %vm3081, %v3080, %v3079
    %v3083 = vrot.slane %v3040, 3
    %vm3084 = vcmask 1045509
    %v3085 = vsel %vm3084, %v3083, %v3082
    %v3086 = vrot.slane %v3041, 2
    %vm3087 = vcmask 1046534
    %v3088 = vsel %vm3087, %v3086, %v3085
    %v3089 = vrot.slane %v3042, 1
    %vm3090 = vcmask 1047559
    %v3091 = vsel %vm3090, %v3089, %v3088
    %v3092 = vsel %vm231, %v3091, 0
    %3094 = vmatprep.subr.mxu0 0.0
    %3095 = vmatpush1.msra.mxu0 %v3043
    %3096 = vmatprep.subr.mxu0 0.0
    %3097 = vmatpush1.msra.mxu0 %v3044
    %3098 = vmatprep.subr.mxu0 0.0
    %3099 = vmatpush1.msra.mxu0 %v3045
    %3100 = vmatprep.subr.mxu0 0.0
    %3101 = vmatpush1.msra.mxu0 %v3046
    %3102 = vmatprep.subr.mxu0 0.0
    %3103 = vmatpush1.msra.mxu0 0.0
    %3104 = vmatprep.subr.mxu0 0.0
    %3105 = vmatpush1.msra.mxu0 0.0
    %3106 = vmatprep.subr.mxu0 0.0
    %3107 = vmatpush1.msra.mxu0 0.0
    %3108 = vmatprep.subr.mxu0 0.0
    %3109 = vmatpush1.msra.mxu0 0.0
    %3110 = vmatprep.subr.mxu0 0.0
    %3111 = vmatpush1.msra.mxu0 0.0
    %3112 = vmatprep.subr.mxu0 0.0
    %3113 = vmatpush1.msra.mxu0 0.0
    %3114 = vmatprep.subr.mxu0 0.0
    %3115 = vmatpush1.msra.mxu0 0.0
    %3116 = vmatprep.subr.mxu0 0.0
    %3117 = vmatpush1.msra.mxu0 0.0
    %3118 = vmatprep.subr.mxu0 0.0
    %3119 = vmatpush1.msra.mxu0 0.0
    %3120 = vmatprep.subr.mxu0 0.0
    %3121 = vmatpush1.msra.mxu0 0.0
    %3122 = vmatprep.subr.mxu0 0.0
    %3123 = vmatpush1.msra.mxu0 0.0
    %3124 = vmatprep.subr.mxu0 0.0
    %3125 = vmatpush1.msra.mxu0 0.0
    %3126 = vmatprep.subr.mxu0 0.0
    %3127 = vmatpush1.msra.mxu0 0.0
    %3128 = vmatprep.subr.mxu0 0.0
    %3129 = vmatpush1.msra.mxu0 0.0
    %3130 = vmatprep.subr.mxu0 0.0
    %3131 = vmatpush1.msra.mxu0 0.0
    %3132 = vmatprep.subr.mxu0 0.0
    %3133 = vmatpush1.msra.mxu0 0.0
    %3134 = vmatprep.subr.mxu0 0.0
    %3135 = vmatpush1.msra.mxu0 0.0
    %3136 = vmatprep.subr.mxu0 0.0
    %3137 = vmatpush1.msra.mxu0 0.0
    %3138 = vmatprep.subr.mxu0 0.0
    %3139 = vmatpush1.msra.mxu0 0.0
    %3140 = vmatprep.subr.mxu0 0.0
    %3141 = vmatpush1.msra.mxu0 0.0
    %3142 = vmatprep.subr.mxu0 0.0
    %3143 = vmatpush1.msra.mxu0 0.0
    %3144 = vmatprep.subr.mxu0 0.0
    %3145 = vmatpush1.msra.mxu0 0.0
    %3146 = vmatprep.subr.mxu0 0.0
    %3147 = vmatpush1.msra.mxu0 0.0
    %3148 = vmatprep.subr.mxu0 0.0
    %3149 = vmatpush1.msra.mxu0 0.0
    %3150 = vmatprep.subr.mxu0 0.0
    %3151 = vmatpush1.msra.mxu0 0.0
    %3152 = vmatprep.subr.mxu0 0.0
    %3153 = vmatpush1.msra.mxu0 0.0
    %3154 = vmatprep.subr.mxu0 0.0
    %3155 = vmatpush1.msra.mxu0 0.0
    %3156 = vmatprep.subr.mxu0 0.0
    %3157 = vmatpush1.msra.mxu0 0.0
    %3158 = vmatprep.mubr.f32.mxu0 0.0
    %3159 = vmatmul.mubr.f32.gmra.mrb[0].mxu0 %v3092
    %v3160 = vpop.f32.mrb[0].mxu0
    %v3161 = vadd.f32 %v3062, %v3160
    %v3162 = vpop.f32.mrb[0].mxu0
    %3163 = vdwg.mxu0
    %v3165 = vlaneseq
    %v3166 = vshrl.u32 %v3165, 7
    %v3167 = vsub.s32 0, %v3166
    %v3168 = vrot.slane %v3052, %v3167
    %v3170 = vadd.f32 %v3168, 0.0
    %3172 = vrot.lane.b32.xlu0 %v3161, 96
    %v3173 = vpop.permute.xlu0 %3172
    %v3174 = vsel %vm310, %v3161, 0
    %v3176 = vsel %vm310, %v3173, 0
    %3178 = vmatprep.subr.mxu0 0.0
    %3179 = vmatpush1.xpose.msra.mxu0 %v3176
    %3180 = vmatprep.subr.mxu0 0.0
    %3181 = vmatpush1.xpose.msra.mxu0 0.0
    %3182 = vmatprep.subr.mxu0 0.0
    %3183 = vmatpush1.xpose.msra.mxu0 0.0
    %3184 = vmatprep.subr.mxu0 0.0
    %3185 = vmatpush1.xpose.msra.mxu0 0.0
    %3186 = vmatprep.subr.mxu0 0.0
    %3187 = vmatpush1.xpose.msra.mxu0 0.0
    %3188 = vmatprep.subr.mxu0 0.0
    %3189 = vmatpush1.xpose.msra.mxu0 0.0
    %3190 = vmatprep.subr.mxu0 0.0
    %3191 = vmatpush1.xpose.msra.mxu0 0.0
    %3192 = vmatprep.subr.mxu0 0.0
    %3193 = vmatpush1.xpose.msra.mxu0 0.0
    %3194 = vmatprep.subr.mxu0 0.0
    %3195 = vmatpush1.xpose.msra.mxu0 0.0
    %3196 = vmatprep.subr.mxu0 0.0
    %3197 = vmatpush1.xpose.msra.mxu0 0.0
    %3198 = vmatprep.subr.mxu0 0.0
    %3199 = vmatpush1.xpose.msra.mxu0 0.0
    %3200 = vmatprep.subr.mxu0 0.0
    %3201 = vmatpush1.xpose.msra.mxu0 0.0
    %3202 = vmatprep.subr.mxu0 0.0
    %3203 = vmatpush1.xpose.msra.mxu0 0.0
    %3204 = vmatprep.subr.mxu0 0.0
    %3205 = vmatpush1.xpose.msra.mxu0 0.0
    %3206 = vmatprep.subr.mxu0 0.0
    %3207 = vmatpush1.xpose.msra.mxu0 0.0
    %3208 = vmatprep.subr.mxu0 0.0
    %3209 = vmatpush1.xpose.msra.mxu0 0.0
    %3210 = vmatprep.subr.mxu0 0.0
    %3211 = vmatpush1.xpose.msra.mxu0 0.0
    %3212 = vmatprep.subr.mxu0 0.0
    %3213 = vmatpush1.xpose.msra.mxu0 0.0
    %3214 = vmatprep.subr.mxu0 0.0
    %3215 = vmatpush1.xpose.msra.mxu0 0.0
    %3216 = vmatprep.subr.mxu0 0.0
    %3217 = vmatpush1.xpose.msra.mxu0 0.0
    %3218 = vmatprep.subr.mxu0 0.0
    %3219 = vmatpush1.xpose.msra.mxu0 0.0
    %3220 = vmatprep.subr.mxu0 0.0
    %3221 = vmatpush1.xpose.msra.mxu0 0.0
    %3222 = vmatprep.subr.mxu0 0.0
    %3223 = vmatpush1.xpose.msra.mxu0 0.0
    %3224 = vmatprep.subr.mxu0 0.0
    %3225 = vmatpush1.xpose.msra.mxu0 0.0
    %3226 = vmatprep.subr.mxu0 0.0
    %3227 = vmatpush1.xpose.msra.mxu0 0.0
    %3228 = vmatprep.subr.mxu0 0.0
    %3229 = vmatpush1.xpose.msra.mxu0 0.0
    %3230 = vmatprep.subr.mxu0 0.0
    %3231 = vmatpush1.xpose.msra.mxu0 0.0
    %3232 = vmatprep.subr.mxu0 0.0
    %3233 = vmatpush1.xpose.msra.mxu0 0.0
    %3234 = vmatprep.subr.mxu0 0.0
    %3235 = vmatpush1.xpose.msra.mxu0 0.0
    %3236 = vmatprep.subr.mxu0 0.0
    %3237 = vmatpush1.xpose.msra.mxu0 0.0
    %3238 = vmatprep.subr.mxu0 0.0
    %3239 = vmatpush1.xpose.msra.mxu0 0.0
    %3240 = vmatprep.subr.mxu0 0.0
    %3241 = vmatpush1.xpose.msra.mxu0 0.0
    %3242 = vmatprep.mubr.f32.mxu0 0.0
    %3243 = vmatmul.mubr.f32.gmra.mrb[0].mxu0 %v3174
    %v3244 = vpop.f32.mrb[0].mxu0
    %v3245 = vadd.f32 0.0, %v3244
    %v3246 = vpop.f32.mrb[0].mxu0
    %3247 = vdwg.mxu0
    %v3248 = vmul.f32 %v3245, 0.35355338
    %v3249 = vsel %vm310, %v3248, -inf
    %3250 = vmax.xlane.f32.xlu0 %v3249
    %v3251 = vpop.xlane.xlu0 %3250
    %v3252 = vsub.f32 %v3248, %v3251
    %v3253 = vmul.f32 %v3252, 1.442695
    %v3254 = vpow.pop %v3253
    %v3255 = vsel %vm310, %v3254, 0.0
    %3256 = vadd.xlane.f32.xlu0 %v3255
    %v3257 = vpop.xlane.xlu0 %3256
    %v3258 = vrcp.pop %v3257
    %v3259 = vmul.f32 %v3254, %v3258
    %3260 = vrot.lane.b32.xlu0 %v3161, 64
    %v3261 = vpop.permute.xlu0 %3260
    %v3264 = vsel %vm310, %v3259, 0
    %3266 = vmatprep.subr.mxu0 0.0
    %3267 = vmatpush1.msra.mxu0 %v3261
    %3268 = vmatprep.subr.mxu0 0.0
    %3269 = vmatpush1.msra.mxu0 0.0
    %3270 = vmatprep.subr.mxu0 0.0
    %3271 = vmatpush1.msra.mxu0 0.0
    %3272 = vmatprep.subr.mxu0 0.0
    %3273 = vmatpush1.msra.mxu0 0.0
    %3274 = vmatprep.subr.mxu0 0.0
    %3275 = vmatpush1.msra.mxu0 0.0
    %3276 = vmatprep.subr.mxu0 0.0
    %3277 = vmatpush1.msra.mxu0 0.0
    %3278 = vmatprep.subr.mxu0 0.0
    %3279 = vmatpush1.msra.mxu0 0.0
    %3280 = vmatprep.subr.mxu0 0.0
    %3281 = vmatpush1.msra.mxu0 0.0
    %3282 = vmatprep.subr.mxu0 0.0
    %3283 = vmatpush1.msra.mxu0 0.0
    %3284 = vmatprep.subr.mxu0 0.0
    %3285 = vmatpush1.msra.mxu0 0.0
    %3286 = vmatprep.subr.mxu0 0.0
    %3287 = vmatpush1.msra.mxu0 0.0
    %3288 = vmatprep.subr.mxu0 0.0
    %3289 = vmatpush1.msra.mxu0 0.0
    %3290 = vmatprep.subr.mxu0 0.0
    %3291 = vmatpush1.msra.mxu0 0.0
    %3292 = vmatprep.subr.mxu0 0.0
    %3293 = vmatpush1.msra.mxu0 0.0
    %3294 = vmatprep.subr.mxu0 0.0
    %3295 = vmatpush1.msra.mxu0 0.0
    %3296 = vmatprep.subr.mxu0 0.0
    %3297 = vmatpush1.msra.mxu0 0.0
    %3298 = vmatprep.subr.mxu0 0.0
    %3299 = vmatpush1.msra.mxu0 0.0
    %3300 = vmatprep.subr.mxu0 0.0
    %3301 = vmatpush1.msra.mxu0 0.0
    %3302 = vmatprep.subr.mxu0 0.0
    %3303 = vmatpush1.msra.mxu0 0.0
    %3304 = vmatprep.subr.mxu0 0.0
    %3305 = vmatpush1.msra.mxu0 0.0
    %3306 = vmatprep.subr.mxu0 0.0
    %3307 = vmatpush1.msra.mxu0 0.0
    %3308 = vmatprep.subr.mxu0 0.0
    %3309 = vmatpush1.msra.mxu0 0.0
    %3310 = vmatprep.subr.mxu0 0.0
    %3311 = vmatpush1.msra.mxu0 0.0
    %3312 = vmatprep.subr.mxu0 0.0
    %3313 = vmatpush1.msra.mxu0 0.0
    %3314 = vmatprep.subr.mxu0 0.0
    %3315 = vmatpush1.msra.mxu0 0.0
    %3316 = vmatprep.subr.mxu0 0.0
    %3317 = vmatpush1.msra.mxu0 0.0
    %3318 = vmatprep.subr.mxu0 0.0
    %3319 = vmatpush1.msra.mxu0 0.0
    %3320 = vmatprep.subr.mxu0 0.0
    %3321 = vmatpush1.msra.mxu0 0.0
    %3322 = vmatprep.subr.mxu0 0.0
    %3323 = vmatpush1.msra.mxu0 0.0
    %3324 = vmatprep.subr.mxu0 0.0
    %3325 = vmatpush1.msra.mxu0 0.0
    %3326 = vmatprep.subr.mxu0 0.0
    %3327 = vmatpush1.msra.mxu0 0.0
    %3328 = vmatprep.subr.mxu0 0.0
    %3329 = vmatpush1.msra.mxu0 0.0
    %3330 = vmatprep.mubr.f32.mxu0 0.0
    %3331 = vmatmul.mubr.f32.gmra.mrb[0].mxu0 %v3264
    %v3332 = vpop.f32.mrb[0].mxu0
    %v3333 = vadd.f32 0.0, %v3332
    %v3334 = vpop.f32.mrb[0].mxu0
    %3335 = vdwg.mxu0
    %v3337 = vsel %vm310, %v3333, 0
    %3339 = vmatprep.subr.mxu0 0.0
    %3340 = vmatpush1.msra.mxu0 %v3048
    %3341 = vmatprep.subr.mxu0 0.0
    %3342 = vmatpush1.msra.mxu0 0.0
    %3343 = vmatprep.subr.mxu0 0.0
    %3344 = vmatpush1.msra.mxu0 0.0
    %3345 = vmatprep.subr.mxu0 0.0
    %3346 = vmatpush1.msra.mxu0 0.0
    %3347 = vmatprep.subr.mxu0 0.0
    %3348 = vmatpush1.msra.mxu0 0.0
    %3349 = vmatprep.subr.mxu0 0.0
    %3350 = vmatpush1.msra.mxu0 0.0
    %3351 = vmatprep.subr.mxu0 0.0
    %3352 = vmatpush1.msra.mxu0 0.0
    %3353 = vmatprep.subr.mxu0 0.0
    %3354 = vmatpush1.msra.mxu0 0.0
    %3355 = vmatprep.subr.mxu0 0.0
    %3356 = vmatpush1.msra.mxu0 0.0
    %3357 = vmatprep.subr.mxu0 0.0
    %3358 = vmatpush1.msra.mxu0 0.0
    %3359 = vmatprep.subr.mxu0 0.0
    %3360 = vmatpush1.msra.mxu0 0.0
    %3361 = vmatprep.subr.mxu0 0.0
    %3362 = vmatpush1.msra.mxu0 0.0
    %3363 = vmatprep.subr.mxu0 0.0
    %3364 = vmatpush1.msra.mxu0 0.0
    %3365 = vmatprep.subr.mxu0 0.0
    %3366 = vmatpush1.msra.mxu0 0.0
    %3367 = vmatprep.subr.mxu0 0.0
    %3368 = vmatpush1.msra.mxu0 0.0
    %3369 = vmatprep.subr.mxu0 0.0
    %3370 = vmatpush1.msra.mxu0 0.0
    %3371 = vmatprep.subr.mxu0 0.0
    %3372 = vmatpush1.msra.mxu0 0.0
    %3373 = vmatprep.subr.mxu0 0.0
    %3374 = vmatpush1.msra.mxu0 0.0
    %3375 = vmatprep.subr.mxu0 0.0
    %3376 = vmatpush1.msra.mxu0 0.0
    %3377 = vmatprep.subr.mxu0 0.0
    %3378 = vmatpush1.msra.mxu0 0.0
    %3379 = vmatprep.subr.mxu0 0.0
    %3380 = vmatpush1.msra.mxu0 0.0
    %3381 = vmatprep.subr.mxu0 0.0
    %3382 = vmatpush1.msra.mxu0 0.0
    %3383 = vmatprep.subr.mxu0 0.0
    %3384 = vmatpush1.msra.mxu0 0.0
    %3385 = vmatprep.subr.mxu0 0.0
    %3386 = vmatpush1.msra.mxu0 0.0
    %3387 = vmatprep.subr.mxu0 0.0
    %3388 = vmatpush1.msra.mxu0 0.0
    %3389 = vmatprep.subr.mxu0 0.0
    %3390 = vmatpush1.msra.mxu0 0.0
    %3391 = vmatprep.subr.mxu0 0.0
    %3392 = vmatpush1.msra.mxu0 0.0
    %3393 = vmatprep.subr.mxu0 0.0
    %3394 = vmatpush1.msra.mxu0 0.0
    %3395 = vmatprep.subr.mxu0 0.0
    %3396 = vmatpush1.msra.mxu0 0.0
    %3397 = vmatprep.subr.mxu0 0.0
    %3398 = vmatpush1.msra.mxu0 0.0
    %3399 = vmatprep.subr.mxu0 0.0
    %3400 = vmatpush1.msra.mxu0 0.0
    %3401 = vmatprep.subr.mxu0 0.0
    %3402 = vmatpush1.msra.mxu0 0.0
    %3403 = vmatprep.mubr.f32.mxu0 0.0
    %3404 = vmatmul.mubr.f32.gmra.mrb[0].mxu0 %v3337
    %v3405 = vpop.f32.mrb[0].mxu0
    %v3406 = vadd.f32 0.0, %v3405
    %v3407 = vpop.f32.mrb[0].mxu0
    %3408 = vdwg.mxu0
    %v3409 = vadd.f32 %v3170, %v3406
    %3410 = vrot.lane.b32.xlu0 %v3161, 120
    %v3411 = vpop.permute.xlu0 %3410
    %3412 = vrot.lane.b32.xlu0 %v3161, 88
    %v3413 = vpop.permute.xlu0 %3412
    %v3414 = vsel %vm310, %v3411, 0
    %v3416 = vsel %vm310, %v3413, 0
    %3418 = vmatprep.subr.mxu0 0.0
    %3419 = vmatpush1.xpose.msra.mxu0 %v3416
    %3420 = vmatprep.subr.mxu0 0.0
    %3421 = vmatpush1.xpose.msra.mxu0 0.0
    %3422 = vmatprep.subr.mxu0 0.0
    %3423 = vmatpush1.xpose.msra.mxu0 0.0
    %3424 = vmatprep.subr.mxu0 0.0
    %3425 = vmatpush1.xpose.msra.mxu0 0.0
    %3426 = vmatprep.subr.mxu0 0.0
    %3427 = vmatpush1.xpose.msra.mxu0 0.0
    %3428 = vmatprep.subr.mxu0 0.0
    %3429 = vmatpush1.xpose.msra.mxu0 0.0
    %3430 = vmatprep.subr.mxu0 0.0
    %3431 = vmatpush1.xpose.msra.mxu0 0.0
    %3432 = vmatprep.subr.mxu0 0.0
    %3433 = vmatpush1.xpose.msra.mxu0 0.0
    %3434 = vmatprep.subr.mxu0 0.0
    %3435 = vmatpush1.xpose.msra.mxu0 0.0
    %3436 = vmatprep.subr.mxu0 0.0
    %3437 = vmatpush1.xpose.msra.mxu0 0.0
    %3438 = vmatprep.subr.mxu0 0.0
    %3439 = vmatpush1.xpose.msra.mxu0 0.0
    %3440 = vmatprep.subr.mxu0 0.0
    %3441 = vmatpush1.xpose.msra.mxu0 0.0
    %3442 = vmatprep.subr.mxu0 0.0
    %3443 = vmatpush1.xpose.msra.mxu0 0.0
    %3444 = vmatprep.subr.mxu0 0.0
    %3445 = vmatpush1.xpose.msra.mxu0 0.0
    %3446 = vmatprep.subr.mxu0 0.0
    %3447 = vmatpush1.xpose.msra.mxu0 0.0
    %3448 = vmatprep.subr.mxu0 0.0
    %3449 = vmatpush1.xpose.msra.mxu0 0.0
    %3450 = vmatprep.subr.mxu0 0.0
    %3451 = vmatpush1.xpose.msra.mxu0 0.0
    %3452 = vmatprep.subr.mxu0 0.0
    %3453 = vmatpush1.xpose.msra.mxu0 0.0
    %3454 = vmatprep.subr.mxu0 0.0
    %3455 = vmatpush1.xpose.msra.mxu0 0.0
    %3456 = vmatprep.subr.mxu0 0.0
    %3457 = vmatpush1.xpose.msra.mxu0 0.0
    %3458 = vmatprep.subr.mxu0 0.0
    %3459 = vmatpush1.xpose.msra.mxu0 0.0
    %3460 = vmatprep.subr.mxu0 0.0
    %3461 = vmatpush1.xpose.msra.mxu0 0.0
    %3462 = vmatprep.subr.mxu0 0.0
    %3463 = vmatpush1.xpose.msra.mxu0 0.0
    %3464 = vmatprep.subr.mxu0 0.0
    %3465 = vmatpush1.xpose.msra.mxu0 0.0
    %3466 = vmatprep.subr.mxu0 0.0
    %3467 = vmatpush1.xpose.msra.mxu0 0.0
    %3468 = vmatprep.subr.mxu0 0.0
    %3469 = vmatpush1.xpose.msra.mxu0 0.0
    %3470 = vmatprep.subr.mxu0 0.0
    %3471 = vmatpush1.xpose.msra.mxu0 0.0
    %3472 = vmatprep.subr.mxu0 0.0
    %3473 = vmatpush1.xpose.msra.mxu0 0.0
    %3474 = vmatprep.subr.mxu0 0.0
    %3475 = vmatpush1.xpose.msra.mxu0 0.0
    %3476 = vmatprep.subr.mxu0 0.0
    %3477 = vmatpush1.xpose.msra.mxu0 0.0
    %3478 = vmatprep.subr.mxu0 0.0
    %3479 = vmatpush1.xpose.msra.mxu0 0.0
    %3480 = vmatprep.subr.mxu0 0.0
    %3481 = vmatpush1.xpose.msra.mxu0 0.0
    %3482 = vmatprep.mubr.f32.mxu0 0.0
    %3483 = vmatmul.mubr.f32.gmra.mrb[0].mxu0 %v3414
    %v3484 = vpop.f32.mrb[0].mxu0
    %v3485 = vadd.f32 0.0, %v3484
    %v3486 = vpop.f32.mrb[0].mxu0
    %3487 = vdwg.mxu0
    %v3488 = vmul.f32 %v3485, 0.35355338
    %v3489 = vsel %vm310, %v3488, -inf
    %3490 = vmax.xlane.f32.xlu0 %v3489
    %v3491 = vpop.xlane.xlu0 %3490
    %v3492 = vsub.f32 %v3488, %v3491
    %v3493 = vmul.f32 %v3492, 1.442695
    %v3494 = vpow.pop %v3493
    %v3495 = vsel %vm310, %v3494, 0.0
    %3496 = vadd.xlane.f32.xlu0 %v3495
    %v3497 = vpop.xlane.xlu0 %3496
    %v3498 = vrcp.pop %v3497
    %v3499 = vmul.f32 %v3494, %v3498
    %3500 = vrot.lane.b32.xlu0 %v3161, 56
    %v3501 = vpop.permute.xlu0 %3500
    %v3504 = vsel %vm310, %v3499, 0
    %3506 = vmatprep.subr.mxu0 0.0
    %3507 = vmatpush1.msra.mxu0 %v3501
    %3508 = vmatprep.subr.mxu0 0.0
    %3509 = vmatpush1.msra.mxu0 0.0
    %3510 = vmatprep.subr.mxu0 0.0
    %3511 = vmatpush1.msra.mxu0 0.0
    %3512 = vmatprep.subr.mxu0 0.0
    %3513 = vmatpush1.msra.mxu0 0.0
    %3514 = vmatprep.subr.mxu0 0.0
    %3515 = vmatpush1.msra.mxu0 0.0
    %3516 = vmatprep.subr.mxu0 0.0
    %3517 = vmatpush1.msra.mxu0 0.0
    %3518 = vmatprep.subr.mxu0 0.0
    %3519 = vmatpush1.msra.mxu0 0.0
    %3520 = vmatprep.subr.mxu0 0.0
    %3521 = vmatpush1.msra.mxu0 0.0
    %3522 = vmatprep.subr.mxu0 0.0
    %3523 = vmatpush1.msra.mxu0 0.0
    %3524 = vmatprep.subr.mxu0 0.0
    %3525 = vmatpush1.msra.mxu0 0.0
    %3526 = vmatprep.subr.mxu0 0.0
    %3527 = vmatpush1.msra.mxu0 0.0
    %3528 = vmatprep.subr.mxu0 0.0
    %3529 = vmatpush1.msra.mxu0 0.0
    %3530 = vmatprep.subr.mxu0 0.0
    %3531 = vmatpush1.msra.mxu0 0.0
    %3532 = vmatprep.subr.mxu0 0.0
    %3533 = vmatpush1.msra.mxu0 0.0
    %3534 = vmatprep.subr.mxu0 0.0
    %3535 = vmatpush1.msra.mxu0 0.0
    %3536 = vmatprep.subr.mxu0 0.0
    %3537 = vmatpush1.msra.mxu0 0.0
    %3538 = vmatprep.subr.mxu0 0.0
    %3539 = vmatpush1.msra.mxu0 0.0
    %3540 = vmatprep.subr.mxu0 0.0
    %3541 = vmatpush1.msra.mxu0 0.0
    %3542 = vmatprep.subr.mxu0 0.0
    %3543 = vmatpush1.msra.mxu0 0.0
    %3544 = vmatprep.subr.mxu0 0.0
    %3545 = vmatpush1.msra.mxu0 0.0
    %3546 = vmatprep.subr.mxu0 0.0
    %3547 = vmatpush1.msra.mxu0 0.0
    %3548 = vmatprep.subr.mxu0 0.0
    %3549 = vmatpush1.msra.mxu0 0.0
    %3550 = vmatprep.subr.mxu0 0.0
    %3551 = vmatpush1.msra.mxu0 0.0
    %3552 = vmatprep.subr.mxu0 0.0
    %3553 = vmatpush1.msra.mxu0 0.0
    %3554 = vmatprep.subr.mxu0 0.0
    %3555 = vmatpush1.msra.mxu0 0.0
    %3556 = vmatprep.subr.mxu0 0.0
    %3557 = vmatpush1.msra.mxu0 0.0
    %3558 = vmatprep.subr.mxu0 0.0
    %3559 = vmatpush1.msra.mxu0 0.0
    %3560 = vmatprep.subr.mxu0 0.0
    %3561 = vmatpush1.msra.mxu0 0.0
    %3562 = vmatprep.subr.mxu0 0.0
    %3563 = vmatpush1.msra.mxu0 0.0
    %3564 = vmatprep.subr.mxu0 0.0
    %3565 = vmatpush1.msra.mxu0 0.0
    %3566 = vmatprep.subr.mxu0 0.0
    %3567 = vmatpush1.msra.mxu0 0.0
    %3568 = vmatprep.subr.mxu0 0.0
    %3569 = vmatpush1.msra.mxu0 0.0
    %3570 = vmatprep.mubr.f32.mxu0 0.0
    %3571 = vmatmul.mubr.f32.gmra.mrb[0].mxu0 %v3504
    %v3572 = vpop.f32.mrb[0].mxu0
    %v3573 = vadd.f32 0.0, %v3572
    %v3574 = vpop.f32.mrb[0].mxu0
    %3575 = vdwg.mxu0
    %v3577 = vsel %vm310, %v3573, 0
    %3579 = vmatprep.subr.mxu0 0.0
    %3580 = vmatpush1.msra.mxu0 %v3049
    %3581 = vmatprep.subr.mxu0 0.0
    %3582 = vmatpush1.msra.mxu0 0.0
    %3583 = vmatprep.subr.mxu0 0.0
    %3584 = vmatpush1.msra.mxu0 0.0
    %3585 = vmatprep.subr.mxu0 0.0
    %3586 = vmatpush1.msra.mxu0 0.0
    %3587 = vmatprep.subr.mxu0 0.0
    %3588 = vmatpush1.msra.mxu0 0.0
    %3589 = vmatprep.subr.mxu0 0.0
    %3590 = vmatpush1.msra.mxu0 0.0
    %3591 = vmatprep.subr.mxu0 0.0
    %3592 = vmatpush1.msra.mxu0 0.0
    %3593 = vmatprep.subr.mxu0 0.0
    %3594 = vmatpush1.msra.mxu0 0.0
    %3595 = vmatprep.subr.mxu0 0.0
    %3596 = vmatpush1.msra.mxu0 0.0
    %3597 = vmatprep.subr.mxu0 0.0
    %3598 = vmatpush1.msra.mxu0 0.0
    %3599 = vmatprep.subr.mxu0 0.0
    %3600 = vmatpush1.msra.mxu0 0.0
    %3601 = vmatprep.subr.mxu0 0.0
    %3602 = vmatpush1.msra.mxu0 0.0
    %3603 = vmatprep.subr.mxu0 0.0
    %3604 = vmatpush1.msra.mxu0 0.0
    %3605 = vmatprep.subr.mxu0 0.0
    %3606 = vmatpush1.msra.mxu0 0.0
    %3607 = vmatprep.subr.mxu0 0.0
    %3608 = vmatpush1.msra.mxu0 0.0
    %3609 = vmatprep.subr.mxu0 0.0
    %3610 = vmatpush1.msra.mxu0 0.0
    %3611 = vmatprep.subr.mxu0 0.0
    %3612 = vmatpush1.msra.mxu0 0.0
    %3613 = vmatprep.subr.mxu0 0.0
    %3614 = vmatpush1.msra.mxu0 0.0
    %3615 = vmatprep.subr.mxu0 0.0
    %3616 = vmatpush1.msra.mxu0 0.0
    %3617 = vmatprep.subr.mxu0 0.0
    %3618 = vmatpush1.msra.mxu0 0.0
    %3619 = vmatprep.subr.mxu0 0.0
    %3620 = vmatpush1.msra.mxu0 0.0
    %3621 = vmatprep.subr.mxu0 0.0
    %3622 = vmatpush1.msra.mxu0 0.0
    %3623 = vmatprep.subr.mxu0 0.0
    %3624 = vmatpush1.msra.mxu0 0.0
    %3625 = vmatprep.subr.mxu0 0.0
    %3626 = vmatpush1.msra.mxu0 0.0
    %3627 = vmatprep.subr.mxu0 0.0
    %3628 = vmatpush1.msra.mxu0 0.0
    %3629 = vmatprep.subr.mxu0 0.0
    %3630 = vmatpush1.msra.mxu0 0.0
    %3631 = vmatprep.subr.mxu0 0.0
    %3632 = vmatpush1.msra.mxu0 0.0
    %3633 = vmatprep.subr.mxu0 0.0
    %3634 = vmatpush1.msra.mxu0 0.0
    %3635 = vmatprep.subr.mxu0 0.0
    %3636 = vmatpush1.msra.mxu0 0.0
    %3637 = vmatprep.subr.mxu0 0.0
    %3638 = vmatpush1.msra.mxu0 0.0
    %3639 = vmatprep.subr.mxu0 0.0
    %3640 = vmatpush1.msra.mxu0 0.0
    %3641 = vmatprep.subr.mxu0 0.0
    %3642 = vmatpush1.msra.mxu0 0.0
    %3643 = vmatprep.mubr.f32.mxu0 0.0
    %3644 = vmatmul.mubr.f32.gmra.mrb[0].mxu0 %v3577
    %v3645 = vpop.f32.mrb[0].mxu0
    %v3646 = vadd.f32 0.0, %v3645
    %v3647 = vpop.f32.mrb[0].mxu0
    %3648 = vdwg.mxu0
    %v3649 = vadd.f32 %v3409, %v3646
    %3650 = vrot.lane.b32.xlu0 %v3161, 112
    %v3651 = vpop.permute.xlu0 %3650
    %3652 = vrot.lane.b32.xlu0 %v3161, 80
    %v3653 = vpop.permute.xlu0 %3652
    %v3654 = vsel %vm310, %v3651, 0
    %v3656 = vsel %vm310, %v3653, 0
    %3658 = vmatprep.subr.mxu0 0.0
    %3659 = vmatpush1.xpose.msra.mxu0 %v3656
    %3660 = vmatprep.subr.mxu0 0.0
    %3661 = vmatpush1.xpose.msra.mxu0 0.0
    %3662 = vmatprep.subr.mxu0 0.0
    %3663 = vmatpush1.xpose.msra.mxu0 0.0
    %3664 = vmatprep.subr.mxu0 0.0
    %3665 = vmatpush1.xpose.msra.mxu0 0.0
    %3666 = vmatprep.subr.mxu0 0.0
    %3667 = vmatpush1.xpose.msra.mxu0 0.0
    %3668 = vmatprep.subr.mxu0 0.0
    %3669 = vmatpush1.xpose.msra.mxu0 0.0
    %3670 = vmatprep.subr.mxu0 0.0
    %3671 = vmatpush1.xpose.msra.mxu0 0.0
    %3672 = vmatprep.subr.mxu0 0.0
    %3673 = vmatpush1.xpose.msra.mxu0 0.0
    %3674 = vmatprep.subr.mxu0 0.0
    %3675 = vmatpush1.xpose.msra.mxu0 0.0
    %3676 = vmatprep.subr.mxu0 0.0
    %3677 = vmatpush1.xpose.msra.mxu0 0.0
    %3678 = vmatprep.subr.mxu0 0.0
    %3679 = vmatpush1.xpose.msra.mxu0 0.0
    %3680 = vmatprep.subr.mxu0 0.0
    %3681 = vmatpush1.xpose.msra.mxu0 0.0
    %3682 = vmatprep.subr.mxu0 0.0
    %3683 = vmatpush1.xpose.msra.mxu0 0.0
    %3684 = vmatprep.subr.mxu0 0.0
    %3685 = vmatpush1.xpose.msra.mxu0 0.0
    %3686 = vmatprep.subr.mxu0 0.0
    %3687 = vmatpush1.xpose.msra.mxu0 0.0
    %3688 = vmatprep.subr.mxu0 0.0
    %3689 = vmatpush1.xpose.msra.mxu0 0.0
    %3690 = vmatprep.subr.mxu0 0.0
    %3691 = vmatpush1.xpose.msra.mxu0 0.0
    %3692 = vmatprep.subr.mxu0 0.0
    %3693 = vmatpush1.xpose.msra.mxu0 0.0
    %3694 = vmatprep.subr.mxu0 0.0
    %3695 = vmatpush1.xpose.msra.mxu0 0.0
    %3696 = vmatprep.subr.mxu0 0.0
    %3697 = vmatpush1.xpose.msra.mxu0 0.0
    %3698 = vmatprep.subr.mxu0 0.0
    %3699 = vmatpush1.xpose.msra.mxu0 0.0
    %3700 = vmatprep.subr.mxu0 0.0
    %3701 = vmatpush1.xpose.msra.mxu0 0.0
    %3702 = vmatprep.subr.mxu0 0.0
    %3703 = vmatpush1.xpose.msra.mxu0 0.0
    %3704 = vmatprep.subr.mxu0 0.0
    %3705 = vmatpush1.xpose.msra.mxu0 0.0
    %3706 = vmatprep.subr.mxu0 0.0
    %3707 = vmatpush1.xpose.msra.mxu0 0.0
    %3708 = vmatprep.subr.mxu0 0.0
    %3709 = vmatpush1.xpose.msra.mxu0 0.0
    %3710 = vmatprep.subr.mxu0 0.0
    %3711 = vmatpush1.xpose.msra.mxu0 0.0
    %3712 = vmatprep.subr.mxu0 0.0
    %3713 = vmatpush1.xpose.msra.mxu0 0.0
    %3714 = vmatprep.subr.mxu0 0.0
    %3715 = vmatpush1.xpose.msra.mxu0 0.0
    %3716 = vmatprep.subr.mxu0 0.0
    %3717 = vmatpush1.xpose.msra.mxu0 0.0
    %3718 = vmatprep.subr.mxu0 0.0
    %3719 = vmatpush1.xpose.msra.mxu0 0.0
    %3720 = vmatprep.subr.mxu0 0.0
    %3721 = vmatpush1.xpose.msra.mxu0 0.0
    %3722 = vmatprep.mubr.f32.mxu0 0.0
    %3723 = vmatmul.mubr.f32.gmra.mrb[0].mxu0 %v3654
    %v3724 = vpop.f32.mrb[0].mxu0
    %v3725 = vadd.f32 0.0, %v3724
    %v3726 = vpop.f32.mrb[0].mxu0
    %3727 = vdwg.mxu0
    %v3728 = vmul.f32 %v3725, 0.35355338
    %v3729 = vsel %vm310, %v3728, -inf
    %3730 = vmax.xlane.f32.xlu0 %v3729
    %v3731 = vpop.xlane.xlu0 %3730
    %v3732 = vsub.f32 %v3728, %v3731
    %v3733 = vmul.f32 %v3732, 1.442695
    %v3734 = vpow.pop %v3733
    %v3735 = vsel %vm310, %v3734, 0.0
    %3736 = vadd.xlane.f32.xlu0 %v3735
    %v3737 = vpop.xlane.xlu0 %3736
    %v3738 = vrcp.pop %v3737
    %v3739 = vmul.f32 %v3734, %v3738
    %3740 = vrot.lane.b32.xlu0 %v3161, 48
    %v3741 = vpop.permute.xlu0 %3740
    %v3744 = vsel %vm310, %v3739, 0
    %3746 = vmatprep.subr.mxu0 0.0
    %3747 = vmatpush1.msra.mxu0 %v3741
    %3748 = vmatprep.subr.mxu0 0.0
    %3749 = vmatpush1.msra.mxu0 0.0
    %3750 = vmatprep.subr.mxu0 0.0
    %3751 = vmatpush1.msra.mxu0 0.0
    %3752 = vmatprep.subr.mxu0 0.0
    %3753 = vmatpush1.msra.mxu0 0.0
    %3754 = vmatprep.subr.mxu0 0.0
    %3755 = vmatpush1.msra.mxu0 0.0
    %3756 = vmatprep.subr.mxu0 0.0
    %3757 = vmatpush1.msra.mxu0 0.0
    %3758 = vmatprep.subr.mxu0 0.0
    %3759 = vmatpush1.msra.mxu0 0.0
    %3760 = vmatprep.subr.mxu0 0.0
    %3761 = vmatpush1.msra.mxu0 0.0
    %3762 = vmatprep.subr.mxu0 0.0
    %3763 = vmatpush1.msra.mxu0 0.0
    %3764 = vmatprep.subr.mxu0 0.0
    %3765 = vmatpush1.msra.mxu0 0.0
    %3766 = vmatprep.subr.mxu0 0.0
    %3767 = vmatpush1.msra.mxu0 0.0
    %3768 = vmatprep.subr.mxu0 0.0
    %3769 = vmatpush1.msra.mxu0 0.0
    %3770 = vmatprep.subr.mxu0 0.0
    %3771 = vmatpush1.msra.mxu0 0.0
    %3772 = vmatprep.subr.mxu0 0.0
    %3773 = vmatpush1.msra.mxu0 0.0
    %3774 = vmatprep.subr.mxu0 0.0
    %3775 = vmatpush1.msra.mxu0 0.0
    %3776 = vmatprep.subr.mxu0 0.0
    %3777 = vmatpush1.msra.mxu0 0.0
    %3778 = vmatprep.subr.mxu0 0.0
    %3779 = vmatpush1.msra.mxu0 0.0
    %3780 = vmatprep.subr.mxu0 0.0
    %3781 = vmatpush1.msra.mxu0 0.0
    %3782 = vmatprep.subr.mxu0 0.0
    %3783 = vmatpush1.msra.mxu0 0.0
    %3784 = vmatprep.subr.mxu0 0.0
    %3785 = vmatpush1.msra.mxu0 0.0
    %3786 = vmatprep.subr.mxu0 0.0
    %3787 = vmatpush1.msra.mxu0 0.0
    %3788 = vmatprep.subr.mxu0 0.0
    %3789 = vmatpush1.msra.mxu0 0.0
    %3790 = vmatprep.subr.mxu0 0.0
    %3791 = vmatpush1.msra.mxu0 0.0
    %3792 = vmatprep.subr.mxu0 0.0
    %3793 = vmatpush1.msra.mxu0 0.0
    %3794 = vmatprep.subr.mxu0 0.0
    %3795 = vmatpush1.msra.mxu0 0.0
    %3796 = vmatprep.subr.mxu0 0.0
    %3797 = vmatpush1.msra.mxu0 0.0
    %3798 = vmatprep.subr.mxu0 0.0
    %3799 = vmatpush1.msra.mxu0 0.0
    %3800 = vmatprep.subr.mxu0 0.0
    %3801 = vmatpush1.msra.mxu0 0.0
    %3802 = vmatprep.subr.mxu0 0.0
    %3803 = vmatpush1.msra.mxu0 0.0
    %3804 = vmatprep.subr.mxu0 0.0
    %3805 = vmatpush1.msra.mxu0 0.0
    %3806 = vmatprep.subr.mxu0 0.0
    %3807 = vmatpush1.msra.mxu0 0.0
    %3808 = vmatprep.subr.mxu0 0.0
    %3809 = vmatpush1.msra.mxu0 0.0
    %3810 = vmatprep.mubr.f32.mxu0 0.0
    %3811 = vmatmul.mubr.f32.gmra.mrb[0].mxu0 %v3744
    %v3812 = vpop.f32.mrb[0].mxu0
    %v3813 = vadd.f32 0.0, %v3812
    %v3814 = vpop.f32.mrb[0].mxu0
    %3815 = vdwg.mxu0
    %v3817 = vsel %vm310, %v3813, 0
    %3819 = vmatprep.subr.mxu0 0.0
    %3820 = vmatpush1.msra.mxu0 %v3050
    %3821 = vmatprep.subr.mxu0 0.0
    %3822 = vmatpush1.msra.mxu0 0.0
    %3823 = vmatprep.subr.mxu0 0.0
    %3824 = vmatpush1.msra.mxu0 0.0
    %3825 = vmatprep.subr.mxu0 0.0
    %3826 = vmatpush1.msra.mxu0 0.0
    %3827 = vmatprep.subr.mxu0 0.0
    %3828 = vmatpush1.msra.mxu0 0.0
    %3829 = vmatprep.subr.mxu0 0.0
    %3830 = vmatpush1.msra.mxu0 0.0
    %3831 = vmatprep.subr.mxu0 0.0
    %3832 = vmatpush1.msra.mxu0 0.0
    %3833 = vmatprep.subr.mxu0 0.0
    %3834 = vmatpush1.msra.mxu0 0.0
    %3835 = vmatprep.subr.mxu0 0.0
    %3836 = vmatpush1.msra.mxu0 0.0
    %3837 = vmatprep.subr.mxu0 0.0
    %3838 = vmatpush1.msra.mxu0 0.0
    %3839 = vmatprep.subr.mxu0 0.0
    %3840 = vmatpush1.msra.mxu0 0.0
    %3841 = vmatprep.subr.mxu0 0.0
    %3842 = vmatpush1.msra.mxu0 0.0
    %3843 = vmatprep.subr.mxu0 0.0
    %3844 = vmatpush1.msra.mxu0 0.0
    %3845 = vmatprep.subr.mxu0 0.0
    %3846 = vmatpush1.msra.mxu0 0.0
    %3847 = vmatprep.subr.mxu0 0.0
    %3848 = vmatpush1.msra.mxu0 0.0
    %3849 = vmatprep.subr.mxu0 0.0
    %3850 = vmatpush1.msra.mxu0 0.0
    %3851 = vmatprep.subr.mxu0 0.0
    %3852 = vmatpush1.msra.mxu0 0.0
    %3853 = vmatprep.subr.mxu0 0.0
    %3854 = vmatpush1.msra.mxu0 0.0
    %3855 = vmatprep.subr.mxu0 0.0
    %3856 = vmatpush1.msra.mxu0 0.0
    %3857 = vmatprep.subr.mxu0 0.0
    %3858 = vmatpush1.msra.mxu0 0.0
    %3859 = vmatprep.subr.mxu0 0.0
    %3860 = vmatpush1.msra.mxu0 0.0
    %3861 = vmatprep.subr.mxu0 0.0
    %3862 = vmatpush1.msra.mxu0 0.0
    %3863 = vmatprep.subr.mxu0 0.0
    %3864 = vmatpush1.msra.mxu0 0.0
    %3865 = vmatprep.subr.mxu0 0.0
    %3866 = vmatpush1.msra.mxu0 0.0
    %3867 = vmatprep.subr.mxu0 0.0
    %3868 = vmatpush1.msra.mxu0 0.0
    %3869 = vmatprep.subr.mxu0 0.0
    %3870 = vmatpush1.msra.mxu0 0.0
    %3871 = vmatprep.subr.mxu0 0.0
    %3872 = vmatpush1.msra.mxu0 0.0
    %3873 = vmatprep.subr.mxu0 0.0
    %3874 = vmatpush1.msra.mxu0 0.0
    %3875 = vmatprep.subr.mxu0 0.0
    %3876 = vmatpush1.msra.mxu0 0.0
    %3877 = vmatprep.subr.mxu0 0.0
    %3878 = vmatpush1.msra.mxu0 0.0
    %3879 = vmatprep.subr.mxu0 0.0
    %3880 = vmatpush1.msra.mxu0 0.0
    %3881 = vmatprep.subr.mxu0 0.0
    %3882 = vmatpush1.msra.mxu0 0.0
    %3883 = vmatprep.mubr.f32.mxu0 0.0
    %3884 = vmatmul.mubr.f32.gmra.mrb[0].mxu0 %v3817
    %v3885 = vpop.f32.mrb[0].mxu0
    %v3886 = vadd.f32 0.0, %v3885
    %v3887 = vpop.f32.mrb[0].mxu0
    %3888 = vdwg.mxu0
    %v3889 = vadd.f32 %v3649, %v3886
    %3890 = vrot.lane.b32.xlu0 %v3161, 104
    %v3891 = vpop.permute.xlu0 %3890
    %3892 = vrot.lane.b32.xlu0 %v3161, 72
    %v3893 = vpop.permute.xlu0 %3892
    %v3894 = vsel %vm310, %v3891, 0
    %v3896 = vsel %vm310, %v3893, 0
    %3898 = vmatprep.subr.mxu0 0.0
    %3899 = vmatpush1.xpose.msra.mxu0 %v3896
    %3900 = vmatprep.subr.mxu0 0.0
    %3901 = vmatpush1.xpose.msra.mxu0 0.0
    %3902 = vmatprep.subr.mxu0 0.0
    %3903 = vmatpush1.xpose.msra.mxu0 0.0
    %3904 = vmatprep.subr.mxu0 0.0
    %3905 = vmatpush1.xpose.msra.mxu0 0.0
    %3906 = vmatprep.subr.mxu0 0.0
    %3907 = vmatpush1.xpose.msra.mxu0 0.0
    %3908 = vmatprep.subr.mxu0 0.0
    %3909 = vmatpush1.xpose.msra.mxu0 0.0
    %3910 = vmatprep.subr.mxu0 0.0
    %3911 = vmatpush1.xpose.msra.mxu0 0.0
    %3912 = vmatprep.subr.mxu0 0.0
    %3913 = vmatpush1.xpose.msra.mxu0 0.0
    %3914 = vmatprep.subr.mxu0 0.0
    %3915 = vmatpush1.xpose.msra.mxu0 0.0
    %3916 = vmatprep.subr.mxu0 0.0
    %3917 = vmatpush1.xpose.msra.mxu0 0.0
    %3918 = vmatprep.subr.mxu0 0.0
    %3919 = vmatpush1.xpose.msra.mxu0 0.0
    %3920 = vmatprep.subr.mxu0 0.0
    %3921 = vmatpush1.xpose.msra.mxu0 0.0
    %3922 = vmatprep.subr.mxu0 0.0
    %3923 = vmatpush1.xpose.msra.mxu0 0.0
    %3924 = vmatprep.subr.mxu0 0.0
    %3925 = vmatpush1.xpose.msra.mxu0 0.0
    %3926 = vmatprep.subr.mxu0 0.0
    %3927 = vmatpush1.xpose.msra.mxu0 0.0
    %3928 = vmatprep.subr.mxu0 0.0
    %3929 = vmatpush1.xpose.msra.mxu0 0.0
    %3930 = vmatprep.subr.mxu0 0.0
    %3931 = vmatpush1.xpose.msra.mxu0 0.0
    %3932 = vmatprep.subr.mxu0 0.0
    %3933 = vmatpush1.xpose.msra.mxu0 0.0
    %3934 = vmatprep.subr.mxu0 0.0
    %3935 = vmatpush1.xpose.msra.mxu0 0.0
    %3936 = vmatprep.subr.mxu0 0.0
    %3937 = vmatpush1.xpose.msra.mxu0 0.0
    %3938 = vmatprep.subr.mxu0 0.0
    %3939 = vmatpush1.xpose.msra.mxu0 0.0
    %3940 = vmatprep.subr.mxu0 0.0
    %3941 = vmatpush1.xpose.msra.mxu0 0.0
    %3942 = vmatprep.subr.mxu0 0.0
    %3943 = vmatpush1.xpose.msra.mxu0 0.0
    %3944 = vmatprep.subr.mxu0 0.0
    %3945 = vmatpush1.xpose.msra.mxu0 0.0
    %3946 = vmatprep.subr.mxu0 0.0
    %3947 = vmatpush1.xpose.msra.mxu0 0.0
    %3948 = vmatprep.subr.mxu0 0.0
    %3949 = vmatpush1.xpose.msra.mxu0 0.0
    %3950 = vmatprep.subr.mxu0 0.0
    %3951 = vmatpush1.xpose.msra.mxu0 0.0
    %3952 = vmatprep.subr.mxu0 0.0
    %3953 = vmatpush1.xpose.msra.mxu0 0.0
    %3954 = vmatprep.subr.mxu0 0.0
    %3955 = vmatpush1.xpose.msra.mxu0 0.0
    %3956 = vmatprep.subr.mxu0 0.0
    %3957 = vmatpush1.xpose.msra.mxu0 0.0
    %3958 = vmatprep.subr.mxu0 0.0
    %3959 = vmatpush1.xpose.msra.mxu0 0.0
    %3960 = vmatprep.subr.mxu0 0.0
    %3961 = vmatpush1.xpose.msra.mxu0 0.0
    %3962 = vmatprep.mubr.f32.mxu0 0.0
    %3963 = vmatmul.mubr.f32.gmra.mrb[0].mxu0 %v3894
    %v3964 = vpop.f32.mrb[0].mxu0
    %v3965 = vadd.f32 0.0, %v3964
    %v3966 = vpop.f32.mrb[0].mxu0
    %3967 = vdwg.mxu0
    %v3968 = vmul.f32 %v3965, 0.35355338
    %v3969 = vsel %vm310, %v3968, -inf
    %3970 = vmax.xlane.f32.xlu0 %v3969
    %v3971 = vpop.xlane.xlu0 %3970
    %v3972 = vsub.f32 %v3968, %v3971
    %v3973 = vmul.f32 %v3972, 1.442695
    %v3974 = vpow.pop %v3973
    %v3975 = vsel %vm310, %v3974, 0.0
    %3976 = vadd.xlane.f32.xlu0 %v3975
    %v3977 = vpop.xlane.xlu0 %3976
    %v3978 = vrcp.pop %v3977
    %v3979 = vmul.f32 %v3974, %v3978
    %3980 = vrot.lane.b32.xlu0 %v3161, 40
    %v3981 = vpop.permute.xlu0 %3980
    %v3984 = vsel %vm310, %v3979, 0
    %3986 = vmatprep.subr.mxu0 0.0
    %3987 = vmatpush1.msra.mxu0 %v3981
    %3988 = vmatprep.subr.mxu0 0.0
    %3989 = vmatpush1.msra.mxu0 0.0
    %3990 = vmatprep.subr.mxu0 0.0
    %3991 = vmatpush1.msra.mxu0 0.0
    %3992 = vmatprep.subr.mxu0 0.0
    %3993 = vmatpush1.msra.mxu0 0.0
    %3994 = vmatprep.subr.mxu0 0.0
    %3995 = vmatpush1.msra.mxu0 0.0
    %3996 = vmatprep.subr.mxu0 0.0
    %3997 = vmatpush1.msra.mxu0 0.0
    %3998 = vmatprep.subr.mxu0 0.0
    %3999 = vmatpush1.msra.mxu0 0.0
    %4000 = vmatprep.subr.mxu0 0.0
    %4001 = vmatpush1.msra.mxu0 0.0
    %4002 = vmatprep.subr.mxu0 0.0
    %4003 = vmatpush1.msra.mxu0 0.0
    %4004 = vmatprep.subr.mxu0 0.0
    %4005 = vmatpush1.msra.mxu0 0.0
    %4006 = vmatprep.subr.mxu0 0.0
    %4007 = vmatpush1.msra.mxu0 0.0
    %4008 = vmatprep.subr.mxu0 0.0
    %4009 = vmatpush1.msra.mxu0 0.0
    %4010 = vmatprep.subr.mxu0 0.0
    %4011 = vmatpush1.msra.mxu0 0.0
    %4012 = vmatprep.subr.mxu0 0.0
    %4013 = vmatpush1.msra.mxu0 0.0
    %4014 = vmatprep.subr.mxu0 0.0
    %4015 = vmatpush1.msra.mxu0 0.0
    %4016 = vmatprep.subr.mxu0 0.0
    %4017 = vmatpush1.msra.mxu0 0.0
    %4018 = vmatprep.subr.mxu0 0.0
    %4019 = vmatpush1.msra.mxu0 0.0
    %4020 = vmatprep.subr.mxu0 0.0
    %4021 = vmatpush1.msra.mxu0 0.0
    %4022 = vmatprep.subr.mxu0 0.0
    %4023 = vmatpush1.msra.mxu0 0.0
    %4024 = vmatprep.subr.mxu0 0.0
    %4025 = vmatpush1.msra.mxu0 0.0
    %4026 = vmatprep.subr.mxu0 0.0
    %4027 = vmatpush1.msra.mxu0 0.0
    %4028 = vmatprep.subr.mxu0 0.0
    %4029 = vmatpush1.msra.mxu0 0.0
    %4030 = vmatprep.subr.mxu0 0.0
    %4031 = vmatpush1.msra.mxu0 0.0
    %4032 = vmatprep.subr.mxu0 0.0
    %4033 = vmatpush1.msra.mxu0 0.0
    %4034 = vmatprep.subr.mxu0 0.0
    %4035 = vmatpush1.msra.mxu0 0.0
    %4036 = vmatprep.subr.mxu0 0.0
    %4037 = vmatpush1.msra.mxu0 0.0
    %4038 = vmatprep.subr.mxu0 0.0
    %4039 = vmatpush1.msra.mxu0 0.0
    %4040 = vmatprep.subr.mxu0 0.0
    %4041 = vmatpush1.msra.mxu0 0.0
    %4042 = vmatprep.subr.mxu0 0.0
    %4043 = vmatpush1.msra.mxu0 0.0
    %4044 = vmatprep.subr.mxu0 0.0
    %4045 = vmatpush1.msra.mxu0 0.0
    %4046 = vmatprep.subr.mxu0 0.0
    %4047 = vmatpush1.msra.mxu0 0.0
    %4048 = vmatprep.subr.mxu0 0.0
    %4049 = vmatpush1.msra.mxu0 0.0
    %4050 = vmatprep.mubr.f32.mxu0 0.0
    %4051 = vmatmul.mubr.f32.gmra.mrb[0].mxu0 %v3984
    %v4052 = vpop.f32.mrb[0].mxu0
    %v4053 = vadd.f32 0.0, %v4052
    %v4054 = vpop.f32.mrb[0].mxu0
    %4055 = vdwg.mxu0
    %v4057 = vsel %vm310, %v4053, 0
    %4059 = vmatprep.subr.mxu0 0.0
    %4060 = vmatpush1.msra.mxu0 %v3051
    %4061 = vmatprep.subr.mxu0 0.0
    %4062 = vmatpush1.msra.mxu0 0.0
    %4063 = vmatprep.subr.mxu0 0.0
    %4064 = vmatpush1.msra.mxu0 0.0
    %4065 = vmatprep.subr.mxu0 0.0
    %4066 = vmatpush1.msra.mxu0 0.0
    %4067 = vmatprep.subr.mxu0 0.0
    %4068 = vmatpush1.msra.mxu0 0.0
    %4069 = vmatprep.subr.mxu0 0.0
    %4070 = vmatpush1.msra.mxu0 0.0
    %4071 = vmatprep.subr.mxu0 0.0
    %4072 = vmatpush1.msra.mxu0 0.0
    %4073 = vmatprep.subr.mxu0 0.0
    %4074 = vmatpush1.msra.mxu0 0.0
    %4075 = vmatprep.subr.mxu0 0.0
    %4076 = vmatpush1.msra.mxu0 0.0
    %4077 = vmatprep.subr.mxu0 0.0
    %4078 = vmatpush1.msra.mxu0 0.0
    %4079 = vmatprep.subr.mxu0 0.0
    %4080 = vmatpush1.msra.mxu0 0.0
    %4081 = vmatprep.subr.mxu0 0.0
    %4082 = vmatpush1.msra.mxu0 0.0
    %4083 = vmatprep.subr.mxu0 0.0
    %4084 = vmatpush1.msra.mxu0 0.0
    %4085 = vmatprep.subr.mxu0 0.0
    %4086 = vmatpush1.msra.mxu0 0.0
    %4087 = vmatprep.subr.mxu0 0.0
    %4088 = vmatpush1.msra.mxu0 0.0
    %4089 = vmatprep.subr.mxu0 0.0
    %4090 = vmatpush1.msra.mxu0 0.0
    %4091 = vmatprep.subr.mxu0 0.0
    %4092 = vmatpush1.msra.mxu0 0.0
    %4093 = vmatprep.subr.mxu0 0.0
    %4094 = vmatpush1.msra.mxu0 0.0
    %4095 = vmatprep.subr.mxu0 0.0
    %4096 = vmatpush1.msra.mxu0 0.0
    %4097 = vmatprep.subr.mxu0 0.0
    %4098 = vmatpush1.msra.mxu0 0.0
    %4099 = vmatprep.subr.mxu0 0.0
    %4100 = vmatpush1.msra.mxu0 0.0
    %4101 = vmatprep.subr.mxu0 0.0
    %4102 = vmatpush1.msra.mxu0 0.0
    %4103 = vmatprep.subr.mxu0 0.0
    %4104 = vmatpush1.msra.mxu0 0.0
    %4105 = vmatprep.subr.mxu0 0.0
    %4106 = vmatpush1.msra.mxu0 0.0
    %4107 = vmatprep.subr.mxu0 0.0
    %4108 = vmatpush1.msra.mxu0 0.0
    %4109 = vmatprep.subr.mxu0 0.0
    %4110 = vmatpush1.msra.mxu0 0.0
    %4111 = vmatprep.subr.mxu0 0.0
    %4112 = vmatpush1.msra.mxu0 0.0
    %4113 = vmatprep.subr.mxu0 0.0
    %4114 = vmatpush1.msra.mxu0 0.0
    %4115 = vmatprep.subr.mxu0 0.0
    %4116 = vmatpush1.msra.mxu0 0.0
    %4117 = vmatprep.subr.mxu0 0.0
    %4118 = vmatpush1.msra.mxu0 0.0
    %4119 = vmatprep.subr.mxu0 0.0
    %4120 = vmatpush1.msra.mxu0 0.0
    %4121 = vmatprep.subr.mxu0 0.0
    %4122 = vmatpush1.msra.mxu0 0.0
    %4123 = vmatprep.mubr.f32.mxu0 0.0
    %4124 = vmatmul.mubr.f32.gmra.mrb[0].mxu0 %v4057
    %v4125 = vpop.f32.mrb[0].mxu0
    %v4126 = vadd.f32 0.0, %v4125
    %v4127 = vpop.f32.mrb[0].mxu0
    %4128 = vdwg.mxu0
    %v4129 = vadd.f32 %v3889, %v4126
    %v4131 = vlaneseq
    %v4132 = vshrl.u32 %v4131, 7
    %v4133 = vsub.s32 0, %v4132
    %v4134 = vrot.slane %v3057, %v4133
    %v4137 = vsel %vm231, %v4129, 0
    %4139 = vmatprep.subr.mxu0 0.0
    %4140 = vmatpush1.msra.mxu0 %v3053
    %4141 = vmatprep.subr.mxu0 0.0
    %4142 = vmatpush1.msra.mxu0 %v3054
    %4143 = vmatprep.subr.mxu0 0.0
    %4144 = vmatpush1.msra.mxu0 %v3055
    %4145 = vmatprep.subr.mxu0 0.0
    %4146 = vmatpush1.msra.mxu0 %v3056
    %4147 = vmatprep.subr.mxu0 0.0
    %4148 = vmatpush1.msra.mxu0 0.0
    %4149 = vmatprep.subr.mxu0 0.0
    %4150 = vmatpush1.msra.mxu0 0.0
    %4151 = vmatprep.subr.mxu0 0.0
    %4152 = vmatpush1.msra.mxu0 0.0
    %4153 = vmatprep.subr.mxu0 0.0
    %4154 = vmatpush1.msra.mxu0 0.0
    %4155 = vmatprep.subr.mxu0 0.0
    %4156 = vmatpush1.msra.mxu0 0.0
    %4157 = vmatprep.subr.mxu0 0.0
    %4158 = vmatpush1.msra.mxu0 0.0
    %4159 = vmatprep.subr.mxu0 0.0
    %4160 = vmatpush1.msra.mxu0 0.0
    %4161 = vmatprep.subr.mxu0 0.0
    %4162 = vmatpush1.msra.mxu0 0.0
    %4163 = vmatprep.subr.mxu0 0.0
    %4164 = vmatpush1.msra.mxu0 0.0
    %4165 = vmatprep.subr.mxu0 0.0
    %4166 = vmatpush1.msra.mxu0 0.0
    %4167 = vmatprep.subr.mxu0 0.0
    %4168 = vmatpush1.msra.mxu0 0.0
    %4169 = vmatprep.subr.mxu0 0.0
    %4170 = vmatpush1.msra.mxu0 0.0
    %4171 = vmatprep.subr.mxu0 0.0
    %4172 = vmatpush1.msra.mxu0 0.0
    %4173 = vmatprep.subr.mxu0 0.0
    %4174 = vmatpush1.msra.mxu0 0.0
    %4175 = vmatprep.subr.mxu0 0.0
    %4176 = vmatpush1.msra.mxu0 0.0
    %4177 = vmatprep.subr.mxu0 0.0
    %4178 = vmatpush1.msra.mxu0 0.0
    %4179 = vmatprep.subr.mxu0 0.0
    %4180 = vmatpush1.msra.mxu0 0.0
    %4181 = vmatprep.subr.mxu0 0.0
    %4182 = vmatpush1.msra.mxu0 0.0
    %4183 = vmatprep.subr.mxu0 0.0
    %4184 = vmatpush1.msra.mxu0 0.0
    %4185 = vmatprep.subr.mxu0 0.0
    %4186 = vmatpush1.msra.mxu0 0.0
    %4187 = vmatprep.subr.mxu0 0.0
    %4188 = vmatpush1.msra.mxu0 0.0
    %4189 = vmatprep.subr.mxu0 0.0
    %4190 = vmatpush1.msra.mxu0 0.0
    %4191 = vmatprep.subr.mxu0 0.0
    %4192 = vmatpush1.msra.mxu0 0.0
    %4193 = vmatprep.subr.mxu0 0.0
    %4194 = vmatpush1.msra.mxu0 0.0
    %4195 = vmatprep.subr.mxu0 0.0
    %4196 = vmatpush1.msra.mxu0 0.0
    %4197 = vmatprep.subr.mxu0 0.0
    %4198 = vmatpush1.msra.mxu0 0.0
    %4199 = vmatprep.subr.mxu0 0.0
    %4200 = vmatpush1.msra.mxu0 0.0
    %4201 = vmatprep.subr.mxu0 0.0
    %4202 = vmatpush1.msra.mxu0 0.0
    %4203 = vmatprep.mubr.f32.mxu0 0.0
    %4204 = vmatmul.mubr.f32.gmra.mrb[0].mxu0 %v4137
    %v4205 = vpop.f32.mrb[0].mxu0
    %v4206 = vadd.f32 %v4134, %v4205
    %v4207 = vpop.f32.mrb[0].mxu0
    %4208 = vdwg.mxu0
    %vm4209 = vcmask 130048
    %4210 = vst.msk [vmem:[#allocation3] sm:$0xff] %vm4209, %v4206
    %v4211 = vrot.slane %v3035, 1
    %v4212 = vsel %vm308, %v3036, %v4211
    %v4213 = vrot.slane %v3037, 7
    %v4214 = vsel %vm3075, %v4213, %v4212
    %v4215 = vrot.slane %v3038, 6
    %v4216 = vsel %vm3078, %v4215, %v4214
    %v4217 = vrot.slane %v3039, 5
    %v4218 = vsel %vm3081, %v4217, %v4216
    %v4219 = vrot.slane %v3040, 4
    %v4220 = vsel %vm3084, %v4219, %v4218
    %v4221 = vrot.slane %v3041, 3
    %v4222 = vsel %vm3087, %v4221, %v4220
    %v4223 = vrot.slane %v3042, 2
    %v4224 = vsel %vm3090, %v4223, %v4222
    %v4225 = vsel %vm231, %v4224, 0
    %4227 = vmatprep.subr.mxu0 0.0
    %4228 = vmatpush1.msra.mxu0 %v3043
    %4229 = vmatprep.subr.mxu0 0.0
    %4230 = vmatpush1.msra.mxu0 %v3044
    %4231 = vmatprep.subr.mxu0 0.0
    %4232 = vmatpush1.msra.mxu0 %v3045
    %4233 = vmatprep.subr.mxu0 0.0
    %4234 = vmatpush1.msra.mxu0 %v3046
    %4235 = vmatprep.subr.mxu0 0.0
    %4236 = vmatpush1.msra.mxu0 0.0
    %4237 = vmatprep.subr.mxu0 0.0
    %4238 = vmatpush1.msra.mxu0 0.0
    %4239 = vmatprep.subr.mxu0 0.0
    %4240 = vmatpush1.msra.mxu0 0.0
    %4241 = vmatprep.subr.mxu0 0.0
    %4242 = vmatpush1.msra.mxu0 0.0
    %4243 = vmatprep.subr.mxu0 0.0
    %4244 = vmatpush1.msra.mxu0 0.0
    %4245 = vmatprep.subr.mxu0 0.0
    %4246 = vmatpush1.msra.mxu0 0.0
    %4247 = vmatprep.subr.mxu0 0.0
    %4248 = vmatpush1.msra.mxu0 0.0
    %4249 = vmatprep.subr.mxu0 0.0
    %4250 = vmatpush1.msra.mxu0 0.0
    %4251 = vmatprep.subr.mxu0 0.0
    %4252 = vmatpush1.msra.mxu0 0.0
    %4253 = vmatprep.subr.mxu0 0.0
    %4254 = vmatpush1.msra.mxu0 0.0
    %4255 = vmatprep.subr.mxu0 0.0
    %4256 = vmatpush1.msra.mxu0 0.0
    %4257 = vmatprep.subr.mxu0 0.0
    %4258 = vmatpush1.msra.mxu0 0.0
    %4259 = vmatprep.subr.mxu0 0.0
    %4260 = vmatpush1.msra.mxu0 0.0
    %4261 = vmatprep.subr.mxu0 0.0
    %4262 = vmatpush1.msra.mxu0 0.0
    %4263 = vmatprep.subr.mxu0 0.0
    %4264 = vmatpush1.msra.mxu0 0.0
    %4265 = vmatprep.subr.mxu0 0.0
    %4266 = vmatpush1.msra.mxu0 0.0
    %4267 = vmatprep.subr.mxu0 0.0
    %4268 = vmatpush1.msra.mxu0 0.0
    %4269 = vmatprep.subr.mxu0 0.0
    %4270 = vmatpush1.msra.mxu0 0.0
    %4271 = vmatprep.subr.mxu0 0.0
    %4272 = vmatpush1.msra.mxu0 0.0
    %4273 = vmatprep.subr.mxu0 0.0
    %4274 = vmatpush1.msra.mxu0 0.0
    %4275 = vmatprep.subr.mxu0 0.0
    %4276 = vmatpush1.msra.mxu0 0.0
    %4277 = vmatprep.subr.mxu0 0.0
    %4278 = vmatpush1.msra.mxu0 0.0
    %4279 = vmatprep.subr.mxu0 0.0
    %4280 = vmatpush1.msra.mxu0 0.0
    %4281 = vmatprep.subr.mxu0 0.0
    %4282 = vmatpush1.msra.mxu0 0.0
    %4283 = vmatprep.subr.mxu0 0.0
    %4284 = vmatpush1.msra.mxu0 0.0
    %4285 = vmatprep.subr.mxu0 0.0
    %4286 = vmatpush1.msra.mxu0 0.0
    %4287 = vmatprep.subr.mxu0 0.0
    %4288 = vmatpush1.msra.mxu0 0.0
    %4289 = vmatprep.subr.mxu0 0.0
    %4290 = vmatpush1.msra.mxu0 0.0
    %4291 = vmatprep.mubr.f32.mxu0 0.0
    %4292 = vmatmul.mubr.f32.gmra.mrb[0].mxu0 %v4225
    %v4293 = vpop.f32.mrb[0].mxu0
    %v4294 = vadd.f32 %v3062, %v4293
    %v4295 = vpop.f32.mrb[0].mxu0
    %4296 = vdwg.mxu0
    %4298 = vrot.lane.b32.xlu0 %v4294, 96
    %v4299 = vpop.permute.xlu0 %4298
    %v4300 = vsel %vm310, %v4294, 0
    %v4302 = vsel %vm310, %v4299, 0
    %4304 = vmatprep.subr.mxu0 0.0
    %4305 = vmatpush1.xpose.msra.mxu0 %v4302
    %4306 = vmatprep.subr.mxu0 0.0
    %4307 = vmatpush1.xpose.msra.mxu0 0.0
    %4308 = vmatprep.subr.mxu0 0.0
    %4309 = vmatpush1.xpose.msra.mxu0 0.0
    %4310 = vmatprep.subr.mxu0 0.0
    %4311 = vmatpush1.xpose.msra.mxu0 0.0
    %4312 = vmatprep.subr.mxu0 0.0
    %4313 = vmatpush1.xpose.msra.mxu0 0.0
    %4314 = vmatprep.subr.mxu0 0.0
    %4315 = vmatpush1.xpose.msra.mxu0 0.0
    %4316 = vmatprep.subr.mxu0 0.0
    %4317 = vmatpush1.xpose.msra.mxu0 0.0
    %4318 = vmatprep.subr.mxu0 0.0
    %4319 = vmatpush1.xpose.msra.mxu0 0.0
    %4320 = vmatprep.subr.mxu0 0.0
    %4321 = vmatpush1.xpose.msra.mxu0 0.0
    %4322 = vmatprep.subr.mxu0 0.0
    %4323 = vmatpush1.xpose.msra.mxu0 0.0
    %4324 = vmatprep.subr.mxu0 0.0
    %4325 = vmatpush1.xpose.msra.mxu0 0.0
    %4326 = vmatprep.subr.mxu0 0.0
    %4327 = vmatpush1.xpose.msra.mxu0 0.0
    %4328 = vmatprep.subr.mxu0 0.0
    %4329 = vmatpush1.xpose.msra.mxu0 0.0
    %4330 = vmatprep.subr.mxu0 0.0
    %4331 = vmatpush1.xpose.msra.mxu0 0.0
    %4332 = vmatprep.subr.mxu0 0.0
    %4333 = vmatpush1.xpose.msra.mxu0 0.0
    %4334 = vmatprep.subr.mxu0 0.0
    %4335 = vmatpush1.xpose.msra.mxu0 0.0
    %4336 = vmatprep.subr.mxu0 0.0
    %4337 = vmatpush1.xpose.msra.mxu0 0.0
    %4338 = vmatprep.subr.mxu0 0.0
    %4339 = vmatpush1.xpose.msra.mxu0 0.0
    %4340 = vmatprep.subr.mxu0 0.0
    %4341 = vmatpush1.xpose.msra.mxu0 0.0
    %4342 = vmatprep.subr.mxu0 0.0
    %4343 = vmatpush1.xpose.msra.mxu0 0.0
    %4344 = vmatprep.subr.mxu0 0.0
    %4345 = vmatpush1.xpose.msra.mxu0 0.0
    %4346 = vmatprep.subr.mxu0 0.0
    %4347 = vmatpush1.xpose.msra.mxu0 0.0
    %4348 = vmatprep.subr.mxu0 0.0
    %4349 = vmatpush1.xpose.msra.mxu0 0.0
    %4350 = vmatprep.subr.mxu0 0.0
    %4351 = vmatpush1.xpose.msra.mxu0 0.0
    %4352 = vmatprep.subr.mxu0 0.0
    %4353 = vmatpush1.xpose.msra.mxu0 0.0
    %4354 = vmatprep.subr.mxu0 0.0
    %4355 = vmatpush1.xpose.msra.mxu0 0.0
    %4356 = vmatprep.subr.mxu0 0.0
    %4357 = vmatpush1.xpose.msra.mxu0 0.0
    %4358 = vmatprep.subr.mxu0 0.0
    %4359 = vmatpush1.xpose.msra.mxu0 0.0
    %4360 = vmatprep.subr.mxu0 0.0
    %4361 = vmatpush1.xpose.msra.mxu0 0.0
    %4362 = vmatprep.subr.mxu0 0.0
    %4363 = vmatpush1.xpose.msra.mxu0 0.0
    %4364 = vmatprep.subr.mxu0 0.0
    %4365 = vmatpush1.xpose.msra.mxu0 0.0
    %4366 = vmatprep.subr.mxu0 0.0
    %4367 = vmatpush1.xpose.msra.mxu0 0.0
    %4368 = vmatprep.mubr.f32.mxu0 0.0
    %4369 = vmatmul.mubr.f32.gmra.mrb[0].mxu0 %v4300
    %v4370 = vpop.f32.mrb[0].mxu0
    %v4371 = vadd.f32 0.0, %v4370
    %v4372 = vpop.f32.mrb[0].mxu0
    %4373 = vdwg.mxu0
    %v4374 = vmul.f32 %v4371, 0.35355338
    %v4375 = vsel %vm310, %v4374, -inf
    %4376 = vmax.xlane.f32.xlu0 %v4375
    %v4377 = vpop.xlane.xlu0 %4376
    %v4378 = vsub.f32 %v4374, %v4377
    %v4379 = vmul.f32 %v4378, 1.442695
    %v4380 = vpow.pop %v4379
    %v4381 = vsel %vm310, %v4380, 0.0
    %4382 = vadd.xlane.f32.xlu0 %v4381
    %v4383 = vpop.xlane.xlu0 %4382
    %v4384 = vrcp.pop %v4383
    %v4385 = vmul.f32 %v4380, %v4384
    %4386 = vrot.lane.b32.xlu0 %v4294, 64
    %v4387 = vpop.permute.xlu0 %4386
    %v4390 = vsel %vm310, %v4385, 0
    %4392 = vmatprep.subr.mxu0 0.0
    %4393 = vmatpush1.msra.mxu0 %v4387
    %4394 = vmatprep.subr.mxu0 0.0
    %4395 = vmatpush1.msra.mxu0 0.0
    %4396 = vmatprep.subr.mxu0 0.0
    %4397 = vmatpush1.msra.mxu0 0.0
    %4398 = vmatprep.subr.mxu0 0.0
    %4399 = vmatpush1.msra.mxu0 0.0
    %4400 = vmatprep.subr.mxu0 0.0
    %4401 = vmatpush1.msra.mxu0 0.0
    %4402 = vmatprep.subr.mxu0 0.0
    %4403 = vmatpush1.msra.mxu0 0.0
    %4404 = vmatprep.subr.mxu0 0.0
    %4405 = vmatpush1.msra.mxu0 0.0
    %4406 = vmatprep.subr.mxu0 0.0
    %4407 = vmatpush1.msra.mxu0 0.0
    %4408 = vmatprep.subr.mxu0 0.0
    %4409 = vmatpush1.msra.mxu0 0.0
    %4410 = vmatprep.subr.mxu0 0.0
    %4411 = vmatpush1.msra.mxu0 0.0
    %4412 = vmatprep.subr.mxu0 0.0
    %4413 = vmatpush1.msra.mxu0 0.0
    %4414 = vmatprep.subr.mxu0 0.0
    %4415 = vmatpush1.msra.mxu0 0.0
    %4416 = vmatprep.subr.mxu0 0.0
    %4417 = vmatpush1.msra.mxu0 0.0
    %4418 = vmatprep.subr.mxu0 0.0
    %4419 = vmatpush1.msra.mxu0 0.0
    %4420 = vmatprep.subr.mxu0 0.0
    %4421 = vmatpush1.msra.mxu0 0.0
    %4422 = vmatprep.subr.mxu0 0.0
    %4423 = vmatpush1.msra.mxu0 0.0
    %4424 = vmatprep.subr.mxu0 0.0
    %4425 = vmatpush1.msra.mxu0 0.0
    %4426 = vmatprep.subr.mxu0 0.0
    %4427 = vmatpush1.msra.mxu0 0.0
    %4428 = vmatprep.subr.mxu0 0.0
    %4429 = vmatpush1.msra.mxu0 0.0
    %4430 = vmatprep.subr.mxu0 0.0
    %4431 = vmatpush1.msra.mxu0 0.0
    %4432 = vmatprep.subr.mxu0 0.0
    %4433 = vmatpush1.msra.mxu0 0.0
    %4434 = vmatprep.subr.mxu0 0.0
    %4435 = vmatpush1.msra.mxu0 0.0
    %4436 = vmatprep.subr.mxu0 0.0
    %4437 = vmatpush1.msra.mxu0 0.0
    %4438 = vmatprep.subr.mxu0 0.0
    %4439 = vmatpush1.msra.mxu0 0.0
    %4440 = vmatprep.subr.mxu0 0.0
    %4441 = vmatpush1.msra.mxu0 0.0
    %4442 = vmatprep.subr.mxu0 0.0
    %4443 = vmatpush1.msra.mxu0 0.0
    %4444 = vmatprep.subr.mxu0 0.0
    %4445 = vmatpush1.msra.mxu0 0.0
    %4446 = vmatprep.subr.mxu0 0.0
    %4447 = vmatpush1.msra.mxu0 0.0
    %4448 = vmatprep.subr.mxu0 0.0
    %4449 = vmatpush1.msra.mxu0 0.0
    %4450 = vmatprep.subr.mxu0 0.0
    %4451 = vmatpush1.msra.mxu0 0.0
    %4452 = vmatprep.subr.mxu0 0.0
    %4453 = vmatpush1.msra.mxu0 0.0
    %4454 = vmatprep.subr.mxu0 0.0
    %4455 = vmatpush1.msra.mxu0 0.0
    %4456 = vmatprep.mubr.f32.mxu0 0.0
    %4457 = vmatmul.mubr.f32.gmra.mrb[0].mxu0 %v4390
    %v4458 = vpop.f32.mrb[0].mxu0
    %v4459 = vadd.f32 0.0, %v4458
    %v4460 = vpop.f32.mrb[0].mxu0
    %4461 = vdwg.mxu0
    %v4463 = vsel %vm310, %v4459, 0
    %4465 = vmatprep.subr.mxu0 0.0
    %4466 = vmatpush1.msra.mxu0 %v3048
    %4467 = vmatprep.subr.mxu0 0.0
    %4468 = vmatpush1.msra.mxu0 0.0
    %4469 = vmatprep.subr.mxu0 0.0
    %4470 = vmatpush1.msra.mxu0 0.0
    %4471 = vmatprep.subr.mxu0 0.0
    %4472 = vmatpush1.msra.mxu0 0.0
    %4473 = vmatprep.subr.mxu0 0.0
    %4474 = vmatpush1.msra.mxu0 0.0
    %4475 = vmatprep.subr.mxu0 0.0
    %4476 = vmatpush1.msra.mxu0 0.0
    %4477 = vmatprep.subr.mxu0 0.0
    %4478 = vmatpush1.msra.mxu0 0.0
    %4479 = vmatprep.subr.mxu0 0.0
    %4480 = vmatpush1.msra.mxu0 0.0
    %4481 = vmatprep.subr.mxu0 0.0
    %4482 = vmatpush1.msra.mxu0 0.0
    %4483 = vmatprep.subr.mxu0 0.0
    %4484 = vmatpush1.msra.mxu0 0.0
    %4485 = vmatprep.subr.mxu0 0.0
    %4486 = vmatpush1.msra.mxu0 0.0
    %4487 = vmatprep.subr.mxu0 0.0
    %4488 = vmatpush1.msra.mxu0 0.0
    %4489 = vmatprep.subr.mxu0 0.0
    %4490 = vmatpush1.msra.mxu0 0.0
    %4491 = vmatprep.subr.mxu0 0.0
    %4492 = vmatpush1.msra.mxu0 0.0
    %4493 = vmatprep.subr.mxu0 0.0
    %4494 = vmatpush1.msra.mxu0 0.0
    %4495 = vmatprep.subr.mxu0 0.0
    %4496 = vmatpush1.msra.mxu0 0.0
    %4497 = vmatprep.subr.mxu0 0.0
    %4498 = vmatpush1.msra.mxu0 0.0
    %4499 = vmatprep.subr.mxu0 0.0
    %4500 = vmatpush1.msra.mxu0 0.0
    %4501 = vmatprep.subr.mxu0 0.0
    %4502 = vmatpush1.msra.mxu0 0.0
    %4503 = vmatprep.subr.mxu0 0.0
    %4504 = vmatpush1.msra.mxu0 0.0
    %4505 = vmatprep.subr.mxu0 0.0
    %4506 = vmatpush1.msra.mxu0 0.0
    %4507 = vmatprep.subr.mxu0 0.0
    %4508 = vmatpush1.msra.mxu0 0.0
    %4509 = vmatprep.subr.mxu0 0.0
    %4510 = vmatpush1.msra.mxu0 0.0
    %4511 = vmatprep.subr.mxu0 0.0
    %4512 = vmatpush1.msra.mxu0 0.0
    %4513 = vmatprep.subr.mxu0 0.0
    %4514 = vmatpush1.msra.mxu0 0.0
    %4515 = vmatprep.subr.mxu0 0.0
    %4516 = vmatpush1.msra.mxu0 0.0
    %4517 = vmatprep.subr.mxu0 0.0
    %4518 = vmatpush1.msra.mxu0 0.0
    %4519 = vmatprep.subr.mxu0 0.0
    %4520 = vmatpush1.msra.mxu0 0.0
    %4521 = vmatprep.subr.mxu0 0.0
    %4522 = vmatpush1.msra.mxu0 0.0
    %4523 = vmatprep.subr.mxu0 0.0
    %4524 = vmatpush1.msra.mxu0 0.0
    %4525 = vmatprep.subr.mxu0 0.0
    %4526 = vmatpush1.msra.mxu0 0.0
    %4527 = vmatprep.subr.mxu0 0.0
    %4528 = vmatpush1.msra.mxu0 0.0
    %4529 = vmatprep.mubr.f32.mxu0 0.0
    %4530 = vmatmul.mubr.f32.gmra.mrb[0].mxu0 %v4463
    %v4531 = vpop.f32.mrb[0].mxu0
    %v4532 = vadd.f32 0.0, %v4531
    %v4533 = vpop.f32.mrb[0].mxu0
    %4534 = vdwg.mxu0
    %v4535 = vadd.f32 %v3170, %v4532
    %4536 = vrot.lane.b32.xlu0 %v4294, 120
    %v4537 = vpop.permute.xlu0 %4536
    %4538 = vrot.lane.b32.xlu0 %v4294, 88
    %v4539 = vpop.permute.xlu0 %4538
    %v4540 = vsel %vm310, %v4537, 0
    %v4542 = vsel %vm310, %v4539, 0
    %4544 = vmatprep.subr.mxu0 0.0
    %4545 = vmatpush1.xpose.msra.mxu0 %v4542
    %4546 = vmatprep.subr.mxu0 0.0
    %4547 = vmatpush1.xpose.msra.mxu0 0.0
    %4548 = vmatprep.subr.mxu0 0.0
    %4549 = vmatpush1.xpose.msra.mxu0 0.0
    %4550 = vmatprep.subr.mxu0 0.0
    %4551 = vmatpush1.xpose.msra.mxu0 0.0
    %4552 = vmatprep.subr.mxu0 0.0
    %4553 = vmatpush1.xpose.msra.mxu0 0.0
    %4554 = vmatprep.subr.mxu0 0.0
    %4555 = vmatpush1.xpose.msra.mxu0 0.0
    %4556 = vmatprep.subr.mxu0 0.0
    %4557 = vmatpush1.xpose.msra.mxu0 0.0
    %4558 = vmatprep.subr.mxu0 0.0
    %4559 = vmatpush1.xpose.msra.mxu0 0.0
    %4560 = vmatprep.subr.mxu0 0.0
    %4561 = vmatpush1.xpose.msra.mxu0 0.0
    %4562 = vmatprep.subr.mxu0 0.0
    %4563 = vmatpush1.xpose.msra.mxu0 0.0
    %4564 = vmatprep.subr.mxu0 0.0
    %4565 = vmatpush1.xpose.msra.mxu0 0.0
    %4566 = vmatprep.subr.mxu0 0.0
    %4567 = vmatpush1.xpose.msra.mxu0 0.0
    %4568 = vmatprep.subr.mxu0 0.0
    %4569 = vmatpush1.xpose.msra.mxu0 0.0
    %4570 = vmatprep.subr.mxu0 0.0
    %4571 = vmatpush1.xpose.msra.mxu0 0.0
    %4572 = vmatprep.subr.mxu0 0.0
    %4573 = vmatpush1.xpose.msra.mxu0 0.0
    %4574 = vmatprep.subr.mxu0 0.0
    %4575 = vmatpush1.xpose.msra.mxu0 0.0
    %4576 = vmatprep.subr.mxu0 0.0
    %4577 = vmatpush1.xpose.msra.mxu0 0.0
    %4578 = vmatprep.subr.mxu0 0.0
    %4579 = vmatpush1.xpose.msra.mxu0 0.0
    %4580 = vmatprep.subr.mxu0 0.0
    %4581 = vmatpush1.xpose.msra.mxu0 0.0
    %4582 = vmatprep.subr.mxu0 0.0
    %4583 = vmatpush1.xpose.msra.mxu0 0.0
    %4584 = vmatprep.subr.mxu0 0.0
    %4585 = vmatpush1.xpose.msra.mxu0 0.0
    %4586 = vmatprep.subr.mxu0 0.0
    %4587 = vmatpush1.xpose.msra.mxu0 0.0
    %4588 = vmatprep.subr.mxu0 0.0
    %4589 = vmatpush1.xpose.msra.mxu0 0.0
    %4590 = vmatprep.subr.mxu0 0.0
    %4591 = vmatpush1.xpose.msra.mxu0 0.0
    %4592 = vmatprep.subr.mxu0 0.0
    %4593 = vmatpush1.xpose.msra.mxu0 0.0
    %4594 = vmatprep.subr.mxu0 0.0
    %4595 = vmatpush1.xpose.msra.mxu0 0.0
    %4596 = vmatprep.subr.mxu0 0.0
    %4597 = vmatpush1.xpose.msra.mxu0 0.0
    %4598 = vmatprep.subr.mxu0 0.0
    %4599 = vmatpush1.xpose.msra.mxu0 0.0
    %4600 = vmatprep.subr.mxu0 0.0
    %4601 = vmatpush1.xpose.msra.mxu0 0.0
    %4602 = vmatprep.subr.mxu0 0.0
    %4603 = vmatpush1.xpose.msra.mxu0 0.0
    %4604 = vmatprep.subr.mxu0 0.0
    %4605 = vmatpush1.xpose.msra.mxu0 0.0
    %4606 = vmatprep.subr.mxu0 0.0
    %4607 = vmatpush1.xpose.msra.mxu0 0.0
    %4608 = vmatprep.mubr.f32.mxu0 0.0
    %4609 = vmatmul.mubr.f32.gmra.mrb[0].mxu0 %v4540
    %v4610 = vpop.f32.mrb[0].mxu0
    %v4611 = vadd.f32 0.0, %v4610
    %v4612 = vpop.f32.mrb[0].mxu0
    %4613 = vdwg.mxu0
    %v4614 = vmul.f32 %v4611, 0.35355338
    %v4615 = vsel %vm310, %v4614, -inf
    %4616 = vmax.xlane.f32.xlu0 %v4615
    %v4617 = vpop.xlane.xlu0 %4616
    %v4618 = vsub.f32 %v4614, %v4617
    %v4619 = vmul.f32 %v4618, 1.442695
    %v4620 = vpow.pop %v4619
    %v4621 = vsel %vm310, %v4620, 0.0
    %4622 = vadd.xlane.f32.xlu0 %v4621
    %v4623 = vpop.xlane.xlu0 %4622
    %v4624 = vrcp.pop %v4623
    %v4625 = vmul.f32 %v4620, %v4624
    %4626 = vrot.lane.b32.xlu0 %v4294, 56
    %v4627 = vpop.permute.xlu0 %4626
    %v4630 = vsel %vm310, %v4625, 0
    %4632 = vmatprep.subr.mxu0 0.0
    %4633 = vmatpush1.msra.mxu0 %v4627
    %4634 = vmatprep.subr.mxu0 0.0
    %4635 = vmatpush1.msra.mxu0 0.0
    %4636 = vmatprep.subr.mxu0 0.0
    %4637 = vmatpush1.msra.mxu0 0.0
    %4638 = vmatprep.subr.mxu0 0.0
    %4639 = vmatpush1.msra.mxu0 0.0
    %4640 = vmatprep.subr.mxu0 0.0
    %4641 = vmatpush1.msra.mxu0 0.0
    %4642 = vmatprep.subr.mxu0 0.0
    %4643 = vmatpush1.msra.mxu0 0.0
    %4644 = vmatprep.subr.mxu0 0.0
    %4645 = vmatpush1.msra.mxu0 0.0
    %4646 = vmatprep.subr.mxu0 0.0
    %4647 = vmatpush1.msra.mxu0 0.0
    %4648 = vmatprep.subr.mxu0 0.0
    %4649 = vmatpush1.msra.mxu0 0.0
    %4650 = vmatprep.subr.mxu0 0.0
    %4651 = vmatpush1.msra.mxu0 0.0
    %4652 = vmatprep.subr.mxu0 0.0
    %4653 = vmatpush1.msra.mxu0 0.0
    %4654 = vmatprep.subr.mxu0 0.0
    %4655 = vmatpush1.msra.mxu0 0.0
    %4656 = vmatprep.subr.mxu0 0.0
    %4657 = vmatpush1.msra.mxu0 0.0
    %4658 = vmatprep.subr.mxu0 0.0
    %4659 = vmatpush1.msra.mxu0 0.0
    %4660 = vmatprep.subr.mxu0 0.0
    %4661 = vmatpush1.msra.mxu0 0.0
    %4662 = vmatprep.subr.mxu0 0.0
    %4663 = vmatpush1.msra.mxu0 0.0
    %4664 = vmatprep.subr.mxu0 0.0
    %4665 = vmatpush1.msra.mxu0 0.0
    %4666 = vmatprep.subr.mxu0 0.0
    %4667 = vmatpush1.msra.mxu0 0.0
    %4668 = vmatprep.subr.mxu0 0.0
    %4669 = vmatpush1.msra.mxu0 0.0
    %4670 = vmatprep.subr.mxu0 0.0
    %4671 = vmatpush1.msra.mxu0 0.0
    %4672 = vmatprep.subr.mxu0 0.0
    %4673 = vmatpush1.msra.mxu0 0.0
    %4674 = vmatprep.subr.mxu0 0.0
    %4675 = vmatpush1.msra.mxu0 0.0
    %4676 = vmatprep.subr.mxu0 0.0
    %4677 = vmatpush1.msra.mxu0 0.0
    %4678 = vmatprep.subr.mxu0 0.0
    %4679 = vmatpush1.msra.mxu0 0.0
    %4680 = vmatprep.subr.mxu0 0.0
    %4681 = vmatpush1.msra.mxu0 0.0
    %4682 = vmatprep.subr.mxu0 0.0
    %4683 = vmatpush1.msra.mxu0 0.0
    %4684 = vmatprep.subr.mxu0 0.0
    %4685 = vmatpush1.msra.mxu0 0.0
    %4686 = vmatprep.subr.mxu0 0.0
    %4687 = vmatpush1.msra.mxu0 0.0
    %4688 = vmatprep.subr.mxu0 0.0
    %4689 = vmatpush1.msra.mxu0 0.0
    %4690 = vmatprep.subr.mxu0 0.0
    %4691 = vmatpush1.msra.mxu0 0.0
    %4692 = vmatprep.subr.mxu0 0.0
    %4693 = vmatpush1.msra.mxu0 0.0
    %4694 = vmatprep.subr.mxu0 0.0
    %4695 = vmatpush1.msra.mxu0 0.0
    %4696 = vmatprep.mubr.f32.mxu0 0.0
    %4697 = vmatmul.mubr.f32.gmra.mrb[0].mxu0 %v4630
    %v4698 = vpop.f32.mrb[0].mxu0
    %v4699 = vadd.f32 0.0, %v4698
    %v4700 = vpop.f32.mrb[0].mxu0
    %4701 = vdwg.mxu0
    %v4703 = vsel %vm310, %v4699, 0
    %4705 = vmatprep.subr.mxu0 0.0
    %4706 = vmatpush1.msra.mxu0 %v3049
    %4707 = vmatprep.subr.mxu0 0.0
    %4708 = vmatpush1.msra.mxu0 0.0
    %4709 = vmatprep.subr.mxu0 0.0
    %4710 = vmatpush1.msra.mxu0 0.0
    %4711 = vmatprep.subr.mxu0 0.0
    %4712 = vmatpush1.msra.mxu0 0.0
    %4713 = vmatprep.subr.mxu0 0.0
    %4714 = vmatpush1.msra.mxu0 0.0
    %4715 = vmatprep.subr.mxu0 0.0
    %4716 = vmatpush1.msra.mxu0 0.0
    %4717 = vmatprep.subr.mxu0 0.0
    %4718 = vmatpush1.msra.mxu0 0.0
    %4719 = vmatprep.subr.mxu0 0.0
    %4720 = vmatpush1.msra.mxu0 0.0
    %4721 = vmatprep.subr.mxu0 0.0
    %4722 = vmatpush1.msra.mxu0 0.0
    %4723 = vmatprep.subr.mxu0 0.0
    %4724 = vmatpush1.msra.mxu0 0.0
    %4725 = vmatprep.subr.mxu0 0.0
    %4726 = vmatpush1.msra.mxu0 0.0
    %4727 = vmatprep.subr.mxu0 0.0
    %4728 = vmatpush1.msra.mxu0 0.0
    %4729 = vmatprep.subr.mxu0 0.0
    %4730 = vmatpush1.msra.mxu0 0.0
    %4731 = vmatprep.subr.mxu0 0.0
    %4732 = vmatpush1.msra.mxu0 0.0
    %4733 = vmatprep.subr.mxu0 0.0
    %4734 = vmatpush1.msra.mxu0 0.0
    %4735 = vmatprep.subr.mxu0 0.0
    %4736 = vmatpush1.msra.mxu0 0.0
    %4737 = vmatprep.subr.mxu0 0.0
    %4738 = vmatpush1.msra.mxu0 0.0
    %4739 = vmatprep.subr.mxu0 0.0
    %4740 = vmatpush1.msra.mxu0 0.0
    %4741 = vmatprep.subr.mxu0 0.0
    %4742 = vmatpush1.msra.mxu0 0.0
    %4743 = vmatprep.subr.mxu0 0.0
    %4744 = vmatpush1.msra.mxu0 0.0
    %4745 = vmatprep.subr.mxu0 0.0
    %4746 = vmatpush1.msra.mxu0 0.0
    %4747 = vmatprep.subr.mxu0 0.0
    %4748 = vmatpush1.msra.mxu0 0.0
    %4749 = vmatprep.subr.mxu0 0.0
    %4750 = vmatpush1.msra.mxu0 0.0
    %4751 = vmatprep.subr.mxu0 0.0
    %4752 = vmatpush1.msra.mxu0 0.0
    %4753 = vmatprep.subr.mxu0 0.0
    %4754 = vmatpush1.msra.mxu0 0.0
    %4755 = vmatprep.subr.mxu0 0.0
    %4756 = vmatpush1.msra.mxu0 0.0
    %4757 = vmatprep.subr.mxu0 0.0
    %4758 = vmatpush1.msra.mxu0 0.0
    %4759 = vmatprep.subr.mxu0 0.0
    %4760 = vmatpush1.msra.mxu0 0.0
    %4761 = vmatprep.subr.mxu0 0.0
    %4762 = vmatpush1.msra.mxu0 0.0
    %4763 = vmatprep.subr.mxu0 0.0
    %4764 = vmatpush1.msra.mxu0 0.0
    %4765 = vmatprep.subr.mxu0 0.0
    %4766 = vmatpush1.msra.mxu0 0.0
    %4767 = vmatprep.subr.mxu0 0.0
    %4768 = vmatpush1.msra.mxu0 0.0
    %4769 = vmatprep.mubr.f32.mxu0 0.0
    %4770 = vmatmul.mubr.f32.gmra.mrb[0].mxu0 %v4703
    %v4771 = vpop.f32.mrb[0].mxu0
    %v4772 = vadd.f32 0.0, %v4771
    %v4773 = vpop.f32.mrb[0].mxu0
    %4774 = vdwg.mxu0
    %v4775 = vadd.f32 %v4535, %v4772
    %4776 = vrot.lane.b32.xlu0 %v4294, 112
    %v4777 = vpop.permute.xlu0 %4776
    %4778 = vrot.lane.b32.xlu0 %v4294, 80
    %v4779 = vpop.permute.xlu0 %4778
    %v4780 = vsel %vm310, %v4777, 0
    %v4782 = vsel %vm310, %v4779, 0
    %4784 = vmatprep.subr.mxu0 0.0
    %4785 = vmatpush1.xpose.msra.mxu0 %v4782
    %4786 = vmatprep.subr.mxu0 0.0
    %4787 = vmatpush1.xpose.msra.mxu0 0.0
    %4788 = vmatprep.subr.mxu0 0.0
    %4789 = vmatpush1.xpose.msra.mxu0 0.0
    %4790 = vmatprep.subr.mxu0 0.0
    %4791 = vmatpush1.xpose.msra.mxu0 0.0
    %4792 = vmatprep.subr.mxu0 0.0
    %4793 = vmatpush1.xpose.msra.mxu0 0.0
    %4794 = vmatprep.subr.mxu0 0.0
    %4795 = vmatpush1.xpose.msra.mxu0 0.0
    %4796 = vmatprep.subr.mxu0 0.0
    %4797 = vmatpush1.xpose.msra.mxu0 0.0
    %4798 = vmatprep.subr.mxu0 0.0
    %4799 = vmatpush1.xpose.msra.mxu0 0.0
    %4800 = vmatprep.subr.mxu0 0.0
    %4801 = vmatpush1.xpose.msra.mxu0 0.0
    %4802 = vmatprep.subr.mxu0 0.0
    %4803 = vmatpush1.xpose.msra.mxu0 0.0
    %4804 = vmatprep.subr.mxu0 0.0
    %4805 = vmatpush1.xpose.msra.mxu0 0.0
    %4806 = vmatprep.subr.mxu0 0.0
    %4807 = vmatpush1.xpose.msra.mxu0 0.0
    %4808 = vmatprep.subr.mxu0 0.0
    %4809 = vmatpush1.xpose.msra.mxu0 0.0
    %4810 = vmatprep.subr.mxu0 0.0
    %4811 = vmatpush1.xpose.msra.mxu0 0.0
    %4812 = vmatprep.subr.mxu0 0.0
    %4813 = vmatpush1.xpose.msra.mxu0 0.0
    %4814 = vmatprep.subr.mxu0 0.0
    %4815 = vmatpush1.xpose.msra.mxu0 0.0
    %4816 = vmatprep.subr.mxu0 0.0
    %4817 = vmatpush1.xpose.msra.mxu0 0.0
    %4818 = vmatprep.subr.mxu0 0.0
    %4819 = vmatpush1.xpose.msra.mxu0 0.0
    %4820 = vmatprep.subr.mxu0 0.0
    %4821 = vmatpush1.xpose.msra.mxu0 0.0
    %4822 = vmatprep.subr.mxu0 0.0
    %4823 = vmatpush1.xpose.msra.mxu0 0.0
    %4824 = vmatprep.subr.mxu0 0.0
    %4825 = vmatpush1.xpose.msra.mxu0 0.0
    %4826 = vmatprep.subr.mxu0 0.0
    %4827 = vmatpush1.xpose.msra.mxu0 0.0
    %4828 = vmatprep.subr.mxu0 0.0
    %4829 = vmatpush1.xpose.msra.mxu0 0.0
    %4830 = vmatprep.subr.mxu0 0.0
    %4831 = vmatpush1.xpose.msra.mxu0 0.0
    %4832 = vmatprep.subr.mxu0 0.0
    %4833 = vmatpush1.xpose.msra.mxu0 0.0
    %4834 = vmatprep.subr.mxu0 0.0
    %4835 = vmatpush1.xpose.msra.mxu0 0.0
    %4836 = vmatprep.subr.mxu0 0.0
    %4837 = vmatpush1.xpose.msra.mxu0 0.0
    %4838 = vmatprep.subr.mxu0 0.0
    %4839 = vmatpush1.xpose.msra.mxu0 0.0
    %4840 = vmatprep.subr.mxu0 0.0
    %4841 = vmatpush1.xpose.msra.mxu0 0.0
    %4842 = vmatprep.subr.mxu0 0.0
    %4843 = vmatpush1.xpose.msra.mxu0 0.0
    %4844 = vmatprep.subr.mxu0 0.0
    %4845 = vmatpush1.xpose.msra.mxu0 0.0
    %4846 = vmatprep.subr.mxu0 0.0
    %4847 = vmatpush1.xpose.msra.mxu0 0.0
    %4848 = vmatprep.mubr.f32.mxu0 0.0
    %4849 = vmatmul.mubr.f32.gmra.mrb[0].mxu0 %v4780
    %v4850 = vpop.f32.mrb[0].mxu0
    %v4851 = vadd.f32 0.0, %v4850
    %v4852 = vpop.f32.mrb[0].mxu0
    %4853 = vdwg.mxu0
    %v4854 = vmul.f32 %v4851, 0.35355338
    %v4855 = vsel %vm310, %v4854, -inf
    %4856 = vmax.xlane.f32.xlu0 %v4855
    %v4857 = vpop.xlane.xlu0 %4856
    %v4858 = vsub.f32 %v4854, %v4857
    %v4859 = vmul.f32 %v4858, 1.442695
    %v4860 = vpow.pop %v4859
    %v4861 = vsel %vm310, %v4860, 0.0
    %4862 = vadd.xlane.f32.xlu0 %v4861
    %v4863 = vpop.xlane.xlu0 %4862
    %v4864 = vrcp.pop %v4863
    %v4865 = vmul.f32 %v4860, %v4864
    %4866 = vrot.lane.b32.xlu0 %v4294, 48
    %v4867 = vpop.permute.xlu0 %4866
    %v4870 = vsel %vm310, %v4865, 0
    %4872 = vmatprep.subr.mxu0 0.0
    %4873 = vmatpush1.msra.mxu0 %v4867
    %4874 = vmatprep.subr.mxu0 0.0
    %4875 = vmatpush1.msra.mxu0 0.0
    %4876 = vmatprep.subr.mxu0 0.0
    %4877 = vmatpush1.msra.mxu0 0.0
    %4878 = vmatprep.subr.mxu0 0.0
    %4879 = vmatpush1.msra.mxu0 0.0
    %4880 = vmatprep.subr.mxu0 0.0
    %4881 = vmatpush1.msra.mxu0 0.0
    %4882 = vmatprep.subr.mxu0 0.0
    %4883 = vmatpush1.msra.mxu0 0.0
    %4884 = vmatprep.subr.mxu0 0.0
    %4885 = vmatpush1.msra.mxu0 0.0
    %4886 = vmatprep.subr.mxu0 0.0
    %4887 = vmatpush1.msra.mxu0 0.0
    %4888 = vmatprep.subr.mxu0 0.0
    %4889 = vmatpush1.msra.mxu0 0.0
    %4890 = vmatprep.subr.mxu0 0.0
    %4891 = vmatpush1.msra.mxu0 0.0
    %4892 = vmatprep.subr.mxu0 0.0
    %4893 = vmatpush1.msra.mxu0 0.0
    %4894 = vmatprep.subr.mxu0 0.0
    %4895 = vmatpush1.msra.mxu0 0.0
    %4896 = vmatprep.subr.mxu0 0.0
    %4897 = vmatpush1.msra.mxu0 0.0
    %4898 = vmatprep.subr.mxu0 0.0
    %4899 = vmatpush1.msra.mxu0 0.0
    %4900 = vmatprep.subr.mxu0 0.0
    %4901 = vmatpush1.msra.mxu0 0.0
    %4902 = vmatprep.subr.mxu0 0.0
    %4903 = vmatpush1.msra.mxu0 0.0
    %4904 = vmatprep.subr.mxu0 0.0
    %4905 = vmatpush1.msra.mxu0 0.0
    %4906 = vmatprep.subr.mxu0 0.0
    %4907 = vmatpush1.msra.mxu0 0.0
    %4908 = vmatprep.subr.mxu0 0.0
    %4909 = vmatpush1.msra.mxu0 0.0
    %4910 = vmatprep.subr.mxu0 0.0
    %4911 = vmatpush1.msra.mxu0 0.0
    %4912 = vmatprep.subr.mxu0 0.0
    %4913 = vmatpush1.msra.mxu0 0.0
    %4914 = vmatprep.subr.mxu0 0.0
    %4915 = vmatpush1.msra.mxu0 0.0
    %4916 = vmatprep.subr.mxu0 0.0
    %4917 = vmatpush1.msra.mxu0 0.0
    %4918 = vmatprep.subr.mxu0 0.0
    %4919 = vmatpush1.msra.mxu0 0.0
    %4920 = vmatprep.subr.mxu0 0.0
    %4921 = vmatpush1.msra.mxu0 0.0
    %4922 = vmatprep.subr.mxu0 0.0
    %4923 = vmatpush1.msra.mxu0 0.0
    %4924 = vmatprep.subr.mxu0 0.0
    %4925 = vmatpush1.msra.mxu0 0.0
    %4926 = vmatprep.subr.mxu0 0.0
    %4927 = vmatpush1.msra.mxu0 0.0
    %4928 = vmatprep.subr.mxu0 0.0
    %4929 = vmatpush1.msra.mxu0 0.0
    %4930 = vmatprep.subr.mxu0 0.0
    %4931 = vmatpush1.msra.mxu0 0.0
    %4932 = vmatprep.subr.mxu0 0.0
    %4933 = vmatpush1.msra.mxu0 0.0
    %4934 = vmatprep.subr.mxu0 0.0
    %4935 = vmatpush1.msra.mxu0 0.0
    %4936 = vmatprep.mubr.f32.mxu0 0.0
    %4937 = vmatmul.mubr.f32.gmra.mrb[0].mxu0 %v4870
    %v4938 = vpop.f32.mrb[0].mxu0
    %v4939 = vadd.f32 0.0, %v4938
    %v4940 = vpop.f32.mrb[0].mxu0
    %4941 = vdwg.mxu0
    %v4943 = vsel %vm310, %v4939, 0
    %4945 = vmatprep.subr.mxu0 0.0
    %4946 = vmatpush1.msra.mxu0 %v3050
    %4947 = vmatprep.subr.mxu0 0.0
    %4948 = vmatpush1.msra.mxu0 0.0
    %4949 = vmatprep.subr.mxu0 0.0
    %4950 = vmatpush1.msra.mxu0 0.0
    %4951 = vmatprep.subr.mxu0 0.0
    %4952 = vmatpush1.msra.mxu0 0.0
    %4953 = vmatprep.subr.mxu0 0.0
    %4954 = vmatpush1.msra.mxu0 0.0
    %4955 = vmatprep.subr.mxu0 0.0
    %4956 = vmatpush1.msra.mxu0 0.0
    %4957 = vmatprep.subr.mxu0 0.0
    %4958 = vmatpush1.msra.mxu0 0.0
    %4959 = vmatprep.subr.mxu0 0.0
    %4960 = vmatpush1.msra.mxu0 0.0
    %4961 = vmatprep.subr.mxu0 0.0
    %4962 = vmatpush1.msra.mxu0 0.0
    %4963 = vmatprep.subr.mxu0 0.0
    %4964 = vmatpush1.msra.mxu0 0.0
    %4965 = vmatprep.subr.mxu0 0.0
    %4966 = vmatpush1.msra.mxu0 0.0
    %4967 = vmatprep.subr.mxu0 0.0
    %4968 = vmatpush1.msra.mxu0 0.0
    %4969 = vmatprep.subr.mxu0 0.0
    %4970 = vmatpush1.msra.mxu0 0.0
    %4971 = vmatprep.subr.mxu0 0.0
    %4972 = vmatpush1.msra.mxu0 0.0
    %4973 = vmatprep.subr.mxu0 0.0
    %4974 = vmatpush1.msra.mxu0 0.0
    %4975 = vmatprep.subr.mxu0 0.0
    %4976 = vmatpush1.msra.mxu0 0.0
    %4977 = vmatprep.subr.mxu0 0.0
    %4978 = vmatpush1.msra.mxu0 0.0
    %4979 = vmatprep.subr.mxu0 0.0
    %4980 = vmatpush1.msra.mxu0 0.0
    %4981 = vmatprep.subr.mxu0 0.0
    %4982 = vmatpush1.msra.mxu0 0.0
    %4983 = vmatprep.subr.mxu0 0.0
    %4984 = vmatpush1.msra.mxu0 0.0
    %4985 = vmatprep.subr.mxu0 0.0
    %4986 = vmatpush1.msra.mxu0 0.0
    %4987 = vmatprep.subr.mxu0 0.0
    %4988 = vmatpush1.msra.mxu0 0.0
    %4989 = vmatprep.subr.mxu0 0.0
    %4990 = vmatpush1.msra.mxu0 0.0
    %4991 = vmatprep.subr.mxu0 0.0
    %4992 = vmatpush1.msra.mxu0 0.0
    %4993 = vmatprep.subr.mxu0 0.0
    %4994 = vmatpush1.msra.mxu0 0.0
    %4995 = vmatprep.subr.mxu0 0.0
    %4996 = vmatpush1.msra.mxu0 0.0
    %4997 = vmatprep.subr.mxu0 0.0
    %4998 = vmatpush1.msra.mxu0 0.0
    %4999 = vmatprep.subr.mxu0 0.0
    %5000 = vmatpush1.msra.mxu0 0.0
    %5001 = vmatprep.subr.mxu0 0.0
    %5002 = vmatpush1.msra.mxu0 0.0
    %5003 = vmatprep.subr.mxu0 0.0
    %5004 = vmatpush1.msra.mxu0 0.0
    %5005 = vmatprep.subr.mxu0 0.0
    %5006 = vmatpush1.msra.mxu0 0.0
    %5007 = vmatprep.subr.mxu0 0.0
    %5008 = vmatpush1.msra.mxu0 0.0
    %5009 = vmatprep.mubr.f32.mxu0 0.0
    %5010 = vmatmul.mubr.f32.gmra.mrb[0].mxu0 %v4943
    %v5011 = vpop.f32.mrb[0].mxu0
    %v5012 = vadd.f32 0.0, %v5011
    %v5013 = vpop.f32.mrb[0].mxu0
    %5014 = vdwg.mxu0
    %v5015 = vadd.f32 %v4775, %v5012
    %5016 = vrot.lane.b32.xlu0 %v4294, 104
    %v5017 = vpop.permute.xlu0 %5016
    %5018 = vrot.lane.b32.xlu0 %v4294, 72
    %v5019 = vpop.permute.xlu0 %5018
    %v5020 = vsel %vm310, %v5017, 0
    %v5022 = vsel %vm310, %v5019, 0
    %5024 = vmatprep.subr.mxu0 0.0
    %5025 = vmatpush1.xpose.msra.mxu0 %v5022
    %5026 = vmatprep.subr.mxu0 0.0
    %5027 = vmatpush1.xpose.msra.mxu0 0.0
    %5028 = vmatprep.subr.mxu0 0.0
    %5029 = vmatpush1.xpose.msra.mxu0 0.0
    %5030 = vmatprep.subr.mxu0 0.0
    %5031 = vmatpush1.xpose.msra.mxu0 0.0
    %5032 = vmatprep.subr.mxu0 0.0
    %5033 = vmatpush1.xpose.msra.mxu0 0.0
    %5034 = vmatprep.subr.mxu0 0.0
    %5035 = vmatpush1.xpose.msra.mxu0 0.0
    %5036 = vmatprep.subr.mxu0 0.0
    %5037 = vmatpush1.xpose.msra.mxu0 0.0
    %5038 = vmatprep.subr.mxu0 0.0
    %5039 = vmatpush1.xpose.msra.mxu0 0.0
    %5040 = vmatprep.subr.mxu0 0.0
    %5041 = vmatpush1.xpose.msra.mxu0 0.0
    %5042 = vmatprep.subr.mxu0 0.0
    %5043 = vmatpush1.xpose.msra.mxu0 0.0
    %5044 = vmatprep.subr.mxu0 0.0
    %5045 = vmatpush1.xpose.msra.mxu0 0.0
    %5046 = vmatprep.subr.mxu0 0.0
    %5047 = vmatpush1.xpose.msra.mxu0 0.0
    %5048 = vmatprep.subr.mxu0 0.0
    %5049 = vmatpush1.xpose.msra.mxu0 0.0
    %5050 = vmatprep.subr.mxu0 0.0
    %5051 = vmatpush1.xpose.msra.mxu0 0.0
    %5052 = vmatprep.subr.mxu0 0.0
    %5053 = vmatpush1.xpose.msra.mxu0 0.0
    %5054 = vmatprep.subr.mxu0 0.0
    %5055 = vmatpush1.xpose.msra.mxu0 0.0
    %5056 = vmatprep.subr.mxu0 0.0
    %5057 = vmatpush1.xpose.msra.mxu0 0.0
    %5058 = vmatprep.subr.mxu0 0.0
    %5059 = vmatpush1.xpose.msra.mxu0 0.0
    %5060 = vmatprep.subr.mxu0 0.0
    %5061 = vmatpush1.xpose.msra.mxu0 0.0
    %5062 = vmatprep.subr.mxu0 0.0
    %5063 = vmatpush1.xpose.msra.mxu0 0.0
    %5064 = vmatprep.subr.mxu0 0.0
    %5065 = vmatpush1.xpose.msra.mxu0 0.0
    %5066 = vmatprep.subr.mxu0 0.0
    %5067 = vmatpush1.xpose.msra.mxu0 0.0
    %5068 = vmatprep.subr.mxu0 0.0
    %5069 = vmatpush1.xpose.msra.mxu0 0.0
    %5070 = vmatprep.subr.mxu0 0.0
    %5071 = vmatpush1.xpose.msra.mxu0 0.0
    %5072 = vmatprep.subr.mxu0 0.0
    %5073 = vmatpush1.xpose.msra.mxu0 0.0
    %5074 = vmatprep.subr.mxu0 0.0
    %5075 = vmatpush1.xpose.msra.mxu0 0.0
    %5076 = vmatprep.subr.mxu0 0.0
    %5077 = vmatpush1.xpose.msra.mxu0 0.0
    %5078 = vmatprep.subr.mxu0 0.0
    %5079 = vmatpush1.xpose.msra.mxu0 0.0
    %5080 = vmatprep.subr.mxu0 0.0
    %5081 = vmatpush1.xpose.msra.mxu0 0.0
    %5082 = vmatprep.subr.mxu0 0.0
    %5083 = vmatpush1.xpose.msra.mxu0 0.0
    %5084 = vmatprep.subr.mxu0 0.0
    %5085 = vmatpush1.xpose.msra.mxu0 0.0
    %5086 = vmatprep.subr.mxu0 0.0
    %5087 = vmatpush1.xpose.msra.mxu0 0.0
    %5088 = vmatprep.mubr.f32.mxu0 0.0
    %5089 = vmatmul.mubr.f32.gmra.mrb[0].mxu0 %v5020
    %v5090 = vpop.f32.mrb[0].mxu0
    %v5091 = vadd.f32 0.0, %v5090
    %v5092 = vpop.f32.mrb[0].mxu0
    %5093 = vdwg.mxu0
    %v5094 = vmul.f32 %v5091, 0.35355338
    %v5095 = vsel %vm310, %v5094, -inf
    %5096 = vmax.xlane.f32.xlu0 %v5095
    %v5097 = vpop.xlane.xlu0 %5096
    %v5098 = vsub.f32 %v5094, %v5097
    %v5099 = vmul.f32 %v5098, 1.442695
    %v5100 = vpow.pop %v5099
    %v5101 = vsel %vm310, %v5100, 0.0
    %5102 = vadd.xlane.f32.xlu0 %v5101
    %v5103 = vpop.xlane.xlu0 %5102
    %v5104 = vrcp.pop %v5103
    %v5105 = vmul.f32 %v5100, %v5104
    %5106 = vrot.lane.b32.xlu0 %v4294, 40
    %v5107 = vpop.permute.xlu0 %5106
    %v5110 = vsel %vm310, %v5105, 0
    %5112 = vmatprep.subr.mxu0 0.0
    %5113 = vmatpush1.msra.mxu0 %v5107
    %5114 = vmatprep.subr.mxu0 0.0
    %5115 = vmatpush1.msra.mxu0 0.0
    %5116 = vmatprep.subr.mxu0 0.0
    %5117 = vmatpush1.msra.mxu0 0.0
    %5118 = vmatprep.subr.mxu0 0.0
    %5119 = vmatpush1.msra.mxu0 0.0
    %5120 = vmatprep.subr.mxu0 0.0
    %5121 = vmatpush1.msra.mxu0 0.0
    %5122 = vmatprep.subr.mxu0 0.0
    %5123 = vmatpush1.msra.mxu0 0.0
    %5124 = vmatprep.subr.mxu0 0.0
    %5125 = vmatpush1.msra.mxu0 0.0
    %5126 = vmatprep.subr.mxu0 0.0
    %5127 = vmatpush1.msra.mxu0 0.0
    %5128 = vmatprep.subr.mxu0 0.0
    %5129 = vmatpush1.msra.mxu0 0.0
    %5130 = vmatprep.subr.mxu0 0.0
    %5131 = vmatpush1.msra.mxu0 0.0
    %5132 = vmatprep.subr.mxu0 0.0
    %5133 = vmatpush1.msra.mxu0 0.0
    %5134 = vmatprep.subr.mxu0 0.0
    %5135 = vmatpush1.msra.mxu0 0.0
    %5136 = vmatprep.subr.mxu0 0.0
    %5137 = vmatpush1.msra.mxu0 0.0
    %5138 = vmatprep.subr.mxu0 0.0
    %5139 = vmatpush1.msra.mxu0 0.0
    %5140 = vmatprep.subr.mxu0 0.0
    %5141 = vmatpush1.msra.mxu0 0.0
    %5142 = vmatprep.subr.mxu0 0.0
    %5143 = vmatpush1.msra.mxu0 0.0
    %5144 = vmatprep.subr.mxu0 0.0
    %5145 = vmatpush1.msra.mxu0 0.0
    %5146 = vmatprep.subr.mxu0 0.0
    %5147 = vmatpush1.msra.mxu0 0.0
    %5148 = vmatprep.subr.mxu0 0.0
    %5149 = vmatpush1.msra.mxu0 0.0
    %5150 = vmatprep.subr.mxu0 0.0
    %5151 = vmatpush1.msra.mxu0 0.0
    %5152 = vmatprep.subr.mxu0 0.0
    %5153 = vmatpush1.msra.mxu0 0.0
    %5154 = vmatprep.subr.mxu0 0.0
    %5155 = vmatpush1.msra.mxu0 0.0
    %5156 = vmatprep.subr.mxu0 0.0
    %5157 = vmatpush1.msra.mxu0 0.0
    %5158 = vmatprep.subr.mxu0 0.0
    %5159 = vmatpush1.msra.mxu0 0.0
    %5160 = vmatprep.subr.mxu0 0.0
    %5161 = vmatpush1.msra.mxu0 0.0
    %5162 = vmatprep.subr.mxu0 0.0
    %5163 = vmatpush1.msra.mxu0 0.0
    %5164 = vmatprep.subr.mxu0 0.0
    %5165 = vmatpush1.msra.mxu0 0.0
    %5166 = vmatprep.subr.mxu0 0.0
    %5167 = vmatpush1.msra.mxu0 0.0
    %5168 = vmatprep.subr.mxu0 0.0
    %5169 = vmatpush1.msra.mxu0 0.0
    %5170 = vmatprep.subr.mxu0 0.0
    %5171 = vmatpush1.msra.mxu0 0.0
    %5172 = vmatprep.subr.mxu0 0.0
    %5173 = vmatpush1.msra.mxu0 0.0
    %5174 = vmatprep.subr.mxu0 0.0
    %5175 = vmatpush1.msra.mxu0 0.0
    %5176 = vmatprep.mubr.f32.mxu0 0.0
    %5177 = vmatmul.mubr.f32.gmra.mrb[0].mxu0 %v5110
    %v5178 = vpop.f32.mrb[0].mxu0
    %v5179 = vadd.f32 0.0, %v5178
    %v5180 = vpop.f32.mrb[0].mxu0
    %5181 = vdwg.mxu0
    %v5183 = vsel %vm310, %v5179, 0
    %5185 = vmatprep.subr.mxu0 0.0
    %5186 = vmatpush1.msra.mxu0 %v3051
    %5187 = vmatprep.subr.mxu0 0.0
    %5188 = vmatpush1.msra.mxu0 0.0
    %5189 = vmatprep.subr.mxu0 0.0
    %5190 = vmatpush1.msra.mxu0 0.0
    %5191 = vmatprep.subr.mxu0 0.0
    %5192 = vmatpush1.msra.mxu0 0.0
    %5193 = vmatprep.subr.mxu0 0.0
    %5194 = vmatpush1.msra.mxu0 0.0
    %5195 = vmatprep.subr.mxu0 0.0
    %5196 = vmatpush1.msra.mxu0 0.0
    %5197 = vmatprep.subr.mxu0 0.0
    %5198 = vmatpush1.msra.mxu0 0.0
    %5199 = vmatprep.subr.mxu0 0.0
    %5200 = vmatpush1.msra.mxu0 0.0
    %5201 = vmatprep.subr.mxu0 0.0
    %5202 = vmatpush1.msra.mxu0 0.0
    %5203 = vmatprep.subr.mxu0 0.0
    %5204 = vmatpush1.msra.mxu0 0.0
    %5205 = vmatprep.subr.mxu0 0.0
    %5206 = vmatpush1.msra.mxu0 0.0
    %5207 = vmatprep.subr.mxu0 0.0
    %5208 = vmatpush1.msra.mxu0 0.0
    %5209 = vmatprep.subr.mxu0 0.0
    %5210 = vmatpush1.msra.mxu0 0.0
    %5211 = vmatprep.subr.mxu0 0.0
    %5212 = vmatpush1.msra.mxu0 0.0
    %5213 = vmatprep.subr.mxu0 0.0
    %5214 = vmatpush1.msra.mxu0 0.0
    %5215 = vmatprep.subr.mxu0 0.0
    %5216 = vmatpush1.msra.mxu0 0.0
    %5217 = vmatprep.subr.mxu0 0.0
    %5218 = vmatpush1.msra.mxu0 0.0
    %5219 = vmatprep.subr.mxu0 0.0
    %5220 = vmatpush1.msra.mxu0 0.0
    %5221 = vmatprep.subr.mxu0 0.0
    %5222 = vmatpush1.msra.mxu0 0.0
    %5223 = vmatprep.subr.mxu0 0.0
    %5224 = vmatpush1.msra.mxu0 0.0
    %5225 = vmatprep.subr.mxu0 0.0
    %5226 = vmatpush1.msra.mxu0 0.0
    %5227 = vmatprep.subr.mxu0 0.0
    %5228 = vmatpush1.msra.mxu0 0.0
    %5229 = vmatprep.subr.mxu0 0.0
    %5230 = vmatpush1.msra.mxu0 0.0
    %5231 = vmatprep.subr.mxu0 0.0
    %5232 = vmatpush1.msra.mxu0 0.0
    %5233 = vmatprep.subr.mxu0 0.0
    %5234 = vmatpush1.msra.mxu0 0.0
    %5235 = vmatprep.subr.mxu0 0.0
    %5236 = vmatpush1.msra.mxu0 0.0
    %5237 = vmatprep.subr.mxu0 0.0
    %5238 = vmatpush1.msra.mxu0 0.0
    %5239 = vmatprep.subr.mxu0 0.0
    %5240 = vmatpush1.msra.mxu0 0.0
    %5241 = vmatprep.subr.mxu0 0.0
    %5242 = vmatpush1.msra.mxu0 0.0
    %5243 = vmatprep.subr.mxu0 0.0
    %5244 = vmatpush1.msra.mxu0 0.0
    %5245 = vmatprep.subr.mxu0 0.0
    %5246 = vmatpush1.msra.mxu0 0.0
    %5247 = vmatprep.subr.mxu0 0.0
    %5248 = vmatpush1.msra.mxu0 0.0
    %5249 = vmatprep.mubr.f32.mxu0 0.0
    %5250 = vmatmul.mubr.f32.gmra.mrb[0].mxu0 %v5183
    %v5251 = vpop.f32.mrb[0].mxu0
    %v5252 = vadd.f32 0.0, %v5251
    %v5253 = vpop.f32.mrb[0].mxu0
    %5254 = vdwg.mxu0
    %v5255 = vadd.f32 %v5015, %v5252
    %v5257 = vsel %vm231, %v5255, 0
    %5259 = vmatprep.subr.mxu0 0.0
    %5260 = vmatpush1.msra.mxu0 %v3053
    %5261 = vmatprep.subr.mxu0 0.0
    %5262 = vmatpush1.msra.mxu0 %v3054
    %5263 = vmatprep.subr.mxu0 0.0
    %5264 = vmatpush1.msra.mxu0 %v3055
    %5265 = vmatprep.subr.mxu0 0.0
    %5266 = vmatpush1.msra.mxu0 %v3056
    %5267 = vmatprep.subr.mxu0 0.0
    %5268 = vmatpush1.msra.mxu0 0.0
    %5269 = vmatprep.subr.mxu0 0.0
    %5270 = vmatpush1.msra.mxu0 0.0
    %5271 = vmatprep.subr.mxu0 0.0
    %5272 = vmatpush1.msra.mxu0 0.0
    %5273 = vmatprep.subr.mxu0 0.0
    %5274 = vmatpush1.msra.mxu0 0.0
    %5275 = vmatprep.subr.mxu0 0.0
    %5276 = vmatpush1.msra.mxu0 0.0
    %5277 = vmatprep.subr.mxu0 0.0
    %5278 = vmatpush1.msra.mxu0 0.0
    %5279 = vmatprep.subr.mxu0 0.0
    %5280 = vmatpush1.msra.mxu0 0.0
    %5281 = vmatprep.subr.mxu0 0.0
    %5282 = vmatpush1.msra.mxu0 0.0
    %5283 = vmatprep.subr.mxu0 0.0
    %5284 = vmatpush1.msra.mxu0 0.0
    %5285 = vmatprep.subr.mxu0 0.0
    %5286 = vmatpush1.msra.mxu0 0.0
    %5287 = vmatprep.subr.mxu0 0.0
    %5288 = vmatpush1.msra.mxu0 0.0
    %5289 = vmatprep.subr.mxu0 0.0
    %5290 = vmatpush1.msra.mxu0 0.0
    %5291 = vmatprep.subr.mxu0 0.0
    %5292 = vmatpush1.msra.mxu0 0.0
    %5293 = vmatprep.subr.mxu0 0.0
    %5294 = vmatpush1.msra.mxu0 0.0
    %5295 = vmatprep.subr.mxu0 0.0
    %5296 = vmatpush1.msra.mxu0 0.0
    %5297 = vmatprep.subr.mxu0 0.0
    %5298 = vmatpush1.msra.mxu0 0.0
    %5299 = vmatprep.subr.mxu0 0.0
    %5300 = vmatpush1.msra.mxu0 0.0
    %5301 = vmatprep.subr.mxu0 0.0
    %5302 = vmatpush1.msra.mxu0 0.0
    %5303 = vmatprep.subr.mxu0 0.0
    %5304 = vmatpush1.msra.mxu0 0.0
    %5305 = vmatprep.subr.mxu0 0.0
    %5306 = vmatpush1.msra.mxu0 0.0
    %5307 = vmatprep.subr.mxu0 0.0
    %5308 = vmatpush1.msra.mxu0 0.0
    %5309 = vmatprep.subr.mxu0 0.0
    %5310 = vmatpush1.msra.mxu0 0.0
    %5311 = vmatprep.subr.mxu0 0.0
    %5312 = vmatpush1.msra.mxu0 0.0
    %5313 = vmatprep.subr.mxu0 0.0
    %5314 = vmatpush1.msra.mxu0 0.0
    %5315 = vmatprep.subr.mxu0 0.0
    %5316 = vmatpush1.msra.mxu0 0.0
    %5317 = vmatprep.subr.mxu0 0.0
    %5318 = vmatpush1.msra.mxu0 0.0
    %5319 = vmatprep.subr.mxu0 0.0
    %5320 = vmatpush1.msra.mxu0 0.0
    %5321 = vmatprep.subr.mxu0 0.0
    %5322 = vmatpush1.msra.mxu0 0.0
    %5323 = vmatprep.mubr.f32.mxu0 0.0
    %5324 = vmatmul.mubr.f32.gmra.mrb[0].mxu0 %v5257
    %v5325 = vpop.f32.mrb[0].mxu0
    %v5326 = vadd.f32 %v4134, %v5325
    %v5327 = vpop.f32.mrb[0].mxu0
    %5328 = vdwg.mxu0
    %s5329 = scalar_lea.vmem [#allocation3], 8
    %5330 = vst.msk [vmem:[%s5329] sm:$0xff] %vm4209, %v5326
    %v5331 = vld [vmem:[#allocation3] sm:$0xff]
    %v5332 = vld [vmem:[#allocation3 + $0x8] sm:$0xff]
    %v5333 = vld [vmem:[#allocation16] sm:$0xff]
    %v5334 = vld [vmem:[#allocation16 + $0x8] sm:$0xff]
    %v5335 = vld [vmem:[#allocation16 + $0x10] sm:$0xff]
    %v5336 = vld [vmem:[#allocation16 + $0x18] sm:$0xff]
    %v5337 = vld [vmem:[#allocation16 + $0x20] sm:$0xff]
    %v5338 = vld [vmem:[#allocation16 + $0x28] sm:$0xff]
    %v5339 = vld [vmem:[#allocation16 + $0x30] sm:$0xff]
    %v5340 = vld [vmem:[#allocation16 + $0x38] sm:$0xff]
    %v5341 = vld [vmem:[#allocation16 + $0x40] sm:$0xff]
    %v5342 = vld [vmem:[#allocation16 + $0x48] sm:$0xff]
    %v5343 = vld [vmem:[#allocation16 + $0x50] sm:$0xff]
    %v5344 = vld [vmem:[#allocation16 + $0x58] sm:$0xff]
    %v5345 = vld [vmem:[#allocation16 + $0x60] sm:$0xff]
    %v5346 = vld [vmem:[#allocation16 + $0x68] sm:$0xff]
    %v5347 = vld [vmem:[#allocation16 + $0x70] sm:$0xff]
    %v5348 = vld [vmem:[#allocation16 + $0x78] sm:$0xff]
    %v5349 = vld [vmem:[#allocation18] sm:$0x1]
    %v5351 = vlaneseq
    %v5352 = vshrl.u32 %v5351, 7
    %v5353 = vsub.s32 0, %v5352
    %v5354 = vrot.slane %v5349, %v5353
    %v5356 = vadd.f32 %v5354, 0.0
    %v5359 = vrot.slane %v5332, 7
    %v5360 = vsel %vm308, %v5359, %v5331
    %v5361 = vsel %vm4209, %v5360, 0
    %5363 = vmatprep.subr.mxu0 0.0
    %5364 = vmatpush1.msra.mxu0 %v5333
    %5365 = vmatprep.subr.mxu0 0.0
    %5366 = vmatpush1.msra.mxu0 %v5334
    %5367 = vmatprep.subr.mxu0 0.0
    %5368 = vmatpush1.msra.mxu0 0.0
    %5369 = vmatprep.subr.mxu0 0.0
    %5370 = vmatpush1.msra.mxu0 0.0
    %5371 = vmatprep.subr.mxu0 0.0
    %5372 = vmatpush1.msra.mxu0 0.0
    %5373 = vmatprep.subr.mxu0 0.0
    %5374 = vmatpush1.msra.mxu0 0.0
    %5375 = vmatprep.subr.mxu0 0.0
    %5376 = vmatpush1.msra.mxu0 0.0
    %5377 = vmatprep.subr.mxu0 0.0
    %5378 = vmatpush1.msra.mxu0 0.0
    %5379 = vmatprep.subr.mxu0 0.0
    %5380 = vmatpush1.msra.mxu0 0.0
    %5381 = vmatprep.subr.mxu0 0.0
    %5382 = vmatpush1.msra.mxu0 0.0
    %5383 = vmatprep.subr.mxu0 0.0
    %5384 = vmatpush1.msra.mxu0 0.0
    %5385 = vmatprep.subr.mxu0 0.0
    %5386 = vmatpush1.msra.mxu0 0.0
    %5387 = vmatprep.subr.mxu0 0.0
    %5388 = vmatpush1.msra.mxu0 0.0
    %5389 = vmatprep.subr.mxu0 0.0
    %5390 = vmatpush1.msra.mxu0 0.0
    %5391 = vmatprep.subr.mxu0 0.0
    %5392 = vmatpush1.msra.mxu0 0.0
    %5393 = vmatprep.subr.mxu0 0.0
    %5394 = vmatpush1.msra.mxu0 0.0
    %5395 = vmatprep.subr.mxu0 0.0
    %5396 = vmatpush1.msra.mxu0 0.0
    %5397 = vmatprep.subr.mxu0 0.0
    %5398 = vmatpush1.msra.mxu0 0.0
    %5399 = vmatprep.subr.mxu0 0.0
    %5400 = vmatpush1.msra.mxu0 0.0
    %5401 = vmatprep.subr.mxu0 0.0
    %5402 = vmatpush1.msra.mxu0 0.0
    %5403 = vmatprep.subr.mxu0 0.0
    %5404 = vmatpush1.msra.mxu0 0.0
    %5405 = vmatprep.subr.mxu0 0.0
    %5406 = vmatpush1.msra.mxu0 0.0
    %5407 = vmatprep.subr.mxu0 0.0
    %5408 = vmatpush1.msra.mxu0 0.0
    %5409 = vmatprep.subr.mxu0 0.0
    %5410 = vmatpush1.msra.mxu0 0.0
    %5411 = vmatprep.subr.mxu0 0.0
    %5412 = vmatpush1.msra.mxu0 0.0
    %5413 = vmatprep.subr.mxu0 0.0
    %5414 = vmatpush1.msra.mxu0 0.0
    %5415 = vmatprep.subr.mxu0 0.0
    %5416 = vmatpush1.msra.mxu0 0.0
    %5417 = vmatprep.subr.mxu0 0.0
    %5418 = vmatpush1.msra.mxu0 0.0
    %5419 = vmatprep.subr.mxu0 0.0
    %5420 = vmatpush1.msra.mxu0 0.0
    %5421 = vmatprep.subr.mxu0 0.0
    %5422 = vmatpush1.msra.mxu0 0.0
    %5423 = vmatprep.subr.mxu0 0.0
    %5424 = vmatpush1.msra.mxu0 0.0
    %5425 = vmatprep.subr.mxu0 0.0
    %5426 = vmatpush1.msra.mxu0 0.0
    %5427 = vmatprep.mubr.f32.mxu0 0.0
    %5428 = vmatmul.mubr.f32.gmra.mrb[0].mxu0 %v5361
    %v5429 = vpop.f32.mrb[0].mxu0
    %v5430 = vadd.f32 0.0, %v5429
    %v5431 = vpop.f32.mrb[0].mxu0
    %5432 = vdwg.mxu0
    %v5433 = vadd.f32 %v5356, %v5430
    %v5434 = vrot.slane %v5331, 1
    %v5435 = vsel %vm308, %v5332, %v5434
    %v5436 = vsel %vm4209, %v5435, 0
    %5438 = vmatprep.subr.mxu0 0.0
    %5439 = vmatpush1.msra.mxu0 %v5335
    %5440 = vmatprep.subr.mxu0 0.0
    %5441 = vmatpush1.msra.mxu0 %v5336
    %5442 = vmatprep.subr.mxu0 0.0
    %5443 = vmatpush1.msra.mxu0 0.0
    %5444 = vmatprep.subr.mxu0 0.0
    %5445 = vmatpush1.msra.mxu0 0.0
    %5446 = vmatprep.subr.mxu0 0.0
    %5447 = vmatpush1.msra.mxu0 0.0
    %5448 = vmatprep.subr.mxu0 0.0
    %5449 = vmatpush1.msra.mxu0 0.0
    %5450 = vmatprep.subr.mxu0 0.0
    %5451 = vmatpush1.msra.mxu0 0.0
    %5452 = vmatprep.subr.mxu0 0.0
    %5453 = vmatpush1.msra.mxu0 0.0
    %5454 = vmatprep.subr.mxu0 0.0
    %5455 = vmatpush1.msra.mxu0 0.0
    %5456 = vmatprep.subr.mxu0 0.0
    %5457 = vmatpush1.msra.mxu0 0.0
    %5458 = vmatprep.subr.mxu0 0.0
    %5459 = vmatpush1.msra.mxu0 0.0
    %5460 = vmatprep.subr.mxu0 0.0
    %5461 = vmatpush1.msra.mxu0 0.0
    %5462 = vmatprep.subr.mxu0 0.0
    %5463 = vmatpush1.msra.mxu0 0.0
    %5464 = vmatprep.subr.mxu0 0.0
    %5465 = vmatpush1.msra.mxu0 0.0
    %5466 = vmatprep.subr.mxu0 0.0
    %5467 = vmatpush1.msra.mxu0 0.0
    %5468 = vmatprep.subr.mxu0 0.0
    %5469 = vmatpush1.msra.mxu0 0.0
    %5470 = vmatprep.subr.mxu0 0.0
    %5471 = vmatpush1.msra.mxu0 0.0
    %5472 = vmatprep.subr.mxu0 0.0
    %5473 = vmatpush1.msra.mxu0 0.0
    %5474 = vmatprep.subr.mxu0 0.0
    %5475 = vmatpush1.msra.mxu0 0.0
    %5476 = vmatprep.subr.mxu0 0.0
    %5477 = vmatpush1.msra.mxu0 0.0
    %5478 = vmatprep.subr.mxu0 0.0
    %5479 = vmatpush1.msra.mxu0 0.0
    %5480 = vmatprep.subr.mxu0 0.0
    %5481 = vmatpush1.msra.mxu0 0.0
    %5482 = vmatprep.subr.mxu0 0.0
    %5483 = vmatpush1.msra.mxu0 0.0
    %5484 = vmatprep.subr.mxu0 0.0
    %5485 = vmatpush1.msra.mxu0 0.0
    %5486 = vmatprep.subr.mxu0 0.0
    %5487 = vmatpush1.msra.mxu0 0.0
    %5488 = vmatprep.subr.mxu0 0.0
    %5489 = vmatpush1.msra.mxu0 0.0
    %5490 = vmatprep.subr.mxu0 0.0
    %5491 = vmatpush1.msra.mxu0 0.0
    %5492 = vmatprep.subr.mxu0 0.0
    %5493 = vmatpush1.msra.mxu0 0.0
    %5494 = vmatprep.subr.mxu0 0.0
    %5495 = vmatpush1.msra.mxu0 0.0
    %5496 = vmatprep.subr.mxu0 0.0
    %5497 = vmatpush1.msra.mxu0 0.0
    %5498 = vmatprep.subr.mxu0 0.0
    %5499 = vmatpush1.msra.mxu0 0.0
    %5500 = vmatprep.subr.mxu0 0.0
    %5501 = vmatpush1.msra.mxu0 0.0
    %5502 = vmatprep.mubr.f32.mxu0 0.0
    %5503 = vmatmul.mubr.f32.gmra.mrb[0].mxu0 %v5436
    %v5504 = vpop.f32.mrb[0].mxu0
    %v5505 = vadd.f32 0.0, %v5504
    %v5506 = vpop.f32.mrb[0].mxu0
    %5507 = vdwg.mxu0
    %v5508 = vadd.f32 %v5433, %v5505
    %v5509 = vrot.slane %v5331, 2
    %v5510 = vrot.slane %v5332, 1
    %v5511 = vsel %vm308, %v5510, %v5509
    %v5512 = vsel %vm4209, %v5511, 0
    %5514 = vmatprep.subr.mxu0 0.0
    %5515 = vmatpush1.msra.mxu0 %v5337
    %5516 = vmatprep.subr.mxu0 0.0
    %5517 = vmatpush1.msra.mxu0 %v5338
    %5518 = vmatprep.subr.mxu0 0.0
    %5519 = vmatpush1.msra.mxu0 0.0
    %5520 = vmatprep.subr.mxu0 0.0
    %5521 = vmatpush1.msra.mxu0 0.0
    %5522 = vmatprep.subr.mxu0 0.0
    %5523 = vmatpush1.msra.mxu0 0.0
    %5524 = vmatprep.subr.mxu0 0.0
    %5525 = vmatpush1.msra.mxu0 0.0
    %5526 = vmatprep.subr.mxu0 0.0
    %5527 = vmatpush1.msra.mxu0 0.0
    %5528 = vmatprep.subr.mxu0 0.0
    %5529 = vmatpush1.msra.mxu0 0.0
    %5530 = vmatprep.subr.mxu0 0.0
    %5531 = vmatpush1.msra.mxu0 0.0
    %5532 = vmatprep.subr.mxu0 0.0
    %5533 = vmatpush1.msra.mxu0 0.0
    %5534 = vmatprep.subr.mxu0 0.0
    %5535 = vmatpush1.msra.mxu0 0.0
    %5536 = vmatprep.subr.mxu0 0.0
    %5537 = vmatpush1.msra.mxu0 0.0
    %5538 = vmatprep.subr.mxu0 0.0
    %5539 = vmatpush1.msra.mxu0 0.0
    %5540 = vmatprep.subr.mxu0 0.0
    %5541 = vmatpush1.msra.mxu0 0.0
    %5542 = vmatprep.subr.mxu0 0.0
    %5543 = vmatpush1.msra.mxu0 0.0
    %5544 = vmatprep.subr.mxu0 0.0
    %5545 = vmatpush1.msra.mxu0 0.0
    %5546 = vmatprep.subr.mxu0 0.0
    %5547 = vmatpush1.msra.mxu0 0.0
    %5548 = vmatprep.subr.mxu0 0.0
    %5549 = vmatpush1.msra.mxu0 0.0
    %5550 = vmatprep.subr.mxu0 0.0
    %5551 = vmatpush1.msra.mxu0 0.0
    %5552 = vmatprep.subr.mxu0 0.0
    %5553 = vmatpush1.msra.mxu0 0.0
    %5554 = vmatprep.subr.mxu0 0.0
    %5555 = vmatpush1.msra.mxu0 0.0
    %5556 = vmatprep.subr.mxu0 0.0
    %5557 = vmatpush1.msra.mxu0 0.0
    %5558 = vmatprep.subr.mxu0 0.0
    %5559 = vmatpush1.msra.mxu0 0.0
    %5560 = vmatprep.subr.mxu0 0.0
    %5561 = vmatpush1.msra.mxu0 0.0
    %5562 = vmatprep.subr.mxu0 0.0
    %5563 = vmatpush1.msra.mxu0 0.0
    %5564 = vmatprep.subr.mxu0 0.0
    %5565 = vmatpush1.msra.mxu0 0.0
    %5566 = vmatprep.subr.mxu0 0.0
    %5567 = vmatpush1.msra.mxu0 0.0
    %5568 = vmatprep.subr.mxu0 0.0
    %5569 = vmatpush1.msra.mxu0 0.0
    %5570 = vmatprep.subr.mxu0 0.0
    %5571 = vmatpush1.msra.mxu0 0.0
    %5572 = vmatprep.subr.mxu0 0.0
    %5573 = vmatpush1.msra.mxu0 0.0
    %5574 = vmatprep.subr.mxu0 0.0
    %5575 = vmatpush1.msra.mxu0 0.0
    %5576 = vmatprep.subr.mxu0 0.0
    %5577 = vmatpush1.msra.mxu0 0.0
    %5578 = vmatprep.mubr.f32.mxu0 0.0
    %5579 = vmatmul.mubr.f32.gmra.mrb[0].mxu0 %v5512
    %v5580 = vpop.f32.mrb[0].mxu0
    %v5581 = vadd.f32 0.0, %v5580
    %v5582 = vpop.f32.mrb[0].mxu0
    %5583 = vdwg.mxu0
    %v5584 = vadd.f32 %v5508, %v5581
    %v5585 = vrot.slane %v5331, 3
    %v5586 = vrot.slane %v5332, 2
    %v5587 = vsel %vm308, %v5586, %v5585
    %v5588 = vsel %vm4209, %v5587, 0
    %5590 = vmatprep.subr.mxu0 0.0
    %5591 = vmatpush1.msra.mxu0 %v5339
    %5592 = vmatprep.subr.mxu0 0.0
    %5593 = vmatpush1.msra.mxu0 %v5340
    %5594 = vmatprep.subr.mxu0 0.0
    %5595 = vmatpush1.msra.mxu0 0.0
    %5596 = vmatprep.subr.mxu0 0.0
    %5597 = vmatpush1.msra.mxu0 0.0
    %5598 = vmatprep.subr.mxu0 0.0
    %5599 = vmatpush1.msra.mxu0 0.0
    %5600 = vmatprep.subr.mxu0 0.0
    %5601 = vmatpush1.msra.mxu0 0.0
    %5602 = vmatprep.subr.mxu0 0.0
    %5603 = vmatpush1.msra.mxu0 0.0
    %5604 = vmatprep.subr.mxu0 0.0
    %5605 = vmatpush1.msra.mxu0 0.0
    %5606 = vmatprep.subr.mxu0 0.0
    %5607 = vmatpush1.msra.mxu0 0.0
    %5608 = vmatprep.subr.mxu0 0.0
    %5609 = vmatpush1.msra.mxu0 0.0
    %5610 = vmatprep.subr.mxu0 0.0
    %5611 = vmatpush1.msra.mxu0 0.0
    %5612 = vmatprep.subr.mxu0 0.0
    %5613 = vmatpush1.msra.mxu0 0.0
    %5614 = vmatprep.subr.mxu0 0.0
    %5615 = vmatpush1.msra.mxu0 0.0
    %5616 = vmatprep.subr.mxu0 0.0
    %5617 = vmatpush1.msra.mxu0 0.0
    %5618 = vmatprep.subr.mxu0 0.0
    %5619 = vmatpush1.msra.mxu0 0.0
    %5620 = vmatprep.subr.mxu0 0.0
    %5621 = vmatpush1.msra.mxu0 0.0
    %5622 = vmatprep.subr.mxu0 0.0
    %5623 = vmatpush1.msra.mxu0 0.0
    %5624 = vmatprep.subr.mxu0 0.0
    %5625 = vmatpush1.msra.mxu0 0.0
    %5626 = vmatprep.subr.mxu0 0.0
    %5627 = vmatpush1.msra.mxu0 0.0
    %5628 = vmatprep.subr.mxu0 0.0
    %5629 = vmatpush1.msra.mxu0 0.0
    %5630 = vmatprep.subr.mxu0 0.0
    %5631 = vmatpush1.msra.mxu0 0.0
    %5632 = vmatprep.subr.mxu0 0.0
    %5633 = vmatpush1.msra.mxu0 0.0
    %5634 = vmatprep.subr.mxu0 0.0
    %5635 = vmatpush1.msra.mxu0 0.0
    %5636 = vmatprep.subr.mxu0 0.0
    %5637 = vmatpush1.msra.mxu0 0.0
    %5638 = vmatprep.subr.mxu0 0.0
    %5639 = vmatpush1.msra.mxu0 0.0
    %5640 = vmatprep.subr.mxu0 0.0
    %5641 = vmatpush1.msra.mxu0 0.0
    %5642 = vmatprep.subr.mxu0 0.0
    %5643 = vmatpush1.msra.mxu0 0.0
    %5644 = vmatprep.subr.mxu0 0.0
    %5645 = vmatpush1.msra.mxu0 0.0
    %5646 = vmatprep.subr.mxu0 0.0
    %5647 = vmatpush1.msra.mxu0 0.0
    %5648 = vmatprep.subr.mxu0 0.0
    %5649 = vmatpush1.msra.mxu0 0.0
    %5650 = vmatprep.subr.mxu0 0.0
    %5651 = vmatpush1.msra.mxu0 0.0
    %5652 = vmatprep.subr.mxu0 0.0
    %5653 = vmatpush1.msra.mxu0 0.0
    %5654 = vmatprep.mubr.f32.mxu0 0.0
    %5655 = vmatmul.mubr.f32.gmra.mrb[0].mxu0 %v5588
    %v5656 = vpop.f32.mrb[0].mxu0
    %v5657 = vadd.f32 0.0, %v5656
    %v5658 = vpop.f32.mrb[0].mxu0
    %5659 = vdwg.mxu0
    %v5660 = vadd.f32 %v5584, %v5657
    %v5661 = vrot.slane %v5331, 4
    %v5662 = vrot.slane %v5332, 3
    %v5663 = vsel %vm308, %v5662, %v5661
    %v5664 = vsel %vm4209, %v5663, 0
    %5666 = vmatprep.subr.mxu0 0.0
    %5667 = vmatpush1.msra.mxu0 %v5341
    %5668 = vmatprep.subr.mxu0 0.0
    %5669 = vmatpush1.msra.mxu0 %v5342
    %5670 = vmatprep.subr.mxu0 0.0
    %5671 = vmatpush1.msra.mxu0 0.0
    %5672 = vmatprep.subr.mxu0 0.0
    %5673 = vmatpush1.msra.mxu0 0.0
    %5674 = vmatprep.subr.mxu0 0.0
    %5675 = vmatpush1.msra.mxu0 0.0
    %5676 = vmatprep.subr.mxu0 0.0
    %5677 = vmatpush1.msra.mxu0 0.0
    %5678 = vmatprep.subr.mxu0 0.0
    %5679 = vmatpush1.msra.mxu0 0.0
    %5680 = vmatprep.subr.mxu0 0.0
    %5681 = vmatpush1.msra.mxu0 0.0
    %5682 = vmatprep.subr.mxu0 0.0
    %5683 = vmatpush1.msra.mxu0 0.0
    %5684 = vmatprep.subr.mxu0 0.0
    %5685 = vmatpush1.msra.mxu0 0.0
    %5686 = vmatprep.subr.mxu0 0.0
    %5687 = vmatpush1.msra.mxu0 0.0
    %5688 = vmatprep.subr.mxu0 0.0
    %5689 = vmatpush1.msra.mxu0 0.0
    %5690 = vmatprep.subr.mxu0 0.0
    %5691 = vmatpush1.msra.mxu0 0.0
    %5692 = vmatprep.subr.mxu0 0.0
    %5693 = vmatpush1.msra.mxu0 0.0
    %5694 = vmatprep.subr.mxu0 0.0
    %5695 = vmatpush1.msra.mxu0 0.0
    %5696 = vmatprep.subr.mxu0 0.0
    %5697 = vmatpush1.msra.mxu0 0.0
    %5698 = vmatprep.subr.mxu0 0.0
    %5699 = vmatpush1.msra.mxu0 0.0
    %5700 = vmatprep.subr.mxu0 0.0
    %5701 = vmatpush1.msra.mxu0 0.0
    %5702 = vmatprep.subr.mxu0 0.0
    %5703 = vmatpush1.msra.mxu0 0.0
    %5704 = vmatprep.subr.mxu0 0.0
    %5705 = vmatpush1.msra.mxu0 0.0
    %5706 = vmatprep.subr.mxu0 0.0
    %5707 = vmatpush1.msra.mxu0 0.0
    %5708 = vmatprep.subr.mxu0 0.0
    %5709 = vmatpush1.msra.mxu0 0.0
    %5710 = vmatprep.subr.mxu0 0.0
    %5711 = vmatpush1.msra.mxu0 0.0
    %5712 = vmatprep.subr.mxu0 0.0
    %5713 = vmatpush1.msra.mxu0 0.0
    %5714 = vmatprep.subr.mxu0 0.0
    %5715 = vmatpush1.msra.mxu0 0.0
    %5716 = vmatprep.subr.mxu0 0.0
    %5717 = vmatpush1.msra.mxu0 0.0
    %5718 = vmatprep.subr.mxu0 0.0
    %5719 = vmatpush1.msra.mxu0 0.0
    %5720 = vmatprep.subr.mxu0 0.0
    %5721 = vmatpush1.msra.mxu0 0.0
    %5722 = vmatprep.subr.mxu0 0.0
    %5723 = vmatpush1.msra.mxu0 0.0
    %5724 = vmatprep.subr.mxu0 0.0
    %5725 = vmatpush1.msra.mxu0 0.0
    %5726 = vmatprep.subr.mxu0 0.0
    %5727 = vmatpush1.msra.mxu0 0.0
    %5728 = vmatprep.subr.mxu0 0.0
    %5729 = vmatpush1.msra.mxu0 0.0
    %5730 = vmatprep.mubr.f32.mxu0 0.0
    %5731 = vmatmul.mubr.f32.gmra.mrb[0].mxu0 %v5664
    %v5732 = vpop.f32.mrb[0].mxu0
    %v5733 = vadd.f32 0.0, %v5732
    %v5734 = vpop.f32.mrb[0].mxu0
    %5735 = vdwg.mxu0
    %v5736 = vadd.f32 %v5660, %v5733
    %v5737 = vrot.slane %v5331, 5
    %v5738 = vrot.slane %v5332, 4
    %v5739 = vsel %vm308, %v5738, %v5737
    %v5740 = vsel %vm4209, %v5739, 0
    %5742 = vmatprep.subr.mxu0 0.0
    %5743 = vmatpush1.msra.mxu0 %v5343
    %5744 = vmatprep.subr.mxu0 0.0
    %5745 = vmatpush1.msra.mxu0 %v5344
    %5746 = vmatprep.subr.mxu0 0.0
    %5747 = vmatpush1.msra.mxu0 0.0
    %5748 = vmatprep.subr.mxu0 0.0
    %5749 = vmatpush1.msra.mxu0 0.0
    %5750 = vmatprep.subr.mxu0 0.0
    %5751 = vmatpush1.msra.mxu0 0.0
    %5752 = vmatprep.subr.mxu0 0.0
    %5753 = vmatpush1.msra.mxu0 0.0
    %5754 = vmatprep.subr.mxu0 0.0
    %5755 = vmatpush1.msra.mxu0 0.0
    %5756 = vmatprep.subr.mxu0 0.0
    %5757 = vmatpush1.msra.mxu0 0.0
    %5758 = vmatprep.subr.mxu0 0.0
    %5759 = vmatpush1.msra.mxu0 0.0
    %5760 = vmatprep.subr.mxu0 0.0
    %5761 = vmatpush1.msra.mxu0 0.0
    %5762 = vmatprep.subr.mxu0 0.0
    %5763 = vmatpush1.msra.mxu0 0.0
    %5764 = vmatprep.subr.mxu0 0.0
    %5765 = vmatpush1.msra.mxu0 0.0
    %5766 = vmatprep.subr.mxu0 0.0
    %5767 = vmatpush1.msra.mxu0 0.0
    %5768 = vmatprep.subr.mxu0 0.0
    %5769 = vmatpush1.msra.mxu0 0.0
    %5770 = vmatprep.subr.mxu0 0.0
    %5771 = vmatpush1.msra.mxu0 0.0
    %5772 = vmatprep.subr.mxu0 0.0
    %5773 = vmatpush1.msra.mxu0 0.0
    %5774 = vmatprep.subr.mxu0 0.0
    %5775 = vmatpush1.msra.mxu0 0.0
    %5776 = vmatprep.subr.mxu0 0.0
    %5777 = vmatpush1.msra.mxu0 0.0
    %5778 = vmatprep.subr.mxu0 0.0
    %5779 = vmatpush1.msra.mxu0 0.0
    %5780 = vmatprep.subr.mxu0 0.0
    %5781 = vmatpush1.msra.mxu0 0.0
    %5782 = vmatprep.subr.mxu0 0.0
    %5783 = vmatpush1.msra.mxu0 0.0
    %5784 = vmatprep.subr.mxu0 0.0
    %5785 = vmatpush1.msra.mxu0 0.0
    %5786 = vmatprep.subr.mxu0 0.0
    %5787 = vmatpush1.msra.mxu0 0.0
    %5788 = vmatprep.subr.mxu0 0.0
    %5789 = vmatpush1.msra.mxu0 0.0
    %5790 = vmatprep.subr.mxu0 0.0
    %5791 = vmatpush1.msra.mxu0 0.0
    %5792 = vmatprep.subr.mxu0 0.0
    %5793 = vmatpush1.msra.mxu0 0.0
    %5794 = vmatprep.subr.mxu0 0.0
    %5795 = vmatpush1.msra.mxu0 0.0
    %5796 = vmatprep.subr.mxu0 0.0
    %5797 = vmatpush1.msra.mxu0 0.0
    %5798 = vmatprep.subr.mxu0 0.0
    %5799 = vmatpush1.msra.mxu0 0.0
    %5800 = vmatprep.subr.mxu0 0.0
    %5801 = vmatpush1.msra.mxu0 0.0
    %5802 = vmatprep.subr.mxu0 0.0
    %5803 = vmatpush1.msra.mxu0 0.0
    %5804 = vmatprep.subr.mxu0 0.0
    %5805 = vmatpush1.msra.mxu0 0.0
    %5806 = vmatprep.mubr.f32.mxu0 0.0
    %5807 = vmatmul.mubr.f32.gmra.mrb[0].mxu0 %v5740
    %v5808 = vpop.f32.mrb[0].mxu0
    %v5809 = vadd.f32 0.0, %v5808
    %v5810 = vpop.f32.mrb[0].mxu0
    %5811 = vdwg.mxu0
    %v5812 = vadd.f32 %v5736, %v5809
    %v5813 = vrot.slane %v5331, 6
    %v5814 = vrot.slane %v5332, 5
    %v5815 = vsel %vm308, %v5814, %v5813
    %v5816 = vsel %vm4209, %v5815, 0
    %5818 = vmatprep.subr.mxu0 0.0
    %5819 = vmatpush1.msra.mxu0 %v5345
    %5820 = vmatprep.subr.mxu0 0.0
    %5821 = vmatpush1.msra.mxu0 %v5346
    %5822 = vmatprep.subr.mxu0 0.0
    %5823 = vmatpush1.msra.mxu0 0.0
    %5824 = vmatprep.subr.mxu0 0.0
    %5825 = vmatpush1.msra.mxu0 0.0
    %5826 = vmatprep.subr.mxu0 0.0
    %5827 = vmatpush1.msra.mxu0 0.0
    %5828 = vmatprep.subr.mxu0 0.0
    %5829 = vmatpush1.msra.mxu0 0.0
    %5830 = vmatprep.subr.mxu0 0.0
    %5831 = vmatpush1.msra.mxu0 0.0
    %5832 = vmatprep.subr.mxu0 0.0
    %5833 = vmatpush1.msra.mxu0 0.0
    %5834 = vmatprep.subr.mxu0 0.0
    %5835 = vmatpush1.msra.mxu0 0.0
    %5836 = vmatprep.subr.mxu0 0.0
    %5837 = vmatpush1.msra.mxu0 0.0
    %5838 = vmatprep.subr.mxu0 0.0
    %5839 = vmatpush1.msra.mxu0 0.0
    %5840 = vmatprep.subr.mxu0 0.0
    %5841 = vmatpush1.msra.mxu0 0.0
    %5842 = vmatprep.subr.mxu0 0.0
    %5843 = vmatpush1.msra.mxu0 0.0
    %5844 = vmatprep.subr.mxu0 0.0
    %5845 = vmatpush1.msra.mxu0 0.0
    %5846 = vmatprep.subr.mxu0 0.0
    %5847 = vmatpush1.msra.mxu0 0.0
    %5848 = vmatprep.subr.mxu0 0.0
    %5849 = vmatpush1.msra.mxu0 0.0
    %5850 = vmatprep.subr.mxu0 0.0
    %5851 = vmatpush1.msra.mxu0 0.0
    %5852 = vmatprep.subr.mxu0 0.0
    %5853 = vmatpush1.msra.mxu0 0.0
    %5854 = vmatprep.subr.mxu0 0.0
    %5855 = vmatpush1.msra.mxu0 0.0
    %5856 = vmatprep.subr.mxu0 0.0
    %5857 = vmatpush1.msra.mxu0 0.0
    %5858 = vmatprep.subr.mxu0 0.0
    %5859 = vmatpush1.msra.mxu0 0.0
    %5860 = vmatprep.subr.mxu0 0.0
    %5861 = vmatpush1.msra.mxu0 0.0
    %5862 = vmatprep.subr.mxu0 0.0
    %5863 = vmatpush1.msra.mxu0 0.0
    %5864 = vmatprep.subr.mxu0 0.0
    %5865 = vmatpush1.msra.mxu0 0.0
    %5866 = vmatprep.subr.mxu0 0.0
    %5867 = vmatpush1.msra.mxu0 0.0
    %5868 = vmatprep.subr.mxu0 0.0
    %5869 = vmatpush1.msra.mxu0 0.0
    %5870 = vmatprep.subr.mxu0 0.0
    %5871 = vmatpush1.msra.mxu0 0.0
    %5872 = vmatprep.subr.mxu0 0.0
    %5873 = vmatpush1.msra.mxu0 0.0
    %5874 = vmatprep.subr.mxu0 0.0
    %5875 = vmatpush1.msra.mxu0 0.0
    %5876 = vmatprep.subr.mxu0 0.0
    %5877 = vmatpush1.msra.mxu0 0.0
    %5878 = vmatprep.subr.mxu0 0.0
    %5879 = vmatpush1.msra.mxu0 0.0
    %5880 = vmatprep.subr.mxu0 0.0
    %5881 = vmatpush1.msra.mxu0 0.0
    %5882 = vmatprep.mubr.f32.mxu0 0.0
    %5883 = vmatmul.mubr.f32.gmra.mrb[0].mxu0 %v5816
    %v5884 = vpop.f32.mrb[0].mxu0
    %v5885 = vadd.f32 0.0, %v5884
    %v5886 = vpop.f32.mrb[0].mxu0
    %5887 = vdwg.mxu0
    %v5888 = vadd.f32 %v5812, %v5885
    %v5889 = vrot.slane %v5331, 7
    %v5890 = vrot.slane %v5332, 6
    %v5891 = vsel %vm308, %v5890, %v5889
    %v5892 = vsel %vm4209, %v5891, 0
    %5894 = vmatprep.subr.mxu0 0.0
    %5895 = vmatpush1.msra.mxu0 %v5347
    %5896 = vmatprep.subr.mxu0 0.0
    %5897 = vmatpush1.msra.mxu0 %v5348
    %5898 = vmatprep.subr.mxu0 0.0
    %5899 = vmatpush1.msra.mxu0 0.0
    %5900 = vmatprep.subr.mxu0 0.0
    %5901 = vmatpush1.msra.mxu0 0.0
    %5902 = vmatprep.subr.mxu0 0.0
    %5903 = vmatpush1.msra.mxu0 0.0
    %5904 = vmatprep.subr.mxu0 0.0
    %5905 = vmatpush1.msra.mxu0 0.0
    %5906 = vmatprep.subr.mxu0 0.0
    %5907 = vmatpush1.msra.mxu0 0.0
    %5908 = vmatprep.subr.mxu0 0.0
    %5909 = vmatpush1.msra.mxu0 0.0
    %5910 = vmatprep.subr.mxu0 0.0
    %5911 = vmatpush1.msra.mxu0 0.0
    %5912 = vmatprep.subr.mxu0 0.0
    %5913 = vmatpush1.msra.mxu0 0.0
    %5914 = vmatprep.subr.mxu0 0.0
    %5915 = vmatpush1.msra.mxu0 0.0
    %5916 = vmatprep.subr.mxu0 0.0
    %5917 = vmatpush1.msra.mxu0 0.0
    %5918 = vmatprep.subr.mxu0 0.0
    %5919 = vmatpush1.msra.mxu0 0.0
    %5920 = vmatprep.subr.mxu0 0.0
    %5921 = vmatpush1.msra.mxu0 0.0
    %5922 = vmatprep.subr.mxu0 0.0
    %5923 = vmatpush1.msra.mxu0 0.0
    %5924 = vmatprep.subr.mxu0 0.0
    %5925 = vmatpush1.msra.mxu0 0.0
    %5926 = vmatprep.subr.mxu0 0.0
    %5927 = vmatpush1.msra.mxu0 0.0
    %5928 = vmatprep.subr.mxu0 0.0
    %5929 = vmatpush1.msra.mxu0 0.0
    %5930 = vmatprep.subr.mxu0 0.0
    %5931 = vmatpush1.msra.mxu0 0.0
    %5932 = vmatprep.subr.mxu0 0.0
    %5933 = vmatpush1.msra.mxu0 0.0
    %5934 = vmatprep.subr.mxu0 0.0
    %5935 = vmatpush1.msra.mxu0 0.0
    %5936 = vmatprep.subr.mxu0 0.0
    %5937 = vmatpush1.msra.mxu0 0.0
    %5938 = vmatprep.subr.mxu0 0.0
    %5939 = vmatpush1.msra.mxu0 0.0
    %5940 = vmatprep.subr.mxu0 0.0
    %5941 = vmatpush1.msra.mxu0 0.0
    %5942 = vmatprep.subr.mxu0 0.0
    %5943 = vmatpush1.msra.mxu0 0.0
    %5944 = vmatprep.subr.mxu0 0.0
    %5945 = vmatpush1.msra.mxu0 0.0
    %5946 = vmatprep.subr.mxu0 0.0
    %5947 = vmatpush1.msra.mxu0 0.0
    %5948 = vmatprep.subr.mxu0 0.0
    %5949 = vmatpush1.msra.mxu0 0.0
    %5950 = vmatprep.subr.mxu0 0.0
    %5951 = vmatpush1.msra.mxu0 0.0
    %5952 = vmatprep.subr.mxu0 0.0
    %5953 = vmatpush1.msra.mxu0 0.0
    %5954 = vmatprep.subr.mxu0 0.0
    %5955 = vmatpush1.msra.mxu0 0.0
    %5956 = vmatprep.subr.mxu0 0.0
    %5957 = vmatpush1.msra.mxu0 0.0
    %5958 = vmatprep.mubr.f32.mxu0 0.0
    %5959 = vmatmul.mubr.f32.gmra.mrb[0].mxu0 %v5892
    %v5960 = vpop.f32.mrb[0].mxu0
    %v5961 = vadd.f32 0.0, %v5960
    %v5962 = vpop.f32.mrb[0].mxu0
    %5963 = vdwg.mxu0
    %v5964 = vadd.f32 %v5888, %v5961
    %v5965 = vld [vmem:[%s17] sm:$0xff]
    %v5966 = vld [vmem:[%s17 + $0x8] sm:$0xff]
    %v5967 = vld [vmem:[%s17 + $0x10] sm:$0xff]
    %v5968 = vld [vmem:[%s17 + $0x18] sm:$0xff]
    %v5969 = vld [vmem:[%s17 + $0x20] sm:$0xf]
    %v5970 = vld [vmem:[#allocation19] sm:$0x1]
    %v5972 = vlaneseq
    %v5973 = vshrl.u32 %v5972, 7
    %v5974 = vsub.s32 0, %v5973
    %v5975 = vrot.slane %v5970, %v5974
    %vm5977 = vcmask 293888
    %v5979 = vsel %vm5977, %v5964, 0
    %vm5981 = vcmask 1043456
    %v5983 = vsel %vm5981, %v5969, 0
    %5985 = vmatprep.subr.mxu0 0.0
    %5986 = vmatpush1.msra.mxu0 %v5965
    %5987 = vmatprep.subr.mxu0 0.0
    %5988 = vmatpush1.msra.mxu0 %v5966
    %5989 = vmatprep.subr.mxu0 0.0
    %5990 = vmatpush1.msra.mxu0 %v5967
    %5991 = vmatprep.subr.mxu0 0.0
    %5992 = vmatpush1.msra.mxu0 %v5968
    %5993 = vmatprep.subr.mxu0 0.0
    %5994 = vmatpush1.msra.mxu0 %v5983
    %5995 = vmatprep.subr.mxu0 0.0
    %5996 = vmatpush1.msra.mxu0 0.0
    %5997 = vmatprep.subr.mxu0 0.0
    %5998 = vmatpush1.msra.mxu0 0.0
    %5999 = vmatprep.subr.mxu0 0.0
    %6000 = vmatpush1.msra.mxu0 0.0
    %6001 = vmatprep.subr.mxu0 0.0
    %6002 = vmatpush1.msra.mxu0 0.0
    %6003 = vmatprep.subr.mxu0 0.0
    %6004 = vmatpush1.msra.mxu0 0.0
    %6005 = vmatprep.subr.mxu0 0.0
    %6006 = vmatpush1.msra.mxu0 0.0
    %6007 = vmatprep.subr.mxu0 0.0
    %6008 = vmatpush1.msra.mxu0 0.0
    %6009 = vmatprep.subr.mxu0 0.0
    %6010 = vmatpush1.msra.mxu0 0.0
    %6011 = vmatprep.subr.mxu0 0.0
    %6012 = vmatpush1.msra.mxu0 0.0
    %6013 = vmatprep.subr.mxu0 0.0
    %6014 = vmatpush1.msra.mxu0 0.0
    %6015 = vmatprep.subr.mxu0 0.0
    %6016 = vmatpush1.msra.mxu0 0.0
    %6017 = vmatprep.subr.mxu0 0.0
    %6018 = vmatpush1.msra.mxu0 0.0
    %6019 = vmatprep.subr.mxu0 0.0
    %6020 = vmatpush1.msra.mxu0 0.0
    %6021 = vmatprep.subr.mxu0 0.0
    %6022 = vmatpush1.msra.mxu0 0.0
    %6023 = vmatprep.subr.mxu0 0.0
    %6024 = vmatpush1.msra.mxu0 0.0
    %6025 = vmatprep.subr.mxu0 0.0
    %6026 = vmatpush1.msra.mxu0 0.0
    %6027 = vmatprep.subr.mxu0 0.0
    %6028 = vmatpush1.msra.mxu0 0.0
    %6029 = vmatprep.subr.mxu0 0.0
    %6030 = vmatpush1.msra.mxu0 0.0
    %6031 = vmatprep.subr.mxu0 0.0
    %6032 = vmatpush1.msra.mxu0 0.0
    %6033 = vmatprep.subr.mxu0 0.0
    %6034 = vmatpush1.msra.mxu0 0.0
    %6035 = vmatprep.subr.mxu0 0.0
    %6036 = vmatpush1.msra.mxu0 0.0
    %6037 = vmatprep.subr.mxu0 0.0
    %6038 = vmatpush1.msra.mxu0 0.0
    %6039 = vmatprep.subr.mxu0 0.0
    %6040 = vmatpush1.msra.mxu0 0.0
    %6041 = vmatprep.subr.mxu0 0.0
    %6042 = vmatpush1.msra.mxu0 0.0
    %6043 = vmatprep.subr.mxu0 0.0
    %6044 = vmatpush1.msra.mxu0 0.0
    %6045 = vmatprep.subr.mxu0 0.0
    %6046 = vmatpush1.msra.mxu0 0.0
    %6047 = vmatprep.subr.mxu0 0.0
    %6048 = vmatpush1.msra.mxu0 0.0
    %6049 = vmatprep.mubr.f32.mxu0 0.0
    %6050 = vmatmul.mubr.f32.gmra.mrb[0].mxu0 %v5979
    %v6051 = vpop.f32.mrb[0].mxu0
    %v6052 = vadd.f32 %v5975, %v6051
    %v6053 = vpop.f32.mrb[0].mxu0
    %6054 = vdwg.mxu0
    %v6055 = vld [vmem:[#allocation21] sm:$0x3f]
    %v6056 = vld [vmem:[#allocation22] sm:$0x1]
    %v6058 = vlaneseq
    %v6059 = vshrl.u32 %v6058, 7
    %v6060 = vsub.s32 0, %v6059
    %v6061 = vrot.slane %v6056, %v6060
    %vm6063 = vcmask 48128
    %v6065 = vsel %vm6063, %v6052, 0
    %vm6067 = vcmask 1045504
    %v6069 = vsel %vm6067, %v6055, 0
    %6071 = vmatprep.subr.mxu0 0.0
    %6072 = vmatpush1.msra.mxu0 %v6069
    %6073 = vmatprep.subr.mxu0 0.0
    %6074 = vmatpush1.msra.mxu0 0.0
    %6075 = vmatprep.subr.mxu0 0.0
    %6076 = vmatpush1.msra.mxu0 0.0
    %6077 = vmatprep.subr.mxu0 0.0
    %6078 = vmatpush1.msra.mxu0 0.0
    %6079 = vmatprep.subr.mxu0 0.0
    %6080 = vmatpush1.msra.mxu0 0.0
    %6081 = vmatprep.subr.mxu0 0.0
    %6082 = vmatpush1.msra.mxu0 0.0
    %6083 = vmatprep.subr.mxu0 0.0
    %6084 = vmatpush1.msra.mxu0 0.0
    %6085 = vmatprep.subr.mxu0 0.0
    %6086 = vmatpush1.msra.mxu0 0.0
    %6087 = vmatprep.subr.mxu0 0.0
    %6088 = vmatpush1.msra.mxu0 0.0
    %6089 = vmatprep.subr.mxu0 0.0
    %6090 = vmatpush1.msra.mxu0 0.0
    %6091 = vmatprep.subr.mxu0 0.0
    %6092 = vmatpush1.msra.mxu0 0.0
    %6093 = vmatprep.subr.mxu0 0.0
    %6094 = vmatpush1.msra.mxu0 0.0
    %6095 = vmatprep.subr.mxu0 0.0
    %6096 = vmatpush1.msra.mxu0 0.0
    %6097 = vmatprep.subr.mxu0 0.0
    %6098 = vmatpush1.msra.mxu0 0.0
    %6099 = vmatprep.subr.mxu0 0.0
    %6100 = vmatpush1.msra.mxu0 0.0
    %6101 = vmatprep.subr.mxu0 0.0
    %6102 = vmatpush1.msra.mxu0 0.0
    %6103 = vmatprep.subr.mxu0 0.0
    %6104 = vmatpush1.msra.mxu0 0.0
    %6105 = vmatprep.subr.mxu0 0.0
    %6106 = vmatpush1.msra.mxu0 0.0
    %6107 = vmatprep.subr.mxu0 0.0
    %6108 = vmatpush1.msra.mxu0 0.0
    %6109 = vmatprep.subr.mxu0 0.0
    %6110 = vmatpush1.msra.mxu0 0.0
    %6111 = vmatprep.subr.mxu0 0.0
    %6112 = vmatpush1.msra.mxu0 0.0
    %6113 = vmatprep.subr.mxu0 0.0
    %6114 = vmatpush1.msra.mxu0 0.0
    %6115 = vmatprep.subr.mxu0 0.0
    %6116 = vmatpush1.msra.mxu0 0.0
    %6117 = vmatprep.subr.mxu0 0.0
    %6118 = vmatpush1.msra.mxu0 0.0
    %6119 = vmatprep.subr.mxu0 0.0
    %6120 = vmatpush1.msra.mxu0 0.0
    %6121 = vmatprep.subr.mxu0 0.0
    %6122 = vmatpush1.msra.mxu0 0.0
    %6123 = vmatprep.subr.mxu0 0.0
    %6124 = vmatpush1.msra.mxu0 0.0
    %6125 = vmatprep.subr.mxu0 0.0
    %6126 = vmatpush1.msra.mxu0 0.0
    %6127 = vmatprep.subr.mxu0 0.0
    %6128 = vmatpush1.msra.mxu0 0.0
    %6129 = vmatprep.subr.mxu0 0.0
    %6130 = vmatpush1.msra.mxu0 0.0
    %6131 = vmatprep.subr.mxu0 0.0
    %6132 = vmatpush1.msra.mxu0 0.0
    %6133 = vmatprep.subr.mxu0 0.0
    %6134 = vmatpush1.msra.mxu0 0.0
    %6135 = vmatprep.mubr.f32.mxu0 0.0
    %6136 = vmatmul.mubr.f32.gmra.mrb[0].mxu0 %v6065
    %v6137 = vpop.f32.mrb[0].mxu0
    %v6138 = vadd.f32 %v6061, %v6137
    %v6139 = vpop.f32.mrb[0].mxu0
    %6140 = vdwg.mxu0
    %v6141 = vmax.f32 %v6138, 0.0
    %vm6142 = vcmask 41984
    %6143 = vst.msk [vmem:[#allocation24] sm:$0x3] %vm6142, %v6141
    // Predicated region
    $region134: #{complex_model_forward.1} parent=1 // pred_check
      _
    $region135: #{complex_model_forward.1} parent=1 // pred_check_branch
      %6145 = sbr.rel (0) target = $region137
    $region136: #{complex_model_forward.1} parent=1 // pred_region
      %s6147 = ssub.s32 32, 32
      %6148 = vsyncadd [#allocation6], %s6147
      %s6150 = sshll.u32 [#allocation24], 4
      %s6151 = int_to_ptr.vmem [resolvable:$true] %s6150
      %6153 = dma.vmem_to_hbm [thread:$0]  %s6151, 32, %s21, [#allocation6]
    $region137: #{complex_model_forward.1} parent=1 // pred_fallthru
      _
    // Predicated region
    $region138: #{complex_model_forward.1} parent=1 // pred_check
      _
    $region139: #{complex_model_forward.1} parent=1 // pred_check_branch
      %6155 = sbr.rel (0) target = $region141
    $region140: #{complex_model_forward.1} parent=1 // pred_region
      %6156 = dma.done [#allocation6], 32
    $region141: #{complex_model_forward.1} parent=1 // pred_fallthru
      _
    %6157 = vsyncpa [#allocation5], 1
    %6158 = vsyncpa [#allocation8], 1
    %6159 = vsyncpa [#allocation11], 1
    %6160 = vsyncpa [#allocation14], 1
    %6161 = vsyncpa [#allocation17], 1
    %6162 = vsyncpa [#allocation20], 1
    %6163 = vsyncpa [#allocation23], 1
    %6164 = vsyncpa [#allocation6], 1

</llo_original>
